<compile_context>
chip_gen: v7x
topology: tpu7x:2x2x1
jax: 0.10.0
libtpu: 0.0.40
codegen_flags: <defaults>
</compile_context>

<pallas_src>
import math

import jax
import jax.numpy as jnp
from jax.experimental import pallas as pl
from jax.experimental.pallas import tpu as pltpu

MNIST_IMAGE_SIZE = 28
OUT_DIM = MNIST_IMAGE_SIZE * MNIST_IMAGE_SIZE          # 784
LAYER_DIMS = [128, 256, 512, 1024, OUT_DIM]


def _sigmoid(z):
    # One EUP transcendental per element (tanh) instead of exp + reciprocal.
    # Mathematically exact sigmoid and naturally bounded to [0, 1].
    return 0.5 * (1.0 + jnp.tanh(0.5 * z))


def _dequant_bf16(wq_ref, s_ref):
    # int8 -> f32 (exact) * per-output-channel scale, then bf16 for the MXU.
    return (wq_ref[...] * s_ref[...]).astype(jnp.bfloat16)


def generator_zero_kernel(
    x_ref,
    w1_ref, s1_ref, b1_ref,
    w2_ref, s2_ref, b2_ref,
    w3_ref, s3_ref, b3_ref,
    w4_ref, s4_ref, b4_ref,
    w5_ref, s5_ref, b5_ref,
    o_ref,
):
    # Layer 1: Linear(latent_dim, 128) + ReLU
    h = jnp.dot(x_ref[...].astype(jnp.bfloat16), _dequant_bf16(w1_ref, s1_ref),
                preferred_element_type=jnp.float32)
    h = jnp.maximum(h + b1_ref[...], 0.0)
    # Layer 2: Linear(128, 256) + Sigmoid
    h = jnp.dot(h.astype(jnp.bfloat16), _dequant_bf16(w2_ref, s2_ref),
                preferred_element_type=jnp.float32)
    h = _sigmoid(h + b2_ref[...])
    # Layer 3: Linear(256, 512) + ReLU
    h = jnp.dot(h.astype(jnp.bfloat16), _dequant_bf16(w3_ref, s3_ref),
                preferred_element_type=jnp.float32)
    h = jnp.maximum(h + b3_ref[...], 0.0)
    # Layer 4: Linear(512, 1024) + ReLU
    h = jnp.dot(h.astype(jnp.bfloat16), _dequant_bf16(w4_ref, s4_ref),
                preferred_element_type=jnp.float32)
    h = jnp.maximum(h + b4_ref[...], 0.0)
    # Layer 5: Linear(1024, 784) + Sigmoid (unpadded; output store is masked,
    # which costs far less than streaming zero-padded weight columns).
    h = jnp.dot(h.astype(jnp.bfloat16), _dequant_bf16(w5_ref, s5_ref),
                preferred_element_type=jnp.float32)
    o_ref[...] = _sigmoid(h + b5_ref[...])


def prepare_params(params):
    """One-time param prep (do NOT call per forward): symmetric int8 weights
    with per-output-channel f32 scales + 2-D f32 biases."""
    prepped = []
    for w, b in params:
        w = w.astype(jnp.float32)
        amax = jnp.max(jnp.abs(w), axis=0, keepdims=True)            # (1, out)
        scale = jnp.maximum(amax, 1e-12) / 127.0                     # (1, out) f32
        wq = jnp.clip(jnp.round(w / scale), -127.0, 127.0).astype(jnp.int8)
        prepped.append((wq, scale, b.reshape(1, -1).astype(jnp.float32)))
    return prepped


@jax.jit
def generator_zero_forward(x, prepped_params):
    """x: (1, latent_dim) f32.  prepped_params: output of prepare_params.
    Returns (1, 28, 28) f32."""
    assert x.shape[0] == 1, "GeneratorZero forward is defined for a single sample"
    # Pad batch dim to 8 so the sublane dimension is dense; only row 0 is real.
    xb = jnp.pad(x.astype(jnp.float32), ((0, 8 - x.shape[0]), (0, 0)))

    flat_params = []
    for wq, s, b in prepped_params:
        flat_params += [wq, s, b]

    vmem_spec = pl.BlockSpec(memory_space=pltpu.MemorySpace.VMEM)
    out = pl.pallas_call(
        generator_zero_kernel,
        out_shape=jax.ShapeDtypeStruct((8, OUT_DIM), jnp.float32),
        in_specs=[vmem_spec] * (1 + len(flat_params)),
        out_specs=vmem_spec,
    )(xb, *flat_params)

    return out[0:1, :].reshape(1, MNIST_IMAGE_SIZE, MNIST_IMAGE_SIZE)


def init_params(latent_dim, key):
    """Deterministic init mimicking nn.Linear default (U[-1/sqrt(fan_in), ...])."""
    params = []
    dims = [latent_dim] + LAYER_DIMS
    for i in range(len(LAYER_DIMS)):
        fan_in, fan_out = dims[i], dims[i + 1]
        key, kw, kb = jax.random.split(key, 3)
        bound = 1.0 / math.sqrt(fan_in)
        w = jax.random.uniform(kw, (fan_in, fan_out), jnp.float32, -bound, bound)
        b = jax.random.uniform(kb, (fan_out,), jnp.float32, -bound, bound)
        params.append((w, b))
    return params


def reference_forward_quant(x, prepped_params):
    """Mirrors the kernel math exactly (int8-dequantized bf16 weights, bf16
    activations, f32 accumulation, tanh-form sigmoid)."""
    h = x.astype(jnp.float32)
    acts = ["relu", "sigmoid", "relu", "relu", "sigmoid"]
    for (wq, s, b), act in zip(prepped_params, acts):
        w_bf16 = (wq * s).astype(jnp.bfloat16)
        h = jnp.dot(h.astype(jnp.bfloat16), w_bf16,
                    preferred_element_type=jnp.float32)
        h = h + b
        h = jnp.maximum(h, 0.0) if act == "relu" else 0.5 * (1.0 + jnp.tanh(0.5 * h))
    return h.reshape(1, MNIST_IMAGE_SIZE, MNIST_IMAGE_SIZE)


def reference_forward_f32(x, params):
    h = x
    acts = ["relu", "sigmoid", "relu", "relu", "sigmoid"]
    for (w, b), act in zip(params, acts):
        h = h @ w + b
        h = jnp.maximum(h, 0.0) if act == "relu" else 1.0 / (1.0 + jnp.exp(-h))
    return h.reshape(1, MNIST_IMAGE_SIZE, MNIST_IMAGE_SIZE)


if __name__ == "__main__":
    latent_dim = 64
    key = jax.random.PRNGKey(0)
    key, kx = jax.random.split(key)
    x = jax.random.normal(kx, (1, latent_dim), jnp.float32)
    params = init_params(latent_dim, key)

    # One-time param preparation (int8 + scales); reused across every forward.
    prepped = prepare_params(params)

    out = generator_zero_forward(x, prepped)
    out = jax.block_until_ready(out)
    assert out.shape == (1, 28, 28), out.shape

    # Tight check vs. reference mirroring the exact kernel arithmetic.
    ref_q = reference_forward_quant(x, prepped)
    err_q = float(jnp.max(jnp.abs(out - ref_q)))
    assert err_q < 1e-2, err_q

    # Loose sanity check vs. the exact f32 reference (int8/bf16 quantization).
    ref_f32 = reference_forward_f32(x, params)
    err_f32 = float(jnp.max(jnp.abs(out - ref_f32)))
    assert err_f32 < 5e-2, err_f32

    print("KERNEL_OK")
</pallas_src>

<mosaic_0001>
module attributes {stable_mosaic.version = 11 : i64} {
  func.func @generator_zero_kernel(%arg0: memref<8x64xf32, #tpu.memory_space<vmem>>, %arg1: memref<64x128xi8, #tpu.memory_space<vmem>>, %arg2: memref<1x128xf32, #tpu.memory_space<vmem>>, %arg3: memref<1x128xf32, #tpu.memory_space<vmem>>, %arg4: memref<128x256xi8, #tpu.memory_space<vmem>>, %arg5: memref<1x256xf32, #tpu.memory_space<vmem>>, %arg6: memref<1x256xf32, #tpu.memory_space<vmem>>, %arg7: memref<256x512xi8, #tpu.memory_space<vmem>>, %arg8: memref<1x512xf32, #tpu.memory_space<vmem>>, %arg9: memref<1x512xf32, #tpu.memory_space<vmem>>, %arg10: memref<512x1024xi8, #tpu.memory_space<vmem>>, %arg11: memref<1x1024xf32, #tpu.memory_space<vmem>>, %arg12: memref<1x1024xf32, #tpu.memory_space<vmem>>, %arg13: memref<1024x784xi8, #tpu.memory_space<vmem>>, %arg14: memref<1x784xf32, #tpu.memory_space<vmem>>, %arg15: memref<1x784xf32, #tpu.memory_space<vmem>>, %arg16: memref<8x784xf32, #tpu.memory_space<vmem>>) attributes {dimension_semantics = [], scalar_prefetch = 0 : i64, scratch_operands = 0 : i64, tpu.core_type = #tpu.core_type<tc>} {
    %c0 = arith.constant 0 : index
    %c0_0 = arith.constant 0 : index
    %0 = vector.load %arg0[%c0, %c0_0] : memref<8x64xf32, #tpu.memory_space<vmem>>, vector<8x64xf32>
    %1 = arith.truncf %0 : vector<8x64xf32> to vector<8x64xbf16>
    %c0_1 = arith.constant 0 : index
    %c0_2 = arith.constant 0 : index
    %2 = vector.load %arg1[%c0_1, %c0_2] : memref<64x128xi8, #tpu.memory_space<vmem>>, vector<64x128xi8>
    %c0_3 = arith.constant 0 : index
    %c0_4 = arith.constant 0 : index
    %3 = vector.load %arg2[%c0_3, %c0_4] : memref<1x128xf32, #tpu.memory_space<vmem>>, vector<1x128xf32>
    %4 = arith.sitofp %2 : vector<64x128xi8> to vector<64x128xf32>
    %5 = vector.broadcast %3 : vector<1x128xf32> to vector<64x128xf32>
    %6 = arith.mulf %4, %5 : vector<64x128xf32>
    %7 = arith.truncf %6 : vector<64x128xf32> to vector<64x128xbf16>
    %cst = arith.constant dense<0.000000e+00> : vector<8x128xf32>
    %8 = tpu.matmul %1, %7, %cst {dimension_numbers = #tpu.dot_dimension_numbers<[1], [0], [0], [1], [0, 0, 1, 1], [], []>} : vector<8x64xbf16>, vector<64x128xbf16>, vector<8x128xf32> -> vector<8x128xf32>
    %c0_5 = arith.constant 0 : index
    %c0_6 = arith.constant 0 : index
    %9 = vector.load %arg3[%c0_5, %c0_6] : memref<1x128xf32, #tpu.memory_space<vmem>>, vector<1x128xf32>
    %10 = vector.broadcast %9 : vector<1x128xf32> to vector<8x128xf32>
    %11 = arith.addf %8, %10 : vector<8x128xf32>
    %cst_7 = arith.constant 0.000000e+00 : f32
    %12 = vector.broadcast %cst_7 : f32 to vector<8x128xf32>
    %13 = arith.maximumf %11, %12 : vector<8x128xf32>
    %14 = arith.truncf %13 : vector<8x128xf32> to vector<8x128xbf16>
    %c0_8 = arith.constant 0 : index
    %c0_9 = arith.constant 0 : index
    %15 = vector.load %arg4[%c0_8, %c0_9] : memref<128x256xi8, #tpu.memory_space<vmem>>, vector<128x256xi8>
    %c0_10 = arith.constant 0 : index
    %c0_11 = arith.constant 0 : index
    %16 = vector.load %arg5[%c0_10, %c0_11] : memref<1x256xf32, #tpu.memory_space<vmem>>, vector<1x256xf32>
    %17 = arith.sitofp %15 : vector<128x256xi8> to vector<128x256xf32>
    %18 = vector.broadcast %16 : vector<1x256xf32> to vector<128x256xf32>
    %19 = arith.mulf %17, %18 : vector<128x256xf32>
    %20 = arith.truncf %19 : vector<128x256xf32> to vector<128x256xbf16>
    %cst_12 = arith.constant dense<0.000000e+00> : vector<8x256xf32>
    %21 = tpu.matmul %14, %20, %cst_12 {dimension_numbers = #tpu.dot_dimension_numbers<[1], [0], [0], [1], [0, 0, 1, 1], [], []>} : vector<8x128xbf16>, vector<128x256xbf16>, vector<8x256xf32> -> vector<8x256xf32>
    %c0_13 = arith.constant 0 : index
    %c0_14 = arith.constant 0 : index
    %22 = vector.load %arg6[%c0_13, %c0_14] : memref<1x256xf32, #tpu.memory_space<vmem>>, vector<1x256xf32>
    %23 = vector.broadcast %22 : vector<1x256xf32> to vector<8x256xf32>
    %24 = arith.addf %21, %23 : vector<8x256xf32>
    %cst_15 = arith.constant 5.000000e-01 : f32
    %25 = vector.broadcast %cst_15 : f32 to vector<8x256xf32>
    %26 = arith.mulf %25, %24 : vector<8x256xf32>
    %27 = math.tanh %26 : vector<8x256xf32>
    %cst_16 = arith.constant 1.000000e+00 : f32
    %28 = vector.broadcast %cst_16 : f32 to vector<8x256xf32>
    %29 = arith.addf %28, %27 : vector<8x256xf32>
    %cst_17 = arith.constant 5.000000e-01 : f32
    %30 = vector.broadcast %cst_17 : f32 to vector<8x256xf32>
    %31 = arith.mulf %30, %29 : vector<8x256xf32>
    %32 = arith.truncf %31 : vector<8x256xf32> to vector<8x256xbf16>
    %c0_18 = arith.constant 0 : index
    %c0_19 = arith.constant 0 : index
    %33 = vector.load %arg7[%c0_18, %c0_19] : memref<256x512xi8, #tpu.memory_space<vmem>>, vector<256x512xi8>
    %c0_20 = arith.constant 0 : index
    %c0_21 = arith.constant 0 : index
    %34 = vector.load %arg8[%c0_20, %c0_21] : memref<1x512xf32, #tpu.memory_space<vmem>>, vector<1x512xf32>
    %35 = arith.sitofp %33 : vector<256x512xi8> to vector<256x512xf32>
    %36 = vector.broadcast %34 : vector<1x512xf32> to vector<256x512xf32>
    %37 = arith.mulf %35, %36 : vector<256x512xf32>
    %38 = arith.truncf %37 : vector<256x512xf32> to vector<256x512xbf16>
    %cst_22 = arith.constant dense<0.000000e+00> : vector<8x512xf32>
    %39 = tpu.matmul %32, %38, %cst_22 {dimension_numbers = #tpu.dot_dimension_numbers<[1], [0], [0], [1], [0, 0, 1, 1], [], []>} : vector<8x256xbf16>, vector<256x512xbf16>, vector<8x512xf32> -> vector<8x512xf32>
    %c0_23 = arith.constant 0 : index
    %c0_24 = arith.constant 0 : index
    %40 = vector.load %arg9[%c0_23, %c0_24] : memref<1x512xf32, #tpu.memory_space<vmem>>, vector<1x512xf32>
    %41 = vector.broadcast %40 : vector<1x512xf32> to vector<8x512xf32>
    %42 = arith.addf %39, %41 : vector<8x512xf32>
    %cst_25 = arith.constant 0.000000e+00 : f32
    %43 = vector.broadcast %cst_25 : f32 to vector<8x512xf32>
    %44 = arith.maximumf %42, %43 : vector<8x512xf32>
    %45 = arith.truncf %44 : vector<8x512xf32> to vector<8x512xbf16>
    %c0_26 = arith.constant 0 : index
    %c0_27 = arith.constant 0 : index
    %46 = vector.load %arg10[%c0_26, %c0_27] : memref<512x1024xi8, #tpu.memory_space<vmem>>, vector<512x1024xi8>
    %c0_28 = arith.constant 0 : index
    %c0_29 = arith.constant 0 : index
    %47 = vector.load %arg11[%c0_28, %c0_29] : memref<1x1024xf32, #tpu.memory_space<vmem>>, vector<1x1024xf32>
    %48 = arith.sitofp %46 : vector<512x1024xi8> to vector<512x1024xf32>
    %49 = vector.broadcast %47 : vector<1x1024xf32> to vector<512x1024xf32>
    %50 = arith.mulf %48, %49 : vector<512x1024xf32>
    %51 = arith.truncf %50 : vector<512x1024xf32> to vector<512x1024xbf16>
    %cst_30 = arith.constant dense<0.000000e+00> : vector<8x1024xf32>
    %52 = tpu.matmul %45, %51, %cst_30 {dimension_numbers = #tpu.dot_dimension_numbers<[1], [0], [0], [1], [0, 0, 1, 1], [], []>} : vector<8x512xbf16>, vector<512x1024xbf16>, vector<8x1024xf32> -> vector<8x1024xf32>
    %c0_31 = arith.constant 0 : index
    %c0_32 = arith.constant 0 : index
    %53 = vector.load %arg12[%c0_31, %c0_32] : memref<1x1024xf32, #tpu.memory_space<vmem>>, vector<1x1024xf32>
    %54 = vector.broadcast %53 : vector<1x1024xf32> to vector<8x1024xf32>
    %55 = arith.addf %52, %54 : vector<8x1024xf32>
    %cst_33 = arith.constant 0.000000e+00 : f32
    %56 = vector.broadcast %cst_33 : f32 to vector<8x1024xf32>
    %57 = arith.maximumf %55, %56 : vector<8x1024xf32>
    %58 = arith.truncf %57 : vector<8x1024xf32> to vector<8x1024xbf16>
    %c0_34 = arith.constant 0 : index
    %c0_35 = arith.constant 0 : index
    %59 = vector.load %arg13[%c0_34, %c0_35] : memref<1024x784xi8, #tpu.memory_space<vmem>>, vector<1024x784xi8>
    %c0_36 = arith.constant 0 : index
    %c0_37 = arith.constant 0 : index
    %60 = vector.load %arg14[%c0_36, %c0_37] : memref<1x784xf32, #tpu.memory_space<vmem>>, vector<1x784xf32>
    %61 = arith.sitofp %59 : vector<1024x784xi8> to vector<1024x784xf32>
    %62 = vector.broadcast %60 : vector<1x784xf32> to vector<1024x784xf32>
    %63 = arith.mulf %61, %62 : vector<1024x784xf32>
    %64 = arith.truncf %63 : vector<1024x784xf32> to vector<1024x784xbf16>
    %cst_38 = arith.constant dense<0.000000e+00> : vector<8x784xf32>
    %65 = tpu.matmul %58, %64, %cst_38 {dimension_numbers = #tpu.dot_dimension_numbers<[1], [0], [0], [1], [0, 0, 1, 1], [], []>} : vector<8x1024xbf16>, vector<1024x784xbf16>, vector<8x784xf32> -> vector<8x784xf32>
    %c0_39 = arith.constant 0 : index
    %c0_40 = arith.constant 0 : index
    %66 = vector.load %arg15[%c0_39, %c0_40] : memref<1x784xf32, #tpu.memory_space<vmem>>, vector<1x784xf32>
    %67 = vector.broadcast %66 : vector<1x784xf32> to vector<8x784xf32>
    %68 = arith.addf %65, %67 : vector<8x784xf32>
    %cst_41 = arith.constant 5.000000e-01 : f32
    %69 = vector.broadcast %cst_41 : f32 to vector<8x784xf32>
    %70 = arith.mulf %69, %68 : vector<8x784xf32>
    %71 = math.tanh %70 : vector<8x784xf32>
    %cst_42 = arith.constant 1.000000e+00 : f32
    %72 = vector.broadcast %cst_42 : f32 to vector<8x784xf32>
    %73 = arith.addf %72, %71 : vector<8x784xf32>
    %cst_43 = arith.constant 5.000000e-01 : f32
    %74 = vector.broadcast %cst_43 : f32 to vector<8x784xf32>
    %75 = arith.mulf %74, %73 : vector<8x784xf32>
    %c0_44 = arith.constant 0 : index
    %c0_45 = arith.constant 0 : index
    %76 = vector.load %arg16[%c0_44, %c0_45] : memref<8x784xf32, #tpu.memory_space<vmem>>, vector<8x784xf32>
    tpu.vector_store %arg16[%c0_44, %c0_45], %75 {strides = array<i32>} : memref<8x784xf32, #tpu.memory_space<vmem>>, vector<8x784xf32>,
    return
  }
}

</mosaic_0001>

<llo_original>
// kernel: generator_zero_forward.1
$region0: #{generator_zero_forward.1}
  #allocation0 [shape = 'u32[]', space=smem, size = 0x4, offset = 0x4, fixed_abs, tag = 'smem constant byte address 0x4 - core index']
  #allocation1 [shape = 'u32[144,128]{1,0:T(1,128)}', space=vmem, size = 0x12000, scoped, tag = 'internal scratch']
  %s0 = inlined_call_operand.vmem [shape: f32[8,64], index: 0, kind: input, shape index: {}]
  %s1 = inlined_call_operand.vmem [shape: s8[64,128], index: 1, kind: input, shape index: {}]
  %s2 = inlined_call_operand.vmem [shape: f32[1,128], index: 2, kind: input, shape index: {}]
  %s3 = inlined_call_operand.vmem [shape: f32[1,128], index: 3, kind: input, shape index: {}]
  %s4 = inlined_call_operand.vmem [shape: s8[128,256], index: 4, kind: input, shape index: {}]
  %s5 = inlined_call_operand.vmem [shape: f32[1,256], index: 5, kind: input, shape index: {}]
  %s6 = inlined_call_operand.vmem [shape: f32[1,256], index: 6, kind: input, shape index: {}]
  %s7 = inlined_call_operand.vmem [shape: s8[256,512], index: 7, kind: input, shape index: {}]
  %s8 = inlined_call_operand.vmem [shape: f32[1,512], index: 8, kind: input, shape index: {}]
  %s9 = inlined_call_operand.vmem [shape: f32[1,512], index: 9, kind: input, shape index: {}]
  %s10 = inlined_call_operand.vmem [shape: s8[512,1024], index: 10, kind: input, shape index: {}]
  %s11 = inlined_call_operand.vmem [shape: f32[1,1024], index: 11, kind: input, shape index: {}]
  %s12 = inlined_call_operand.vmem [shape: f32[1,1024], index: 12, kind: input, shape index: {}]
  %s13 = inlined_call_operand.vmem [shape: s8[1024,784], index: 13, kind: input, shape index: {}]
  %s14 = inlined_call_operand.vmem [shape: f32[1,784], index: 14, kind: input, shape index: {}]
  %s15 = inlined_call_operand.vmem [shape: f32[1,784], index: 15, kind: input, shape index: {}]
  %s16 = inlined_call_operand.vmem [shape: f32[8,784], index: 16, kind: output, shape index: {}]
  %s17 = sld [smem:[#allocation0]]
  $region74: #{generator_zero_forward.1} parent=0
    _
  %s19 = ssub.s32 1, %s17
  %s20 = scalar_select 0, %s19, %s17
  // Predicated region
  $region2: #{generator_zero_forward.1} parent=0 // pred_check
    _
  $region3: #{generator_zero_forward.1} parent=0 // pred_check_branch
    %22 = sbr.rel (0) target = $region5
  $region4: #{generator_zero_forward.1} parent=0 // pred_region
    _
  $region5: #{generator_zero_forward.1} parent=0 // pred_fallthru
    _
  // Predicated region
  $region6: #{generator_zero_forward.1} parent=0 // pred_check
    _
  $region7: #{generator_zero_forward.1} parent=0 // pred_check_branch
    %24 = sbr.rel (0) target = $region9
  $region8: #{generator_zero_forward.1} parent=0 // pred_region
    _
  $region9: #{generator_zero_forward.1} parent=0 // pred_fallthru
    _
  // Predicated region
  $region10: #{generator_zero_forward.1} parent=0 // pred_check
    _
  $region11: #{generator_zero_forward.1} parent=0 // pred_check_branch
    %26 = sbr.rel (0) target = $region13
  $region12: #{generator_zero_forward.1} parent=0 // pred_region
    _
  $region13: #{generator_zero_forward.1} parent=0 // pred_fallthru
    _
  // Predicated region
  $region14: #{generator_zero_forward.1} parent=0 // pred_check
    _
  $region15: #{generator_zero_forward.1} parent=0 // pred_check_branch
    %28 = sbr.rel (0) target = $region17
  $region16: #{generator_zero_forward.1} parent=0 // pred_region
    _
  $region17: #{generator_zero_forward.1} parent=0 // pred_fallthru
    _
  // Predicated region
  $region18: #{generator_zero_forward.1} parent=0 // pred_check
    _
  $region19: #{generator_zero_forward.1} parent=0 // pred_check_branch
    %30 = sbr.rel (0) target = $region21
  $region20: #{generator_zero_forward.1} parent=0 // pred_region
    _
  $region21: #{generator_zero_forward.1} parent=0 // pred_fallthru
    _
  // Predicated region
  $region22: #{generator_zero_forward.1} parent=0 // pred_check
    _
  $region23: #{generator_zero_forward.1} parent=0 // pred_check_branch
    %32 = sbr.rel (0) target = $region25
  $region24: #{generator_zero_forward.1} parent=0 // pred_region
    _
  $region25: #{generator_zero_forward.1} parent=0 // pred_fallthru
    _
  // Predicated region
  $region26: #{generator_zero_forward.1} parent=0 // pred_check
    _
  $region27: #{generator_zero_forward.1} parent=0 // pred_check_branch
    %34 = sbr.rel (0) target = $region29
  $region28: #{generator_zero_forward.1} parent=0 // pred_region
    _
  $region29: #{generator_zero_forward.1} parent=0 // pred_fallthru
    _
  // Predicated region
  $region30: #{generator_zero_forward.1} parent=0 // pred_check
    _
  $region31: #{generator_zero_forward.1} parent=0 // pred_check_branch
    %36 = sbr.rel (0) target = $region33
  $region32: #{generator_zero_forward.1} parent=0 // pred_region
    _
  $region33: #{generator_zero_forward.1} parent=0 // pred_fallthru
    _
  // Predicated region
  $region34: #{generator_zero_forward.1} parent=0 // pred_check
    _
  $region35: #{generator_zero_forward.1} parent=0 // pred_check_branch
    %38 = sbr.rel (0) target = $region37
  $region36: #{generator_zero_forward.1} parent=0 // pred_region
    _
  $region37: #{generator_zero_forward.1} parent=0 // pred_fallthru
    _
  // Predicated region
  $region38: #{generator_zero_forward.1} parent=0 // pred_check
    _
  $region39: #{generator_zero_forward.1} parent=0 // pred_check_branch
    %40 = sbr.rel (0) target = $region41
  $region40: #{generator_zero_forward.1} parent=0 // pred_region
    _
  $region41: #{generator_zero_forward.1} parent=0 // pred_fallthru
    _
  // Predicated region
  $region42: #{generator_zero_forward.1} parent=0 // pred_check
    _
  $region43: #{generator_zero_forward.1} parent=0 // pred_check_branch
    %42 = sbr.rel (0) target = $region45
  $region44: #{generator_zero_forward.1} parent=0 // pred_region
    _
  $region45: #{generator_zero_forward.1} parent=0 // pred_fallthru
    _
  // Predicated region
  $region46: #{generator_zero_forward.1} parent=0 // pred_check
    _
  $region47: #{generator_zero_forward.1} parent=0 // pred_check_branch
    %44 = sbr.rel (0) target = $region49
  $region48: #{generator_zero_forward.1} parent=0 // pred_region
    _
  $region49: #{generator_zero_forward.1} parent=0 // pred_fallthru
    _
  // Predicated region
  $region50: #{generator_zero_forward.1} parent=0 // pred_check
    _
  $region51: #{generator_zero_forward.1} parent=0 // pred_check_branch
    %46 = sbr.rel (0) target = $region53
  $region52: #{generator_zero_forward.1} parent=0 // pred_region
    _
  $region53: #{generator_zero_forward.1} parent=0 // pred_fallthru
    _
  // Predicated region
  $region54: #{generator_zero_forward.1} parent=0 // pred_check
    _
  $region55: #{generator_zero_forward.1} parent=0 // pred_check_branch
    %48 = sbr.rel (0) target = $region57
  $region56: #{generator_zero_forward.1} parent=0 // pred_region
    _
  $region57: #{generator_zero_forward.1} parent=0 // pred_fallthru
    _
  // Predicated region
  $region58: #{generator_zero_forward.1} parent=0 // pred_check
    _
  $region59: #{generator_zero_forward.1} parent=0 // pred_check_branch
    %50 = sbr.rel (0) target = $region61
  $region60: #{generator_zero_forward.1} parent=0 // pred_region
    _
  $region61: #{generator_zero_forward.1} parent=0 // pred_fallthru
    _
  // Predicated region
  $region62: #{generator_zero_forward.1} parent=0 // pred_check
    _
  $region63: #{generator_zero_forward.1} parent=0 // pred_check_branch
    %52 = sbr.rel (0) target = $region65
  $region64: #{generator_zero_forward.1} parent=0 // pred_region
    _
  $region65: #{generator_zero_forward.1} parent=0 // pred_fallthru
    _
  %v54 = vld [vmem:[%s0] sm:$0xff]
  %v55 = vpack.c.bf16 %v54, %v54
  %v56 = vld [vmem:[%s1] sm:$0xff]
  %v57 = vld [vmem:[%s1 + $0x8] sm:$0xff]
  %v58 = vld [vmem:[%s2] sm:$0x1]
  %v59 = vunpack.c.0.s8 %v56
  %v60 = vunpack.c.1.s8 %v56
  %v61 = vunpack.c.2.s8 %v56
  %v62 = vunpack.c.3.s8 %v56
  %v63 = vunpack.c.0.s8 %v57
  %v64 = vunpack.c.1.s8 %v57
  %v65 = vunpack.c.2.s8 %v57
  %v66 = vunpack.c.3.s8 %v57
  %v67 = vcvt.s32.f32 %v59
  %v68 = vcvt.s32.f32 %v60
  %v69 = vcvt.s32.f32 %v61
  %v70 = vcvt.s32.f32 %v62
  %v71 = vcvt.s32.f32 %v63
  %v72 = vcvt.s32.f32 %v64
  %v73 = vcvt.s32.f32 %v65
  %v74 = vcvt.s32.f32 %v66
  %v76 = vlaneseq
  %v77 = vshrl.u32 %v76, 7
  %v78 = vsub.s32 0, %v77
  %v79 = vrot.slane %v58, %v78
  %v81 = vmul.f32 %v67, %v79
  %v82 = vmul.f32 %v68, %v79
  %v83 = vmul.f32 %v69, %v79
  %v84 = vmul.f32 %v70, %v79
  %v85 = vmul.f32 %v71, %v79
  %v86 = vmul.f32 %v72, %v79
  %v87 = vmul.f32 %v73, %v79
  %v88 = vmul.f32 %v74, %v79
  %v89 = vpack.c.bf16 %v82, %v81
  %v90 = vpack.c.bf16 %v84, %v83
  %v91 = vpack.c.bf16 %v86, %v85
  %v92 = vpack.c.bf16 %v88, %v87
  %v93 = vld [vmem:[%s3] sm:$0x1]
  %v95 = vlaneseq
  %v96 = vshrl.u32 %v95, 7
  %v97 = vsub.s32 0, %v96
  %v98 = vrot.slane %v93, %v97
  %vm100 = vcmask 523264
  %v102 = vsel %vm100, %v55, 0
  %104 = vmatprep.subr.bf16.mxu0 0
  %105 = vmatpush1.bf16.msra.mxu0 %v89
  %106 = vmatprep.subr.bf16.mxu0 0
  %107 = vmatpush1.bf16.msra.mxu0 %v90
  %108 = vmatprep.subr.bf16.mxu0 0
  %109 = vmatpush1.bf16.msra.mxu0 %v91
  %110 = vmatprep.subr.bf16.mxu0 0
  %111 = vmatpush1.bf16.msra.mxu0 %v92
  %112 = vmatprep.subr.bf16.mxu0 0
  %113 = vmatpush1.bf16.msra.mxu0 0
  %114 = vmatprep.subr.bf16.mxu0 0
  %115 = vmatpush1.bf16.msra.mxu0 0
  %116 = vmatprep.subr.bf16.mxu0 0
  %117 = vmatpush1.bf16.msra.mxu0 0
  %118 = vmatprep.subr.bf16.mxu0 0
  %119 = vmatpush1.bf16.msra.mxu0 0
  %120 = vmatprep.subr.bf16.mxu0 0
  %121 = vmatpush1.bf16.msra.mxu0 0
  %122 = vmatprep.subr.bf16.mxu0 0
  %123 = vmatpush1.bf16.msra.mxu0 0
  %124 = vmatprep.subr.bf16.mxu0 0
  %125 = vmatpush1.bf16.msra.mxu0 0
  %126 = vmatprep.subr.bf16.mxu0 0
  %127 = vmatpush1.bf16.msra.mxu0 0
  %128 = vmatprep.subr.bf16.mxu0 0
  %129 = vmatpush1.bf16.msra.mxu0 0
  %130 = vmatprep.subr.bf16.mxu0 0
  %131 = vmatpush1.bf16.msra.mxu0 0
  %132 = vmatprep.subr.bf16.mxu0 0
  %133 = vmatpush1.bf16.msra.mxu0 0
  %134 = vmatprep.subr.bf16.mxu0 0
  %135 = vmatpush1.bf16.msra.mxu0 0
  %136 = vmatprep.mubr.bf16.mxu0 0
  %137 = vmatmul.mubr.bf16.gmra.mrb[0].mxu0 %v102
  %v138 = vpop.f32.mrb[0].mxu0
  %v139 = vadd.f32 %v98, %v138
  %v140 = vpop.f32.mrb[0].mxu0
  %v141 = vpop.f32.mrb[0].mxu0
  %v142 = vpop.f32.mrb[0].mxu0
  %143 = vdwg.mxu0
  %v144 = vmax.f32 %v139, 0.0
  %v145 = vpack.c.bf16 %v144, %v144
  %v146 = vld [vmem:[%s4] sm:$0xff]
  %v147 = vld [vmem:[%s4 + $0x8] sm:$0xff]
  %v148 = vld [vmem:[%s4 + $0x10] sm:$0xff]
  %v149 = vld [vmem:[%s4 + $0x18] sm:$0xff]
  %v150 = vld [vmem:[%s4 + $0x20] sm:$0xff]
  %v151 = vld [vmem:[%s4 + $0x28] sm:$0xff]
  %v152 = vld [vmem:[%s4 + $0x30] sm:$0xff]
  %v153 = vld [vmem:[%s4 + $0x38] sm:$0xff]
  %v154 = vld [vmem:[%s5] sm:$0x3]
  %v155 = vunpack.c.0.s8 %v146
  %v156 = vunpack.c.0.s8 %v147
  %v157 = vunpack.c.1.s8 %v146
  %v158 = vunpack.c.1.s8 %v147
  %v159 = vunpack.c.2.s8 %v146
  %v160 = vunpack.c.2.s8 %v147
  %v161 = vunpack.c.3.s8 %v146
  %v162 = vunpack.c.3.s8 %v147
  %v163 = vunpack.c.0.s8 %v148
  %v164 = vunpack.c.0.s8 %v149
  %v165 = vunpack.c.1.s8 %v148
  %v166 = vunpack.c.1.s8 %v149
  %v167 = vunpack.c.2.s8 %v148
  %v168 = vunpack.c.2.s8 %v149
  %v169 = vunpack.c.3.s8 %v148
  %v170 = vunpack.c.3.s8 %v149
  %v171 = vunpack.c.0.s8 %v150
  %v172 = vunpack.c.0.s8 %v151
  %v173 = vunpack.c.1.s8 %v150
  %v174 = vunpack.c.1.s8 %v151
  %v175 = vunpack.c.2.s8 %v150
  %v176 = vunpack.c.2.s8 %v151
  %v177 = vunpack.c.3.s8 %v150
  %v178 = vunpack.c.3.s8 %v151
  %v179 = vunpack.c.0.s8 %v152
  %v180 = vunpack.c.0.s8 %v153
  %v181 = vunpack.c.1.s8 %v152
  %v182 = vunpack.c.1.s8 %v153
  %v183 = vunpack.c.2.s8 %v152
  %v184 = vunpack.c.2.s8 %v153
  %v185 = vunpack.c.3.s8 %v152
  %v186 = vunpack.c.3.s8 %v153
  %v187 = vcvt.s32.f32 %v155
  %v188 = vcvt.s32.f32 %v156
  %v189 = vcvt.s32.f32 %v157
  %v190 = vcvt.s32.f32 %v158
  %v191 = vcvt.s32.f32 %v159
  %v192 = vcvt.s32.f32 %v160
  %v193 = vcvt.s32.f32 %v161
  %v194 = vcvt.s32.f32 %v162
  %v195 = vcvt.s32.f32 %v163
  %v196 = vcvt.s32.f32 %v164
  %v197 = vcvt.s32.f32 %v165
  %v198 = vcvt.s32.f32 %v166
  %v199 = vcvt.s32.f32 %v167
  %v200 = vcvt.s32.f32 %v168
  %v201 = vcvt.s32.f32 %v169
  %v202 = vcvt.s32.f32 %v170
  %v203 = vcvt.s32.f32 %v171
  %v204 = vcvt.s32.f32 %v172
  %v205 = vcvt.s32.f32 %v173
  %v206 = vcvt.s32.f32 %v174
  %v207 = vcvt.s32.f32 %v175
  %v208 = vcvt.s32.f32 %v176
  %v209 = vcvt.s32.f32 %v177
  %v210 = vcvt.s32.f32 %v178
  %v211 = vcvt.s32.f32 %v179
  %v212 = vcvt.s32.f32 %v180
  %v213 = vcvt.s32.f32 %v181
  %v214 = vcvt.s32.f32 %v182
  %v215 = vcvt.s32.f32 %v183
  %v216 = vcvt.s32.f32 %v184
  %v217 = vcvt.s32.f32 %v185
  %v218 = vcvt.s32.f32 %v186
  %v220 = vlaneseq
  %v221 = vshrl.u32 %v220, 7
  %v222 = vsub.s32 0, %v221
  %v223 = vrot.slane %v154, %v222
  %v224 = vlaneseq
  %v225 = vshrl.u32 %v224, 7
  %v226 = vsub.s32 1, %v225
  %v227 = vrot.slane %v154, %v226
  %v230 = vmul.f32 %v187, %v223
  %v231 = vmul.f32 %v188, %v227
  %v232 = vmul.f32 %v189, %v223
  %v233 = vmul.f32 %v190, %v227
  %v234 = vmul.f32 %v191, %v223
  %v235 = vmul.f32 %v192, %v227
  %v236 = vmul.f32 %v193, %v223
  %v237 = vmul.f32 %v194, %v227
  %v238 = vmul.f32 %v195, %v223
  %v239 = vmul.f32 %v196, %v227
  %v240 = vmul.f32 %v197, %v223
  %v241 = vmul.f32 %v198, %v227
  %v242 = vmul.f32 %v199, %v223
  %v243 = vmul.f32 %v200, %v227
  %v244 = vmul.f32 %v201, %v223
  %v245 = vmul.f32 %v202, %v227
  %v246 = vmul.f32 %v203, %v223
  %v247 = vmul.f32 %v204, %v227
  %v248 = vmul.f32 %v205, %v223
  %v249 = vmul.f32 %v206, %v227
  %v250 = vmul.f32 %v207, %v223
  %v251 = vmul.f32 %v208, %v227
  %v252 = vmul.f32 %v209, %v223
  %v253 = vmul.f32 %v210, %v227
  %v254 = vmul.f32 %v211, %v223
  %v255 = vmul.f32 %v212, %v227
  %v256 = vmul.f32 %v213, %v223
  %v257 = vmul.f32 %v214, %v227
  %v258 = vmul.f32 %v215, %v223
  %v259 = vmul.f32 %v216, %v227
  %v260 = vmul.f32 %v217, %v223
  %v261 = vmul.f32 %v218, %v227
  %v262 = vpack.c.bf16 %v232, %v230
  %v263 = vpack.c.bf16 %v233, %v231
  %v264 = vpack.c.bf16 %v236, %v234
  %v265 = vpack.c.bf16 %v237, %v235
  %v266 = vpack.c.bf16 %v240, %v238
  %v267 = vpack.c.bf16 %v241, %v239
  %v268 = vpack.c.bf16 %v244, %v242
  %v269 = vpack.c.bf16 %v245, %v243
  %v270 = vpack.c.bf16 %v248, %v246
  %v271 = vpack.c.bf16 %v249, %v247
  %v272 = vpack.c.bf16 %v252, %v250
  %v273 = vpack.c.bf16 %v253, %v251
  %v274 = vpack.c.bf16 %v256, %v254
  %v275 = vpack.c.bf16 %v257, %v255
  %v276 = vpack.c.bf16 %v260, %v258
  %v277 = vpack.c.bf16 %v261, %v259
  %v278 = vld [vmem:[%s6] sm:$0x3]
  %v280 = vlaneseq
  %v281 = vshrl.u32 %v280, 7
  %v282 = vsub.s32 0, %v281
  %v283 = vrot.slane %v278, %v282
  %v284 = vlaneseq
  %v285 = vshrl.u32 %v284, 7
  %v286 = vsub.s32 1, %v285
  %v287 = vrot.slane %v278, %v286
  %290 = vmatprep.subr.bf16.mxu0 %v263
  %291 = vmatpush1.bf16.msra.mxu0 %v262
  %292 = vmatprep.subr.bf16.mxu0 %v265
  %293 = vmatpush1.bf16.msra.mxu0 %v264
  %294 = vmatprep.subr.bf16.mxu0 %v267
  %295 = vmatpush1.bf16.msra.mxu0 %v266
  %296 = vmatprep.subr.bf16.mxu0 %v269
  %297 = vmatpush1.bf16.msra.mxu0 %v268
  %298 = vmatprep.subr.bf16.mxu0 %v271
  %299 = vmatpush1.bf16.msra.mxu0 %v270
  %300 = vmatprep.subr.bf16.mxu0 %v273
  %301 = vmatpush1.bf16.msra.mxu0 %v272
  %302 = vmatprep.subr.bf16.mxu0 %v275
  %303 = vmatpush1.bf16.msra.mxu0 %v274
  %304 = vmatprep.subr.bf16.mxu0 %v277
  %305 = vmatpush1.bf16.msra.mxu0 %v276
  %306 = vmatprep.subr.bf16.mxu0 0
  %307 = vmatpush1.bf16.msra.mxu0 0
  %308 = vmatprep.subr.bf16.mxu0 0
  %309 = vmatpush1.bf16.msra.mxu0 0
  %310 = vmatprep.subr.bf16.mxu0 0
  %311 = vmatpush1.bf16.msra.mxu0 0
  %312 = vmatprep.subr.bf16.mxu0 0
  %313 = vmatpush1.bf16.msra.mxu0 0
  %314 = vmatprep.subr.bf16.mxu0 0
  %315 = vmatpush1.bf16.msra.mxu0 0
  %316 = vmatprep.subr.bf16.mxu0 0
  %317 = vmatpush1.bf16.msra.mxu0 0
  %318 = vmatprep.subr.bf16.mxu0 0
  %319 = vmatpush1.bf16.msra.mxu0 0
  %320 = vmatprep.subr.bf16.mxu0 0
  %321 = vmatpush1.bf16.msra.mxu0 0
  %322 = vmatprep.mubr.bf16.mxu0 0
  %323 = vmatmul.mubr.bf16.gmra.mrb[0].mxu0 %v145
  %v324 = vpop.f32.mrb[0].mxu0
  %v325 = vadd.f32 %v283, %v324
  %v326 = vpop.f32.mrb[0].mxu0
  %v327 = vadd.f32 %v287, %v326
  %v328 = vpop.f32.mrb[0].mxu0
  %v329 = vpop.f32.mrb[0].mxu0
  %330 = vdwg.mxu0
  %v331 = vmul.f32 %v325, 0.5
  %v332 = vmul.f32 %v327, 0.5
  %v333 = vtanh.pop %v331
  %v334 = vtanh.pop %v332
  %v335 = vadd.f32 %v333, 1.0
  %v336 = vadd.f32 %v334, 1.0
  %v337 = vmul.f32 %v335, 0.5
  %v338 = vmul.f32 %v336, 0.5
  %v339 = vpack.c.bf16 %v337, %v337
  %v340 = vpack.c.bf16 %v338, %v338
  %v341 = vld [vmem:[%s7] sm:$0xff]
  %v342 = vld [vmem:[%s7 + $0x8] sm:$0xff]
  %v343 = vld [vmem:[%s7 + $0x10] sm:$0xff]
  %v344 = vld [vmem:[%s7 + $0x18] sm:$0xff]
  %v345 = vld [vmem:[%s7 + $0x20] sm:$0xff]
  %v346 = vld [vmem:[%s7 + $0x28] sm:$0xff]
  %v347 = vld [vmem:[%s7 + $0x30] sm:$0xff]
  %v348 = vld [vmem:[%s7 + $0x38] sm:$0xff]
  %v349 = vld [vmem:[%s7 + $0x40] sm:$0xff]
  %v350 = vld [vmem:[%s7 + $0x48] sm:$0xff]
  %v351 = vld [vmem:[%s7 + $0x50] sm:$0xff]
  %v352 = vld [vmem:[%s7 + $0x58] sm:$0xff]
  %v353 = vld [vmem:[%s7 + $0x60] sm:$0xff]
  %v354 = vld [vmem:[%s7 + $0x68] sm:$0xff]
  %v355 = vld [vmem:[%s7 + $0x70] sm:$0xff]
  %v356 = vld [vmem:[%s7 + $0x78] sm:$0xff]
  %v357 = vld [vmem:[%s7 + $0x80] sm:$0xff]
  %v358 = vld [vmem:[%s7 + $0x88] sm:$0xff]
  %v359 = vld [vmem:[%s7 + $0x90] sm:$0xff]
  %v360 = vld [vmem:[%s7 + $0x98] sm:$0xff]
  %v361 = vld [vmem:[%s7 + $0xa0] sm:$0xff]
  %v362 = vld [vmem:[%s7 + $0xa8] sm:$0xff]
  %v363 = vld [vmem:[%s7 + $0xb0] sm:$0xff]
  %v364 = vld [vmem:[%s7 + $0xb8] sm:$0xff]
  %v365 = vld [vmem:[%s7 + $0xc0] sm:$0xff]
  %v366 = vld [vmem:[%s7 + $0xc8] sm:$0xff]
  %v367 = vld [vmem:[%s7 + $0xd0] sm:$0xff]
  %v368 = vld [vmem:[%s7 + $0xd8] sm:$0xff]
  %v369 = vld [vmem:[%s7 + $0xe0] sm:$0xff]
  %v370 = vld [vmem:[%s7 + $0xe8] sm:$0xff]
  %v371 = vld [vmem:[%s7 + $0xf0] sm:$0xff]
  %v372 = vld [vmem:[%s7 + $0xf8] sm:$0xff]
  %v373 = vld [vmem:[%s8] sm:$0xf]
  %v374 = vunpack.c.0.s8 %v341
  %v375 = vunpack.c.0.s8 %v342
  %v376 = vunpack.c.0.s8 %v343
  %v377 = vunpack.c.0.s8 %v344
  %v378 = vunpack.c.1.s8 %v341
  %v379 = vunpack.c.1.s8 %v342
  %v380 = vunpack.c.1.s8 %v343
  %v381 = vunpack.c.1.s8 %v344
  %v382 = vunpack.c.2.s8 %v341
  %v383 = vunpack.c.2.s8 %v342
  %v384 = vunpack.c.2.s8 %v343
  %v385 = vunpack.c.2.s8 %v344
  %v386 = vunpack.c.3.s8 %v341
  %v387 = vunpack.c.3.s8 %v342
  %v388 = vunpack.c.3.s8 %v343
  %v389 = vunpack.c.3.s8 %v344
  %v390 = vunpack.c.0.s8 %v345
  %v391 = vunpack.c.0.s8 %v346
  %v392 = vunpack.c.0.s8 %v347
  %v393 = vunpack.c.0.s8 %v348
  %v394 = vunpack.c.1.s8 %v345
  %v395 = vunpack.c.1.s8 %v346
  %v396 = vunpack.c.1.s8 %v347
  %v397 = vunpack.c.1.s8 %v348
  %v398 = vunpack.c.2.s8 %v345
  %v399 = vunpack.c.2.s8 %v346
  %v400 = vunpack.c.2.s8 %v347
  %v401 = vunpack.c.2.s8 %v348
  %v402 = vunpack.c.3.s8 %v345
  %v403 = vunpack.c.3.s8 %v346
  %v404 = vunpack.c.3.s8 %v347
  %v405 = vunpack.c.3.s8 %v348
  %v406 = vunpack.c.0.s8 %v349
  %v407 = vunpack.c.0.s8 %v350
  %v408 = vunpack.c.0.s8 %v351
  %v409 = vunpack.c.0.s8 %v352
  %v410 = vunpack.c.1.s8 %v349
  %v411 = vunpack.c.1.s8 %v350
  %v412 = vunpack.c.1.s8 %v351
  %v413 = vunpack.c.1.s8 %v352
  %v414 = vunpack.c.2.s8 %v349
  %v415 = vunpack.c.2.s8 %v350
  %v416 = vunpack.c.2.s8 %v351
  %v417 = vunpack.c.2.s8 %v352
  %v418 = vunpack.c.3.s8 %v349
  %v419 = vunpack.c.3.s8 %v350
  %v420 = vunpack.c.3.s8 %v351
  %v421 = vunpack.c.3.s8 %v352
  %v422 = vunpack.c.0.s8 %v353
  %v423 = vunpack.c.0.s8 %v354
  %v424 = vunpack.c.0.s8 %v355
  %v425 = vunpack.c.0.s8 %v356
  %v426 = vunpack.c.1.s8 %v353
  %v427 = vunpack.c.1.s8 %v354
  %v428 = vunpack.c.1.s8 %v355
  %v429 = vunpack.c.1.s8 %v356
  %v430 = vunpack.c.2.s8 %v353
  %v431 = vunpack.c.2.s8 %v354
  %v432 = vunpack.c.2.s8 %v355
  %v433 = vunpack.c.2.s8 %v356
  %v434 = vunpack.c.3.s8 %v353
  %v435 = vunpack.c.3.s8 %v354
  %v436 = vunpack.c.3.s8 %v355
  %v437 = vunpack.c.3.s8 %v356
  %v438 = vunpack.c.0.s8 %v357
  %v439 = vunpack.c.0.s8 %v358
  %v440 = vunpack.c.0.s8 %v359
  %v441 = vunpack.c.0.s8 %v360
  %v442 = vunpack.c.1.s8 %v357
  %v443 = vunpack.c.1.s8 %v358
  %v444 = vunpack.c.1.s8 %v359
  %v445 = vunpack.c.1.s8 %v360
  %v446 = vunpack.c.2.s8 %v357
  %v447 = vunpack.c.2.s8 %v358
  %v448 = vunpack.c.2.s8 %v359
  %v449 = vunpack.c.2.s8 %v360
  %v450 = vunpack.c.3.s8 %v357
  %v451 = vunpack.c.3.s8 %v358
  %v452 = vunpack.c.3.s8 %v359
  %v453 = vunpack.c.3.s8 %v360
  %v454 = vunpack.c.0.s8 %v361
  %v455 = vunpack.c.0.s8 %v362
  %v456 = vunpack.c.0.s8 %v363
  %v457 = vunpack.c.0.s8 %v364
  %v458 = vunpack.c.1.s8 %v361
  %v459 = vunpack.c.1.s8 %v362
  %v460 = vunpack.c.1.s8 %v363
  %v461 = vunpack.c.1.s8 %v364
  %v462 = vunpack.c.2.s8 %v361
  %v463 = vunpack.c.2.s8 %v362
  %v464 = vunpack.c.2.s8 %v363
  %v465 = vunpack.c.2.s8 %v364
  %v466 = vunpack.c.3.s8 %v361
  %v467 = vunpack.c.3.s8 %v362
  %v468 = vunpack.c.3.s8 %v363
  %v469 = vunpack.c.3.s8 %v364
  %v470 = vunpack.c.0.s8 %v365
  %v471 = vunpack.c.0.s8 %v366
  %v472 = vunpack.c.0.s8 %v367
  %v473 = vunpack.c.0.s8 %v368
  %v474 = vunpack.c.1.s8 %v365
  %v475 = vunpack.c.1.s8 %v366
  %v476 = vunpack.c.1.s8 %v367
  %v477 = vunpack.c.1.s8 %v368
  %v478 = vunpack.c.2.s8 %v365
  %v479 = vunpack.c.2.s8 %v366
  %v480 = vunpack.c.2.s8 %v367
  %v481 = vunpack.c.2.s8 %v368
  %v482 = vunpack.c.3.s8 %v365
  %v483 = vunpack.c.3.s8 %v366
  %v484 = vunpack.c.3.s8 %v367
  %v485 = vunpack.c.3.s8 %v368
  %v486 = vunpack.c.0.s8 %v369
  %v487 = vunpack.c.0.s8 %v370
  %v488 = vunpack.c.0.s8 %v371
  %v489 = vunpack.c.0.s8 %v372
  %v490 = vunpack.c.1.s8 %v369
  %v491 = vunpack.c.1.s8 %v370
  %v492 = vunpack.c.1.s8 %v371
  %v493 = vunpack.c.1.s8 %v372
  %v494 = vunpack.c.2.s8 %v369
  %v495 = vunpack.c.2.s8 %v370
  %v496 = vunpack.c.2.s8 %v371
  %v497 = vunpack.c.2.s8 %v372
  %v498 = vunpack.c.3.s8 %v369
  %v499 = vunpack.c.3.s8 %v370
  %v500 = vunpack.c.3.s8 %v371
  %v501 = vunpack.c.3.s8 %v372
  %v502 = vcvt.s32.f32 %v374
  %v503 = vcvt.s32.f32 %v375
  %v504 = vcvt.s32.f32 %v376
  %v505 = vcvt.s32.f32 %v377
  %v506 = vcvt.s32.f32 %v378
  %v507 = vcvt.s32.f32 %v379
  %v508 = vcvt.s32.f32 %v380
  %v509 = vcvt.s32.f32 %v381
  %v510 = vcvt.s32.f32 %v382
  %v511 = vcvt.s32.f32 %v383
  %v512 = vcvt.s32.f32 %v384
  %v513 = vcvt.s32.f32 %v385
  %v514 = vcvt.s32.f32 %v386
  %v515 = vcvt.s32.f32 %v387
  %v516 = vcvt.s32.f32 %v388
  %v517 = vcvt.s32.f32 %v389
  %v518 = vcvt.s32.f32 %v390
  %v519 = vcvt.s32.f32 %v391
  %v520 = vcvt.s32.f32 %v392
  %v521 = vcvt.s32.f32 %v393
  %v522 = vcvt.s32.f32 %v394
  %v523 = vcvt.s32.f32 %v395
  %v524 = vcvt.s32.f32 %v396
  %v525 = vcvt.s32.f32 %v397
  %v526 = vcvt.s32.f32 %v398
  %v527 = vcvt.s32.f32 %v399
  %v528 = vcvt.s32.f32 %v400
  %v529 = vcvt.s32.f32 %v401
  %v530 = vcvt.s32.f32 %v402
  %v531 = vcvt.s32.f32 %v403
  %v532 = vcvt.s32.f32 %v404
  %v533 = vcvt.s32.f32 %v405
  %v534 = vcvt.s32.f32 %v406
  %v535 = vcvt.s32.f32 %v407
  %v536 = vcvt.s32.f32 %v408
  %v537 = vcvt.s32.f32 %v409
  %v538 = vcvt.s32.f32 %v410
  %v539 = vcvt.s32.f32 %v411
  %v540 = vcvt.s32.f32 %v412
  %v541 = vcvt.s32.f32 %v413
  %v542 = vcvt.s32.f32 %v414
  %v543 = vcvt.s32.f32 %v415
  %v544 = vcvt.s32.f32 %v416
  %v545 = vcvt.s32.f32 %v417
  %v546 = vcvt.s32.f32 %v418
  %v547 = vcvt.s32.f32 %v419
  %v548 = vcvt.s32.f32 %v420
  %v549 = vcvt.s32.f32 %v421
  %v550 = vcvt.s32.f32 %v422
  %v551 = vcvt.s32.f32 %v423
  %v552 = vcvt.s32.f32 %v424
  %v553 = vcvt.s32.f32 %v425
  %v554 = vcvt.s32.f32 %v426
  %v555 = vcvt.s32.f32 %v427
  %v556 = vcvt.s32.f32 %v428
  %v557 = vcvt.s32.f32 %v429
  %v558 = vcvt.s32.f32 %v430
  %v559 = vcvt.s32.f32 %v431
  %v560 = vcvt.s32.f32 %v432
  %v561 = vcvt.s32.f32 %v433
  %v562 = vcvt.s32.f32 %v434
  %v563 = vcvt.s32.f32 %v435
  %v564 = vcvt.s32.f32 %v436
  %v565 = vcvt.s32.f32 %v437
  %v566 = vcvt.s32.f32 %v438
  %v567 = vcvt.s32.f32 %v439
  %v568 = vcvt.s32.f32 %v440
  %v569 = vcvt.s32.f32 %v441
  %v570 = vcvt.s32.f32 %v442
  %v571 = vcvt.s32.f32 %v443
  %v572 = vcvt.s32.f32 %v444
  %v573 = vcvt.s32.f32 %v445
  %v574 = vcvt.s32.f32 %v446
  %v575 = vcvt.s32.f32 %v447
  %v576 = vcvt.s32.f32 %v448
  %v577 = vcvt.s32.f32 %v449
  %v578 = vcvt.s32.f32 %v450
  %v579 = vcvt.s32.f32 %v451
  %v580 = vcvt.s32.f32 %v452
  %v581 = vcvt.s32.f32 %v453
  %v582 = vcvt.s32.f32 %v454
  %v583 = vcvt.s32.f32 %v455
  %v584 = vcvt.s32.f32 %v456
  %v585 = vcvt.s32.f32 %v457
  %v586 = vcvt.s32.f32 %v458
  %v587 = vcvt.s32.f32 %v459
  %v588 = vcvt.s32.f32 %v460
  %v589 = vcvt.s32.f32 %v461
  %v590 = vcvt.s32.f32 %v462
  %v591 = vcvt.s32.f32 %v463
  %v592 = vcvt.s32.f32 %v464
  %v593 = vcvt.s32.f32 %v465
  %v594 = vcvt.s32.f32 %v466
  %v595 = vcvt.s32.f32 %v467
  %v596 = vcvt.s32.f32 %v468
  %v597 = vcvt.s32.f32 %v469
  %v598 = vcvt.s32.f32 %v470
  %v599 = vcvt.s32.f32 %v471
  %v600 = vcvt.s32.f32 %v472
  %v601 = vcvt.s32.f32 %v473
  %v602 = vcvt.s32.f32 %v474
  %v603 = vcvt.s32.f32 %v475
  %v604 = vcvt.s32.f32 %v476
  %v605 = vcvt.s32.f32 %v477
  %v606 = vcvt.s32.f32 %v478
  %v607 = vcvt.s32.f32 %v479
  %v608 = vcvt.s32.f32 %v480
  %v609 = vcvt.s32.f32 %v481
  %v610 = vcvt.s32.f32 %v482
  %v611 = vcvt.s32.f32 %v483
  %v612 = vcvt.s32.f32 %v484
  %v613 = vcvt.s32.f32 %v485
  %v614 = vcvt.s32.f32 %v486
  %v615 = vcvt.s32.f32 %v487
  %v616 = vcvt.s32.f32 %v488
  %v617 = vcvt.s32.f32 %v489
  %v618 = vcvt.s32.f32 %v490
  %v619 = vcvt.s32.f32 %v491
  %v620 = vcvt.s32.f32 %v492
  %v621 = vcvt.s32.f32 %v493
  %v622 = vcvt.s32.f32 %v494
  %v623 = vcvt.s32.f32 %v495
  %v624 = vcvt.s32.f32 %v496
  %v625 = vcvt.s32.f32 %v497
  %v626 = vcvt.s32.f32 %v498
  %v627 = vcvt.s32.f32 %v499
  %v628 = vcvt.s32.f32 %v500
  %v629 = vcvt.s32.f32 %v501
  %v631 = vlaneseq
  %v632 = vshrl.u32 %v631, 7
  %v633 = vsub.s32 0, %v632
  %v634 = vrot.slane %v373, %v633
  %v635 = vlaneseq
  %v636 = vshrl.u32 %v635, 7
  %v637 = vsub.s32 1, %v636
  %v638 = vrot.slane %v373, %v637
  %v639 = vlaneseq
  %v640 = vshrl.u32 %v639, 7
  %v641 = vsub.s32 2, %v640
  %v642 = vrot.slane %v373, %v641
  %v643 = vlaneseq
  %v644 = vshrl.u32 %v643, 7
  %v645 = vsub.s32 3, %v644
  %v646 = vrot.slane %v373, %v645
  %v651 = vmul.f32 %v502, %v634
  %v652 = vmul.f32 %v503, %v638
  %v653 = vmul.f32 %v504, %v642
  %v654 = vmul.f32 %v505, %v646
  %v655 = vmul.f32 %v506, %v634
  %v656 = vmul.f32 %v507, %v638
  %v657 = vmul.f32 %v508, %v642
  %v658 = vmul.f32 %v509, %v646
  %v659 = vmul.f32 %v510, %v634
  %v660 = vmul.f32 %v511, %v638
  %v661 = vmul.f32 %v512, %v642
  %v662 = vmul.f32 %v513, %v646
  %v663 = vmul.f32 %v514, %v634
  %v664 = vmul.f32 %v515, %v638
  %v665 = vmul.f32 %v516, %v642
  %v666 = vmul.f32 %v517, %v646
  %v667 = vmul.f32 %v518, %v634
  %v668 = vmul.f32 %v519, %v638
  %v669 = vmul.f32 %v520, %v642
  %v670 = vmul.f32 %v521, %v646
  %v671 = vmul.f32 %v522, %v634
  %v672 = vmul.f32 %v523, %v638
  %v673 = vmul.f32 %v524, %v642
  %v674 = vmul.f32 %v525, %v646
  %v675 = vmul.f32 %v526, %v634
  %v676 = vmul.f32 %v527, %v638
  %v677 = vmul.f32 %v528, %v642
  %v678 = vmul.f32 %v529, %v646
  %v679 = vmul.f32 %v530, %v634
  %v680 = vmul.f32 %v531, %v638
  %v681 = vmul.f32 %v532, %v642
  %v682 = vmul.f32 %v533, %v646
  %v683 = vmul.f32 %v534, %v634
  %v684 = vmul.f32 %v535, %v638
  %v685 = vmul.f32 %v536, %v642
  %v686 = vmul.f32 %v537, %v646
  %v687 = vmul.f32 %v538, %v634
  %v688 = vmul.f32 %v539, %v638
  %v689 = vmul.f32 %v540, %v642
  %v690 = vmul.f32 %v541, %v646
  %v691 = vmul.f32 %v542, %v634
  %v692 = vmul.f32 %v543, %v638
  %v693 = vmul.f32 %v544, %v642
  %v694 = vmul.f32 %v545, %v646
  %v695 = vmul.f32 %v546, %v634
  %v696 = vmul.f32 %v547, %v638
  %v697 = vmul.f32 %v548, %v642
  %v698 = vmul.f32 %v549, %v646
  %v699 = vmul.f32 %v550, %v634
  %v700 = vmul.f32 %v551, %v638
  %v701 = vmul.f32 %v552, %v642
  %v702 = vmul.f32 %v553, %v646
  %v703 = vmul.f32 %v554, %v634
  %v704 = vmul.f32 %v555, %v638
  %v705 = vmul.f32 %v556, %v642
  %v706 = vmul.f32 %v557, %v646
  %v707 = vmul.f32 %v558, %v634
  %v708 = vmul.f32 %v559, %v638
  %v709 = vmul.f32 %v560, %v642
  %v710 = vmul.f32 %v561, %v646
  %v711 = vmul.f32 %v562, %v634
  %v712 = vmul.f32 %v563, %v638
  %v713 = vmul.f32 %v564, %v642
  %v714 = vmul.f32 %v565, %v646
  %v715 = vmul.f32 %v566, %v634
  %v716 = vmul.f32 %v567, %v638
  %v717 = vmul.f32 %v568, %v642
  %v718 = vmul.f32 %v569, %v646
  %v719 = vmul.f32 %v570, %v634
  %v720 = vmul.f32 %v571, %v638
  %v721 = vmul.f32 %v572, %v642
  %v722 = vmul.f32 %v573, %v646
  %v723 = vmul.f32 %v574, %v634
  %v724 = vmul.f32 %v575, %v638
  %v725 = vmul.f32 %v576, %v642
  %v726 = vmul.f32 %v577, %v646
  %v727 = vmul.f32 %v578, %v634
  %v728 = vmul.f32 %v579, %v638
  %v729 = vmul.f32 %v580, %v642
  %v730 = vmul.f32 %v581, %v646
  %v731 = vmul.f32 %v582, %v634
  %v732 = vmul.f32 %v583, %v638
  %v733 = vmul.f32 %v584, %v642
  %v734 = vmul.f32 %v585, %v646
  %v735 = vmul.f32 %v586, %v634
  %v736 = vmul.f32 %v587, %v638
  %v737 = vmul.f32 %v588, %v642
  %v738 = vmul.f32 %v589, %v646
  %v739 = vmul.f32 %v590, %v634
  %v740 = vmul.f32 %v591, %v638
  %v741 = vmul.f32 %v592, %v642
  %v742 = vmul.f32 %v593, %v646
  %v743 = vmul.f32 %v594, %v634
  %v744 = vmul.f32 %v595, %v638
  %v745 = vmul.f32 %v596, %v642
  %v746 = vmul.f32 %v597, %v646
  %v747 = vmul.f32 %v598, %v634
  %v748 = vmul.f32 %v599, %v638
  %v749 = vmul.f32 %v600, %v642
  %v750 = vmul.f32 %v601, %v646
  %v751 = vmul.f32 %v602, %v634
  %v752 = vmul.f32 %v603, %v638
  %v753 = vmul.f32 %v604, %v642
  %v754 = vmul.f32 %v605, %v646
  %v755 = vmul.f32 %v606, %v634
  %v756 = vmul.f32 %v607, %v638
  %v757 = vmul.f32 %v608, %v642
  %v758 = vmul.f32 %v609, %v646
  %v759 = vmul.f32 %v610, %v634
  %v760 = vmul.f32 %v611, %v638
  %v761 = vmul.f32 %v612, %v642
  %v762 = vmul.f32 %v613, %v646
  %v763 = vmul.f32 %v614, %v634
  %v764 = vmul.f32 %v615, %v638
  %v765 = vmul.f32 %v616, %v642
  %v766 = vmul.f32 %v617, %v646
  %v767 = vmul.f32 %v618, %v634
  %v768 = vmul.f32 %v619, %v638
  %v769 = vmul.f32 %v620, %v642
  %v770 = vmul.f32 %v621, %v646
  %v771 = vmul.f32 %v622, %v634
  %v772 = vmul.f32 %v623, %v638
  %v773 = vmul.f32 %v624, %v642
  %v774 = vmul.f32 %v625, %v646
  %v775 = vmul.f32 %v626, %v634
  %v776 = vmul.f32 %v627, %v638
  %v777 = vmul.f32 %v628, %v642
  %v778 = vmul.f32 %v629, %v646
  %v779 = vpack.c.bf16 %v655, %v651
  %v780 = vpack.c.bf16 %v656, %v652
  %v781 = vpack.c.bf16 %v657, %v653
  %v782 = vpack.c.bf16 %v658, %v654
  %v783 = vpack.c.bf16 %v663, %v659
  %v784 = vpack.c.bf16 %v664, %v660
  %v785 = vpack.c.bf16 %v665, %v661
  %v786 = vpack.c.bf16 %v666, %v662
  %v787 = vpack.c.bf16 %v671, %v667
  %v788 = vpack.c.bf16 %v672, %v668
  %v789 = vpack.c.bf16 %v673, %v669
  %v790 = vpack.c.bf16 %v674, %v670
  %v791 = vpack.c.bf16 %v679, %v675
  %v792 = vpack.c.bf16 %v680, %v676
  %v793 = vpack.c.bf16 %v681, %v677
  %v794 = vpack.c.bf16 %v682, %v678
  %v795 = vpack.c.bf16 %v687, %v683
  %v796 = vpack.c.bf16 %v688, %v684
  %v797 = vpack.c.bf16 %v689, %v685
  %v798 = vpack.c.bf16 %v690, %v686
  %v799 = vpack.c.bf16 %v695, %v691
  %v800 = vpack.c.bf16 %v696, %v692
  %v801 = vpack.c.bf16 %v697, %v693
  %v802 = vpack.c.bf16 %v698, %v694
  %v803 = vpack.c.bf16 %v703, %v699
  %v804 = vpack.c.bf16 %v704, %v700
  %v805 = vpack.c.bf16 %v705, %v701
  %v806 = vpack.c.bf16 %v706, %v702
  %v807 = vpack.c.bf16 %v711, %v707
  %v808 = vpack.c.bf16 %v712, %v708
  %v809 = vpack.c.bf16 %v713, %v709
  %v810 = vpack.c.bf16 %v714, %v710
  %v811 = vpack.c.bf16 %v719, %v715
  %v812 = vpack.c.bf16 %v720, %v716
  %v813 = vpack.c.bf16 %v721, %v717
  %v814 = vpack.c.bf16 %v722, %v718
  %v815 = vpack.c.bf16 %v727, %v723
  %v816 = vpack.c.bf16 %v728, %v724
  %v817 = vpack.c.bf16 %v729, %v725
  %v818 = vpack.c.bf16 %v730, %v726
  %v819 = vpack.c.bf16 %v735, %v731
  %v820 = vpack.c.bf16 %v736, %v732
  %v821 = vpack.c.bf16 %v737, %v733
  %v822 = vpack.c.bf16 %v738, %v734
  %v823 = vpack.c.bf16 %v743, %v739
  %v824 = vpack.c.bf16 %v744, %v740
  %v825 = vpack.c.bf16 %v745, %v741
  %v826 = vpack.c.bf16 %v746, %v742
  %v827 = vpack.c.bf16 %v751, %v747
  %v828 = vpack.c.bf16 %v752, %v748
  %v829 = vpack.c.bf16 %v753, %v749
  %v830 = vpack.c.bf16 %v754, %v750
  %v831 = vpack.c.bf16 %v759, %v755
  %v832 = vpack.c.bf16 %v760, %v756
  %v833 = vpack.c.bf16 %v761, %v757
  %v834 = vpack.c.bf16 %v762, %v758
  %v835 = vpack.c.bf16 %v767, %v763
  %v836 = vpack.c.bf16 %v768, %v764
  %v837 = vpack.c.bf16 %v769, %v765
  %v838 = vpack.c.bf16 %v770, %v766
  %v839 = vpack.c.bf16 %v775, %v771
  %v840 = vpack.c.bf16 %v776, %v772
  %v841 = vpack.c.bf16 %v777, %v773
  %v842 = vpack.c.bf16 %v778, %v774
  %v843 = vld [vmem:[%s9] sm:$0xf]
  %v845 = vlaneseq
  %v846 = vshrl.u32 %v845, 7
  %v847 = vsub.s32 0, %v846
  %v848 = vrot.slane %v843, %v847
  %v849 = vlaneseq
  %v850 = vshrl.u32 %v849, 7
  %v851 = vsub.s32 1, %v850
  %v852 = vrot.slane %v843, %v851
  %v853 = vlaneseq
  %v854 = vshrl.u32 %v853, 7
  %v855 = vsub.s32 2, %v854
  %v856 = vrot.slane %v843, %v855
  %v857 = vlaneseq
  %v858 = vshrl.u32 %v857, 7
  %v859 = vsub.s32 3, %v858
  %v860 = vrot.slane %v843, %v859
  %865 = vmatprep.subr.bf16.mxu0 %v780
  %866 = vmatpush1.bf16.msra.mxu0 %v779
  %867 = vmatprep.subr.bf16.mxu0 %v784
  %868 = vmatpush1.bf16.msra.mxu0 %v783
  %869 = vmatprep.subr.bf16.mxu0 %v788
  %870 = vmatpush1.bf16.msra.mxu0 %v787
  %871 = vmatprep.subr.bf16.mxu0 %v792
  %872 = vmatpush1.bf16.msra.mxu0 %v791
  %873 = vmatprep.subr.bf16.mxu0 %v796
  %874 = vmatpush1.bf16.msra.mxu0 %v795
  %875 = vmatprep.subr.bf16.mxu0 %v800
  %876 = vmatpush1.bf16.msra.mxu0 %v799
  %877 = vmatprep.subr.bf16.mxu0 %v804
  %878 = vmatpush1.bf16.msra.mxu0 %v803
  %879 = vmatprep.subr.bf16.mxu0 %v808
  %880 = vmatpush1.bf16.msra.mxu0 %v807
  %881 = vmatprep.subr.bf16.mxu0 %v812
  %882 = vmatpush1.bf16.msra.mxu0 %v811
  %883 = vmatprep.subr.bf16.mxu0 %v816
  %884 = vmatpush1.bf16.msra.mxu0 %v815
  %885 = vmatprep.subr.bf16.mxu0 %v820
  %886 = vmatpush1.bf16.msra.mxu0 %v819
  %887 = vmatprep.subr.bf16.mxu0 %v824
  %888 = vmatpush1.bf16.msra.mxu0 %v823
  %889 = vmatprep.subr.bf16.mxu0 %v828
  %890 = vmatpush1.bf16.msra.mxu0 %v827
  %891 = vmatprep.subr.bf16.mxu0 %v832
  %892 = vmatpush1.bf16.msra.mxu0 %v831
  %893 = vmatprep.subr.bf16.mxu0 %v836
  %894 = vmatpush1.bf16.msra.mxu0 %v835
  %895 = vmatprep.subr.bf16.mxu0 %v840
  %896 = vmatpush1.bf16.msra.mxu0 %v839
  %897 = vmatprep.mubr.bf16.mxu0 %v340
  %898 = vmatmul.mubr.bf16.gmra.mrb[0].mxu0 %v339
  %v899 = vpop.f32.mrb[0].mxu0
  %v900 = vadd.f32 %v848, %v899
  %v901 = vpop.f32.mrb[0].mxu0
  %v902 = vadd.f32 %v852, %v901
  %v903 = vpop.f32.mrb[0].mxu0
  %v904 = vpop.f32.mrb[0].mxu0
  %905 = vdwg.mxu0
  %906 = vmatprep.subr.bf16.mxu0 %v782
  %907 = vmatpush1.bf16.msra.mxu0 %v781
  %908 = vmatprep.subr.bf16.mxu0 %v786
  %909 = vmatpush1.bf16.msra.mxu0 %v785
  %910 = vmatprep.subr.bf16.mxu0 %v790
  %911 = vmatpush1.bf16.msra.mxu0 %v789
  %912 = vmatprep.subr.bf16.mxu0 %v794
  %913 = vmatpush1.bf16.msra.mxu0 %v793
  %914 = vmatprep.subr.bf16.mxu0 %v798
  %915 = vmatpush1.bf16.msra.mxu0 %v797
  %916 = vmatprep.subr.bf16.mxu0 %v802
  %917 = vmatpush1.bf16.msra.mxu0 %v801
  %918 = vmatprep.subr.bf16.mxu0 %v806
  %919 = vmatpush1.bf16.msra.mxu0 %v805
  %920 = vmatprep.subr.bf16.mxu0 %v810
  %921 = vmatpush1.bf16.msra.mxu0 %v809
  %922 = vmatprep.subr.bf16.mxu0 %v814
  %923 = vmatpush1.bf16.msra.mxu0 %v813
  %924 = vmatprep.subr.bf16.mxu0 %v818
  %925 = vmatpush1.bf16.msra.mxu0 %v817
  %926 = vmatprep.subr.bf16.mxu0 %v822
  %927 = vmatpush1.bf16.msra.mxu0 %v821
  %928 = vmatprep.subr.bf16.mxu0 %v826
  %929 = vmatpush1.bf16.msra.mxu0 %v825
  %930 = vmatprep.subr.bf16.mxu0 %v830
  %931 = vmatpush1.bf16.msra.mxu0 %v829
  %932 = vmatprep.subr.bf16.mxu0 %v834
  %933 = vmatpush1.bf16.msra.mxu0 %v833
  %934 = vmatprep.subr.bf16.mxu0 %v838
  %935 = vmatpush1.bf16.msra.mxu0 %v837
  %936 = vmatprep.subr.bf16.mxu0 %v842
  %937 = vmatpush1.bf16.msra.mxu0 %v841
  %938 = vmatprep.mubr.bf16.mxu0 %v340
  %939 = vmatmul.mubr.bf16.gmra.mrb[0].mxu0 %v339
  %v940 = vpop.f32.mrb[0].mxu0
  %v941 = vadd.f32 %v856, %v940
  %v942 = vpop.f32.mrb[0].mxu0
  %v943 = vadd.f32 %v860, %v942
  %v944 = vpop.f32.mrb[0].mxu0
  %v945 = vpop.f32.mrb[0].mxu0
  %946 = vdwg.mxu0
  %v947 = vmax.f32 %v900, 0.0
  %v948 = vmax.f32 %v902, 0.0
  %v949 = vmax.f32 %v941, 0.0
  %v950 = vmax.f32 %v943, 0.0
  %v951 = vpack.c.bf16 %v947, %v947
  %v952 = vpack.c.bf16 %v948, %v948
  %v953 = vpack.c.bf16 %v949, %v949
  %v954 = vpack.c.bf16 %v950, %v950
  %v955 = vld [vmem:[%s10] sm:$0xff]
  %v956 = vld [vmem:[%s10 + $0x8] sm:$0xff]
  %v957 = vld [vmem:[%s10 + $0x10] sm:$0xff]
  %v958 = vld [vmem:[%s10 + $0x18] sm:$0xff]
  %v959 = vld [vmem:[%s10 + $0x20] sm:$0xff]
  %v960 = vld [vmem:[%s10 + $0x28] sm:$0xff]
  %v961 = vld [vmem:[%s10 + $0x30] sm:$0xff]
  %v962 = vld [vmem:[%s10 + $0x38] sm:$0xff]
  %v963 = vld [vmem:[%s10 + $0x40] sm:$0xff]
  %v964 = vld [vmem:[%s10 + $0x48] sm:$0xff]
  %v965 = vld [vmem:[%s10 + $0x50] sm:$0xff]
  %v966 = vld [vmem:[%s10 + $0x58] sm:$0xff]
  %v967 = vld [vmem:[%s10 + $0x60] sm:$0xff]
  %v968 = vld [vmem:[%s10 + $0x68] sm:$0xff]
  %v969 = vld [vmem:[%s10 + $0x70] sm:$0xff]
  %v970 = vld [vmem:[%s10 + $0x78] sm:$0xff]
  %v971 = vld [vmem:[%s10 + $0x80] sm:$0xff]
  %v972 = vld [vmem:[%s10 + $0x88] sm:$0xff]
  %v973 = vld [vmem:[%s10 + $0x90] sm:$0xff]
  %v974 = vld [vmem:[%s10 + $0x98] sm:$0xff]
  %v975 = vld [vmem:[%s10 + $0xa0] sm:$0xff]
  %v976 = vld [vmem:[%s10 + $0xa8] sm:$0xff]
  %v977 = vld [vmem:[%s10 + $0xb0] sm:$0xff]
  %v978 = vld [vmem:[%s10 + $0xb8] sm:$0xff]
  %v979 = vld [vmem:[%s10 + $0xc0] sm:$0xff]
  %v980 = vld [vmem:[%s10 + $0xc8] sm:$0xff]
  %v981 = vld [vmem:[%s10 + $0xd0] sm:$0xff]
  %v982 = vld [vmem:[%s10 + $0xd8] sm:$0xff]
  %v983 = vld [vmem:[%s10 + $0xe0] sm:$0xff]
  %v984 = vld [vmem:[%s10 + $0xe8] sm:$0xff]
  %v985 = vld [vmem:[%s10 + $0xf0] sm:$0xff]
  %v986 = vld [vmem:[%s10 + $0xf8] sm:$0xff]
  %v987 = vld [vmem:[%s10 + $0x100] sm:$0xff]
  %v988 = vld [vmem:[%s10 + $0x108] sm:$0xff]
  %v989 = vld [vmem:[%s10 + $0x110] sm:$0xff]
  %v990 = vld [vmem:[%s10 + $0x118] sm:$0xff]
  %v991 = vld [vmem:[%s10 + $0x120] sm:$0xff]
  %v992 = vld [vmem:[%s10 + $0x128] sm:$0xff]
  %v993 = vld [vmem:[%s10 + $0x130] sm:$0xff]
  %v994 = vld [vmem:[%s10 + $0x138] sm:$0xff]
  %v995 = vld [vmem:[%s10 + $0x140] sm:$0xff]
  %v996 = vld [vmem:[%s10 + $0x148] sm:$0xff]
  %v997 = vld [vmem:[%s10 + $0x150] sm:$0xff]
  %v998 = vld [vmem:[%s10 + $0x158] sm:$0xff]
  %v999 = vld [vmem:[%s10 + $0x160] sm:$0xff]
  %v1000 = vld [vmem:[%s10 + $0x168] sm:$0xff]
  %v1001 = vld [vmem:[%s10 + $0x170] sm:$0xff]
  %v1002 = vld [vmem:[%s10 + $0x178] sm:$0xff]
  %v1003 = vld [vmem:[%s10 + $0x180] sm:$0xff]
  %v1004 = vld [vmem:[%s10 + $0x188] sm:$0xff]
  %v1005 = vld [vmem:[%s10 + $0x190] sm:$0xff]
  %v1006 = vld [vmem:[%s10 + $0x198] sm:$0xff]
  %v1007 = vld [vmem:[%s10 + $0x1a0] sm:$0xff]
  %v1008 = vld [vmem:[%s10 + $0x1a8] sm:$0xff]
  %v1009 = vld [vmem:[%s10 + $0x1b0] sm:$0xff]
  %v1010 = vld [vmem:[%s10 + $0x1b8] sm:$0xff]
  %v1011 = vld [vmem:[%s10 + $0x1c0] sm:$0xff]
  %v1012 = vld [vmem:[%s10 + $0x1c8] sm:$0xff]
  %v1013 = vld [vmem:[%s10 + $0x1d0] sm:$0xff]
  %v1014 = vld [vmem:[%s10 + $0x1d8] sm:$0xff]
  %v1015 = vld [vmem:[%s10 + $0x1e0] sm:$0xff]
  %v1016 = vld [vmem:[%s10 + $0x1e8] sm:$0xff]
  %v1017 = vld [vmem:[%s10 + $0x1f0] sm:$0xff]
  %v1018 = vld [vmem:[%s10 + $0x1f8] sm:$0xff]
  %v1019 = vld [vmem:[%s10 + $0x200] sm:$0xff]
  %v1020 = vld [vmem:[%s10 + $0x208] sm:$0xff]
  %v1021 = vld [vmem:[%s10 + $0x210] sm:$0xff]
  %v1022 = vld [vmem:[%s10 + $0x218] sm:$0xff]
  %v1023 = vld [vmem:[%s10 + $0x220] sm:$0xff]
  %v1024 = vld [vmem:[%s10 + $0x228] sm:$0xff]
  %v1025 = vld [vmem:[%s10 + $0x230] sm:$0xff]
  %v1026 = vld [vmem:[%s10 + $0x238] sm:$0xff]
  %v1027 = vld [vmem:[%s10 + $0x240] sm:$0xff]
  %v1028 = vld [vmem:[%s10 + $0x248] sm:$0xff]
  %v1029 = vld [vmem:[%s10 + $0x250] sm:$0xff]
  %v1030 = vld [vmem:[%s10 + $0x258] sm:$0xff]
  %v1031 = vld [vmem:[%s10 + $0x260] sm:$0xff]
  %v1032 = vld [vmem:[%s10 + $0x268] sm:$0xff]
  %v1033 = vld [vmem:[%s10 + $0x270] sm:$0xff]
  %v1034 = vld [vmem:[%s10 + $0x278] sm:$0xff]
  %v1035 = vld [vmem:[%s10 + $0x280] sm:$0xff]
  %v1036 = vld [vmem:[%s10 + $0x288] sm:$0xff]
  %v1037 = vld [vmem:[%s10 + $0x290] sm:$0xff]
  %v1038 = vld [vmem:[%s10 + $0x298] sm:$0xff]
  %v1039 = vld [vmem:[%s10 + $0x2a0] sm:$0xff]
  %v1040 = vld [vmem:[%s10 + $0x2a8] sm:$0xff]
  %v1041 = vld [vmem:[%s10 + $0x2b0] sm:$0xff]
  %v1042 = vld [vmem:[%s10 + $0x2b8] sm:$0xff]
  %v1043 = vld [vmem:[%s10 + $0x2c0] sm:$0xff]
  %v1044 = vld [vmem:[%s10 + $0x2c8] sm:$0xff]
  %v1045 = vld [vmem:[%s10 + $0x2d0] sm:$0xff]
  %v1046 = vld [vmem:[%s10 + $0x2d8] sm:$0xff]
  %v1047 = vld [vmem:[%s10 + $0x2e0] sm:$0xff]
  %v1048 = vld [vmem:[%s10 + $0x2e8] sm:$0xff]
  %v1049 = vld [vmem:[%s10 + $0x2f0] sm:$0xff]
  %v1050 = vld [vmem:[%s10 + $0x2f8] sm:$0xff]
  %v1051 = vld [vmem:[%s10 + $0x300] sm:$0xff]
  %v1052 = vld [vmem:[%s10 + $0x308] sm:$0xff]
  %v1053 = vld [vmem:[%s10 + $0x310] sm:$0xff]
  %v1054 = vld [vmem:[%s10 + $0x318] sm:$0xff]
  %v1055 = vld [vmem:[%s10 + $0x320] sm:$0xff]
  %v1056 = vld [vmem:[%s10 + $0x328] sm:$0xff]
  %v1057 = vld [vmem:[%s10 + $0x330] sm:$0xff]
  %v1058 = vld [vmem:[%s10 + $0x338] sm:$0xff]
  %v1059 = vld [vmem:[%s10 + $0x340] sm:$0xff]
  %v1060 = vld [vmem:[%s10 + $0x348] sm:$0xff]
  %v1061 = vld [vmem:[%s10 + $0x350] sm:$0xff]
  %v1062 = vld [vmem:[%s10 + $0x358] sm:$0xff]
  %v1063 = vld [vmem:[%s10 + $0x360] sm:$0xff]
  %v1064 = vld [vmem:[%s10 + $0x368] sm:$0xff]
  %v1065 = vld [vmem:[%s10 + $0x370] sm:$0xff]
  %v1066 = vld [vmem:[%s10 + $0x378] sm:$0xff]
  %v1067 = vld [vmem:[%s10 + $0x380] sm:$0xff]
  %v1068 = vld [vmem:[%s10 + $0x388] sm:$0xff]
  %v1069 = vld [vmem:[%s10 + $0x390] sm:$0xff]
  %v1070 = vld [vmem:[%s10 + $0x398] sm:$0xff]
  %v1071 = vld [vmem:[%s10 + $0x3a0] sm:$0xff]
  %v1072 = vld [vmem:[%s10 + $0x3a8] sm:$0xff]
  %v1073 = vld [vmem:[%s10 + $0x3b0] sm:$0xff]
  %v1074 = vld [vmem:[%s10 + $0x3b8] sm:$0xff]
  %v1075 = vld [vmem:[%s10 + $0x3c0] sm:$0xff]
  %v1076 = vld [vmem:[%s10 + $0x3c8] sm:$0xff]
  %v1077 = vld [vmem:[%s10 + $0x3d0] sm:$0xff]
  %v1078 = vld [vmem:[%s10 + $0x3d8] sm:$0xff]
  %v1079 = vld [vmem:[%s10 + $0x3e0] sm:$0xff]
  %v1080 = vld [vmem:[%s10 + $0x3e8] sm:$0xff]
  %v1081 = vld [vmem:[%s10 + $0x3f0] sm:$0xff]
  %v1082 = vld [vmem:[%s10 + $0x3f8] sm:$0xff]
  %v1083 = vld [vmem:[%s11] sm:$0xff]
  %v1084 = vunpack.c.0.s8 %v955
  %v1085 = vunpack.c.0.s8 %v956
  %v1086 = vunpack.c.0.s8 %v957
  %v1087 = vunpack.c.0.s8 %v958
  %v1088 = vunpack.c.0.s8 %v959
  %v1089 = vunpack.c.0.s8 %v960
  %v1090 = vunpack.c.0.s8 %v961
  %v1091 = vunpack.c.0.s8 %v962
  %v1092 = vunpack.c.1.s8 %v955
  %v1093 = vunpack.c.1.s8 %v956
  %v1094 = vunpack.c.1.s8 %v957
  %v1095 = vunpack.c.1.s8 %v958
  %v1096 = vunpack.c.1.s8 %v959
  %v1097 = vunpack.c.1.s8 %v960
  %v1098 = vunpack.c.1.s8 %v961
  %v1099 = vunpack.c.1.s8 %v962
  %v1100 = vunpack.c.2.s8 %v955
  %v1101 = vunpack.c.2.s8 %v956
  %v1102 = vunpack.c.2.s8 %v957
  %v1103 = vunpack.c.2.s8 %v958
  %v1104 = vunpack.c.2.s8 %v959
  %v1105 = vunpack.c.2.s8 %v960
  %v1106 = vunpack.c.2.s8 %v961
  %v1107 = vunpack.c.2.s8 %v962
  %v1108 = vunpack.c.3.s8 %v955
  %v1109 = vunpack.c.3.s8 %v956
  %v1110 = vunpack.c.3.s8 %v957
  %v1111 = vunpack.c.3.s8 %v958
  %v1112 = vunpack.c.3.s8 %v959
  %v1113 = vunpack.c.3.s8 %v960
  %v1114 = vunpack.c.3.s8 %v961
  %v1115 = vunpack.c.3.s8 %v962
  %v1116 = vunpack.c.0.s8 %v963
  %v1117 = vunpack.c.0.s8 %v964
  %v1118 = vunpack.c.0.s8 %v965
  %v1119 = vunpack.c.0.s8 %v966
  %v1120 = vunpack.c.0.s8 %v967
  %v1121 = vunpack.c.0.s8 %v968
  %v1122 = vunpack.c.0.s8 %v969
  %v1123 = vunpack.c.0.s8 %v970
  %v1124 = vunpack.c.1.s8 %v963
  %v1125 = vunpack.c.1.s8 %v964
  %v1126 = vunpack.c.1.s8 %v965
  %v1127 = vunpack.c.1.s8 %v966
  %v1128 = vunpack.c.1.s8 %v967
  %v1129 = vunpack.c.1.s8 %v968
  %v1130 = vunpack.c.1.s8 %v969
  %v1131 = vunpack.c.1.s8 %v970
  %v1132 = vunpack.c.2.s8 %v963
  %v1133 = vunpack.c.2.s8 %v964
  %v1134 = vunpack.c.2.s8 %v965
  %v1135 = vunpack.c.2.s8 %v966
  %v1136 = vunpack.c.2.s8 %v967
  %v1137 = vunpack.c.2.s8 %v968
  %v1138 = vunpack.c.2.s8 %v969
  %v1139 = vunpack.c.2.s8 %v970
  %v1140 = vunpack.c.3.s8 %v963
  %v1141 = vunpack.c.3.s8 %v964
  %v1142 = vunpack.c.3.s8 %v965
  %v1143 = vunpack.c.3.s8 %v966
  %v1144 = vunpack.c.3.s8 %v967
  %v1145 = vunpack.c.3.s8 %v968
  %v1146 = vunpack.c.3.s8 %v969
  %v1147 = vunpack.c.3.s8 %v970
  %v1148 = vunpack.c.0.s8 %v971
  %v1149 = vunpack.c.0.s8 %v972
  %v1150 = vunpack.c.0.s8 %v973
  %v1151 = vunpack.c.0.s8 %v974
  %v1152 = vunpack.c.0.s8 %v975
  %v1153 = vunpack.c.0.s8 %v976
  %v1154 = vunpack.c.0.s8 %v977
  %v1155 = vunpack.c.0.s8 %v978
  %v1156 = vunpack.c.1.s8 %v971
  %v1157 = vunpack.c.1.s8 %v972
  %v1158 = vunpack.c.1.s8 %v973
  %v1159 = vunpack.c.1.s8 %v974
  %v1160 = vunpack.c.1.s8 %v975
  %v1161 = vunpack.c.1.s8 %v976
  %v1162 = vunpack.c.1.s8 %v977
  %v1163 = vunpack.c.1.s8 %v978
  %v1164 = vunpack.c.2.s8 %v971
  %v1165 = vunpack.c.2.s8 %v972
  %v1166 = vunpack.c.2.s8 %v973
  %v1167 = vunpack.c.2.s8 %v974
  %v1168 = vunpack.c.2.s8 %v975
  %v1169 = vunpack.c.2.s8 %v976
  %v1170 = vunpack.c.2.s8 %v977
  %v1171 = vunpack.c.2.s8 %v978
  %v1172 = vunpack.c.3.s8 %v971
  %v1173 = vunpack.c.3.s8 %v972
  %v1174 = vunpack.c.3.s8 %v973
  %v1175 = vunpack.c.3.s8 %v974
  %v1176 = vunpack.c.3.s8 %v975
  %v1177 = vunpack.c.3.s8 %v976
  %v1178 = vunpack.c.3.s8 %v977
  %v1179 = vunpack.c.3.s8 %v978
  %v1180 = vunpack.c.0.s8 %v979
  %v1181 = vunpack.c.0.s8 %v980
  %v1182 = vunpack.c.0.s8 %v981
  %v1183 = vunpack.c.0.s8 %v982
  %v1184 = vunpack.c.0.s8 %v983
  %v1185 = vunpack.c.0.s8 %v984
  %v1186 = vunpack.c.0.s8 %v985
  %v1187 = vunpack.c.0.s8 %v986
  %v1188 = vunpack.c.1.s8 %v979
  %v1189 = vunpack.c.1.s8 %v980
  %v1190 = vunpack.c.1.s8 %v981
  %v1191 = vunpack.c.1.s8 %v982
  %v1192 = vunpack.c.1.s8 %v983
  %v1193 = vunpack.c.1.s8 %v984
  %v1194 = vunpack.c.1.s8 %v985
  %v1195 = vunpack.c.1.s8 %v986
  %v1196 = vunpack.c.2.s8 %v979
  %v1197 = vunpack.c.2.s8 %v980
  %v1198 = vunpack.c.2.s8 %v981
  %v1199 = vunpack.c.2.s8 %v982
  %v1200 = vunpack.c.2.s8 %v983
  %v1201 = vunpack.c.2.s8 %v984
  %v1202 = vunpack.c.2.s8 %v985
  %v1203 = vunpack.c.2.s8 %v986
  %v1204 = vunpack.c.3.s8 %v979
  %v1205 = vunpack.c.3.s8 %v980
  %v1206 = vunpack.c.3.s8 %v981
  %v1207 = vunpack.c.3.s8 %v982
  %v1208 = vunpack.c.3.s8 %v983
  %v1209 = vunpack.c.3.s8 %v984
  %v1210 = vunpack.c.3.s8 %v985
  %v1211 = vunpack.c.3.s8 %v986
  %v1212 = vunpack.c.0.s8 %v987
  %v1213 = vunpack.c.0.s8 %v988
  %v1214 = vunpack.c.0.s8 %v989
  %v1215 = vunpack.c.0.s8 %v990
  %v1216 = vunpack.c.0.s8 %v991
  %v1217 = vunpack.c.0.s8 %v992
  %v1218 = vunpack.c.0.s8 %v993
  %v1219 = vunpack.c.0.s8 %v994
  %v1220 = vunpack.c.1.s8 %v987
  %v1221 = vunpack.c.1.s8 %v988
  %v1222 = vunpack.c.1.s8 %v989
  %v1223 = vunpack.c.1.s8 %v990
  %v1224 = vunpack.c.1.s8 %v991
  %v1225 = vunpack.c.1.s8 %v992
  %v1226 = vunpack.c.1.s8 %v993
  %v1227 = vunpack.c.1.s8 %v994
  %v1228 = vunpack.c.2.s8 %v987
  %v1229 = vunpack.c.2.s8 %v988
  %v1230 = vunpack.c.2.s8 %v989
  %v1231 = vunpack.c.2.s8 %v990
  %v1232 = vunpack.c.2.s8 %v991
  %v1233 = vunpack.c.2.s8 %v992
  %v1234 = vunpack.c.2.s8 %v993
  %v1235 = vunpack.c.2.s8 %v994
  %v1236 = vunpack.c.3.s8 %v987
  %v1237 = vunpack.c.3.s8 %v988
  %v1238 = vunpack.c.3.s8 %v989
  %v1239 = vunpack.c.3.s8 %v990
  %v1240 = vunpack.c.3.s8 %v991
  %v1241 = vunpack.c.3.s8 %v992
  %v1242 = vunpack.c.3.s8 %v993
  %v1243 = vunpack.c.3.s8 %v994
  %v1244 = vunpack.c.0.s8 %v995
  %v1245 = vunpack.c.0.s8 %v996
  %v1246 = vunpack.c.0.s8 %v997
  %v1247 = vunpack.c.0.s8 %v998
  %v1248 = vunpack.c.0.s8 %v999
  %v1249 = vunpack.c.0.s8 %v1000
  %v1250 = vunpack.c.0.s8 %v1001
  %v1251 = vunpack.c.0.s8 %v1002
  %v1252 = vunpack.c.1.s8 %v995
  %v1253 = vunpack.c.1.s8 %v996
  %v1254 = vunpack.c.1.s8 %v997
  %v1255 = vunpack.c.1.s8 %v998
  %v1256 = vunpack.c.1.s8 %v999
  %v1257 = vunpack.c.1.s8 %v1000
  %v1258 = vunpack.c.1.s8 %v1001
  %v1259 = vunpack.c.1.s8 %v1002
  %v1260 = vunpack.c.2.s8 %v995
  %v1261 = vunpack.c.2.s8 %v996
  %v1262 = vunpack.c.2.s8 %v997
  %v1263 = vunpack.c.2.s8 %v998
  %v1264 = vunpack.c.2.s8 %v999
  %v1265 = vunpack.c.2.s8 %v1000
  %v1266 = vunpack.c.2.s8 %v1001
  %v1267 = vunpack.c.2.s8 %v1002
  %v1268 = vunpack.c.3.s8 %v995
  %v1269 = vunpack.c.3.s8 %v996
  %v1270 = vunpack.c.3.s8 %v997
  %v1271 = vunpack.c.3.s8 %v998
  %v1272 = vunpack.c.3.s8 %v999
  %v1273 = vunpack.c.3.s8 %v1000
  %v1274 = vunpack.c.3.s8 %v1001
  %v1275 = vunpack.c.3.s8 %v1002
  %v1276 = vunpack.c.0.s8 %v1003
  %v1277 = vunpack.c.0.s8 %v1004
  %v1278 = vunpack.c.0.s8 %v1005
  %v1279 = vunpack.c.0.s8 %v1006
  %v1280 = vunpack.c.0.s8 %v1007
  %v1281 = vunpack.c.0.s8 %v1008
  %v1282 = vunpack.c.0.s8 %v1009
  %v1283 = vunpack.c.0.s8 %v1010
  %v1284 = vunpack.c.1.s8 %v1003
  %v1285 = vunpack.c.1.s8 %v1004
  %v1286 = vunpack.c.1.s8 %v1005
  %v1287 = vunpack.c.1.s8 %v1006
  %v1288 = vunpack.c.1.s8 %v1007
  %v1289 = vunpack.c.1.s8 %v1008
  %v1290 = vunpack.c.1.s8 %v1009
  %v1291 = vunpack.c.1.s8 %v1010
  %v1292 = vunpack.c.2.s8 %v1003
  %v1293 = vunpack.c.2.s8 %v1004
  %v1294 = vunpack.c.2.s8 %v1005
  %v1295 = vunpack.c.2.s8 %v1006
  %v1296 = vunpack.c.2.s8 %v1007
  %v1297 = vunpack.c.2.s8 %v1008
  %v1298 = vunpack.c.2.s8 %v1009
  %v1299 = vunpack.c.2.s8 %v1010
  %v1300 = vunpack.c.3.s8 %v1003
  %v1301 = vunpack.c.3.s8 %v1004
  %v1302 = vunpack.c.3.s8 %v1005
  %v1303 = vunpack.c.3.s8 %v1006
  %v1304 = vunpack.c.3.s8 %v1007
  %v1305 = vunpack.c.3.s8 %v1008
  %v1306 = vunpack.c.3.s8 %v1009
  %v1307 = vunpack.c.3.s8 %v1010
  %v1308 = vunpack.c.0.s8 %v1011
  %v1309 = vunpack.c.0.s8 %v1012
  %v1310 = vunpack.c.0.s8 %v1013
  %v1311 = vunpack.c.0.s8 %v1014
  %v1312 = vunpack.c.0.s8 %v1015
  %v1313 = vunpack.c.0.s8 %v1016
  %v1314 = vunpack.c.0.s8 %v1017
  %v1315 = vunpack.c.0.s8 %v1018
  %v1316 = vunpack.c.1.s8 %v1011
  %v1317 = vunpack.c.1.s8 %v1012
  %v1318 = vunpack.c.1.s8 %v1013
  %v1319 = vunpack.c.1.s8 %v1014
  %v1320 = vunpack.c.1.s8 %v1015
  %v1321 = vunpack.c.1.s8 %v1016
  %v1322 = vunpack.c.1.s8 %v1017
  %v1323 = vunpack.c.1.s8 %v1018
  %v1324 = vunpack.c.2.s8 %v1011
  %v1325 = vunpack.c.2.s8 %v1012
  %v1326 = vunpack.c.2.s8 %v1013
  %v1327 = vunpack.c.2.s8 %v1014
  %v1328 = vunpack.c.2.s8 %v1015
  %v1329 = vunpack.c.2.s8 %v1016
  %v1330 = vunpack.c.2.s8 %v1017
  %v1331 = vunpack.c.2.s8 %v1018
  %v1332 = vunpack.c.3.s8 %v1011
  %v1333 = vunpack.c.3.s8 %v1012
  %v1334 = vunpack.c.3.s8 %v1013
  %v1335 = vunpack.c.3.s8 %v1014
  %v1336 = vunpack.c.3.s8 %v1015
  %v1337 = vunpack.c.3.s8 %v1016
  %v1338 = vunpack.c.3.s8 %v1017
  %v1339 = vunpack.c.3.s8 %v1018
  %v1340 = vunpack.c.0.s8 %v1019
  %v1341 = vunpack.c.0.s8 %v1020
  %v1342 = vunpack.c.0.s8 %v1021
  %v1343 = vunpack.c.0.s8 %v1022
  %v1344 = vunpack.c.0.s8 %v1023
  %v1345 = vunpack.c.0.s8 %v1024
  %v1346 = vunpack.c.0.s8 %v1025
  %v1347 = vunpack.c.0.s8 %v1026
  %v1348 = vunpack.c.1.s8 %v1019
  %v1349 = vunpack.c.1.s8 %v1020
  %v1350 = vunpack.c.1.s8 %v1021
  %v1351 = vunpack.c.1.s8 %v1022
  %v1352 = vunpack.c.1.s8 %v1023
  %v1353 = vunpack.c.1.s8 %v1024
  %v1354 = vunpack.c.1.s8 %v1025
  %v1355 = vunpack.c.1.s8 %v1026
  %v1356 = vunpack.c.2.s8 %v1019
  %v1357 = vunpack.c.2.s8 %v1020
  %v1358 = vunpack.c.2.s8 %v1021
  %v1359 = vunpack.c.2.s8 %v1022
  %v1360 = vunpack.c.2.s8 %v1023
  %v1361 = vunpack.c.2.s8 %v1024
  %v1362 = vunpack.c.2.s8 %v1025
  %v1363 = vunpack.c.2.s8 %v1026
  %v1364 = vunpack.c.3.s8 %v1019
  %v1365 = vunpack.c.3.s8 %v1020
  %v1366 = vunpack.c.3.s8 %v1021
  %v1367 = vunpack.c.3.s8 %v1022
  %v1368 = vunpack.c.3.s8 %v1023
  %v1369 = vunpack.c.3.s8 %v1024
  %v1370 = vunpack.c.3.s8 %v1025
  %v1371 = vunpack.c.3.s8 %v1026
  %v1372 = vunpack.c.0.s8 %v1027
  %v1373 = vunpack.c.0.s8 %v1028
  %v1374 = vunpack.c.0.s8 %v1029
  %v1375 = vunpack.c.0.s8 %v1030
  %v1376 = vunpack.c.0.s8 %v1031
  %v1377 = vunpack.c.0.s8 %v1032
  %v1378 = vunpack.c.0.s8 %v1033
  %v1379 = vunpack.c.0.s8 %v1034
  %v1380 = vunpack.c.1.s8 %v1027
  %v1381 = vunpack.c.1.s8 %v1028
  %v1382 = vunpack.c.1.s8 %v1029
  %v1383 = vunpack.c.1.s8 %v1030
  %v1384 = vunpack.c.1.s8 %v1031
  %v1385 = vunpack.c.1.s8 %v1032
  %v1386 = vunpack.c.1.s8 %v1033
  %v1387 = vunpack.c.1.s8 %v1034
  %v1388 = vunpack.c.2.s8 %v1027
  %v1389 = vunpack.c.2.s8 %v1028
  %v1390 = vunpack.c.2.s8 %v1029
  %v1391 = vunpack.c.2.s8 %v1030
  %v1392 = vunpack.c.2.s8 %v1031
  %v1393 = vunpack.c.2.s8 %v1032
  %v1394 = vunpack.c.2.s8 %v1033
  %v1395 = vunpack.c.2.s8 %v1034
  %v1396 = vunpack.c.3.s8 %v1027
  %v1397 = vunpack.c.3.s8 %v1028
  %v1398 = vunpack.c.3.s8 %v1029
  %v1399 = vunpack.c.3.s8 %v1030
  %v1400 = vunpack.c.3.s8 %v1031
  %v1401 = vunpack.c.3.s8 %v1032
  %v1402 = vunpack.c.3.s8 %v1033
  %v1403 = vunpack.c.3.s8 %v1034
  %v1404 = vunpack.c.0.s8 %v1035
  %v1405 = vunpack.c.0.s8 %v1036
  %v1406 = vunpack.c.0.s8 %v1037
  %v1407 = vunpack.c.0.s8 %v1038
  %v1408 = vunpack.c.0.s8 %v1039
  %v1409 = vunpack.c.0.s8 %v1040
  %v1410 = vunpack.c.0.s8 %v1041
  %v1411 = vunpack.c.0.s8 %v1042
  %v1412 = vunpack.c.1.s8 %v1035
  %v1413 = vunpack.c.1.s8 %v1036
  %v1414 = vunpack.c.1.s8 %v1037
  %v1415 = vunpack.c.1.s8 %v1038
  %v1416 = vunpack.c.1.s8 %v1039
  %v1417 = vunpack.c.1.s8 %v1040
  %v1418 = vunpack.c.1.s8 %v1041
  %v1419 = vunpack.c.1.s8 %v1042
  %v1420 = vunpack.c.2.s8 %v1035
  %v1421 = vunpack.c.2.s8 %v1036
  %v1422 = vunpack.c.2.s8 %v1037
  %v1423 = vunpack.c.2.s8 %v1038
  %v1424 = vunpack.c.2.s8 %v1039
  %v1425 = vunpack.c.2.s8 %v1040
  %v1426 = vunpack.c.2.s8 %v1041
  %v1427 = vunpack.c.2.s8 %v1042
  %v1428 = vunpack.c.3.s8 %v1035
  %v1429 = vunpack.c.3.s8 %v1036
  %v1430 = vunpack.c.3.s8 %v1037
  %v1431 = vunpack.c.3.s8 %v1038
  %v1432 = vunpack.c.3.s8 %v1039
  %v1433 = vunpack.c.3.s8 %v1040
  %v1434 = vunpack.c.3.s8 %v1041
  %v1435 = vunpack.c.3.s8 %v1042
  %v1436 = vunpack.c.0.s8 %v1043
  %v1437 = vunpack.c.0.s8 %v1044
  %v1438 = vunpack.c.0.s8 %v1045
  %v1439 = vunpack.c.0.s8 %v1046
  %v1440 = vunpack.c.0.s8 %v1047
  %v1441 = vunpack.c.0.s8 %v1048
  %v1442 = vunpack.c.0.s8 %v1049
  %v1443 = vunpack.c.0.s8 %v1050
  %v1444 = vunpack.c.1.s8 %v1043
  %v1445 = vunpack.c.1.s8 %v1044
  %v1446 = vunpack.c.1.s8 %v1045
  %v1447 = vunpack.c.1.s8 %v1046
  %v1448 = vunpack.c.1.s8 %v1047
  %v1449 = vunpack.c.1.s8 %v1048
  %v1450 = vunpack.c.1.s8 %v1049
  %v1451 = vunpack.c.1.s8 %v1050
  %v1452 = vunpack.c.2.s8 %v1043
  %v1453 = vunpack.c.2.s8 %v1044
  %v1454 = vunpack.c.2.s8 %v1045
  %v1455 = vunpack.c.2.s8 %v1046
  %v1456 = vunpack.c.2.s8 %v1047
  %v1457 = vunpack.c.2.s8 %v1048
  %v1458 = vunpack.c.2.s8 %v1049
  %v1459 = vunpack.c.2.s8 %v1050
  %v1460 = vunpack.c.3.s8 %v1043
  %v1461 = vunpack.c.3.s8 %v1044
  %v1462 = vunpack.c.3.s8 %v1045
  %v1463 = vunpack.c.3.s8 %v1046
  %v1464 = vunpack.c.3.s8 %v1047
  %v1465 = vunpack.c.3.s8 %v1048
  %v1466 = vunpack.c.3.s8 %v1049
  %v1467 = vunpack.c.3.s8 %v1050
  %v1468 = vunpack.c.0.s8 %v1051
  %v1469 = vunpack.c.0.s8 %v1052
  %v1470 = vunpack.c.0.s8 %v1053
  %v1471 = vunpack.c.0.s8 %v1054
  %v1472 = vunpack.c.0.s8 %v1055
  %v1473 = vunpack.c.0.s8 %v1056
  %v1474 = vunpack.c.0.s8 %v1057
  %v1475 = vunpack.c.0.s8 %v1058
  %v1476 = vunpack.c.1.s8 %v1051
  %v1477 = vunpack.c.1.s8 %v1052
  %v1478 = vunpack.c.1.s8 %v1053
  %v1479 = vunpack.c.1.s8 %v1054
  %v1480 = vunpack.c.1.s8 %v1055
  %v1481 = vunpack.c.1.s8 %v1056
  %v1482 = vunpack.c.1.s8 %v1057
  %v1483 = vunpack.c.1.s8 %v1058
  %v1484 = vunpack.c.2.s8 %v1051
  %v1485 = vunpack.c.2.s8 %v1052
  %v1486 = vunpack.c.2.s8 %v1053
  %v1487 = vunpack.c.2.s8 %v1054
  %v1488 = vunpack.c.2.s8 %v1055
  %v1489 = vunpack.c.2.s8 %v1056
  %v1490 = vunpack.c.2.s8 %v1057
  %v1491 = vunpack.c.2.s8 %v1058
  %v1492 = vunpack.c.3.s8 %v1051
  %v1493 = vunpack.c.3.s8 %v1052
  %v1494 = vunpack.c.3.s8 %v1053
  %v1495 = vunpack.c.3.s8 %v1054
  %v1496 = vunpack.c.3.s8 %v1055
  %v1497 = vunpack.c.3.s8 %v1056
  %v1498 = vunpack.c.3.s8 %v1057
  %v1499 = vunpack.c.3.s8 %v1058
  %v1500 = vunpack.c.0.s8 %v1059
  %v1501 = vunpack.c.0.s8 %v1060
  %v1502 = vunpack.c.0.s8 %v1061
  %v1503 = vunpack.c.0.s8 %v1062
  %v1504 = vunpack.c.0.s8 %v1063
  %v1505 = vunpack.c.0.s8 %v1064
  %v1506 = vunpack.c.0.s8 %v1065
  %v1507 = vunpack.c.0.s8 %v1066
  %v1508 = vunpack.c.1.s8 %v1059
  %v1509 = vunpack.c.1.s8 %v1060
  %v1510 = vunpack.c.1.s8 %v1061
  %v1511 = vunpack.c.1.s8 %v1062
  %v1512 = vunpack.c.1.s8 %v1063
  %v1513 = vunpack.c.1.s8 %v1064
  %v1514 = vunpack.c.1.s8 %v1065
  %v1515 = vunpack.c.1.s8 %v1066
  %v1516 = vunpack.c.2.s8 %v1059
  %v1517 = vunpack.c.2.s8 %v1060
  %v1518 = vunpack.c.2.s8 %v1061
  %v1519 = vunpack.c.2.s8 %v1062
  %v1520 = vunpack.c.2.s8 %v1063
  %v1521 = vunpack.c.2.s8 %v1064
  %v1522 = vunpack.c.2.s8 %v1065
  %v1523 = vunpack.c.2.s8 %v1066
  %v1524 = vunpack.c.3.s8 %v1059
  %v1525 = vunpack.c.3.s8 %v1060
  %v1526 = vunpack.c.3.s8 %v1061
  %v1527 = vunpack.c.3.s8 %v1062
  %v1528 = vunpack.c.3.s8 %v1063
  %v1529 = vunpack.c.3.s8 %v1064
  %v1530 = vunpack.c.3.s8 %v1065
  %v1531 = vunpack.c.3.s8 %v1066
  %v1532 = vunpack.c.0.s8 %v1067
  %v1533 = vunpack.c.0.s8 %v1068
  %v1534 = vunpack.c.0.s8 %v1069
  %v1535 = vunpack.c.0.s8 %v1070
  %v1536 = vunpack.c.0.s8 %v1071
  %v1537 = vunpack.c.0.s8 %v1072
  %v1538 = vunpack.c.0.s8 %v1073
  %v1539 = vunpack.c.0.s8 %v1074
  %v1540 = vunpack.c.1.s8 %v1067
  %v1541 = vunpack.c.1.s8 %v1068
  %v1542 = vunpack.c.1.s8 %v1069
  %v1543 = vunpack.c.1.s8 %v1070
  %v1544 = vunpack.c.1.s8 %v1071
  %v1545 = vunpack.c.1.s8 %v1072
  %v1546 = vunpack.c.1.s8 %v1073
  %v1547 = vunpack.c.1.s8 %v1074
  %v1548 = vunpack.c.2.s8 %v1067
  %v1549 = vunpack.c.2.s8 %v1068
  %v1550 = vunpack.c.2.s8 %v1069
  %v1551 = vunpack.c.2.s8 %v1070
  %v1552 = vunpack.c.2.s8 %v1071
  %v1553 = vunpack.c.2.s8 %v1072
  %v1554 = vunpack.c.2.s8 %v1073
  %v1555 = vunpack.c.2.s8 %v1074
  %v1556 = vunpack.c.3.s8 %v1067
  %v1557 = vunpack.c.3.s8 %v1068
  %v1558 = vunpack.c.3.s8 %v1069
  %v1559 = vunpack.c.3.s8 %v1070
  %v1560 = vunpack.c.3.s8 %v1071
  %v1561 = vunpack.c.3.s8 %v1072
  %v1562 = vunpack.c.3.s8 %v1073
  %v1563 = vunpack.c.3.s8 %v1074
  %v1564 = vunpack.c.0.s8 %v1075
  %v1565 = vunpack.c.0.s8 %v1076
  %v1566 = vunpack.c.0.s8 %v1077
  %v1567 = vunpack.c.0.s8 %v1078
  %v1568 = vunpack.c.0.s8 %v1079
  %v1569 = vunpack.c.0.s8 %v1080
  %v1570 = vunpack.c.0.s8 %v1081
  %v1571 = vunpack.c.0.s8 %v1082
  %v1572 = vunpack.c.1.s8 %v1075
  %v1573 = vunpack.c.1.s8 %v1076
  %v1574 = vunpack.c.1.s8 %v1077
  %v1575 = vunpack.c.1.s8 %v1078
  %v1576 = vunpack.c.1.s8 %v1079
  %v1577 = vunpack.c.1.s8 %v1080
  %v1578 = vunpack.c.1.s8 %v1081
  %v1579 = vunpack.c.1.s8 %v1082
  %v1580 = vunpack.c.2.s8 %v1075
  %v1581 = vunpack.c.2.s8 %v1076
  %v1582 = vunpack.c.2.s8 %v1077
  %v1583 = vunpack.c.2.s8 %v1078
  %v1584 = vunpack.c.2.s8 %v1079
  %v1585 = vunpack.c.2.s8 %v1080
  %v1586 = vunpack.c.2.s8 %v1081
  %v1587 = vunpack.c.2.s8 %v1082
  %v1588 = vunpack.c.3.s8 %v1075
  %v1589 = vunpack.c.3.s8 %v1076
  %v1590 = vunpack.c.3.s8 %v1077
  %v1591 = vunpack.c.3.s8 %v1078
  %v1592 = vunpack.c.3.s8 %v1079
  %v1593 = vunpack.c.3.s8 %v1080
  %v1594 = vunpack.c.3.s8 %v1081
  %v1595 = vunpack.c.3.s8 %v1082
  %v1596 = vcvt.s32.f32 %v1084
  %v1597 = vcvt.s32.f32 %v1085
  %v1598 = vcvt.s32.f32 %v1086
  %v1599 = vcvt.s32.f32 %v1087
  %v1600 = vcvt.s32.f32 %v1088
  %v1601 = vcvt.s32.f32 %v1089
  %v1602 = vcvt.s32.f32 %v1090
  %v1603 = vcvt.s32.f32 %v1091
  %v1604 = vcvt.s32.f32 %v1092
  %v1605 = vcvt.s32.f32 %v1093
  %v1606 = vcvt.s32.f32 %v1094
  %v1607 = vcvt.s32.f32 %v1095
  %v1608 = vcvt.s32.f32 %v1096
  %v1609 = vcvt.s32.f32 %v1097
  %v1610 = vcvt.s32.f32 %v1098
  %v1611 = vcvt.s32.f32 %v1099
  %v1612 = vcvt.s32.f32 %v1100
  %v1613 = vcvt.s32.f32 %v1101
  %v1614 = vcvt.s32.f32 %v1102
  %v1615 = vcvt.s32.f32 %v1103
  %v1616 = vcvt.s32.f32 %v1104
  %v1617 = vcvt.s32.f32 %v1105
  %v1618 = vcvt.s32.f32 %v1106
  %v1619 = vcvt.s32.f32 %v1107
  %v1620 = vcvt.s32.f32 %v1108
  %v1621 = vcvt.s32.f32 %v1109
  %v1622 = vcvt.s32.f32 %v1110
  %v1623 = vcvt.s32.f32 %v1111
  %v1624 = vcvt.s32.f32 %v1112
  %v1625 = vcvt.s32.f32 %v1113
  %v1626 = vcvt.s32.f32 %v1114
  %v1627 = vcvt.s32.f32 %v1115
  %v1628 = vcvt.s32.f32 %v1116
  %v1629 = vcvt.s32.f32 %v1117
  %v1630 = vcvt.s32.f32 %v1118
  %v1631 = vcvt.s32.f32 %v1119
  %v1632 = vcvt.s32.f32 %v1120
  %v1633 = vcvt.s32.f32 %v1121
  %v1634 = vcvt.s32.f32 %v1122
  %v1635 = vcvt.s32.f32 %v1123
  %v1636 = vcvt.s32.f32 %v1124
  %v1637 = vcvt.s32.f32 %v1125
  %v1638 = vcvt.s32.f32 %v1126
  %v1639 = vcvt.s32.f32 %v1127
  %v1640 = vcvt.s32.f32 %v1128
  %v1641 = vcvt.s32.f32 %v1129
  %v1642 = vcvt.s32.f32 %v1130
  %v1643 = vcvt.s32.f32 %v1131
  %v1644 = vcvt.s32.f32 %v1132
  %v1645 = vcvt.s32.f32 %v1133
  %v1646 = vcvt.s32.f32 %v1134
  %v1647 = vcvt.s32.f32 %v1135
  %v1648 = vcvt.s32.f32 %v1136
  %v1649 = vcvt.s32.f32 %v1137
  %v1650 = vcvt.s32.f32 %v1138
  %v1651 = vcvt.s32.f32 %v1139
  %v1652 = vcvt.s32.f32 %v1140
  %v1653 = vcvt.s32.f32 %v1141
  %v1654 = vcvt.s32.f32 %v1142
  %v1655 = vcvt.s32.f32 %v1143
  %v1656 = vcvt.s32.f32 %v1144
  %v1657 = vcvt.s32.f32 %v1145
  %v1658 = vcvt.s32.f32 %v1146
  %v1659 = vcvt.s32.f32 %v1147
  %v1660 = vcvt.s32.f32 %v1148
  %v1661 = vcvt.s32.f32 %v1149
  %v1662 = vcvt.s32.f32 %v1150
  %v1663 = vcvt.s32.f32 %v1151
  %v1664 = vcvt.s32.f32 %v1152
  %v1665 = vcvt.s32.f32 %v1153
  %v1666 = vcvt.s32.f32 %v1154
  %v1667 = vcvt.s32.f32 %v1155
  %v1668 = vcvt.s32.f32 %v1156
  %v1669 = vcvt.s32.f32 %v1157
  %v1670 = vcvt.s32.f32 %v1158
  %v1671 = vcvt.s32.f32 %v1159
  %v1672 = vcvt.s32.f32 %v1160
  %v1673 = vcvt.s32.f32 %v1161
  %v1674 = vcvt.s32.f32 %v1162
  %v1675 = vcvt.s32.f32 %v1163
  %v1676 = vcvt.s32.f32 %v1164
  %v1677 = vcvt.s32.f32 %v1165
  %v1678 = vcvt.s32.f32 %v1166
  %v1679 = vcvt.s32.f32 %v1167
  %v1680 = vcvt.s32.f32 %v1168
  %v1681 = vcvt.s32.f32 %v1169
  %v1682 = vcvt.s32.f32 %v1170
  %v1683 = vcvt.s32.f32 %v1171
  %v1684 = vcvt.s32.f32 %v1172
  %v1685 = vcvt.s32.f32 %v1173
  %v1686 = vcvt.s32.f32 %v1174
  %v1687 = vcvt.s32.f32 %v1175
  %v1688 = vcvt.s32.f32 %v1176
  %v1689 = vcvt.s32.f32 %v1177
  %v1690 = vcvt.s32.f32 %v1178
  %v1691 = vcvt.s32.f32 %v1179
  %v1692 = vcvt.s32.f32 %v1180
  %v1693 = vcvt.s32.f32 %v1181
  %v1694 = vcvt.s32.f32 %v1182
  %v1695 = vcvt.s32.f32 %v1183
  %v1696 = vcvt.s32.f32 %v1184
  %v1697 = vcvt.s32.f32 %v1185
  %v1698 = vcvt.s32.f32 %v1186
  %v1699 = vcvt.s32.f32 %v1187
  %v1700 = vcvt.s32.f32 %v1188
  %v1701 = vcvt.s32.f32 %v1189
  %v1702 = vcvt.s32.f32 %v1190
  %v1703 = vcvt.s32.f32 %v1191
  %v1704 = vcvt.s32.f32 %v1192
  %v1705 = vcvt.s32.f32 %v1193
  %v1706 = vcvt.s32.f32 %v1194
  %v1707 = vcvt.s32.f32 %v1195
  %v1708 = vcvt.s32.f32 %v1196
  %v1709 = vcvt.s32.f32 %v1197
  %v1710 = vcvt.s32.f32 %v1198
  %v1711 = vcvt.s32.f32 %v1199
  %v1712 = vcvt.s32.f32 %v1200
  %v1713 = vcvt.s32.f32 %v1201
  %v1714 = vcvt.s32.f32 %v1202
  %v1715 = vcvt.s32.f32 %v1203
  %v1716 = vcvt.s32.f32 %v1204
  %v1717 = vcvt.s32.f32 %v1205
  %v1718 = vcvt.s32.f32 %v1206
  %v1719 = vcvt.s32.f32 %v1207
  %v1720 = vcvt.s32.f32 %v1208
  %v1721 = vcvt.s32.f32 %v1209
  %v1722 = vcvt.s32.f32 %v1210
  %v1723 = vcvt.s32.f32 %v1211
  %v1724 = vcvt.s32.f32 %v1212
  %v1725 = vcvt.s32.f32 %v1213
  %v1726 = vcvt.s32.f32 %v1214
  %v1727 = vcvt.s32.f32 %v1215
  %v1728 = vcvt.s32.f32 %v1216
  %v1729 = vcvt.s32.f32 %v1217
  %v1730 = vcvt.s32.f32 %v1218
  %v1731 = vcvt.s32.f32 %v1219
  %v1732 = vcvt.s32.f32 %v1220
  %v1733 = vcvt.s32.f32 %v1221
  %v1734 = vcvt.s32.f32 %v1222
  %v1735 = vcvt.s32.f32 %v1223
  %v1736 = vcvt.s32.f32 %v1224
  %v1737 = vcvt.s32.f32 %v1225
  %v1738 = vcvt.s32.f32 %v1226
  %v1739 = vcvt.s32.f32 %v1227
  %v1740 = vcvt.s32.f32 %v1228
  %v1741 = vcvt.s32.f32 %v1229
  %v1742 = vcvt.s32.f32 %v1230
  %v1743 = vcvt.s32.f32 %v1231
  %v1744 = vcvt.s32.f32 %v1232
  %v1745 = vcvt.s32.f32 %v1233
  %v1746 = vcvt.s32.f32 %v1234
  %v1747 = vcvt.s32.f32 %v1235
  %v1748 = vcvt.s32.f32 %v1236
  %v1749 = vcvt.s32.f32 %v1237
  %v1750 = vcvt.s32.f32 %v1238
  %v1751 = vcvt.s32.f32 %v1239
  %v1752 = vcvt.s32.f32 %v1240
  %v1753 = vcvt.s32.f32 %v1241
  %v1754 = vcvt.s32.f32 %v1242
  %v1755 = vcvt.s32.f32 %v1243
  %v1756 = vcvt.s32.f32 %v1244
  %v1757 = vcvt.s32.f32 %v1245
  %v1758 = vcvt.s32.f32 %v1246
  %v1759 = vcvt.s32.f32 %v1247
  %v1760 = vcvt.s32.f32 %v1248
  %v1761 = vcvt.s32.f32 %v1249
  %v1762 = vcvt.s32.f32 %v1250
  %v1763 = vcvt.s32.f32 %v1251
  %v1764 = vcvt.s32.f32 %v1252
  %v1765 = vcvt.s32.f32 %v1253
  %v1766 = vcvt.s32.f32 %v1254
  %v1767 = vcvt.s32.f32 %v1255
  %v1768 = vcvt.s32.f32 %v1256
  %v1769 = vcvt.s32.f32 %v1257
  %v1770 = vcvt.s32.f32 %v1258
  %v1771 = vcvt.s32.f32 %v1259
  %v1772 = vcvt.s32.f32 %v1260
  %v1773 = vcvt.s32.f32 %v1261
  %v1774 = vcvt.s32.f32 %v1262
  %v1775 = vcvt.s32.f32 %v1263
  %v1776 = vcvt.s32.f32 %v1264
  %v1777 = vcvt.s32.f32 %v1265
  %v1778 = vcvt.s32.f32 %v1266
  %v1779 = vcvt.s32.f32 %v1267
  %v1780 = vcvt.s32.f32 %v1268
  %v1781 = vcvt.s32.f32 %v1269
  %v1782 = vcvt.s32.f32 %v1270
  %v1783 = vcvt.s32.f32 %v1271
  %v1784 = vcvt.s32.f32 %v1272
  %v1785 = vcvt.s32.f32 %v1273
  %v1786 = vcvt.s32.f32 %v1274
  %v1787 = vcvt.s32.f32 %v1275
  %v1788 = vcvt.s32.f32 %v1276
  %v1789 = vcvt.s32.f32 %v1277
  %v1790 = vcvt.s32.f32 %v1278
  %v1791 = vcvt.s32.f32 %v1279
  %v1792 = vcvt.s32.f32 %v1280
  %v1793 = vcvt.s32.f32 %v1281
  %v1794 = vcvt.s32.f32 %v1282
  %v1795 = vcvt.s32.f32 %v1283
  %v1796 = vcvt.s32.f32 %v1284
  %v1797 = vcvt.s32.f32 %v1285
  %v1798 = vcvt.s32.f32 %v1286
  %v1799 = vcvt.s32.f32 %v1287
  %v1800 = vcvt.s32.f32 %v1288
  %v1801 = vcvt.s32.f32 %v1289
  %v1802 = vcvt.s32.f32 %v1290
  %v1803 = vcvt.s32.f32 %v1291
  %v1804 = vcvt.s32.f32 %v1292
  %v1805 = vcvt.s32.f32 %v1293
  %v1806 = vcvt.s32.f32 %v1294
  %v1807 = vcvt.s32.f32 %v1295
  %v1808 = vcvt.s32.f32 %v1296
  %v1809 = vcvt.s32.f32 %v1297
  %v1810 = vcvt.s32.f32 %v1298
  %v1811 = vcvt.s32.f32 %v1299
  %v1812 = vcvt.s32.f32 %v1300
  %v1813 = vcvt.s32.f32 %v1301
  %v1814 = vcvt.s32.f32 %v1302
  %v1815 = vcvt.s32.f32 %v1303
  %v1816 = vcvt.s32.f32 %v1304
  %v1817 = vcvt.s32.f32 %v1305
  %v1818 = vcvt.s32.f32 %v1306
  %v1819 = vcvt.s32.f32 %v1307
  %v1820 = vcvt.s32.f32 %v1308
  %v1821 = vcvt.s32.f32 %v1309
  %v1822 = vcvt.s32.f32 %v1310
  %v1823 = vcvt.s32.f32 %v1311
  %v1824 = vcvt.s32.f32 %v1312
  %v1825 = vcvt.s32.f32 %v1313
  %v1826 = vcvt.s32.f32 %v1314
  %v1827 = vcvt.s32.f32 %v1315
  %v1828 = vcvt.s32.f32 %v1316
  %v1829 = vcvt.s32.f32 %v1317
  %v1830 = vcvt.s32.f32 %v1318
  %v1831 = vcvt.s32.f32 %v1319
  %v1832 = vcvt.s32.f32 %v1320
  %v1833 = vcvt.s32.f32 %v1321
  %v1834 = vcvt.s32.f32 %v1322
  %v1835 = vcvt.s32.f32 %v1323
  %v1836 = vcvt.s32.f32 %v1324
  %v1837 = vcvt.s32.f32 %v1325
  %v1838 = vcvt.s32.f32 %v1326
  %v1839 = vcvt.s32.f32 %v1327
  %v1840 = vcvt.s32.f32 %v1328
  %v1841 = vcvt.s32.f32 %v1329
  %v1842 = vcvt.s32.f32 %v1330
  %v1843 = vcvt.s32.f32 %v1331
  %v1844 = vcvt.s32.f32 %v1332
  %v1845 = vcvt.s32.f32 %v1333
  %v1846 = vcvt.s32.f32 %v1334
  %v1847 = vcvt.s32.f32 %v1335
  %v1848 = vcvt.s32.f32 %v1336
  %v1849 = vcvt.s32.f32 %v1337
  %v1850 = vcvt.s32.f32 %v1338
  %v1851 = vcvt.s32.f32 %v1339
  %v1852 = vcvt.s32.f32 %v1340
  %v1853 = vcvt.s32.f32 %v1341
  %v1854 = vcvt.s32.f32 %v1342
  %v1855 = vcvt.s32.f32 %v1343
  %v1856 = vcvt.s32.f32 %v1344
  %v1857 = vcvt.s32.f32 %v1345
  %v1858 = vcvt.s32.f32 %v1346
  %v1859 = vcvt.s32.f32 %v1347
  %v1860 = vcvt.s32.f32 %v1348
  %v1861 = vcvt.s32.f32 %v1349
  %v1862 = vcvt.s32.f32 %v1350
  %v1863 = vcvt.s32.f32 %v1351
  %v1864 = vcvt.s32.f32 %v1352
  %v1865 = vcvt.s32.f32 %v1353
  %v1866 = vcvt.s32.f32 %v1354
  %v1867 = vcvt.s32.f32 %v1355
  %v1868 = vcvt.s32.f32 %v1356
  %v1869 = vcvt.s32.f32 %v1357
  %v1870 = vcvt.s32.f32 %v1358
  %v1871 = vcvt.s32.f32 %v1359
  %v1872 = vcvt.s32.f32 %v1360
  %v1873 = vcvt.s32.f32 %v1361
  %v1874 = vcvt.s32.f32 %v1362
  %v1875 = vcvt.s32.f32 %v1363
  %v1876 = vcvt.s32.f32 %v1364
  %v1877 = vcvt.s32.f32 %v1365
  %v1878 = vcvt.s32.f32 %v1366
  %v1879 = vcvt.s32.f32 %v1367
  %v1880 = vcvt.s32.f32 %v1368
  %v1881 = vcvt.s32.f32 %v1369
  %v1882 = vcvt.s32.f32 %v1370
  %v1883 = vcvt.s32.f32 %v1371
  %v1884 = vcvt.s32.f32 %v1372
  %v1885 = vcvt.s32.f32 %v1373
  %v1886 = vcvt.s32.f32 %v1374
  %v1887 = vcvt.s32.f32 %v1375
  %v1888 = vcvt.s32.f32 %v1376
  %v1889 = vcvt.s32.f32 %v1377
  %v1890 = vcvt.s32.f32 %v1378
  %v1891 = vcvt.s32.f32 %v1379
  %v1892 = vcvt.s32.f32 %v1380
  %v1893 = vcvt.s32.f32 %v1381
  %v1894 = vcvt.s32.f32 %v1382
  %v1895 = vcvt.s32.f32 %v1383
  %v1896 = vcvt.s32.f32 %v1384
  %v1897 = vcvt.s32.f32 %v1385
  %v1898 = vcvt.s32.f32 %v1386
  %v1899 = vcvt.s32.f32 %v1387
  %v1900 = vcvt.s32.f32 %v1388
  %v1901 = vcvt.s32.f32 %v1389
  %v1902 = vcvt.s32.f32 %v1390
  %v1903 = vcvt.s32.f32 %v1391
  %v1904 = vcvt.s32.f32 %v1392
  %v1905 = vcvt.s32.f32 %v1393
  %v1906 = vcvt.s32.f32 %v1394
  %v1907 = vcvt.s32.f32 %v1395
  %v1908 = vcvt.s32.f32 %v1396
  %v1909 = vcvt.s32.f32 %v1397
  %v1910 = vcvt.s32.f32 %v1398
  %v1911 = vcvt.s32.f32 %v1399
  %v1912 = vcvt.s32.f32 %v1400
  %v1913 = vcvt.s32.f32 %v1401
  %v1914 = vcvt.s32.f32 %v1402
  %v1915 = vcvt.s32.f32 %v1403
  %v1916 = vcvt.s32.f32 %v1404
  %v1917 = vcvt.s32.f32 %v1405
  %v1918 = vcvt.s32.f32 %v1406
  %v1919 = vcvt.s32.f32 %v1407
  %v1920 = vcvt.s32.f32 %v1408
  %v1921 = vcvt.s32.f32 %v1409
  %v1922 = vcvt.s32.f32 %v1410
  %v1923 = vcvt.s32.f32 %v1411
  %v1924 = vcvt.s32.f32 %v1412
  %v1925 = vcvt.s32.f32 %v1413
  %v1926 = vcvt.s32.f32 %v1414
  %v1927 = vcvt.s32.f32 %v1415
  %v1928 = vcvt.s32.f32 %v1416
  %v1929 = vcvt.s32.f32 %v1417
  %v1930 = vcvt.s32.f32 %v1418
  %v1931 = vcvt.s32.f32 %v1419
  %v1932 = vcvt.s32.f32 %v1420
  %v1933 = vcvt.s32.f32 %v1421
  %v1934 = vcvt.s32.f32 %v1422
  %v1935 = vcvt.s32.f32 %v1423
  %v1936 = vcvt.s32.f32 %v1424
  %v1937 = vcvt.s32.f32 %v1425
  %v1938 = vcvt.s32.f32 %v1426
  %v1939 = vcvt.s32.f32 %v1427
  %v1940 = vcvt.s32.f32 %v1428
  %v1941 = vcvt.s32.f32 %v1429
  %v1942 = vcvt.s32.f32 %v1430
  %v1943 = vcvt.s32.f32 %v1431
  %v1944 = vcvt.s32.f32 %v1432
  %v1945 = vcvt.s32.f32 %v1433
  %v1946 = vcvt.s32.f32 %v1434
  %v1947 = vcvt.s32.f32 %v1435
  %v1948 = vcvt.s32.f32 %v1436
  %v1949 = vcvt.s32.f32 %v1437
  %v1950 = vcvt.s32.f32 %v1438
  %v1951 = vcvt.s32.f32 %v1439
  %v1952 = vcvt.s32.f32 %v1440
  %v1953 = vcvt.s32.f32 %v1441
  %v1954 = vcvt.s32.f32 %v1442
  %v1955 = vcvt.s32.f32 %v1443
  %v1956 = vcvt.s32.f32 %v1444
  %v1957 = vcvt.s32.f32 %v1445
  %v1958 = vcvt.s32.f32 %v1446
  %v1959 = vcvt.s32.f32 %v1447
  %v1960 = vcvt.s32.f32 %v1448
  %v1961 = vcvt.s32.f32 %v1449
  %v1962 = vcvt.s32.f32 %v1450
  %v1963 = vcvt.s32.f32 %v1451
  %v1964 = vcvt.s32.f32 %v1452
  %v1965 = vcvt.s32.f32 %v1453
  %v1966 = vcvt.s32.f32 %v1454
  %v1967 = vcvt.s32.f32 %v1455
  %v1968 = vcvt.s32.f32 %v1456
  %v1969 = vcvt.s32.f32 %v1457
  %v1970 = vcvt.s32.f32 %v1458
  %v1971 = vcvt.s32.f32 %v1459
  %v1972 = vcvt.s32.f32 %v1460
  %v1973 = vcvt.s32.f32 %v1461
  %v1974 = vcvt.s32.f32 %v1462
  %v1975 = vcvt.s32.f32 %v1463
  %v1976 = vcvt.s32.f32 %v1464
  %v1977 = vcvt.s32.f32 %v1465
  %v1978 = vcvt.s32.f32 %v1466
  %v1979 = vcvt.s32.f32 %v1467
  %v1980 = vcvt.s32.f32 %v1468
  %v1981 = vcvt.s32.f32 %v1469
  %v1982 = vcvt.s32.f32 %v1470
  %v1983 = vcvt.s32.f32 %v1471
  %v1984 = vcvt.s32.f32 %v1472
  %v1985 = vcvt.s32.f32 %v1473
  %v1986 = vcvt.s32.f32 %v1474
  %v1987 = vcvt.s32.f32 %v1475
  %v1988 = vcvt.s32.f32 %v1476
  %v1989 = vcvt.s32.f32 %v1477
  %v1990 = vcvt.s32.f32 %v1478
  %v1991 = vcvt.s32.f32 %v1479
  %v1992 = vcvt.s32.f32 %v1480
  %v1993 = vcvt.s32.f32 %v1481
  %v1994 = vcvt.s32.f32 %v1482
  %v1995 = vcvt.s32.f32 %v1483
  %v1996 = vcvt.s32.f32 %v1484
  %v1997 = vcvt.s32.f32 %v1485
  %v1998 = vcvt.s32.f32 %v1486
  %v1999 = vcvt.s32.f32 %v1487
  %v2000 = vcvt.s32.f32 %v1488
  %v2001 = vcvt.s32.f32 %v1489
  %v2002 = vcvt.s32.f32 %v1490
  %v2003 = vcvt.s32.f32 %v1491
  %v2004 = vcvt.s32.f32 %v1492
  %v2005 = vcvt.s32.f32 %v1493
  %v2006 = vcvt.s32.f32 %v1494
  %v2007 = vcvt.s32.f32 %v1495
  %v2008 = vcvt.s32.f32 %v1496
  %v2009 = vcvt.s32.f32 %v1497
  %v2010 = vcvt.s32.f32 %v1498
  %v2011 = vcvt.s32.f32 %v1499
  %v2012 = vcvt.s32.f32 %v1500
  %v2013 = vcvt.s32.f32 %v1501
  %v2014 = vcvt.s32.f32 %v1502
  %v2015 = vcvt.s32.f32 %v1503
  %v2016 = vcvt.s32.f32 %v1504
  %v2017 = vcvt.s32.f32 %v1505
  %v2018 = vcvt.s32.f32 %v1506
  %v2019 = vcvt.s32.f32 %v1507
  %v2020 = vcvt.s32.f32 %v1508
  %v2021 = vcvt.s32.f32 %v1509
  %v2022 = vcvt.s32.f32 %v1510
  %v2023 = vcvt.s32.f32 %v1511
  %v2024 = vcvt.s32.f32 %v1512
  %v2025 = vcvt.s32.f32 %v1513
  %v2026 = vcvt.s32.f32 %v1514
  %v2027 = vcvt.s32.f32 %v1515
  %v2028 = vcvt.s32.f32 %v1516
  %v2029 = vcvt.s32.f32 %v1517
  %v2030 = vcvt.s32.f32 %v1518
  %v2031 = vcvt.s32.f32 %v1519
  %v2032 = vcvt.s32.f32 %v1520
  %v2033 = vcvt.s32.f32 %v1521
  %v2034 = vcvt.s32.f32 %v1522
  %v2035 = vcvt.s32.f32 %v1523
  %v2036 = vcvt.s32.f32 %v1524
  %v2037 = vcvt.s32.f32 %v1525
  %v2038 = vcvt.s32.f32 %v1526
  %v2039 = vcvt.s32.f32 %v1527
  %v2040 = vcvt.s32.f32 %v1528
  %v2041 = vcvt.s32.f32 %v1529
  %v2042 = vcvt.s32.f32 %v1530
  %v2043 = vcvt.s32.f32 %v1531
  %v2044 = vcvt.s32.f32 %v1532
  %v2045 = vcvt.s32.f32 %v1533
  %v2046 = vcvt.s32.f32 %v1534
  %v2047 = vcvt.s32.f32 %v1535
  %v2048 = vcvt.s32.f32 %v1536
  %v2049 = vcvt.s32.f32 %v1537
  %v2050 = vcvt.s32.f32 %v1538
  %v2051 = vcvt.s32.f32 %v1539
  %v2052 = vcvt.s32.f32 %v1540
  %v2053 = vcvt.s32.f32 %v1541
  %v2054 = vcvt.s32.f32 %v1542
  %v2055 = vcvt.s32.f32 %v1543
  %v2056 = vcvt.s32.f32 %v1544
  %v2057 = vcvt.s32.f32 %v1545
  %v2058 = vcvt.s32.f32 %v1546
  %v2059 = vcvt.s32.f32 %v1547
  %v2060 = vcvt.s32.f32 %v1548
  %v2061 = vcvt.s32.f32 %v1549
  %v2062 = vcvt.s32.f32 %v1550
  %v2063 = vcvt.s32.f32 %v1551
  %v2064 = vcvt.s32.f32 %v1552
  %v2065 = vcvt.s32.f32 %v1553
  %v2066 = vcvt.s32.f32 %v1554
  %v2067 = vcvt.s32.f32 %v1555
  %v2068 = vcvt.s32.f32 %v1556
  %v2069 = vcvt.s32.f32 %v1557
  %v2070 = vcvt.s32.f32 %v1558
  %v2071 = vcvt.s32.f32 %v1559
  %v2072 = vcvt.s32.f32 %v1560
  %v2073 = vcvt.s32.f32 %v1561
  %v2074 = vcvt.s32.f32 %v1562
  %v2075 = vcvt.s32.f32 %v1563
  %v2076 = vcvt.s32.f32 %v1564
  %v2077 = vcvt.s32.f32 %v1565
  %v2078 = vcvt.s32.f32 %v1566
  %v2079 = vcvt.s32.f32 %v1567
  %v2080 = vcvt.s32.f32 %v1568
  %v2081 = vcvt.s32.f32 %v1569
  %v2082 = vcvt.s32.f32 %v1570
  %v2083 = vcvt.s32.f32 %v1571
  %v2084 = vcvt.s32.f32 %v1572
  %v2085 = vcvt.s32.f32 %v1573
  %v2086 = vcvt.s32.f32 %v1574
  %v2087 = vcvt.s32.f32 %v1575
  %v2088 = vcvt.s32.f32 %v1576
  %v2089 = vcvt.s32.f32 %v1577
  %v2090 = vcvt.s32.f32 %v1578
  %v2091 = vcvt.s32.f32 %v1579
  %v2092 = vcvt.s32.f32 %v1580
  %v2093 = vcvt.s32.f32 %v1581
  %v2094 = vcvt.s32.f32 %v1582
  %v2095 = vcvt.s32.f32 %v1583
  %v2096 = vcvt.s32.f32 %v1584
  %v2097 = vcvt.s32.f32 %v1585
  %v2098 = vcvt.s32.f32 %v1586
  %v2099 = vcvt.s32.f32 %v1587
  %v2100 = vcvt.s32.f32 %v1588
  %v2101 = vcvt.s32.f32 %v1589
  %v2102 = vcvt.s32.f32 %v1590
  %v2103 = vcvt.s32.f32 %v1591
  %v2104 = vcvt.s32.f32 %v1592
  %v2105 = vcvt.s32.f32 %v1593
  %v2106 = vcvt.s32.f32 %v1594
  %v2107 = vcvt.s32.f32 %v1595
  %v2109 = vlaneseq
  %v2110 = vshrl.u32 %v2109, 7
  %v2111 = vsub.s32 0, %v2110
  %v2112 = vrot.slane %v1083, %v2111
  %v2113 = vlaneseq
  %v2114 = vshrl.u32 %v2113, 7
  %v2115 = vsub.s32 1, %v2114
  %v2116 = vrot.slane %v1083, %v2115
  %v2117 = vlaneseq
  %v2118 = vshrl.u32 %v2117, 7
  %v2119 = vsub.s32 2, %v2118
  %v2120 = vrot.slane %v1083, %v2119
  %v2121 = vlaneseq
  %v2122 = vshrl.u32 %v2121, 7
  %v2123 = vsub.s32 3, %v2122
  %v2124 = vrot.slane %v1083, %v2123
  %v2125 = vlaneseq
  %v2126 = vshrl.u32 %v2125, 7
  %v2127 = vsub.s32 4, %v2126
  %v2128 = vrot.slane %v1083, %v2127
  %v2129 = vlaneseq
  %v2130 = vshrl.u32 %v2129, 7
  %v2131 = vsub.s32 5, %v2130
  %v2132 = vrot.slane %v1083, %v2131
  %v2133 = vlaneseq
  %v2134 = vshrl.u32 %v2133, 7
  %v2135 = vsub.s32 6, %v2134
  %v2136 = vrot.slane %v1083, %v2135
  %v2137 = vlaneseq
  %v2138 = vshrl.u32 %v2137, 7
  %v2139 = vsub.s32 7, %v2138
  %v2140 = vrot.slane %v1083, %v2139
  %v2149 = vmul.f32 %v1596, %v2112
  %v2150 = vmul.f32 %v1597, %v2116
  %v2151 = vmul.f32 %v1598, %v2120
  %v2152 = vmul.f32 %v1599, %v2124
  %v2153 = vmul.f32 %v1600, %v2128
  %v2154 = vmul.f32 %v1601, %v2132
  %v2155 = vmul.f32 %v1602, %v2136
  %v2156 = vmul.f32 %v1603, %v2140
  %v2157 = vmul.f32 %v1604, %v2112
  %v2158 = vmul.f32 %v1605, %v2116
  %v2159 = vmul.f32 %v1606, %v2120
  %v2160 = vmul.f32 %v1607, %v2124
  %v2161 = vmul.f32 %v1608, %v2128
  %v2162 = vmul.f32 %v1609, %v2132
  %v2163 = vmul.f32 %v1610, %v2136
  %v2164 = vmul.f32 %v1611, %v2140
  %v2165 = vmul.f32 %v1612, %v2112
  %v2166 = vmul.f32 %v1613, %v2116
  %v2167 = vmul.f32 %v1614, %v2120
  %v2168 = vmul.f32 %v1615, %v2124
  %v2169 = vmul.f32 %v1616, %v2128
  %v2170 = vmul.f32 %v1617, %v2132
  %v2171 = vmul.f32 %v1618, %v2136
  %v2172 = vmul.f32 %v1619, %v2140
  %v2173 = vmul.f32 %v1620, %v2112
  %v2174 = vmul.f32 %v1621, %v2116
  %v2175 = vmul.f32 %v1622, %v2120
  %v2176 = vmul.f32 %v1623, %v2124
  %v2177 = vmul.f32 %v1624, %v2128
  %v2178 = vmul.f32 %v1625, %v2132
  %v2179 = vmul.f32 %v1626, %v2136
  %v2180 = vmul.f32 %v1627, %v2140
  %v2181 = vmul.f32 %v1628, %v2112
  %v2182 = vmul.f32 %v1629, %v2116
  %v2183 = vmul.f32 %v1630, %v2120
  %v2184 = vmul.f32 %v1631, %v2124
  %v2185 = vmul.f32 %v1632, %v2128
  %v2186 = vmul.f32 %v1633, %v2132
  %v2187 = vmul.f32 %v1634, %v2136
  %v2188 = vmul.f32 %v1635, %v2140
  %v2189 = vmul.f32 %v1636, %v2112
  %v2190 = vmul.f32 %v1637, %v2116
  %v2191 = vmul.f32 %v1638, %v2120
  %v2192 = vmul.f32 %v1639, %v2124
  %v2193 = vmul.f32 %v1640, %v2128
  %v2194 = vmul.f32 %v1641, %v2132
  %v2195 = vmul.f32 %v1642, %v2136
  %v2196 = vmul.f32 %v1643, %v2140
  %v2197 = vmul.f32 %v1644, %v2112
  %v2198 = vmul.f32 %v1645, %v2116
  %v2199 = vmul.f32 %v1646, %v2120
  %v2200 = vmul.f32 %v1647, %v2124
  %v2201 = vmul.f32 %v1648, %v2128
  %v2202 = vmul.f32 %v1649, %v2132
  %v2203 = vmul.f32 %v1650, %v2136
  %v2204 = vmul.f32 %v1651, %v2140
  %v2205 = vmul.f32 %v1652, %v2112
  %v2206 = vmul.f32 %v1653, %v2116
  %v2207 = vmul.f32 %v1654, %v2120
  %v2208 = vmul.f32 %v1655, %v2124
  %v2209 = vmul.f32 %v1656, %v2128
  %v2210 = vmul.f32 %v1657, %v2132
  %v2211 = vmul.f32 %v1658, %v2136
  %v2212 = vmul.f32 %v1659, %v2140
  %v2213 = vmul.f32 %v1660, %v2112
  %v2214 = vmul.f32 %v1661, %v2116
  %v2215 = vmul.f32 %v1662, %v2120
  %v2216 = vmul.f32 %v1663, %v2124
  %v2217 = vmul.f32 %v1664, %v2128
  %v2218 = vmul.f32 %v1665, %v2132
  %v2219 = vmul.f32 %v1666, %v2136
  %v2220 = vmul.f32 %v1667, %v2140
  %v2221 = vmul.f32 %v1668, %v2112
  %v2222 = vmul.f32 %v1669, %v2116
  %v2223 = vmul.f32 %v1670, %v2120
  %v2224 = vmul.f32 %v1671, %v2124
  %v2225 = vmul.f32 %v1672, %v2128
  %v2226 = vmul.f32 %v1673, %v2132
  %v2227 = vmul.f32 %v1674, %v2136
  %v2228 = vmul.f32 %v1675, %v2140
  %v2229 = vmul.f32 %v1676, %v2112
  %v2230 = vmul.f32 %v1677, %v2116
  %v2231 = vmul.f32 %v1678, %v2120
  %v2232 = vmul.f32 %v1679, %v2124
  %v2233 = vmul.f32 %v1680, %v2128
  %v2234 = vmul.f32 %v1681, %v2132
  %v2235 = vmul.f32 %v1682, %v2136
  %v2236 = vmul.f32 %v1683, %v2140
  %v2237 = vmul.f32 %v1684, %v2112
  %v2238 = vmul.f32 %v1685, %v2116
  %v2239 = vmul.f32 %v1686, %v2120
  %v2240 = vmul.f32 %v1687, %v2124
  %v2241 = vmul.f32 %v1688, %v2128
  %v2242 = vmul.f32 %v1689, %v2132
  %v2243 = vmul.f32 %v1690, %v2136
  %v2244 = vmul.f32 %v1691, %v2140
  %v2245 = vmul.f32 %v1692, %v2112
  %v2246 = vmul.f32 %v1693, %v2116
  %v2247 = vmul.f32 %v1694, %v2120
  %v2248 = vmul.f32 %v1695, %v2124
  %v2249 = vmul.f32 %v1696, %v2128
  %v2250 = vmul.f32 %v1697, %v2132
  %v2251 = vmul.f32 %v1698, %v2136
  %v2252 = vmul.f32 %v1699, %v2140
  %v2253 = vmul.f32 %v1700, %v2112
  %v2254 = vmul.f32 %v1701, %v2116
  %v2255 = vmul.f32 %v1702, %v2120
  %v2256 = vmul.f32 %v1703, %v2124
  %v2257 = vmul.f32 %v1704, %v2128
  %v2258 = vmul.f32 %v1705, %v2132
  %v2259 = vmul.f32 %v1706, %v2136
  %v2260 = vmul.f32 %v1707, %v2140
  %v2261 = vmul.f32 %v1708, %v2112
  %v2262 = vmul.f32 %v1709, %v2116
  %v2263 = vmul.f32 %v1710, %v2120
  %v2264 = vmul.f32 %v1711, %v2124
  %v2265 = vmul.f32 %v1712, %v2128
  %v2266 = vmul.f32 %v1713, %v2132
  %v2267 = vmul.f32 %v1714, %v2136
  %v2268 = vmul.f32 %v1715, %v2140
  %v2269 = vmul.f32 %v1716, %v2112
  %v2270 = vmul.f32 %v1717, %v2116
  %v2271 = vmul.f32 %v1718, %v2120
  %v2272 = vmul.f32 %v1719, %v2124
  %v2273 = vmul.f32 %v1720, %v2128
  %v2274 = vmul.f32 %v1721, %v2132
  %v2275 = vmul.f32 %v1722, %v2136
  %v2276 = vmul.f32 %v1723, %v2140
  %v2277 = vmul.f32 %v1724, %v2112
  %v2278 = vmul.f32 %v1725, %v2116
  %v2279 = vmul.f32 %v1726, %v2120
  %v2280 = vmul.f32 %v1727, %v2124
  %v2281 = vmul.f32 %v1728, %v2128
  %v2282 = vmul.f32 %v1729, %v2132
  %v2283 = vmul.f32 %v1730, %v2136
  %v2284 = vmul.f32 %v1731, %v2140
  %v2285 = vmul.f32 %v1732, %v2112
  %v2286 = vmul.f32 %v1733, %v2116
  %v2287 = vmul.f32 %v1734, %v2120
  %v2288 = vmul.f32 %v1735, %v2124
  %v2289 = vmul.f32 %v1736, %v2128
  %v2290 = vmul.f32 %v1737, %v2132
  %v2291 = vmul.f32 %v1738, %v2136
  %v2292 = vmul.f32 %v1739, %v2140
  %v2293 = vmul.f32 %v1740, %v2112
  %v2294 = vmul.f32 %v1741, %v2116
  %v2295 = vmul.f32 %v1742, %v2120
  %v2296 = vmul.f32 %v1743, %v2124
  %v2297 = vmul.f32 %v1744, %v2128
  %v2298 = vmul.f32 %v1745, %v2132
  %v2299 = vmul.f32 %v1746, %v2136
  %v2300 = vmul.f32 %v1747, %v2140
  %v2301 = vmul.f32 %v1748, %v2112
  %v2302 = vmul.f32 %v1749, %v2116
  %v2303 = vmul.f32 %v1750, %v2120
  %v2304 = vmul.f32 %v1751, %v2124
  %v2305 = vmul.f32 %v1752, %v2128
  %v2306 = vmul.f32 %v1753, %v2132
  %v2307 = vmul.f32 %v1754, %v2136
  %v2308 = vmul.f32 %v1755, %v2140
  %v2309 = vmul.f32 %v1756, %v2112
  %v2310 = vmul.f32 %v1757, %v2116
  %v2311 = vmul.f32 %v1758, %v2120
  %v2312 = vmul.f32 %v1759, %v2124
  %v2313 = vmul.f32 %v1760, %v2128
  %v2314 = vmul.f32 %v1761, %v2132
  %v2315 = vmul.f32 %v1762, %v2136
  %v2316 = vmul.f32 %v1763, %v2140
  %v2317 = vmul.f32 %v1764, %v2112
  %v2318 = vmul.f32 %v1765, %v2116
  %v2319 = vmul.f32 %v1766, %v2120
  %v2320 = vmul.f32 %v1767, %v2124
  %v2321 = vmul.f32 %v1768, %v2128
  %v2322 = vmul.f32 %v1769, %v2132
  %v2323 = vmul.f32 %v1770, %v2136
  %v2324 = vmul.f32 %v1771, %v2140
  %v2325 = vmul.f32 %v1772, %v2112
  %v2326 = vmul.f32 %v1773, %v2116
  %v2327 = vmul.f32 %v1774, %v2120
  %v2328 = vmul.f32 %v1775, %v2124
  %v2329 = vmul.f32 %v1776, %v2128
  %v2330 = vmul.f32 %v1777, %v2132
  %v2331 = vmul.f32 %v1778, %v2136
  %v2332 = vmul.f32 %v1779, %v2140
  %v2333 = vmul.f32 %v1780, %v2112
  %v2334 = vmul.f32 %v1781, %v2116
  %v2335 = vmul.f32 %v1782, %v2120
  %v2336 = vmul.f32 %v1783, %v2124
  %v2337 = vmul.f32 %v1784, %v2128
  %v2338 = vmul.f32 %v1785, %v2132
  %v2339 = vmul.f32 %v1786, %v2136
  %v2340 = vmul.f32 %v1787, %v2140
  %v2341 = vmul.f32 %v1788, %v2112
  %v2342 = vmul.f32 %v1789, %v2116
  %v2343 = vmul.f32 %v1790, %v2120
  %v2344 = vmul.f32 %v1791, %v2124
  %v2345 = vmul.f32 %v1792, %v2128
  %v2346 = vmul.f32 %v1793, %v2132
  %v2347 = vmul.f32 %v1794, %v2136
  %v2348 = vmul.f32 %v1795, %v2140
  %v2349 = vmul.f32 %v1796, %v2112
  %v2350 = vmul.f32 %v1797, %v2116
  %v2351 = vmul.f32 %v1798, %v2120
  %v2352 = vmul.f32 %v1799, %v2124
  %v2353 = vmul.f32 %v1800, %v2128
  %v2354 = vmul.f32 %v1801, %v2132
  %v2355 = vmul.f32 %v1802, %v2136
  %v2356 = vmul.f32 %v1803, %v2140
  %v2357 = vmul.f32 %v1804, %v2112
  %v2358 = vmul.f32 %v1805, %v2116
  %v2359 = vmul.f32 %v1806, %v2120
  %v2360 = vmul.f32 %v1807, %v2124
  %v2361 = vmul.f32 %v1808, %v2128
  %v2362 = vmul.f32 %v1809, %v2132
  %v2363 = vmul.f32 %v1810, %v2136
  %v2364 = vmul.f32 %v1811, %v2140
  %v2365 = vmul.f32 %v1812, %v2112
  %v2366 = vmul.f32 %v1813, %v2116
  %v2367 = vmul.f32 %v1814, %v2120
  %v2368 = vmul.f32 %v1815, %v2124
  %v2369 = vmul.f32 %v1816, %v2128
  %v2370 = vmul.f32 %v1817, %v2132
  %v2371 = vmul.f32 %v1818, %v2136
  %v2372 = vmul.f32 %v1819, %v2140
  %v2373 = vmul.f32 %v1820, %v2112
  %v2374 = vmul.f32 %v1821, %v2116
  %v2375 = vmul.f32 %v1822, %v2120
  %v2376 = vmul.f32 %v1823, %v2124
  %v2377 = vmul.f32 %v1824, %v2128
  %v2378 = vmul.f32 %v1825, %v2132
  %v2379 = vmul.f32 %v1826, %v2136
  %v2380 = vmul.f32 %v1827, %v2140
  %v2381 = vmul.f32 %v1828, %v2112
  %v2382 = vmul.f32 %v1829, %v2116
  %v2383 = vmul.f32 %v1830, %v2120
  %v2384 = vmul.f32 %v1831, %v2124
  %v2385 = vmul.f32 %v1832, %v2128
  %v2386 = vmul.f32 %v1833, %v2132
  %v2387 = vmul.f32 %v1834, %v2136
  %v2388 = vmul.f32 %v1835, %v2140
  %v2389 = vmul.f32 %v1836, %v2112
  %v2390 = vmul.f32 %v1837, %v2116
  %v2391 = vmul.f32 %v1838, %v2120
  %v2392 = vmul.f32 %v1839, %v2124
  %v2393 = vmul.f32 %v1840, %v2128
  %v2394 = vmul.f32 %v1841, %v2132
  %v2395 = vmul.f32 %v1842, %v2136
  %v2396 = vmul.f32 %v1843, %v2140
  %v2397 = vmul.f32 %v1844, %v2112
  %v2398 = vmul.f32 %v1845, %v2116
  %v2399 = vmul.f32 %v1846, %v2120
  %v2400 = vmul.f32 %v1847, %v2124
  %v2401 = vmul.f32 %v1848, %v2128
  %v2402 = vmul.f32 %v1849, %v2132
  %v2403 = vmul.f32 %v1850, %v2136
  %v2404 = vmul.f32 %v1851, %v2140
  %v2405 = vmul.f32 %v1852, %v2112
  %v2406 = vmul.f32 %v1853, %v2116
  %v2407 = vmul.f32 %v1854, %v2120
  %v2408 = vmul.f32 %v1855, %v2124
  %v2409 = vmul.f32 %v1856, %v2128
  %v2410 = vmul.f32 %v1857, %v2132
  %v2411 = vmul.f32 %v1858, %v2136
  %v2412 = vmul.f32 %v1859, %v2140
  %v2413 = vmul.f32 %v1860, %v2112
  %v2414 = vmul.f32 %v1861, %v2116
  %v2415 = vmul.f32 %v1862, %v2120
  %v2416 = vmul.f32 %v1863, %v2124
  %v2417 = vmul.f32 %v1864, %v2128
  %v2418 = vmul.f32 %v1865, %v2132
  %v2419 = vmul.f32 %v1866, %v2136
  %v2420 = vmul.f32 %v1867, %v2140
  %v2421 = vmul.f32 %v1868, %v2112
  %v2422 = vmul.f32 %v1869, %v2116
  %v2423 = vmul.f32 %v1870, %v2120
  %v2424 = vmul.f32 %v1871, %v2124
  %v2425 = vmul.f32 %v1872, %v2128
  %v2426 = vmul.f32 %v1873, %v2132
  %v2427 = vmul.f32 %v1874, %v2136
  %v2428 = vmul.f32 %v1875, %v2140
  %v2429 = vmul.f32 %v1876, %v2112
  %v2430 = vmul.f32 %v1877, %v2116
  %v2431 = vmul.f32 %v1878, %v2120
  %v2432 = vmul.f32 %v1879, %v2124
  %v2433 = vmul.f32 %v1880, %v2128
  %v2434 = vmul.f32 %v1881, %v2132
  %v2435 = vmul.f32 %v1882, %v2136
  %v2436 = vmul.f32 %v1883, %v2140
  %v2437 = vmul.f32 %v1884, %v2112
  %v2438 = vmul.f32 %v1885, %v2116
  %v2439 = vmul.f32 %v1886, %v2120
  %v2440 = vmul.f32 %v1887, %v2124
  %v2441 = vmul.f32 %v1888, %v2128
  %v2442 = vmul.f32 %v1889, %v2132
  %v2443 = vmul.f32 %v1890, %v2136
  %v2444 = vmul.f32 %v1891, %v2140
  %v2445 = vmul.f32 %v1892, %v2112
  %v2446 = vmul.f32 %v1893, %v2116
  %v2447 = vmul.f32 %v1894, %v2120
  %v2448 = vmul.f32 %v1895, %v2124
  %v2449 = vmul.f32 %v1896, %v2128
  %v2450 = vmul.f32 %v1897, %v2132
  %v2451 = vmul.f32 %v1898, %v2136
  %v2452 = vmul.f32 %v1899, %v2140
  %v2453 = vmul.f32 %v1900, %v2112
  %v2454 = vmul.f32 %v1901, %v2116
  %v2455 = vmul.f32 %v1902, %v2120
  %v2456 = vmul.f32 %v1903, %v2124
  %v2457 = vmul.f32 %v1904, %v2128
  %v2458 = vmul.f32 %v1905, %v2132
  %v2459 = vmul.f32 %v1906, %v2136
  %v2460 = vmul.f32 %v1907, %v2140
  %v2461 = vmul.f32 %v1908, %v2112
  %v2462 = vmul.f32 %v1909, %v2116
  %v2463 = vmul.f32 %v1910, %v2120
  %v2464 = vmul.f32 %v1911, %v2124
  %v2465 = vmul.f32 %v1912, %v2128
  %v2466 = vmul.f32 %v1913, %v2132
  %v2467 = vmul.f32 %v1914, %v2136
  %v2468 = vmul.f32 %v1915, %v2140
  %v2469 = vmul.f32 %v1916, %v2112
  %v2470 = vmul.f32 %v1917, %v2116
  %v2471 = vmul.f32 %v1918, %v2120
  %v2472 = vmul.f32 %v1919, %v2124
  %v2473 = vmul.f32 %v1920, %v2128
  %v2474 = vmul.f32 %v1921, %v2132
  %v2475 = vmul.f32 %v1922, %v2136
  %v2476 = vmul.f32 %v1923, %v2140
  %v2477 = vmul.f32 %v1924, %v2112
  %v2478 = vmul.f32 %v1925, %v2116
  %v2479 = vmul.f32 %v1926, %v2120
  %v2480 = vmul.f32 %v1927, %v2124
  %v2481 = vmul.f32 %v1928, %v2128
  %v2482 = vmul.f32 %v1929, %v2132
  %v2483 = vmul.f32 %v1930, %v2136
  %v2484 = vmul.f32 %v1931, %v2140
  %v2485 = vmul.f32 %v1932, %v2112
  %v2486 = vmul.f32 %v1933, %v2116
  %v2487 = vmul.f32 %v1934, %v2120
  %v2488 = vmul.f32 %v1935, %v2124
  %v2489 = vmul.f32 %v1936, %v2128
  %v2490 = vmul.f32 %v1937, %v2132
  %v2491 = vmul.f32 %v1938, %v2136
  %v2492 = vmul.f32 %v1939, %v2140
  %v2493 = vmul.f32 %v1940, %v2112
  %v2494 = vmul.f32 %v1941, %v2116
  %v2495 = vmul.f32 %v1942, %v2120
  %v2496 = vmul.f32 %v1943, %v2124
  %v2497 = vmul.f32 %v1944, %v2128
  %v2498 = vmul.f32 %v1945, %v2132
  %v2499 = vmul.f32 %v1946, %v2136
  %v2500 = vmul.f32 %v1947, %v2140
  %v2501 = vmul.f32 %v1948, %v2112
  %v2502 = vmul.f32 %v1949, %v2116
  %v2503 = vmul.f32 %v1950, %v2120
  %v2504 = vmul.f32 %v1951, %v2124
  %v2505 = vmul.f32 %v1952, %v2128
  %v2506 = vmul.f32 %v1953, %v2132
  %v2507 = vmul.f32 %v1954, %v2136
  %v2508 = vmul.f32 %v1955, %v2140
  %v2509 = vmul.f32 %v1956, %v2112
  %v2510 = vmul.f32 %v1957, %v2116
  %v2511 = vmul.f32 %v1958, %v2120
  %v2512 = vmul.f32 %v1959, %v2124
  %v2513 = vmul.f32 %v1960, %v2128
  %v2514 = vmul.f32 %v1961, %v2132
  %v2515 = vmul.f32 %v1962, %v2136
  %v2516 = vmul.f32 %v1963, %v2140
  %v2517 = vmul.f32 %v1964, %v2112
  %v2518 = vmul.f32 %v1965, %v2116
  %v2519 = vmul.f32 %v1966, %v2120
  %v2520 = vmul.f32 %v1967, %v2124
  %v2521 = vmul.f32 %v1968, %v2128
  %v2522 = vmul.f32 %v1969, %v2132
  %v2523 = vmul.f32 %v1970, %v2136
  %v2524 = vmul.f32 %v1971, %v2140
  %v2525 = vmul.f32 %v1972, %v2112
  %v2526 = vmul.f32 %v1973, %v2116
  %v2527 = vmul.f32 %v1974, %v2120
  %v2528 = vmul.f32 %v1975, %v2124
  %v2529 = vmul.f32 %v1976, %v2128
  %v2530 = vmul.f32 %v1977, %v2132
  %v2531 = vmul.f32 %v1978, %v2136
  %v2532 = vmul.f32 %v1979, %v2140
  %v2533 = vmul.f32 %v1980, %v2112
  %v2534 = vmul.f32 %v1981, %v2116
  %v2535 = vmul.f32 %v1982, %v2120
  %v2536 = vmul.f32 %v1983, %v2124
  %v2537 = vmul.f32 %v1984, %v2128
  %v2538 = vmul.f32 %v1985, %v2132
  %v2539 = vmul.f32 %v1986, %v2136
  %v2540 = vmul.f32 %v1987, %v2140
  %v2541 = vmul.f32 %v1988, %v2112
  %v2542 = vmul.f32 %v1989, %v2116
  %v2543 = vmul.f32 %v1990, %v2120
  %v2544 = vmul.f32 %v1991, %v2124
  %v2545 = vmul.f32 %v1992, %v2128
  %v2546 = vmul.f32 %v1993, %v2132
  %v2547 = vmul.f32 %v1994, %v2136
  %v2548 = vmul.f32 %v1995, %v2140
  %v2549 = vmul.f32 %v1996, %v2112
  %v2550 = vmul.f32 %v1997, %v2116
  %v2551 = vmul.f32 %v1998, %v2120
  %v2552 = vmul.f32 %v1999, %v2124
  %v2553 = vmul.f32 %v2000, %v2128
  %v2554 = vmul.f32 %v2001, %v2132
  %v2555 = vmul.f32 %v2002, %v2136
  %v2556 = vmul.f32 %v2003, %v2140
  %v2557 = vmul.f32 %v2004, %v2112
  %v2558 = vmul.f32 %v2005, %v2116
  %v2559 = vmul.f32 %v2006, %v2120
  %v2560 = vmul.f32 %v2007, %v2124
  %v2561 = vmul.f32 %v2008, %v2128
  %v2562 = vmul.f32 %v2009, %v2132
  %v2563 = vmul.f32 %v2010, %v2136
  %v2564 = vmul.f32 %v2011, %v2140
  %v2565 = vmul.f32 %v2012, %v2112
  %v2566 = vmul.f32 %v2013, %v2116
  %v2567 = vmul.f32 %v2014, %v2120
  %v2568 = vmul.f32 %v2015, %v2124
  %v2569 = vmul.f32 %v2016, %v2128
  %v2570 = vmul.f32 %v2017, %v2132
  %v2571 = vmul.f32 %v2018, %v2136
  %v2572 = vmul.f32 %v2019, %v2140
  %v2573 = vmul.f32 %v2020, %v2112
  %v2574 = vmul.f32 %v2021, %v2116
  %v2575 = vmul.f32 %v2022, %v2120
  %v2576 = vmul.f32 %v2023, %v2124
  %v2577 = vmul.f32 %v2024, %v2128
  %v2578 = vmul.f32 %v2025, %v2132
  %v2579 = vmul.f32 %v2026, %v2136
  %v2580 = vmul.f32 %v2027, %v2140
  %v2581 = vmul.f32 %v2028, %v2112
  %v2582 = vmul.f32 %v2029, %v2116
  %v2583 = vmul.f32 %v2030, %v2120
  %v2584 = vmul.f32 %v2031, %v2124
  %v2585 = vmul.f32 %v2032, %v2128
  %v2586 = vmul.f32 %v2033, %v2132
  %v2587 = vmul.f32 %v2034, %v2136
  %v2588 = vmul.f32 %v2035, %v2140
  %v2589 = vmul.f32 %v2036, %v2112
  %v2590 = vmul.f32 %v2037, %v2116
  %v2591 = vmul.f32 %v2038, %v2120
  %v2592 = vmul.f32 %v2039, %v2124
  %v2593 = vmul.f32 %v2040, %v2128
  %v2594 = vmul.f32 %v2041, %v2132
  %v2595 = vmul.f32 %v2042, %v2136
  %v2596 = vmul.f32 %v2043, %v2140
  %v2597 = vmul.f32 %v2044, %v2112
  %v2598 = vmul.f32 %v2045, %v2116
  %v2599 = vmul.f32 %v2046, %v2120
  %v2600 = vmul.f32 %v2047, %v2124
  %v2601 = vmul.f32 %v2048, %v2128
  %v2602 = vmul.f32 %v2049, %v2132
  %v2603 = vmul.f32 %v2050, %v2136
  %v2604 = vmul.f32 %v2051, %v2140
  %v2605 = vmul.f32 %v2052, %v2112
  %v2606 = vmul.f32 %v2053, %v2116
  %v2607 = vmul.f32 %v2054, %v2120
  %v2608 = vmul.f32 %v2055, %v2124
  %v2609 = vmul.f32 %v2056, %v2128
  %v2610 = vmul.f32 %v2057, %v2132
  %v2611 = vmul.f32 %v2058, %v2136
  %v2612 = vmul.f32 %v2059, %v2140
  %v2613 = vmul.f32 %v2060, %v2112
  %v2614 = vmul.f32 %v2061, %v2116
  %v2615 = vmul.f32 %v2062, %v2120
  %v2616 = vmul.f32 %v2063, %v2124
  %v2617 = vmul.f32 %v2064, %v2128
  %v2618 = vmul.f32 %v2065, %v2132
  %v2619 = vmul.f32 %v2066, %v2136
  %v2620 = vmul.f32 %v2067, %v2140
  %v2621 = vmul.f32 %v2068, %v2112
  %v2622 = vmul.f32 %v2069, %v2116
  %v2623 = vmul.f32 %v2070, %v2120
  %v2624 = vmul.f32 %v2071, %v2124
  %v2625 = vmul.f32 %v2072, %v2128
  %v2626 = vmul.f32 %v2073, %v2132
  %v2627 = vmul.f32 %v2074, %v2136
  %v2628 = vmul.f32 %v2075, %v2140
  %v2629 = vmul.f32 %v2076, %v2112
  %v2630 = vmul.f32 %v2077, %v2116
  %v2631 = vmul.f32 %v2078, %v2120
  %v2632 = vmul.f32 %v2079, %v2124
  %v2633 = vmul.f32 %v2080, %v2128
  %v2634 = vmul.f32 %v2081, %v2132
  %v2635 = vmul.f32 %v2082, %v2136
  %v2636 = vmul.f32 %v2083, %v2140
  %v2637 = vmul.f32 %v2084, %v2112
  %v2638 = vmul.f32 %v2085, %v2116
  %v2639 = vmul.f32 %v2086, %v2120
  %v2640 = vmul.f32 %v2087, %v2124
  %v2641 = vmul.f32 %v2088, %v2128
  %v2642 = vmul.f32 %v2089, %v2132
  %v2643 = vmul.f32 %v2090, %v2136
  %v2644 = vmul.f32 %v2091, %v2140
  %v2645 = vmul.f32 %v2092, %v2112
  %v2646 = vmul.f32 %v2093, %v2116
  %v2647 = vmul.f32 %v2094, %v2120
  %v2648 = vmul.f32 %v2095, %v2124
  %v2649 = vmul.f32 %v2096, %v2128
  %v2650 = vmul.f32 %v2097, %v2132
  %v2651 = vmul.f32 %v2098, %v2136
  %v2652 = vmul.f32 %v2099, %v2140
  %v2653 = vmul.f32 %v2100, %v2112
  %v2654 = vmul.f32 %v2101, %v2116
  %v2655 = vmul.f32 %v2102, %v2120
  %v2656 = vmul.f32 %v2103, %v2124
  %v2657 = vmul.f32 %v2104, %v2128
  %v2658 = vmul.f32 %v2105, %v2132
  %v2659 = vmul.f32 %v2106, %v2136
  %v2660 = vmul.f32 %v2107, %v2140
  %v2661 = vpack.c.bf16 %v2157, %v2149
  %v2662 = vpack.c.bf16 %v2158, %v2150
  %v2663 = vpack.c.bf16 %v2159, %v2151
  %v2664 = vpack.c.bf16 %v2160, %v2152
  %v2665 = vpack.c.bf16 %v2161, %v2153
  %v2666 = vpack.c.bf16 %v2162, %v2154
  %v2667 = vpack.c.bf16 %v2163, %v2155
  %v2668 = vpack.c.bf16 %v2164, %v2156
  %v2669 = vpack.c.bf16 %v2173, %v2165
  %v2670 = vpack.c.bf16 %v2174, %v2166
  %v2671 = vpack.c.bf16 %v2175, %v2167
  %v2672 = vpack.c.bf16 %v2176, %v2168
  %v2673 = vpack.c.bf16 %v2177, %v2169
  %v2674 = vpack.c.bf16 %v2178, %v2170
  %v2675 = vpack.c.bf16 %v2179, %v2171
  %v2676 = vpack.c.bf16 %v2180, %v2172
  %v2677 = vpack.c.bf16 %v2189, %v2181
  %v2678 = vpack.c.bf16 %v2190, %v2182
  %v2679 = vpack.c.bf16 %v2191, %v2183
  %v2680 = vpack.c.bf16 %v2192, %v2184
  %v2681 = vpack.c.bf16 %v2193, %v2185
  %v2682 = vpack.c.bf16 %v2194, %v2186
  %v2683 = vpack.c.bf16 %v2195, %v2187
  %v2684 = vpack.c.bf16 %v2196, %v2188
  %v2685 = vpack.c.bf16 %v2205, %v2197
  %v2686 = vpack.c.bf16 %v2206, %v2198
  %v2687 = vpack.c.bf16 %v2207, %v2199
  %v2688 = vpack.c.bf16 %v2208, %v2200
  %v2689 = vpack.c.bf16 %v2209, %v2201
  %v2690 = vpack.c.bf16 %v2210, %v2202
  %v2691 = vpack.c.bf16 %v2211, %v2203
  %v2692 = vpack.c.bf16 %v2212, %v2204
  %v2693 = vpack.c.bf16 %v2221, %v2213
  %v2694 = vpack.c.bf16 %v2222, %v2214
  %v2695 = vpack.c.bf16 %v2223, %v2215
  %v2696 = vpack.c.bf16 %v2224, %v2216
  %v2697 = vpack.c.bf16 %v2225, %v2217
  %v2698 = vpack.c.bf16 %v2226, %v2218
  %v2699 = vpack.c.bf16 %v2227, %v2219
  %v2700 = vpack.c.bf16 %v2228, %v2220
  %v2701 = vpack.c.bf16 %v2237, %v2229
  %v2702 = vpack.c.bf16 %v2238, %v2230
  %v2703 = vpack.c.bf16 %v2239, %v2231
  %v2704 = vpack.c.bf16 %v2240, %v2232
  %v2705 = vpack.c.bf16 %v2241, %v2233
  %v2706 = vpack.c.bf16 %v2242, %v2234
  %v2707 = vpack.c.bf16 %v2243, %v2235
  %v2708 = vpack.c.bf16 %v2244, %v2236
  %v2709 = vpack.c.bf16 %v2253, %v2245
  %v2710 = vpack.c.bf16 %v2254, %v2246
  %v2711 = vpack.c.bf16 %v2255, %v2247
  %v2712 = vpack.c.bf16 %v2256, %v2248
  %v2713 = vpack.c.bf16 %v2257, %v2249
  %v2714 = vpack.c.bf16 %v2258, %v2250
  %v2715 = vpack.c.bf16 %v2259, %v2251
  %v2716 = vpack.c.bf16 %v2260, %v2252
  %v2717 = vpack.c.bf16 %v2269, %v2261
  %v2718 = vpack.c.bf16 %v2270, %v2262
  %v2719 = vpack.c.bf16 %v2271, %v2263
  %v2720 = vpack.c.bf16 %v2272, %v2264
  %v2721 = vpack.c.bf16 %v2273, %v2265
  %v2722 = vpack.c.bf16 %v2274, %v2266
  %v2723 = vpack.c.bf16 %v2275, %v2267
  %v2724 = vpack.c.bf16 %v2276, %v2268
  %v2725 = vpack.c.bf16 %v2285, %v2277
  %v2726 = vpack.c.bf16 %v2286, %v2278
  %v2727 = vpack.c.bf16 %v2287, %v2279
  %v2728 = vpack.c.bf16 %v2288, %v2280
  %v2729 = vpack.c.bf16 %v2289, %v2281
  %v2730 = vpack.c.bf16 %v2290, %v2282
  %v2731 = vpack.c.bf16 %v2291, %v2283
  %v2732 = vpack.c.bf16 %v2292, %v2284
  %v2733 = vpack.c.bf16 %v2301, %v2293
  %v2734 = vpack.c.bf16 %v2302, %v2294
  %v2735 = vpack.c.bf16 %v2303, %v2295
  %v2736 = vpack.c.bf16 %v2304, %v2296
  %v2737 = vpack.c.bf16 %v2305, %v2297
  %v2738 = vpack.c.bf16 %v2306, %v2298
  %v2739 = vpack.c.bf16 %v2307, %v2299
  %v2740 = vpack.c.bf16 %v2308, %v2300
  %v2741 = vpack.c.bf16 %v2317, %v2309
  %v2742 = vpack.c.bf16 %v2318, %v2310
  %v2743 = vpack.c.bf16 %v2319, %v2311
  %v2744 = vpack.c.bf16 %v2320, %v2312
  %v2745 = vpack.c.bf16 %v2321, %v2313
  %v2746 = vpack.c.bf16 %v2322, %v2314
  %v2747 = vpack.c.bf16 %v2323, %v2315
  %v2748 = vpack.c.bf16 %v2324, %v2316
  %v2749 = vpack.c.bf16 %v2333, %v2325
  %v2750 = vpack.c.bf16 %v2334, %v2326
  %v2751 = vpack.c.bf16 %v2335, %v2327
  %v2752 = vpack.c.bf16 %v2336, %v2328
  %v2753 = vpack.c.bf16 %v2337, %v2329
  %v2754 = vpack.c.bf16 %v2338, %v2330
  %v2755 = vpack.c.bf16 %v2339, %v2331
  %v2756 = vpack.c.bf16 %v2340, %v2332
  %v2757 = vpack.c.bf16 %v2349, %v2341
  %v2758 = vpack.c.bf16 %v2350, %v2342
  %v2759 = vpack.c.bf16 %v2351, %v2343
  %v2760 = vpack.c.bf16 %v2352, %v2344
  %v2761 = vpack.c.bf16 %v2353, %v2345
  %v2762 = vpack.c.bf16 %v2354, %v2346
  %v2763 = vpack.c.bf16 %v2355, %v2347
  %v2764 = vpack.c.bf16 %v2356, %v2348
  %v2765 = vpack.c.bf16 %v2365, %v2357
  %v2766 = vpack.c.bf16 %v2366, %v2358
  %v2767 = vpack.c.bf16 %v2367, %v2359
  %v2768 = vpack.c.bf16 %v2368, %v2360
  %v2769 = vpack.c.bf16 %v2369, %v2361
  %v2770 = vpack.c.bf16 %v2370, %v2362
  %v2771 = vpack.c.bf16 %v2371, %v2363
  %v2772 = vpack.c.bf16 %v2372, %v2364
  %v2773 = vpack.c.bf16 %v2381, %v2373
  %v2774 = vpack.c.bf16 %v2382, %v2374
  %v2775 = vpack.c.bf16 %v2383, %v2375
  %v2776 = vpack.c.bf16 %v2384, %v2376
  %v2777 = vpack.c.bf16 %v2385, %v2377
  %v2778 = vpack.c.bf16 %v2386, %v2378
  %v2779 = vpack.c.bf16 %v2387, %v2379
  %v2780 = vpack.c.bf16 %v2388, %v2380
  %v2781 = vpack.c.bf16 %v2397, %v2389
  %v2782 = vpack.c.bf16 %v2398, %v2390
  %v2783 = vpack.c.bf16 %v2399, %v2391
  %v2784 = vpack.c.bf16 %v2400, %v2392
  %v2785 = vpack.c.bf16 %v2401, %v2393
  %v2786 = vpack.c.bf16 %v2402, %v2394
  %v2787 = vpack.c.bf16 %v2403, %v2395
  %v2788 = vpack.c.bf16 %v2404, %v2396
  %v2789 = vpack.c.bf16 %v2413, %v2405
  %v2790 = vpack.c.bf16 %v2414, %v2406
  %v2791 = vpack.c.bf16 %v2415, %v2407
  %v2792 = vpack.c.bf16 %v2416, %v2408
  %v2793 = vpack.c.bf16 %v2417, %v2409
  %v2794 = vpack.c.bf16 %v2418, %v2410
  %v2795 = vpack.c.bf16 %v2419, %v2411
  %v2796 = vpack.c.bf16 %v2420, %v2412
  %v2797 = vpack.c.bf16 %v2429, %v2421
  %v2798 = vpack.c.bf16 %v2430, %v2422
  %v2799 = vpack.c.bf16 %v2431, %v2423
  %v2800 = vpack.c.bf16 %v2432, %v2424
  %v2801 = vpack.c.bf16 %v2433, %v2425
  %v2802 = vpack.c.bf16 %v2434, %v2426
  %v2803 = vpack.c.bf16 %v2435, %v2427
  %v2804 = vpack.c.bf16 %v2436, %v2428
  %v2805 = vpack.c.bf16 %v2445, %v2437
  %v2806 = vpack.c.bf16 %v2446, %v2438
  %v2807 = vpack.c.bf16 %v2447, %v2439
  %v2808 = vpack.c.bf16 %v2448, %v2440
  %v2809 = vpack.c.bf16 %v2449, %v2441
  %v2810 = vpack.c.bf16 %v2450, %v2442
  %v2811 = vpack.c.bf16 %v2451, %v2443
  %v2812 = vpack.c.bf16 %v2452, %v2444
  %v2813 = vpack.c.bf16 %v2461, %v2453
  %v2814 = vpack.c.bf16 %v2462, %v2454
  %v2815 = vpack.c.bf16 %v2463, %v2455
  %v2816 = vpack.c.bf16 %v2464, %v2456
  %v2817 = vpack.c.bf16 %v2465, %v2457
  %v2818 = vpack.c.bf16 %v2466, %v2458
  %v2819 = vpack.c.bf16 %v2467, %v2459
  %v2820 = vpack.c.bf16 %v2468, %v2460
  %v2821 = vpack.c.bf16 %v2477, %v2469
  %v2822 = vpack.c.bf16 %v2478, %v2470
  %v2823 = vpack.c.bf16 %v2479, %v2471
  %v2824 = vpack.c.bf16 %v2480, %v2472
  %v2825 = vpack.c.bf16 %v2481, %v2473
  %v2826 = vpack.c.bf16 %v2482, %v2474
  %v2827 = vpack.c.bf16 %v2483, %v2475
  %v2828 = vpack.c.bf16 %v2484, %v2476
  %v2829 = vpack.c.bf16 %v2493, %v2485
  %v2830 = vpack.c.bf16 %v2494, %v2486
  %v2831 = vpack.c.bf16 %v2495, %v2487
  %v2832 = vpack.c.bf16 %v2496, %v2488
  %v2833 = vpack.c.bf16 %v2497, %v2489
  %v2834 = vpack.c.bf16 %v2498, %v2490
  %v2835 = vpack.c.bf16 %v2499, %v2491
  %v2836 = vpack.c.bf16 %v2500, %v2492
  %v2837 = vpack.c.bf16 %v2509, %v2501
  %v2838 = vpack.c.bf16 %v2510, %v2502
  %v2839 = vpack.c.bf16 %v2511, %v2503
  %v2840 = vpack.c.bf16 %v2512, %v2504
  %v2841 = vpack.c.bf16 %v2513, %v2505
  %v2842 = vpack.c.bf16 %v2514, %v2506
  %v2843 = vpack.c.bf16 %v2515, %v2507
  %v2844 = vpack.c.bf16 %v2516, %v2508
  %v2845 = vpack.c.bf16 %v2525, %v2517
  %v2846 = vpack.c.bf16 %v2526, %v2518
  %v2847 = vpack.c.bf16 %v2527, %v2519
  %v2848 = vpack.c.bf16 %v2528, %v2520
  %v2849 = vpack.c.bf16 %v2529, %v2521
  %v2850 = vpack.c.bf16 %v2530, %v2522
  %v2851 = vpack.c.bf16 %v2531, %v2523
  %v2852 = vpack.c.bf16 %v2532, %v2524
  %v2853 = vpack.c.bf16 %v2541, %v2533
  %v2854 = vpack.c.bf16 %v2542, %v2534
  %v2855 = vpack.c.bf16 %v2543, %v2535
  %v2856 = vpack.c.bf16 %v2544, %v2536
  %v2857 = vpack.c.bf16 %v2545, %v2537
  %v2858 = vpack.c.bf16 %v2546, %v2538
  %v2859 = vpack.c.bf16 %v2547, %v2539
  %v2860 = vpack.c.bf16 %v2548, %v2540
  %v2861 = vpack.c.bf16 %v2557, %v2549
  %v2862 = vpack.c.bf16 %v2558, %v2550
  %v2863 = vpack.c.bf16 %v2559, %v2551
  %v2864 = vpack.c.bf16 %v2560, %v2552
  %v2865 = vpack.c.bf16 %v2561, %v2553
  %v2866 = vpack.c.bf16 %v2562, %v2554
  %v2867 = vpack.c.bf16 %v2563, %v2555
  %v2868 = vpack.c.bf16 %v2564, %v2556
  %v2869 = vpack.c.bf16 %v2573, %v2565
  %v2870 = vpack.c.bf16 %v2574, %v2566
  %v2871 = vpack.c.bf16 %v2575, %v2567
  %v2872 = vpack.c.bf16 %v2576, %v2568
  %v2873 = vpack.c.bf16 %v2577, %v2569
  %v2874 = vpack.c.bf16 %v2578, %v2570
  %v2875 = vpack.c.bf16 %v2579, %v2571
  %v2876 = vpack.c.bf16 %v2580, %v2572
  %v2877 = vpack.c.bf16 %v2589, %v2581
  %v2878 = vpack.c.bf16 %v2590, %v2582
  %v2879 = vpack.c.bf16 %v2591, %v2583
  %v2880 = vpack.c.bf16 %v2592, %v2584
  %v2881 = vpack.c.bf16 %v2593, %v2585
  %v2882 = vpack.c.bf16 %v2594, %v2586
  %v2883 = vpack.c.bf16 %v2595, %v2587
  %v2884 = vpack.c.bf16 %v2596, %v2588
  %v2885 = vpack.c.bf16 %v2605, %v2597
  %v2886 = vpack.c.bf16 %v2606, %v2598
  %v2887 = vpack.c.bf16 %v2607, %v2599
  %v2888 = vpack.c.bf16 %v2608, %v2600
  %v2889 = vpack.c.bf16 %v2609, %v2601
  %v2890 = vpack.c.bf16 %v2610, %v2602
  %v2891 = vpack.c.bf16 %v2611, %v2603
  %v2892 = vpack.c.bf16 %v2612, %v2604
  %v2893 = vpack.c.bf16 %v2621, %v2613
  %v2894 = vpack.c.bf16 %v2622, %v2614
  %v2895 = vpack.c.bf16 %v2623, %v2615
  %v2896 = vpack.c.bf16 %v2624, %v2616
  %v2897 = vpack.c.bf16 %v2625, %v2617
  %v2898 = vpack.c.bf16 %v2626, %v2618
  %v2899 = vpack.c.bf16 %v2627, %v2619
  %v2900 = vpack.c.bf16 %v2628, %v2620
  %v2901 = vpack.c.bf16 %v2637, %v2629
  %v2902 = vpack.c.bf16 %v2638, %v2630
  %v2903 = vpack.c.bf16 %v2639, %v2631
  %v2904 = vpack.c.bf16 %v2640, %v2632
  %v2905 = vpack.c.bf16 %v2641, %v2633
  %v2906 = vpack.c.bf16 %v2642, %v2634
  %v2907 = vpack.c.bf16 %v2643, %v2635
  %v2908 = vpack.c.bf16 %v2644, %v2636
  %v2909 = vpack.c.bf16 %v2653, %v2645
  %v2910 = vpack.c.bf16 %v2654, %v2646
  %v2911 = vpack.c.bf16 %v2655, %v2647
  %v2912 = vpack.c.bf16 %v2656, %v2648
  %v2913 = vpack.c.bf16 %v2657, %v2649
  %v2914 = vpack.c.bf16 %v2658, %v2650
  %v2915 = vpack.c.bf16 %v2659, %v2651
  %v2916 = vpack.c.bf16 %v2660, %v2652
  %v2917 = vld [vmem:[%s12] sm:$0xff]
  %v2919 = vlaneseq
  %v2920 = vshrl.u32 %v2919, 7
  %v2921 = vsub.s32 0, %v2920
  %v2922 = vrot.slane %v2917, %v2921
  %v2923 = vlaneseq
  %v2924 = vshrl.u32 %v2923, 7
  %v2925 = vsub.s32 1, %v2924
  %v2926 = vrot.slane %v2917, %v2925
  %v2927 = vlaneseq
  %v2928 = vshrl.u32 %v2927, 7
  %v2929 = vsub.s32 2, %v2928
  %v2930 = vrot.slane %v2917, %v2929
  %v2931 = vlaneseq
  %v2932 = vshrl.u32 %v2931, 7
  %v2933 = vsub.s32 3, %v2932
  %v2934 = vrot.slane %v2917, %v2933
  %v2935 = vlaneseq
  %v2936 = vshrl.u32 %v2935, 7
  %v2937 = vsub.s32 4, %v2936
  %v2938 = vrot.slane %v2917, %v2937
  %v2939 = vlaneseq
  %v2940 = vshrl.u32 %v2939, 7
  %v2941 = vsub.s32 5, %v2940
  %v2942 = vrot.slane %v2917, %v2941
  %v2943 = vlaneseq
  %v2944 = vshrl.u32 %v2943, 7
  %v2945 = vsub.s32 6, %v2944
  %v2946 = vrot.slane %v2917, %v2945
  %v2947 = vlaneseq
  %v2948 = vshrl.u32 %v2947, 7
  %v2949 = vsub.s32 7, %v2948
  %v2950 = vrot.slane %v2917, %v2949
  %2959 = vmatprep.subr.bf16.mxu0 %v2662
  %2960 = vmatpush1.bf16.msra.mxu0 %v2661
  %2961 = vmatprep.subr.bf16.mxu0 %v2670
  %2962 = vmatpush1.bf16.msra.mxu0 %v2669
  %2963 = vmatprep.subr.bf16.mxu0 %v2678
  %2964 = vmatpush1.bf16.msra.mxu0 %v2677
  %2965 = vmatprep.subr.bf16.mxu0 %v2686
  %2966 = vmatpush1.bf16.msra.mxu0 %v2685
  %2967 = vmatprep.subr.bf16.mxu0 %v2694
  %2968 = vmatpush1.bf16.msra.mxu0 %v2693
  %2969 = vmatprep.subr.bf16.mxu0 %v2702
  %2970 = vmatpush1.bf16.msra.mxu0 %v2701
  %2971 = vmatprep.subr.bf16.mxu0 %v2710
  %2972 = vmatpush1.bf16.msra.mxu0 %v2709
  %2973 = vmatprep.subr.bf16.mxu0 %v2718
  %2974 = vmatpush1.bf16.msra.mxu0 %v2717
  %2975 = vmatprep.subr.bf16.mxu0 %v2726
  %2976 = vmatpush1.bf16.msra.mxu0 %v2725
  %2977 = vmatprep.subr.bf16.mxu0 %v2734
  %2978 = vmatpush1.bf16.msra.mxu0 %v2733
  %2979 = vmatprep.subr.bf16.mxu0 %v2742
  %2980 = vmatpush1.bf16.msra.mxu0 %v2741
  %2981 = vmatprep.subr.bf16.mxu0 %v2750
  %2982 = vmatpush1.bf16.msra.mxu0 %v2749
  %2983 = vmatprep.subr.bf16.mxu0 %v2758
  %2984 = vmatpush1.bf16.msra.mxu0 %v2757
  %2985 = vmatprep.subr.bf16.mxu0 %v2766
  %2986 = vmatpush1.bf16.msra.mxu0 %v2765
  %2987 = vmatprep.subr.bf16.mxu0 %v2774
  %2988 = vmatpush1.bf16.msra.mxu0 %v2773
  %2989 = vmatprep.subr.bf16.mxu0 %v2782
  %2990 = vmatpush1.bf16.msra.mxu0 %v2781
  %2991 = vmatprep.mubr.bf16.mxu0 %v952
  %2992 = vmatmul.mubr.bf16.gmra.mrb[0].mxu0 %v951
  %v2993 = vpop.f32.mrb[0].mxu0
  %v2994 = vadd.f32 %v2922, %v2993
  %v2995 = vpop.f32.mrb[0].mxu0
  %v2996 = vadd.f32 %v2926, %v2995
  %v2997 = vpop.f32.mrb[0].mxu0
  %v2998 = vpop.f32.mrb[0].mxu0
  %2999 = vdwg.mxu0
  %3000 = vmatprep.subr.bf16.mxu0 %v2790
  %3001 = vmatpush1.bf16.msra.mxu0 %v2789
  %3002 = vmatprep.subr.bf16.mxu0 %v2798
  %3003 = vmatpush1.bf16.msra.mxu0 %v2797
  %3004 = vmatprep.subr.bf16.mxu0 %v2806
  %3005 = vmatpush1.bf16.msra.mxu0 %v2805
  %3006 = vmatprep.subr.bf16.mxu0 %v2814
  %3007 = vmatpush1.bf16.msra.mxu0 %v2813
  %3008 = vmatprep.subr.bf16.mxu0 %v2822
  %3009 = vmatpush1.bf16.msra.mxu0 %v2821
  %3010 = vmatprep.subr.bf16.mxu0 %v2830
  %3011 = vmatpush1.bf16.msra.mxu0 %v2829
  %3012 = vmatprep.subr.bf16.mxu0 %v2838
  %3013 = vmatpush1.bf16.msra.mxu0 %v2837
  %3014 = vmatprep.subr.bf16.mxu0 %v2846
  %3015 = vmatpush1.bf16.msra.mxu0 %v2845
  %3016 = vmatprep.subr.bf16.mxu0 %v2854
  %3017 = vmatpush1.bf16.msra.mxu0 %v2853
  %3018 = vmatprep.subr.bf16.mxu0 %v2862
  %3019 = vmatpush1.bf16.msra.mxu0 %v2861
  %3020 = vmatprep.subr.bf16.mxu0 %v2870
  %3021 = vmatpush1.bf16.msra.mxu0 %v2869
  %3022 = vmatprep.subr.bf16.mxu0 %v2878
  %3023 = vmatpush1.bf16.msra.mxu0 %v2877
  %3024 = vmatprep.subr.bf16.mxu0 %v2886
  %3025 = vmatpush1.bf16.msra.mxu0 %v2885
  %3026 = vmatprep.subr.bf16.mxu0 %v2894
  %3027 = vmatpush1.bf16.msra.mxu0 %v2893
  %3028 = vmatprep.subr.bf16.mxu0 %v2902
  %3029 = vmatpush1.bf16.msra.mxu0 %v2901
  %3030 = vmatprep.subr.bf16.mxu0 %v2910
  %3031 = vmatpush1.bf16.msra.mxu0 %v2909
  %3032 = vmatprep.mubr.bf16.mxu0 %v954
  %3033 = vmatmul.mubr.bf16.gmra.mrb[0].mxu0 %v953
  %v3034 = vpop.f32.mrb[0].mxu0
  %v3035 = vadd.f32 %v2994, %v3034
  %v3036 = vpop.f32.mrb[0].mxu0
  %v3037 = vadd.f32 %v2996, %v3036
  %v3038 = vpop.f32.mrb[0].mxu0
  %v3039 = vpop.f32.mrb[0].mxu0
  %3040 = vdwg.mxu0
  %3041 = vmatprep.subr.bf16.mxu0 %v2664
  %3042 = vmatpush1.bf16.msra.mxu0 %v2663
  %3043 = vmatprep.subr.bf16.mxu0 %v2672
  %3044 = vmatpush1.bf16.msra.mxu0 %v2671
  %3045 = vmatprep.subr.bf16.mxu0 %v2680
  %3046 = vmatpush1.bf16.msra.mxu0 %v2679
  %3047 = vmatprep.subr.bf16.mxu0 %v2688
  %3048 = vmatpush1.bf16.msra.mxu0 %v2687
  %3049 = vmatprep.subr.bf16.mxu0 %v2696
  %3050 = vmatpush1.bf16.msra.mxu0 %v2695
  %3051 = vmatprep.subr.bf16.mxu0 %v2704
  %3052 = vmatpush1.bf16.msra.mxu0 %v2703
  %3053 = vmatprep.subr.bf16.mxu0 %v2712
  %3054 = vmatpush1.bf16.msra.mxu0 %v2711
  %3055 = vmatprep.subr.bf16.mxu0 %v2720
  %3056 = vmatpush1.bf16.msra.mxu0 %v2719
  %3057 = vmatprep.subr.bf16.mxu0 %v2728
  %3058 = vmatpush1.bf16.msra.mxu0 %v2727
  %3059 = vmatprep.subr.bf16.mxu0 %v2736
  %3060 = vmatpush1.bf16.msra.mxu0 %v2735
  %3061 = vmatprep.subr.bf16.mxu0 %v2744
  %3062 = vmatpush1.bf16.msra.mxu0 %v2743
  %3063 = vmatprep.subr.bf16.mxu0 %v2752
  %3064 = vmatpush1.bf16.msra.mxu0 %v2751
  %3065 = vmatprep.subr.bf16.mxu0 %v2760
  %3066 = vmatpush1.bf16.msra.mxu0 %v2759
  %3067 = vmatprep.subr.bf16.mxu0 %v2768
  %3068 = vmatpush1.bf16.msra.mxu0 %v2767
  %3069 = vmatprep.subr.bf16.mxu0 %v2776
  %3070 = vmatpush1.bf16.msra.mxu0 %v2775
  %3071 = vmatprep.subr.bf16.mxu0 %v2784
  %3072 = vmatpush1.bf16.msra.mxu0 %v2783
  %3073 = vmatprep.mubr.bf16.mxu0 %v952
  %3074 = vmatmul.mubr.bf16.gmra.mrb[0].mxu0 %v951
  %v3075 = vpop.f32.mrb[0].mxu0
  %v3076 = vadd.f32 %v2930, %v3075
  %v3077 = vpop.f32.mrb[0].mxu0
  %v3078 = vadd.f32 %v2934, %v3077
  %v3079 = vpop.f32.mrb[0].mxu0
  %v3080 = vpop.f32.mrb[0].mxu0
  %3081 = vdwg.mxu0
  %3082 = vmatprep.subr.bf16.mxu0 %v2792
  %3083 = vmatpush1.bf16.msra.mxu0 %v2791
  %3084 = vmatprep.subr.bf16.mxu0 %v2800
  %3085 = vmatpush1.bf16.msra.mxu0 %v2799
  %3086 = vmatprep.subr.bf16.mxu0 %v2808
  %3087 = vmatpush1.bf16.msra.mxu0 %v2807
  %3088 = vmatprep.subr.bf16.mxu0 %v2816
  %3089 = vmatpush1.bf16.msra.mxu0 %v2815
  %3090 = vmatprep.subr.bf16.mxu0 %v2824
  %3091 = vmatpush1.bf16.msra.mxu0 %v2823
  %3092 = vmatprep.subr.bf16.mxu0 %v2832
  %3093 = vmatpush1.bf16.msra.mxu0 %v2831
  %3094 = vmatprep.subr.bf16.mxu0 %v2840
  %3095 = vmatpush1.bf16.msra.mxu0 %v2839
  %3096 = vmatprep.subr.bf16.mxu0 %v2848
  %3097 = vmatpush1.bf16.msra.mxu0 %v2847
  %3098 = vmatprep.subr.bf16.mxu0 %v2856
  %3099 = vmatpush1.bf16.msra.mxu0 %v2855
  %3100 = vmatprep.subr.bf16.mxu0 %v2864
  %3101 = vmatpush1.bf16.msra.mxu0 %v2863
  %3102 = vmatprep.subr.bf16.mxu0 %v2872
  %3103 = vmatpush1.bf16.msra.mxu0 %v2871
  %3104 = vmatprep.subr.bf16.mxu0 %v2880
  %3105 = vmatpush1.bf16.msra.mxu0 %v2879
  %3106 = vmatprep.subr.bf16.mxu0 %v2888
  %3107 = vmatpush1.bf16.msra.mxu0 %v2887
  %3108 = vmatprep.subr.bf16.mxu0 %v2896
  %3109 = vmatpush1.bf16.msra.mxu0 %v2895
  %3110 = vmatprep.subr.bf16.mxu0 %v2904
  %3111 = vmatpush1.bf16.msra.mxu0 %v2903
  %3112 = vmatprep.subr.bf16.mxu0 %v2912
  %3113 = vmatpush1.bf16.msra.mxu0 %v2911
  %3114 = vmatprep.mubr.bf16.mxu0 %v954
  %3115 = vmatmul.mubr.bf16.gmra.mrb[0].mxu0 %v953
  %v3116 = vpop.f32.mrb[0].mxu0
  %v3117 = vadd.f32 %v3076, %v3116
  %v3118 = vpop.f32.mrb[0].mxu0
  %v3119 = vadd.f32 %v3078, %v3118
  %v3120 = vpop.f32.mrb[0].mxu0
  %v3121 = vpop.f32.mrb[0].mxu0
  %3122 = vdwg.mxu0
  %3123 = vmatprep.subr.bf16.mxu0 %v2666
  %3124 = vmatpush1.bf16.msra.mxu0 %v2665
  %3125 = vmatprep.subr.bf16.mxu0 %v2674
  %3126 = vmatpush1.bf16.msra.mxu0 %v2673
  %3127 = vmatprep.subr.bf16.mxu0 %v2682
  %3128 = vmatpush1.bf16.msra.mxu0 %v2681
  %3129 = vmatprep.subr.bf16.mxu0 %v2690
  %3130 = vmatpush1.bf16.msra.mxu0 %v2689
  %3131 = vmatprep.subr.bf16.mxu0 %v2698
  %3132 = vmatpush1.bf16.msra.mxu0 %v2697
  %3133 = vmatprep.subr.bf16.mxu0 %v2706
  %3134 = vmatpush1.bf16.msra.mxu0 %v2705
  %3135 = vmatprep.subr.bf16.mxu0 %v2714
  %3136 = vmatpush1.bf16.msra.mxu0 %v2713
  %3137 = vmatprep.subr.bf16.mxu0 %v2722
  %3138 = vmatpush1.bf16.msra.mxu0 %v2721
  %3139 = vmatprep.subr.bf16.mxu0 %v2730
  %3140 = vmatpush1.bf16.msra.mxu0 %v2729
  %3141 = vmatprep.subr.bf16.mxu0 %v2738
  %3142 = vmatpush1.bf16.msra.mxu0 %v2737
  %3143 = vmatprep.subr.bf16.mxu0 %v2746
  %3144 = vmatpush1.bf16.msra.mxu0 %v2745
  %3145 = vmatprep.subr.bf16.mxu0 %v2754
  %3146 = vmatpush1.bf16.msra.mxu0 %v2753
  %3147 = vmatprep.subr.bf16.mxu0 %v2762
  %3148 = vmatpush1.bf16.msra.mxu0 %v2761
  %3149 = vmatprep.subr.bf16.mxu0 %v2770
  %3150 = vmatpush1.bf16.msra.mxu0 %v2769
  %3151 = vmatprep.subr.bf16.mxu0 %v2778
  %3152 = vmatpush1.bf16.msra.mxu0 %v2777
  %3153 = vmatprep.subr.bf16.mxu0 %v2786
  %3154 = vmatpush1.bf16.msra.mxu0 %v2785
  %3155 = vmatprep.mubr.bf16.mxu0 %v952
  %3156 = vmatmul.mubr.bf16.gmra.mrb[0].mxu0 %v951
  %v3157 = vpop.f32.mrb[0].mxu0
  %v3158 = vadd.f32 %v2938, %v3157
  %v3159 = vpop.f32.mrb[0].mxu0
  %v3160 = vadd.f32 %v2942, %v3159
  %v3161 = vpop.f32.mrb[0].mxu0
  %v3162 = vpop.f32.mrb[0].mxu0
  %3163 = vdwg.mxu0
  %3164 = vmatprep.subr.bf16.mxu0 %v2794
  %3165 = vmatpush1.bf16.msra.mxu0 %v2793
  %3166 = vmatprep.subr.bf16.mxu0 %v2802
  %3167 = vmatpush1.bf16.msra.mxu0 %v2801
  %3168 = vmatprep.subr.bf16.mxu0 %v2810
  %3169 = vmatpush1.bf16.msra.mxu0 %v2809
  %3170 = vmatprep.subr.bf16.mxu0 %v2818
  %3171 = vmatpush1.bf16.msra.mxu0 %v2817
  %3172 = vmatprep.subr.bf16.mxu0 %v2826
  %3173 = vmatpush1.bf16.msra.mxu0 %v2825
  %3174 = vmatprep.subr.bf16.mxu0 %v2834
  %3175 = vmatpush1.bf16.msra.mxu0 %v2833
  %3176 = vmatprep.subr.bf16.mxu0 %v2842
  %3177 = vmatpush1.bf16.msra.mxu0 %v2841
  %3178 = vmatprep.subr.bf16.mxu0 %v2850
  %3179 = vmatpush1.bf16.msra.mxu0 %v2849
  %3180 = vmatprep.subr.bf16.mxu0 %v2858
  %3181 = vmatpush1.bf16.msra.mxu0 %v2857
  %3182 = vmatprep.subr.bf16.mxu0 %v2866
  %3183 = vmatpush1.bf16.msra.mxu0 %v2865
  %3184 = vmatprep.subr.bf16.mxu0 %v2874
  %3185 = vmatpush1.bf16.msra.mxu0 %v2873
  %3186 = vmatprep.subr.bf16.mxu0 %v2882
  %3187 = vmatpush1.bf16.msra.mxu0 %v2881
  %3188 = vmatprep.subr.bf16.mxu0 %v2890
  %3189 = vmatpush1.bf16.msra.mxu0 %v2889
  %3190 = vmatprep.subr.bf16.mxu0 %v2898
  %3191 = vmatpush1.bf16.msra.mxu0 %v2897
  %3192 = vmatprep.subr.bf16.mxu0 %v2906
  %3193 = vmatpush1.bf16.msra.mxu0 %v2905
  %3194 = vmatprep.subr.bf16.mxu0 %v2914
  %3195 = vmatpush1.bf16.msra.mxu0 %v2913
  %3196 = vmatprep.mubr.bf16.mxu0 %v954
  %3197 = vmatmul.mubr.bf16.gmra.mrb[0].mxu0 %v953
  %v3198 = vpop.f32.mrb[0].mxu0
  %v3199 = vadd.f32 %v3158, %v3198
  %v3200 = vpop.f32.mrb[0].mxu0
  %v3201 = vadd.f32 %v3160, %v3200
  %v3202 = vpop.f32.mrb[0].mxu0
  %v3203 = vpop.f32.mrb[0].mxu0
  %3204 = vdwg.mxu0
  %3205 = vmatprep.subr.bf16.mxu0 %v2668
  %3206 = vmatpush1.bf16.msra.mxu0 %v2667
  %3207 = vmatprep.subr.bf16.mxu0 %v2676
  %3208 = vmatpush1.bf16.msra.mxu0 %v2675
  %3209 = vmatprep.subr.bf16.mxu0 %v2684
  %3210 = vmatpush1.bf16.msra.mxu0 %v2683
  %3211 = vmatprep.subr.bf16.mxu0 %v2692
  %3212 = vmatpush1.bf16.msra.mxu0 %v2691
  %3213 = vmatprep.subr.bf16.mxu0 %v2700
  %3214 = vmatpush1.bf16.msra.mxu0 %v2699
  %3215 = vmatprep.subr.bf16.mxu0 %v2708
  %3216 = vmatpush1.bf16.msra.mxu0 %v2707
  %3217 = vmatprep.subr.bf16.mxu0 %v2716
  %3218 = vmatpush1.bf16.msra.mxu0 %v2715
  %3219 = vmatprep.subr.bf16.mxu0 %v2724
  %3220 = vmatpush1.bf16.msra.mxu0 %v2723
  %3221 = vmatprep.subr.bf16.mxu0 %v2732
  %3222 = vmatpush1.bf16.msra.mxu0 %v2731
  %3223 = vmatprep.subr.bf16.mxu0 %v2740
  %3224 = vmatpush1.bf16.msra.mxu0 %v2739
  %3225 = vmatprep.subr.bf16.mxu0 %v2748
  %3226 = vmatpush1.bf16.msra.mxu0 %v2747
  %3227 = vmatprep.subr.bf16.mxu0 %v2756
  %3228 = vmatpush1.bf16.msra.mxu0 %v2755
  %3229 = vmatprep.subr.bf16.mxu0 %v2764
  %3230 = vmatpush1.bf16.msra.mxu0 %v2763
  %3231 = vmatprep.subr.bf16.mxu0 %v2772
  %3232 = vmatpush1.bf16.msra.mxu0 %v2771
  %3233 = vmatprep.subr.bf16.mxu0 %v2780
  %3234 = vmatpush1.bf16.msra.mxu0 %v2779
  %3235 = vmatprep.subr.bf16.mxu0 %v2788
  %3236 = vmatpush1.bf16.msra.mxu0 %v2787
  %3237 = vmatprep.mubr.bf16.mxu0 %v952
  %3238 = vmatmul.mubr.bf16.gmra.mrb[0].mxu0 %v951
  %v3239 = vpop.f32.mrb[0].mxu0
  %v3240 = vadd.f32 %v2946, %v3239
  %v3241 = vpop.f32.mrb[0].mxu0
  %v3242 = vadd.f32 %v2950, %v3241
  %v3243 = vpop.f32.mrb[0].mxu0
  %v3244 = vpop.f32.mrb[0].mxu0
  %3245 = vdwg.mxu0
  %3246 = vmatprep.subr.bf16.mxu0 %v2796
  %3247 = vmatpush1.bf16.msra.mxu0 %v2795
  %3248 = vmatprep.subr.bf16.mxu0 %v2804
  %3249 = vmatpush1.bf16.msra.mxu0 %v2803
  %3250 = vmatprep.subr.bf16.mxu0 %v2812
  %3251 = vmatpush1.bf16.msra.mxu0 %v2811
  %3252 = vmatprep.subr.bf16.mxu0 %v2820
  %3253 = vmatpush1.bf16.msra.mxu0 %v2819
  %3254 = vmatprep.subr.bf16.mxu0 %v2828
  %3255 = vmatpush1.bf16.msra.mxu0 %v2827
  %3256 = vmatprep.subr.bf16.mxu0 %v2836
  %3257 = vmatpush1.bf16.msra.mxu0 %v2835
  %3258 = vmatprep.subr.bf16.mxu0 %v2844
  %3259 = vmatpush1.bf16.msra.mxu0 %v2843
  %3260 = vmatprep.subr.bf16.mxu0 %v2852
  %3261 = vmatpush1.bf16.msra.mxu0 %v2851
  %3262 = vmatprep.subr.bf16.mxu0 %v2860
  %3263 = vmatpush1.bf16.msra.mxu0 %v2859
  %3264 = vmatprep.subr.bf16.mxu0 %v2868
  %3265 = vmatpush1.bf16.msra.mxu0 %v2867
  %3266 = vmatprep.subr.bf16.mxu0 %v2876
  %3267 = vmatpush1.bf16.msra.mxu0 %v2875
  %3268 = vmatprep.subr.bf16.mxu0 %v2884
  %3269 = vmatpush1.bf16.msra.mxu0 %v2883
  %3270 = vmatprep.subr.bf16.mxu0 %v2892
  %3271 = vmatpush1.bf16.msra.mxu0 %v2891
  %3272 = vmatprep.subr.bf16.mxu0 %v2900
  %3273 = vmatpush1.bf16.msra.mxu0 %v2899
  %3274 = vmatprep.subr.bf16.mxu0 %v2908
  %3275 = vmatpush1.bf16.msra.mxu0 %v2907
  %3276 = vmatprep.subr.bf16.mxu0 %v2916
  %3277 = vmatpush1.bf16.msra.mxu0 %v2915
  %3278 = vmatprep.mubr.bf16.mxu0 %v954
  %3279 = vmatmul.mubr.bf16.gmra.mrb[0].mxu0 %v953
  %v3280 = vpop.f32.mrb[0].mxu0
  %v3281 = vadd.f32 %v3240, %v3280
  %v3282 = vpop.f32.mrb[0].mxu0
  %v3283 = vadd.f32 %v3242, %v3282
  %v3284 = vpop.f32.mrb[0].mxu0
  %v3285 = vpop.f32.mrb[0].mxu0
  %3286 = vdwg.mxu0
  %v3287 = vmax.f32 %v3035, 0.0
  %v3288 = vmax.f32 %v3037, 0.0
  %v3289 = vmax.f32 %v3117, 0.0
  %v3290 = vmax.f32 %v3119, 0.0
  %v3291 = vmax.f32 %v3199, 0.0
  %v3292 = vmax.f32 %v3201, 0.0
  %v3293 = vmax.f32 %v3281, 0.0
  %v3294 = vmax.f32 %v3283, 0.0
  %v3295 = vpack.c.bf16 %v3287, %v3287
  %v3296 = vpack.c.bf16 %v3288, %v3288
  %v3297 = vpack.c.bf16 %v3289, %v3289
  %v3298 = vpack.c.bf16 %v3290, %v3290
  %v3299 = vpack.c.bf16 %v3291, %v3291
  %v3300 = vpack.c.bf16 %v3292, %v3292
  %v3301 = vpack.c.bf16 %v3293, %v3293
  %v3302 = vpack.c.bf16 %v3294, %v3294
  %v3303 = vld [vmem:[%s13] sm:$0xff]
  %v3304 = vld [vmem:[%s13 + $0x8] sm:$0xff]
  %v3305 = vld [vmem:[%s13 + $0x10] sm:$0xff]
  %v3306 = vld [vmem:[%s13 + $0x18] sm:$0xff]
  %v3307 = vld [vmem:[%s13 + $0x20] sm:$0xff]
  %v3308 = vld [vmem:[%s13 + $0x28] sm:$0xff]
  %v3309 = vld [vmem:[%s13 + $0x30] sm:$0xff]
  %v3310 = vld [vmem:[%s13 + $0x38] sm:$0xff]
  %v3311 = vld [vmem:[%s13 + $0x40] sm:$0xff]
  %v3312 = vld [vmem:[%s13 + $0x48] sm:$0xff]
  %v3313 = vld [vmem:[%s13 + $0x50] sm:$0xff]
  %v3314 = vld [vmem:[%s13 + $0x58] sm:$0xff]
  %v3315 = vld [vmem:[%s13 + $0x60] sm:$0xff]
  %v3316 = vld [vmem:[%s13 + $0x68] sm:$0xff]
  %v3317 = vld [vmem:[%s13 + $0x70] sm:$0xff]
  %v3318 = vld [vmem:[%s13 + $0x78] sm:$0xff]
  %v3319 = vld [vmem:[%s13 + $0x80] sm:$0xff]
  %v3320 = vld [vmem:[%s13 + $0x88] sm:$0xff]
  %v3321 = vld [vmem:[%s13 + $0x90] sm:$0xff]
  %v3322 = vld [vmem:[%s13 + $0x98] sm:$0xff]
  %v3323 = vld [vmem:[%s13 + $0xa0] sm:$0xff]
  %v3324 = vld [vmem:[%s13 + $0xa8] sm:$0xff]
  %v3325 = vld [vmem:[%s13 + $0xb0] sm:$0xff]
  %v3326 = vld [vmem:[%s13 + $0xb8] sm:$0xff]
  %v3327 = vld [vmem:[%s13 + $0xc0] sm:$0xff]
  %v3328 = vld [vmem:[%s13 + $0xc8] sm:$0xff]
  %v3329 = vld [vmem:[%s13 + $0xd0] sm:$0xff]
  %v3330 = vld [vmem:[%s13 + $0xd8] sm:$0xff]
  %v3331 = vld [vmem:[%s13 + $0xe0] sm:$0xff]
  %v3332 = vld [vmem:[%s13 + $0xe8] sm:$0xff]
  %v3333 = vld [vmem:[%s13 + $0xf0] sm:$0xff]
  %v3334 = vld [vmem:[%s13 + $0xf8] sm:$0xff]
  %v3335 = vld [vmem:[%s13 + $0x100] sm:$0xff]
  %v3336 = vld [vmem:[%s13 + $0x108] sm:$0xff]
  %v3337 = vld [vmem:[%s13 + $0x110] sm:$0xff]
  %v3338 = vld [vmem:[%s13 + $0x118] sm:$0xff]
  %v3339 = vld [vmem:[%s13 + $0x120] sm:$0xff]
  %v3340 = vld [vmem:[%s13 + $0x128] sm:$0xff]
  %v3341 = vld [vmem:[%s13 + $0x130] sm:$0xff]
  %v3342 = vld [vmem:[%s13 + $0x138] sm:$0xff]
  %v3343 = vld [vmem:[%s13 + $0x140] sm:$0xff]
  %v3344 = vld [vmem:[%s13 + $0x148] sm:$0xff]
  %v3345 = vld [vmem:[%s13 + $0x150] sm:$0xff]
  %v3346 = vld [vmem:[%s13 + $0x158] sm:$0xff]
  %v3347 = vld [vmem:[%s13 + $0x160] sm:$0xff]
  %v3348 = vld [vmem:[%s13 + $0x168] sm:$0xff]
  %v3349 = vld [vmem:[%s13 + $0x170] sm:$0xff]
  %v3350 = vld [vmem:[%s13 + $0x178] sm:$0xff]
  %v3351 = vld [vmem:[%s13 + $0x180] sm:$0xff]
  %v3352 = vld [vmem:[%s13 + $0x188] sm:$0xff]
  %v3353 = vld [vmem:[%s13 + $0x190] sm:$0xff]
  %v3354 = vld [vmem:[%s13 + $0x198] sm:$0xff]
  %v3355 = vld [vmem:[%s13 + $0x1a0] sm:$0xff]
  %v3356 = vld [vmem:[%s13 + $0x1a8] sm:$0xff]
  %v3357 = vld [vmem:[%s13 + $0x1b0] sm:$0xff]
  %v3358 = vld [vmem:[%s13 + $0x1b8] sm:$0xff]
  %v3359 = vld [vmem:[%s13 + $0x1c0] sm:$0xff]
  %v3360 = vld [vmem:[%s13 + $0x1c8] sm:$0xff]
  %v3361 = vld [vmem:[%s13 + $0x1d0] sm:$0xff]
  %v3362 = vld [vmem:[%s13 + $0x1d8] sm:$0xff]
  %v3363 = vld [vmem:[%s13 + $0x1e0] sm:$0xff]
  %v3364 = vld [vmem:[%s13 + $0x1e8] sm:$0xff]
  %v3365 = vld [vmem:[%s13 + $0x1f0] sm:$0xff]
  %v3366 = vld [vmem:[%s13 + $0x1f8] sm:$0xff]
  %v3367 = vld [vmem:[%s13 + $0x200] sm:$0xff]
  %v3368 = vld [vmem:[%s13 + $0x208] sm:$0xff]
  %v3369 = vld [vmem:[%s13 + $0x210] sm:$0xff]
  %v3370 = vld [vmem:[%s13 + $0x218] sm:$0xff]
  %v3371 = vld [vmem:[%s13 + $0x220] sm:$0xff]
  %v3372 = vld [vmem:[%s13 + $0x228] sm:$0xff]
  %v3373 = vld [vmem:[%s13 + $0x230] sm:$0xff]
  %v3374 = vld [vmem:[%s13 + $0x238] sm:$0xff]
  %v3375 = vld [vmem:[%s13 + $0x240] sm:$0xff]
  %v3376 = vld [vmem:[%s13 + $0x248] sm:$0xff]
  %v3377 = vld [vmem:[%s13 + $0x250] sm:$0xff]
  %v3378 = vld [vmem:[%s13 + $0x258] sm:$0xff]
  %v3379 = vld [vmem:[%s13 + $0x260] sm:$0xff]
  %v3380 = vld [vmem:[%s13 + $0x268] sm:$0xff]
  %v3381 = vld [vmem:[%s13 + $0x270] sm:$0xff]
  %v3382 = vld [vmem:[%s13 + $0x278] sm:$0xff]
  %v3383 = vld [vmem:[%s13 + $0x280] sm:$0xff]
  %v3384 = vld [vmem:[%s13 + $0x288] sm:$0xff]
  %v3385 = vld [vmem:[%s13 + $0x290] sm:$0xff]
  %v3386 = vld [vmem:[%s13 + $0x298] sm:$0xff]
  %v3387 = vld [vmem:[%s13 + $0x2a0] sm:$0xff]
  %v3388 = vld [vmem:[%s13 + $0x2a8] sm:$0xff]
  %v3389 = vld [vmem:[%s13 + $0x2b0] sm:$0xff]
  %v3390 = vld [vmem:[%s13 + $0x2b8] sm:$0xff]
  %v3391 = vld [vmem:[%s13 + $0x2c0] sm:$0xff]
  %v3392 = vld [vmem:[%s13 + $0x2c8] sm:$0xff]
  %v3393 = vld [vmem:[%s13 + $0x2d0] sm:$0xff]
  %v3394 = vld [vmem:[%s13 + $0x2d8] sm:$0xff]
  %v3395 = vld [vmem:[%s13 + $0x2e0] sm:$0xff]
  %v3396 = vld [vmem:[%s13 + $0x2e8] sm:$0xff]
  %v3397 = vld [vmem:[%s13 + $0x2f0] sm:$0xff]
  %v3398 = vld [vmem:[%s13 + $0x2f8] sm:$0xff]
  %v3399 = vld [vmem:[%s13 + $0x300] sm:$0xff]
  %v3400 = vld [vmem:[%s13 + $0x308] sm:$0xff]
  %v3401 = vld [vmem:[%s13 + $0x310] sm:$0xff]
  %v3402 = vld [vmem:[%s13 + $0x318] sm:$0xff]
  %v3403 = vld [vmem:[%s13 + $0x320] sm:$0xff]
  %v3404 = vld [vmem:[%s13 + $0x328] sm:$0xff]
  %v3405 = vld [vmem:[%s13 + $0x330] sm:$0xff]
  %v3406 = vld [vmem:[%s13 + $0x338] sm:$0xff]
  %v3407 = vld [vmem:[%s13 + $0x340] sm:$0xff]
  %v3408 = vld [vmem:[%s13 + $0x348] sm:$0xff]
  %v3409 = vld [vmem:[%s13 + $0x350] sm:$0xff]
  %v3410 = vld [vmem:[%s13 + $0x358] sm:$0xff]
  %v3411 = vld [vmem:[%s13 + $0x360] sm:$0xff]
  %v3412 = vld [vmem:[%s13 + $0x368] sm:$0xff]
  %v3413 = vld [vmem:[%s13 + $0x370] sm:$0xff]
  %v3414 = vld [vmem:[%s13 + $0x378] sm:$0xff]
  %v3415 = vld [vmem:[%s13 + $0x380] sm:$0xff]
  %v3416 = vld [vmem:[%s13 + $0x388] sm:$0xff]
  %v3417 = vld [vmem:[%s13 + $0x390] sm:$0xff]
  %v3418 = vld [vmem:[%s13 + $0x398] sm:$0xff]
  %v3419 = vld [vmem:[%s13 + $0x3a0] sm:$0xff]
  %v3420 = vld [vmem:[%s13 + $0x3a8] sm:$0xff]
  %v3421 = vld [vmem:[%s13 + $0x3b0] sm:$0xff]
  %v3422 = vld [vmem:[%s13 + $0x3b8] sm:$0xff]
  %v3423 = vld [vmem:[%s13 + $0x3c0] sm:$0xff]
  %v3424 = vld [vmem:[%s13 + $0x3c8] sm:$0xff]
  %v3425 = vld [vmem:[%s13 + $0x3d0] sm:$0xff]
  %v3426 = vld [vmem:[%s13 + $0x3d8] sm:$0xff]
  %v3427 = vld [vmem:[%s13 + $0x3e0] sm:$0xff]
  %v3428 = vld [vmem:[%s13 + $0x3e8] sm:$0xff]
  %v3429 = vld [vmem:[%s13 + $0x3f0] sm:$0xff]
  %v3430 = vld [vmem:[%s13 + $0x3f8] sm:$0xff]
  %v3431 = vld [vmem:[%s13 + $0x400] sm:$0xff]
  %v3432 = vld [vmem:[%s13 + $0x408] sm:$0xff]
  %v3433 = vld [vmem:[%s13 + $0x410] sm:$0xff]
  %v3434 = vld [vmem:[%s13 + $0x418] sm:$0xff]
  %v3435 = vld [vmem:[%s13 + $0x420] sm:$0xff]
  %v3436 = vld [vmem:[%s13 + $0x428] sm:$0xff]
  %v3437 = vld [vmem:[%s13 + $0x430] sm:$0xff]
  %v3438 = vld [vmem:[%s13 + $0x438] sm:$0xff]
  %v3439 = vld [vmem:[%s13 + $0x440] sm:$0xff]
  %v3440 = vld [vmem:[%s13 + $0x448] sm:$0xff]
  %v3441 = vld [vmem:[%s13 + $0x450] sm:$0xff]
  %v3442 = vld [vmem:[%s13 + $0x458] sm:$0xff]
  %v3443 = vld [vmem:[%s13 + $0x460] sm:$0xff]
  %v3444 = vld [vmem:[%s13 + $0x468] sm:$0xff]
  %v3445 = vld [vmem:[%s13 + $0x470] sm:$0xff]
  %v3446 = vld [vmem:[%s13 + $0x478] sm:$0xff]
  %v3447 = vld [vmem:[%s13 + $0x480] sm:$0xff]
  %v3448 = vld [vmem:[%s13 + $0x488] sm:$0xff]
  %v3449 = vld [vmem:[%s13 + $0x490] sm:$0xff]
  %v3450 = vld [vmem:[%s13 + $0x498] sm:$0xff]
  %v3451 = vld [vmem:[%s13 + $0x4a0] sm:$0xff]
  %v3452 = vld [vmem:[%s13 + $0x4a8] sm:$0xff]
  %v3453 = vld [vmem:[%s13 + $0x4b0] sm:$0xff]
  %v3454 = vld [vmem:[%s13 + $0x4b8] sm:$0xff]
  %v3455 = vld [vmem:[%s13 + $0x4c0] sm:$0xff]
  %v3456 = vld [vmem:[%s13 + $0x4c8] sm:$0xff]
  %v3457 = vld [vmem:[%s13 + $0x4d0] sm:$0xff]
  %v3458 = vld [vmem:[%s13 + $0x4d8] sm:$0xff]
  %v3459 = vld [vmem:[%s13 + $0x4e0] sm:$0xff]
  %v3460 = vld [vmem:[%s13 + $0x4e8] sm:$0xff]
  %v3461 = vld [vmem:[%s13 + $0x4f0] sm:$0xff]
  %v3462 = vld [vmem:[%s13 + $0x4f8] sm:$0xff]
  %v3463 = vld [vmem:[%s13 + $0x500] sm:$0xff]
  %v3464 = vld [vmem:[%s13 + $0x508] sm:$0xff]
  %v3465 = vld [vmem:[%s13 + $0x510] sm:$0xff]
  %v3466 = vld [vmem:[%s13 + $0x518] sm:$0xff]
  %v3467 = vld [vmem:[%s13 + $0x520] sm:$0xff]
  %v3468 = vld [vmem:[%s13 + $0x528] sm:$0xff]
  %v3469 = vld [vmem:[%s13 + $0x530] sm:$0xff]
  %v3470 = vld [vmem:[%s13 + $0x538] sm:$0xff]
  %v3471 = vld [vmem:[%s13 + $0x540] sm:$0xff]
  %v3472 = vld [vmem:[%s13 + $0x548] sm:$0xff]
  %v3473 = vld [vmem:[%s13 + $0x550] sm:$0xff]
  %v3474 = vld [vmem:[%s13 + $0x558] sm:$0xff]
  %v3475 = vld [vmem:[%s13 + $0x560] sm:$0xff]
  %v3476 = vld [vmem:[%s13 + $0x568] sm:$0xff]
  %v3477 = vld [vmem:[%s13 + $0x570] sm:$0xff]
  %v3478 = vld [vmem:[%s13 + $0x578] sm:$0xff]
  %v3479 = vld [vmem:[%s13 + $0x580] sm:$0xff]
  %v3480 = vld [vmem:[%s13 + $0x588] sm:$0xff]
  %v3481 = vld [vmem:[%s13 + $0x590] sm:$0xff]
  %v3482 = vld [vmem:[%s13 + $0x598] sm:$0xff]
  %v3483 = vld [vmem:[%s13 + $0x5a0] sm:$0xff]
  %v3484 = vld [vmem:[%s13 + $0x5a8] sm:$0xff]
  %v3485 = vld [vmem:[%s13 + $0x5b0] sm:$0xff]
  %v3486 = vld [vmem:[%s13 + $0x5b8] sm:$0xff]
  %v3487 = vld [vmem:[%s13 + $0x5c0] sm:$0xff]
  %v3488 = vld [vmem:[%s13 + $0x5c8] sm:$0xff]
  %v3489 = vld [vmem:[%s13 + $0x5d0] sm:$0xff]
  %v3490 = vld [vmem:[%s13 + $0x5d8] sm:$0xff]
  %v3491 = vld [vmem:[%s13 + $0x5e0] sm:$0xff]
  %v3492 = vld [vmem:[%s13 + $0x5e8] sm:$0xff]
  %v3493 = vld [vmem:[%s13 + $0x5f0] sm:$0xff]
  %v3494 = vld [vmem:[%s13 + $0x5f8] sm:$0xff]
  %v3495 = vld [vmem:[%s13 + $0x600] sm:$0xff]
  %v3496 = vld [vmem:[%s13 + $0x608] sm:$0xff]
  %v3497 = vld [vmem:[%s13 + $0x610] sm:$0xff]
  %v3498 = vld [vmem:[%s13 + $0x618] sm:$0xff]
  %v3499 = vld [vmem:[%s13 + $0x620] sm:$0xff]
  %v3500 = vld [vmem:[%s13 + $0x628] sm:$0xff]
  %v3501 = vld [vmem:[%s13 + $0x630] sm:$0xff]
  %v3502 = vld [vmem:[%s13 + $0x638] sm:$0xff]
  %v3503 = vld [vmem:[%s13 + $0x640] sm:$0xff]
  %v3504 = vld [vmem:[%s13 + $0x648] sm:$0xff]
  %v3505 = vld [vmem:[%s13 + $0x650] sm:$0xff]
  %v3506 = vld [vmem:[%s13 + $0x658] sm:$0xff]
  %v3507 = vld [vmem:[%s13 + $0x660] sm:$0xff]
  %v3508 = vld [vmem:[%s13 + $0x668] sm:$0xff]
  %v3509 = vld [vmem:[%s13 + $0x670] sm:$0xff]
  %v3510 = vld [vmem:[%s13 + $0x678] sm:$0xff]
  %v3511 = vld [vmem:[%s13 + $0x680] sm:$0xff]
  %v3512 = vld [vmem:[%s13 + $0x688] sm:$0xff]
  %v3513 = vld [vmem:[%s13 + $0x690] sm:$0xff]
  %v3514 = vld [vmem:[%s13 + $0x698] sm:$0xff]
  %v3515 = vld [vmem:[%s13 + $0x6a0] sm:$0xff]
  %v3516 = vld [vmem:[%s13 + $0x6a8] sm:$0xff]
  %v3517 = vld [vmem:[%s13 + $0x6b0] sm:$0xff]
  %v3518 = vld [vmem:[%s13 + $0x6b8] sm:$0xff]
  %v3519 = vld [vmem:[%s13 + $0x6c0] sm:$0xff]
  %v3520 = vld [vmem:[%s13 + $0x6c8] sm:$0xff]
  %v3521 = vld [vmem:[%s13 + $0x6d0] sm:$0xff]
  %v3522 = vld [vmem:[%s13 + $0x6d8] sm:$0xff]
  %v3523 = vld [vmem:[%s13 + $0x6e0] sm:$0xff]
  %v3524 = vld [vmem:[%s13 + $0x6e8] sm:$0xff]
  %v3525 = vld [vmem:[%s13 + $0x6f0] sm:$0xff]
  %v3526 = vld [vmem:[%s13 + $0x6f8] sm:$0xff]
  %v3527 = vld [vmem:[%s14] sm:$0x7f]
  %v3528 = vunpack.c.0.s8 %v3303
  %v3529 = vunpack.c.0.s8 %v3304
  %v3530 = vunpack.c.0.s8 %v3305
  %v3531 = vunpack.c.0.s8 %v3306
  %v3532 = vunpack.c.0.s8 %v3307
  %v3533 = vunpack.c.0.s8 %v3308
  %v3534 = vunpack.c.0.s8 %v3309
  %v3535 = vunpack.c.1.s8 %v3303
  %v3536 = vunpack.c.1.s8 %v3304
  %v3537 = vunpack.c.1.s8 %v3305
  %v3538 = vunpack.c.1.s8 %v3306
  %v3539 = vunpack.c.1.s8 %v3307
  %v3540 = vunpack.c.1.s8 %v3308
  %v3541 = vunpack.c.1.s8 %v3309
  %v3542 = vunpack.c.2.s8 %v3303
  %v3543 = vunpack.c.2.s8 %v3304
  %v3544 = vunpack.c.2.s8 %v3305
  %v3545 = vunpack.c.2.s8 %v3306
  %v3546 = vunpack.c.2.s8 %v3307
  %v3547 = vunpack.c.2.s8 %v3308
  %v3548 = vunpack.c.2.s8 %v3309
  %v3549 = vunpack.c.3.s8 %v3303
  %v3550 = vunpack.c.3.s8 %v3304
  %v3551 = vunpack.c.3.s8 %v3305
  %v3552 = vunpack.c.3.s8 %v3306
  %v3553 = vunpack.c.3.s8 %v3307
  %v3554 = vunpack.c.3.s8 %v3308
  %v3555 = vunpack.c.3.s8 %v3309
  %v3556 = vunpack.c.0.s8 %v3310
  %v3557 = vunpack.c.0.s8 %v3311
  %v3558 = vunpack.c.0.s8 %v3312
  %v3559 = vunpack.c.0.s8 %v3313
  %v3560 = vunpack.c.0.s8 %v3314
  %v3561 = vunpack.c.0.s8 %v3315
  %v3562 = vunpack.c.0.s8 %v3316
  %v3563 = vunpack.c.1.s8 %v3310
  %v3564 = vunpack.c.1.s8 %v3311
  %v3565 = vunpack.c.1.s8 %v3312
  %v3566 = vunpack.c.1.s8 %v3313
  %v3567 = vunpack.c.1.s8 %v3314
  %v3568 = vunpack.c.1.s8 %v3315
  %v3569 = vunpack.c.1.s8 %v3316
  %v3570 = vunpack.c.2.s8 %v3310
  %v3571 = vunpack.c.2.s8 %v3311
  %v3572 = vunpack.c.2.s8 %v3312
  %v3573 = vunpack.c.2.s8 %v3313
  %v3574 = vunpack.c.2.s8 %v3314
  %v3575 = vunpack.c.2.s8 %v3315
  %v3576 = vunpack.c.2.s8 %v3316
  %v3577 = vunpack.c.3.s8 %v3310
  %v3578 = vunpack.c.3.s8 %v3311
  %v3579 = vunpack.c.3.s8 %v3312
  %v3580 = vunpack.c.3.s8 %v3313
  %v3581 = vunpack.c.3.s8 %v3314
  %v3582 = vunpack.c.3.s8 %v3315
  %v3583 = vunpack.c.3.s8 %v3316
  %v3584 = vunpack.c.0.s8 %v3317
  %v3585 = vunpack.c.0.s8 %v3318
  %v3586 = vunpack.c.0.s8 %v3319
  %v3587 = vunpack.c.0.s8 %v3320
  %v3588 = vunpack.c.0.s8 %v3321
  %v3589 = vunpack.c.0.s8 %v3322
  %v3590 = vunpack.c.0.s8 %v3323
  %v3591 = vunpack.c.1.s8 %v3317
  %v3592 = vunpack.c.1.s8 %v3318
  %v3593 = vunpack.c.1.s8 %v3319
  %v3594 = vunpack.c.1.s8 %v3320
  %v3595 = vunpack.c.1.s8 %v3321
  %v3596 = vunpack.c.1.s8 %v3322
  %v3597 = vunpack.c.1.s8 %v3323
  %v3598 = vunpack.c.2.s8 %v3317
  %v3599 = vunpack.c.2.s8 %v3318
  %v3600 = vunpack.c.2.s8 %v3319
  %v3601 = vunpack.c.2.s8 %v3320
  %v3602 = vunpack.c.2.s8 %v3321
  %v3603 = vunpack.c.2.s8 %v3322
  %v3604 = vunpack.c.2.s8 %v3323
  %v3605 = vunpack.c.3.s8 %v3317
  %v3606 = vunpack.c.3.s8 %v3318
  %v3607 = vunpack.c.3.s8 %v3319
  %v3608 = vunpack.c.3.s8 %v3320
  %v3609 = vunpack.c.3.s8 %v3321
  %v3610 = vunpack.c.3.s8 %v3322
  %v3611 = vunpack.c.3.s8 %v3323
  %v3612 = vunpack.c.0.s8 %v3324
  %v3613 = vunpack.c.0.s8 %v3325
  %v3614 = vunpack.c.0.s8 %v3326
  %v3615 = vunpack.c.0.s8 %v3327
  %v3616 = vunpack.c.0.s8 %v3328
  %v3617 = vunpack.c.0.s8 %v3329
  %v3618 = vunpack.c.0.s8 %v3330
  %v3619 = vunpack.c.1.s8 %v3324
  %v3620 = vunpack.c.1.s8 %v3325
  %v3621 = vunpack.c.1.s8 %v3326
  %v3622 = vunpack.c.1.s8 %v3327
  %v3623 = vunpack.c.1.s8 %v3328
  %v3624 = vunpack.c.1.s8 %v3329
  %v3625 = vunpack.c.1.s8 %v3330
  %v3626 = vunpack.c.2.s8 %v3324
  %v3627 = vunpack.c.2.s8 %v3325
  %v3628 = vunpack.c.2.s8 %v3326
  %v3629 = vunpack.c.2.s8 %v3327
  %v3630 = vunpack.c.2.s8 %v3328
  %v3631 = vunpack.c.2.s8 %v3329
  %v3632 = vunpack.c.2.s8 %v3330
  %v3633 = vunpack.c.3.s8 %v3324
  %v3634 = vunpack.c.3.s8 %v3325
  %v3635 = vunpack.c.3.s8 %v3326
  %v3636 = vunpack.c.3.s8 %v3327
  %v3637 = vunpack.c.3.s8 %v3328
  %v3638 = vunpack.c.3.s8 %v3329
  %v3639 = vunpack.c.3.s8 %v3330
  %v3640 = vunpack.c.0.s8 %v3331
  %v3641 = vunpack.c.0.s8 %v3332
  %v3642 = vunpack.c.0.s8 %v3333
  %v3643 = vunpack.c.0.s8 %v3334
  %v3644 = vunpack.c.0.s8 %v3335
  %v3645 = vunpack.c.0.s8 %v3336
  %v3646 = vunpack.c.0.s8 %v3337
  %v3647 = vunpack.c.1.s8 %v3331
  %v3648 = vunpack.c.1.s8 %v3332
  %v3649 = vunpack.c.1.s8 %v3333
  %v3650 = vunpack.c.1.s8 %v3334
  %v3651 = vunpack.c.1.s8 %v3335
  %v3652 = vunpack.c.1.s8 %v3336
  %v3653 = vunpack.c.1.s8 %v3337
  %v3654 = vunpack.c.2.s8 %v3331
  %v3655 = vunpack.c.2.s8 %v3332
  %v3656 = vunpack.c.2.s8 %v3333
  %v3657 = vunpack.c.2.s8 %v3334
  %v3658 = vunpack.c.2.s8 %v3335
  %v3659 = vunpack.c.2.s8 %v3336
  %v3660 = vunpack.c.2.s8 %v3337
  %v3661 = vunpack.c.3.s8 %v3331
  %v3662 = vunpack.c.3.s8 %v3332
  %v3663 = vunpack.c.3.s8 %v3333
  %v3664 = vunpack.c.3.s8 %v3334
  %v3665 = vunpack.c.3.s8 %v3335
  %v3666 = vunpack.c.3.s8 %v3336
  %v3667 = vunpack.c.3.s8 %v3337
  %v3668 = vunpack.c.0.s8 %v3338
  %v3669 = vunpack.c.0.s8 %v3339
  %v3670 = vunpack.c.0.s8 %v3340
  %v3671 = vunpack.c.0.s8 %v3341
  %v3672 = vunpack.c.0.s8 %v3342
  %v3673 = vunpack.c.0.s8 %v3343
  %v3674 = vunpack.c.0.s8 %v3344
  %v3675 = vunpack.c.1.s8 %v3338
  %v3676 = vunpack.c.1.s8 %v3339
  %v3677 = vunpack.c.1.s8 %v3340
  %v3678 = vunpack.c.1.s8 %v3341
  %v3679 = vunpack.c.1.s8 %v3342
  %v3680 = vunpack.c.1.s8 %v3343
  %v3681 = vunpack.c.1.s8 %v3344
  %v3682 = vunpack.c.2.s8 %v3338
  %v3683 = vunpack.c.2.s8 %v3339
  %v3684 = vunpack.c.2.s8 %v3340
  %v3685 = vunpack.c.2.s8 %v3341
  %v3686 = vunpack.c.2.s8 %v3342
  %v3687 = vunpack.c.2.s8 %v3343
  %v3688 = vunpack.c.2.s8 %v3344
  %v3689 = vunpack.c.3.s8 %v3338
  %v3690 = vunpack.c.3.s8 %v3339
  %v3691 = vunpack.c.3.s8 %v3340
  %v3692 = vunpack.c.3.s8 %v3341
  %v3693 = vunpack.c.3.s8 %v3342
  %v3694 = vunpack.c.3.s8 %v3343
  %v3695 = vunpack.c.3.s8 %v3344
  %v3696 = vunpack.c.0.s8 %v3345
  %v3697 = vunpack.c.0.s8 %v3346
  %v3698 = vunpack.c.0.s8 %v3347
  %v3699 = vunpack.c.0.s8 %v3348
  %v3700 = vunpack.c.0.s8 %v3349
  %v3701 = vunpack.c.0.s8 %v3350
  %v3702 = vunpack.c.0.s8 %v3351
  %v3703 = vunpack.c.1.s8 %v3345
  %v3704 = vunpack.c.1.s8 %v3346
  %v3705 = vunpack.c.1.s8 %v3347
  %v3706 = vunpack.c.1.s8 %v3348
  %v3707 = vunpack.c.1.s8 %v3349
  %v3708 = vunpack.c.1.s8 %v3350
  %v3709 = vunpack.c.1.s8 %v3351
  %v3710 = vunpack.c.2.s8 %v3345
  %v3711 = vunpack.c.2.s8 %v3346
  %v3712 = vunpack.c.2.s8 %v3347
  %v3713 = vunpack.c.2.s8 %v3348
  %v3714 = vunpack.c.2.s8 %v3349
  %v3715 = vunpack.c.2.s8 %v3350
  %v3716 = vunpack.c.2.s8 %v3351
  %v3717 = vunpack.c.3.s8 %v3345
  %v3718 = vunpack.c.3.s8 %v3346
  %v3719 = vunpack.c.3.s8 %v3347
  %v3720 = vunpack.c.3.s8 %v3348
  %v3721 = vunpack.c.3.s8 %v3349
  %v3722 = vunpack.c.3.s8 %v3350
  %v3723 = vunpack.c.3.s8 %v3351
  %v3724 = vunpack.c.0.s8 %v3352
  %v3725 = vunpack.c.0.s8 %v3353
  %v3726 = vunpack.c.0.s8 %v3354
  %v3727 = vunpack.c.0.s8 %v3355
  %v3728 = vunpack.c.0.s8 %v3356
  %v3729 = vunpack.c.0.s8 %v3357
  %v3730 = vunpack.c.0.s8 %v3358
  %v3731 = vunpack.c.1.s8 %v3352
  %v3732 = vunpack.c.1.s8 %v3353
  %v3733 = vunpack.c.1.s8 %v3354
  %v3734 = vunpack.c.1.s8 %v3355
  %v3735 = vunpack.c.1.s8 %v3356
  %v3736 = vunpack.c.1.s8 %v3357
  %v3737 = vunpack.c.1.s8 %v3358
  %v3738 = vunpack.c.2.s8 %v3352
  %v3739 = vunpack.c.2.s8 %v3353
  %v3740 = vunpack.c.2.s8 %v3354
  %v3741 = vunpack.c.2.s8 %v3355
  %v3742 = vunpack.c.2.s8 %v3356
  %v3743 = vunpack.c.2.s8 %v3357
  %v3744 = vunpack.c.2.s8 %v3358
  %v3745 = vunpack.c.3.s8 %v3352
  %v3746 = vunpack.c.3.s8 %v3353
  %v3747 = vunpack.c.3.s8 %v3354
  %v3748 = vunpack.c.3.s8 %v3355
  %v3749 = vunpack.c.3.s8 %v3356
  %v3750 = vunpack.c.3.s8 %v3357
  %v3751 = vunpack.c.3.s8 %v3358
  %v3752 = vunpack.c.0.s8 %v3359
  %v3753 = vunpack.c.0.s8 %v3360
  %v3754 = vunpack.c.0.s8 %v3361
  %v3755 = vunpack.c.0.s8 %v3362
  %v3756 = vunpack.c.0.s8 %v3363
  %v3757 = vunpack.c.0.s8 %v3364
  %v3758 = vunpack.c.0.s8 %v3365
  %v3759 = vunpack.c.1.s8 %v3359
  %v3760 = vunpack.c.1.s8 %v3360
  %v3761 = vunpack.c.1.s8 %v3361
  %v3762 = vunpack.c.1.s8 %v3362
  %v3763 = vunpack.c.1.s8 %v3363
  %v3764 = vunpack.c.1.s8 %v3364
  %v3765 = vunpack.c.1.s8 %v3365
  %v3766 = vunpack.c.2.s8 %v3359
  %v3767 = vunpack.c.2.s8 %v3360
  %v3768 = vunpack.c.2.s8 %v3361
  %v3769 = vunpack.c.2.s8 %v3362
  %v3770 = vunpack.c.2.s8 %v3363
  %v3771 = vunpack.c.2.s8 %v3364
  %v3772 = vunpack.c.2.s8 %v3365
  %v3773 = vunpack.c.3.s8 %v3359
  %v3774 = vunpack.c.3.s8 %v3360
  %v3775 = vunpack.c.3.s8 %v3361
  %v3776 = vunpack.c.3.s8 %v3362
  %v3777 = vunpack.c.3.s8 %v3363
  %v3778 = vunpack.c.3.s8 %v3364
  %v3779 = vunpack.c.3.s8 %v3365
  %v3780 = vunpack.c.0.s8 %v3366
  %v3781 = vunpack.c.0.s8 %v3367
  %v3782 = vunpack.c.0.s8 %v3368
  %v3783 = vunpack.c.0.s8 %v3369
  %v3784 = vunpack.c.0.s8 %v3370
  %v3785 = vunpack.c.0.s8 %v3371
  %v3786 = vunpack.c.0.s8 %v3372
  %v3787 = vunpack.c.1.s8 %v3366
  %v3788 = vunpack.c.1.s8 %v3367
  %v3789 = vunpack.c.1.s8 %v3368
  %v3790 = vunpack.c.1.s8 %v3369
  %v3791 = vunpack.c.1.s8 %v3370
  %v3792 = vunpack.c.1.s8 %v3371
  %v3793 = vunpack.c.1.s8 %v3372
  %v3794 = vunpack.c.2.s8 %v3366
  %v3795 = vunpack.c.2.s8 %v3367
  %v3796 = vunpack.c.2.s8 %v3368
  %v3797 = vunpack.c.2.s8 %v3369
  %v3798 = vunpack.c.2.s8 %v3370
  %v3799 = vunpack.c.2.s8 %v3371
  %v3800 = vunpack.c.2.s8 %v3372
  %v3801 = vunpack.c.3.s8 %v3366
  %v3802 = vunpack.c.3.s8 %v3367
  %v3803 = vunpack.c.3.s8 %v3368
  %v3804 = vunpack.c.3.s8 %v3369
  %v3805 = vunpack.c.3.s8 %v3370
  %v3806 = vunpack.c.3.s8 %v3371
  %v3807 = vunpack.c.3.s8 %v3372
  %v3808 = vunpack.c.0.s8 %v3373
  %v3809 = vunpack.c.0.s8 %v3374
  %v3810 = vunpack.c.0.s8 %v3375
  %v3811 = vunpack.c.0.s8 %v3376
  %v3812 = vunpack.c.0.s8 %v3377
  %v3813 = vunpack.c.0.s8 %v3378
  %v3814 = vunpack.c.0.s8 %v3379
  %v3815 = vunpack.c.1.s8 %v3373
  %v3816 = vunpack.c.1.s8 %v3374
  %v3817 = vunpack.c.1.s8 %v3375
  %v3818 = vunpack.c.1.s8 %v3376
  %v3819 = vunpack.c.1.s8 %v3377
  %v3820 = vunpack.c.1.s8 %v3378
  %v3821 = vunpack.c.1.s8 %v3379
  %v3822 = vunpack.c.2.s8 %v3373
  %v3823 = vunpack.c.2.s8 %v3374
  %v3824 = vunpack.c.2.s8 %v3375
  %v3825 = vunpack.c.2.s8 %v3376
  %v3826 = vunpack.c.2.s8 %v3377
  %v3827 = vunpack.c.2.s8 %v3378
  %v3828 = vunpack.c.2.s8 %v3379
  %v3829 = vunpack.c.3.s8 %v3373
  %v3830 = vunpack.c.3.s8 %v3374
  %v3831 = vunpack.c.3.s8 %v3375
  %v3832 = vunpack.c.3.s8 %v3376
  %v3833 = vunpack.c.3.s8 %v3377
  %v3834 = vunpack.c.3.s8 %v3378
  %v3835 = vunpack.c.3.s8 %v3379
  %v3836 = vunpack.c.0.s8 %v3380
  %v3837 = vunpack.c.0.s8 %v3381
  %v3838 = vunpack.c.0.s8 %v3382
  %v3839 = vunpack.c.0.s8 %v3383
  %v3840 = vunpack.c.0.s8 %v3384
  %v3841 = vunpack.c.0.s8 %v3385
  %v3842 = vunpack.c.0.s8 %v3386
  %v3843 = vunpack.c.1.s8 %v3380
  %v3844 = vunpack.c.1.s8 %v3381
  %v3845 = vunpack.c.1.s8 %v3382
  %v3846 = vunpack.c.1.s8 %v3383
  %v3847 = vunpack.c.1.s8 %v3384
  %v3848 = vunpack.c.1.s8 %v3385
  %v3849 = vunpack.c.1.s8 %v3386
  %v3850 = vunpack.c.2.s8 %v3380
  %v3851 = vunpack.c.2.s8 %v3381
  %v3852 = vunpack.c.2.s8 %v3382
  %v3853 = vunpack.c.2.s8 %v3383
  %v3854 = vunpack.c.2.s8 %v3384
  %v3855 = vunpack.c.2.s8 %v3385
  %v3856 = vunpack.c.2.s8 %v3386
  %v3857 = vunpack.c.3.s8 %v3380
  %v3858 = vunpack.c.3.s8 %v3381
  %v3859 = vunpack.c.3.s8 %v3382
  %v3860 = vunpack.c.3.s8 %v3383
  %v3861 = vunpack.c.3.s8 %v3384
  %v3862 = vunpack.c.3.s8 %v3385
  %v3863 = vunpack.c.3.s8 %v3386
  %v3864 = vunpack.c.0.s8 %v3387
  %v3865 = vunpack.c.0.s8 %v3388
  %v3866 = vunpack.c.0.s8 %v3389
  %v3867 = vunpack.c.0.s8 %v3390
  %v3868 = vunpack.c.0.s8 %v3391
  %v3869 = vunpack.c.0.s8 %v3392
  %v3870 = vunpack.c.0.s8 %v3393
  %v3871 = vunpack.c.1.s8 %v3387
  %v3872 = vunpack.c.1.s8 %v3388
  %v3873 = vunpack.c.1.s8 %v3389
  %v3874 = vunpack.c.1.s8 %v3390
  %v3875 = vunpack.c.1.s8 %v3391
  %v3876 = vunpack.c.1.s8 %v3392
  %v3877 = vunpack.c.1.s8 %v3393
  %v3878 = vunpack.c.2.s8 %v3387
  %v3879 = vunpack.c.2.s8 %v3388
  %v3880 = vunpack.c.2.s8 %v3389
  %v3881 = vunpack.c.2.s8 %v3390
  %v3882 = vunpack.c.2.s8 %v3391
  %v3883 = vunpack.c.2.s8 %v3392
  %v3884 = vunpack.c.2.s8 %v3393
  %v3885 = vunpack.c.3.s8 %v3387
  %v3886 = vunpack.c.3.s8 %v3388
  %v3887 = vunpack.c.3.s8 %v3389
  %v3888 = vunpack.c.3.s8 %v3390
  %v3889 = vunpack.c.3.s8 %v3391
  %v3890 = vunpack.c.3.s8 %v3392
  %v3891 = vunpack.c.3.s8 %v3393
  %v3892 = vunpack.c.0.s8 %v3394
  %v3893 = vunpack.c.0.s8 %v3395
  %v3894 = vunpack.c.0.s8 %v3396
  %v3895 = vunpack.c.0.s8 %v3397
  %v3896 = vunpack.c.0.s8 %v3398
  %v3897 = vunpack.c.0.s8 %v3399
  %v3898 = vunpack.c.0.s8 %v3400
  %v3899 = vunpack.c.1.s8 %v3394
  %v3900 = vunpack.c.1.s8 %v3395
  %v3901 = vunpack.c.1.s8 %v3396
  %v3902 = vunpack.c.1.s8 %v3397
  %v3903 = vunpack.c.1.s8 %v3398
  %v3904 = vunpack.c.1.s8 %v3399
  %v3905 = vunpack.c.1.s8 %v3400
  %v3906 = vunpack.c.2.s8 %v3394
  %v3907 = vunpack.c.2.s8 %v3395
  %v3908 = vunpack.c.2.s8 %v3396
  %v3909 = vunpack.c.2.s8 %v3397
  %v3910 = vunpack.c.2.s8 %v3398
  %v3911 = vunpack.c.2.s8 %v3399
  %v3912 = vunpack.c.2.s8 %v3400
  %v3913 = vunpack.c.3.s8 %v3394
  %v3914 = vunpack.c.3.s8 %v3395
  %v3915 = vunpack.c.3.s8 %v3396
  %v3916 = vunpack.c.3.s8 %v3397
  %v3917 = vunpack.c.3.s8 %v3398
  %v3918 = vunpack.c.3.s8 %v3399
  %v3919 = vunpack.c.3.s8 %v3400
  %v3920 = vunpack.c.0.s8 %v3401
  %v3921 = vunpack.c.0.s8 %v3402
  %v3922 = vunpack.c.0.s8 %v3403
  %v3923 = vunpack.c.0.s8 %v3404
  %v3924 = vunpack.c.0.s8 %v3405
  %v3925 = vunpack.c.0.s8 %v3406
  %v3926 = vunpack.c.0.s8 %v3407
  %v3927 = vunpack.c.1.s8 %v3401
  %v3928 = vunpack.c.1.s8 %v3402
  %v3929 = vunpack.c.1.s8 %v3403
  %v3930 = vunpack.c.1.s8 %v3404
  %v3931 = vunpack.c.1.s8 %v3405
  %v3932 = vunpack.c.1.s8 %v3406
  %v3933 = vunpack.c.1.s8 %v3407
  %v3934 = vunpack.c.2.s8 %v3401
  %v3935 = vunpack.c.2.s8 %v3402
  %v3936 = vunpack.c.2.s8 %v3403
  %v3937 = vunpack.c.2.s8 %v3404
  %v3938 = vunpack.c.2.s8 %v3405
  %v3939 = vunpack.c.2.s8 %v3406
  %v3940 = vunpack.c.2.s8 %v3407
  %v3941 = vunpack.c.3.s8 %v3401
  %v3942 = vunpack.c.3.s8 %v3402
  %v3943 = vunpack.c.3.s8 %v3403
  %v3944 = vunpack.c.3.s8 %v3404
  %v3945 = vunpack.c.3.s8 %v3405
  %v3946 = vunpack.c.3.s8 %v3406
  %v3947 = vunpack.c.3.s8 %v3407
  %v3948 = vunpack.c.0.s8 %v3408
  %v3949 = vunpack.c.0.s8 %v3409
  %v3950 = vunpack.c.0.s8 %v3410
  %v3951 = vunpack.c.0.s8 %v3411
  %v3952 = vunpack.c.0.s8 %v3412
  %v3953 = vunpack.c.0.s8 %v3413
  %v3954 = vunpack.c.0.s8 %v3414
  %v3955 = vunpack.c.1.s8 %v3408
  %v3956 = vunpack.c.1.s8 %v3409
  %v3957 = vunpack.c.1.s8 %v3410
  %v3958 = vunpack.c.1.s8 %v3411
  %v3959 = vunpack.c.1.s8 %v3412
  %v3960 = vunpack.c.1.s8 %v3413
  %v3961 = vunpack.c.1.s8 %v3414
  %v3962 = vunpack.c.2.s8 %v3408
  %v3963 = vunpack.c.2.s8 %v3409
  %v3964 = vunpack.c.2.s8 %v3410
  %v3965 = vunpack.c.2.s8 %v3411
  %v3966 = vunpack.c.2.s8 %v3412
  %v3967 = vunpack.c.2.s8 %v3413
  %v3968 = vunpack.c.2.s8 %v3414
  %v3969 = vunpack.c.3.s8 %v3408
  %v3970 = vunpack.c.3.s8 %v3409
  %v3971 = vunpack.c.3.s8 %v3410
  %v3972 = vunpack.c.3.s8 %v3411
  %v3973 = vunpack.c.3.s8 %v3412
  %v3974 = vunpack.c.3.s8 %v3413
  %v3975 = vunpack.c.3.s8 %v3414
  %v3976 = vunpack.c.0.s8 %v3415
  %v3977 = vunpack.c.0.s8 %v3416
  %v3978 = vunpack.c.0.s8 %v3417
  %v3979 = vunpack.c.0.s8 %v3418
  %v3980 = vunpack.c.0.s8 %v3419
  %v3981 = vunpack.c.0.s8 %v3420
  %v3982 = vunpack.c.0.s8 %v3421
  %v3983 = vunpack.c.1.s8 %v3415
  %v3984 = vunpack.c.1.s8 %v3416
  %v3985 = vunpack.c.1.s8 %v3417
  %v3986 = vunpack.c.1.s8 %v3418
  %v3987 = vunpack.c.1.s8 %v3419
  %v3988 = vunpack.c.1.s8 %v3420
  %v3989 = vunpack.c.1.s8 %v3421
  %v3990 = vunpack.c.2.s8 %v3415
  %v3991 = vunpack.c.2.s8 %v3416
  %v3992 = vunpack.c.2.s8 %v3417
  %v3993 = vunpack.c.2.s8 %v3418
  %v3994 = vunpack.c.2.s8 %v3419
  %v3995 = vunpack.c.2.s8 %v3420
  %v3996 = vunpack.c.2.s8 %v3421
  %v3997 = vunpack.c.3.s8 %v3415
  %v3998 = vunpack.c.3.s8 %v3416
  %v3999 = vunpack.c.3.s8 %v3417
  %v4000 = vunpack.c.3.s8 %v3418
  %v4001 = vunpack.c.3.s8 %v3419
  %v4002 = vunpack.c.3.s8 %v3420
  %v4003 = vunpack.c.3.s8 %v3421
  %v4004 = vunpack.c.0.s8 %v3422
  %v4005 = vunpack.c.0.s8 %v3423
  %v4006 = vunpack.c.0.s8 %v3424
  %v4007 = vunpack.c.0.s8 %v3425
  %v4008 = vunpack.c.0.s8 %v3426
  %v4009 = vunpack.c.0.s8 %v3427
  %v4010 = vunpack.c.0.s8 %v3428
  %v4011 = vunpack.c.1.s8 %v3422
  %v4012 = vunpack.c.1.s8 %v3423
  %v4013 = vunpack.c.1.s8 %v3424
  %v4014 = vunpack.c.1.s8 %v3425
  %v4015 = vunpack.c.1.s8 %v3426
  %v4016 = vunpack.c.1.s8 %v3427
  %v4017 = vunpack.c.1.s8 %v3428
  %v4018 = vunpack.c.2.s8 %v3422
  %v4019 = vunpack.c.2.s8 %v3423
  %v4020 = vunpack.c.2.s8 %v3424
  %v4021 = vunpack.c.2.s8 %v3425
  %v4022 = vunpack.c.2.s8 %v3426
  %v4023 = vunpack.c.2.s8 %v3427
  %v4024 = vunpack.c.2.s8 %v3428
  %v4025 = vunpack.c.3.s8 %v3422
  %v4026 = vunpack.c.3.s8 %v3423
  %v4027 = vunpack.c.3.s8 %v3424
  %v4028 = vunpack.c.3.s8 %v3425
  %v4029 = vunpack.c.3.s8 %v3426
  %v4030 = vunpack.c.3.s8 %v3427
  %v4031 = vunpack.c.3.s8 %v3428
  %v4032 = vunpack.c.0.s8 %v3429
  %v4033 = vunpack.c.0.s8 %v3430
  %v4034 = vunpack.c.0.s8 %v3431
  %v4035 = vunpack.c.0.s8 %v3432
  %v4036 = vunpack.c.0.s8 %v3433
  %v4037 = vunpack.c.0.s8 %v3434
  %v4038 = vunpack.c.0.s8 %v3435
  %v4039 = vunpack.c.1.s8 %v3429
  %v4040 = vunpack.c.1.s8 %v3430
  %v4041 = vunpack.c.1.s8 %v3431
  %v4042 = vunpack.c.1.s8 %v3432
  %v4043 = vunpack.c.1.s8 %v3433
  %v4044 = vunpack.c.1.s8 %v3434
  %v4045 = vunpack.c.1.s8 %v3435
  %v4046 = vunpack.c.2.s8 %v3429
  %v4047 = vunpack.c.2.s8 %v3430
  %v4048 = vunpack.c.2.s8 %v3431
  %v4049 = vunpack.c.2.s8 %v3432
  %v4050 = vunpack.c.2.s8 %v3433
  %v4051 = vunpack.c.2.s8 %v3434
  %v4052 = vunpack.c.2.s8 %v3435
  %v4053 = vunpack.c.3.s8 %v3429
  %v4054 = vunpack.c.3.s8 %v3430
  %v4055 = vunpack.c.3.s8 %v3431
  %v4056 = vunpack.c.3.s8 %v3432
  %v4057 = vunpack.c.3.s8 %v3433
  %v4058 = vunpack.c.3.s8 %v3434
  %v4059 = vunpack.c.3.s8 %v3435
  %v4060 = vunpack.c.0.s8 %v3436
  %v4061 = vunpack.c.0.s8 %v3437
  %v4062 = vunpack.c.0.s8 %v3438
  %v4063 = vunpack.c.0.s8 %v3439
  %v4064 = vunpack.c.0.s8 %v3440
  %v4065 = vunpack.c.0.s8 %v3441
  %v4066 = vunpack.c.0.s8 %v3442
  %v4067 = vunpack.c.1.s8 %v3436
  %v4068 = vunpack.c.1.s8 %v3437
  %v4069 = vunpack.c.1.s8 %v3438
  %v4070 = vunpack.c.1.s8 %v3439
  %v4071 = vunpack.c.1.s8 %v3440
  %v4072 = vunpack.c.1.s8 %v3441
  %v4073 = vunpack.c.1.s8 %v3442
  %v4074 = vunpack.c.2.s8 %v3436
  %v4075 = vunpack.c.2.s8 %v3437
  %v4076 = vunpack.c.2.s8 %v3438
  %v4077 = vunpack.c.2.s8 %v3439
  %v4078 = vunpack.c.2.s8 %v3440
  %v4079 = vunpack.c.2.s8 %v3441
  %v4080 = vunpack.c.2.s8 %v3442
  %v4081 = vunpack.c.3.s8 %v3436
  %v4082 = vunpack.c.3.s8 %v3437
  %v4083 = vunpack.c.3.s8 %v3438
  %v4084 = vunpack.c.3.s8 %v3439
  %v4085 = vunpack.c.3.s8 %v3440
  %v4086 = vunpack.c.3.s8 %v3441
  %v4087 = vunpack.c.3.s8 %v3442
  %v4088 = vunpack.c.0.s8 %v3443
  %v4089 = vunpack.c.0.s8 %v3444
  %v4090 = vunpack.c.0.s8 %v3445
  %v4091 = vunpack.c.0.s8 %v3446
  %v4092 = vunpack.c.0.s8 %v3447
  %v4093 = vunpack.c.0.s8 %v3448
  %v4094 = vunpack.c.0.s8 %v3449
  %v4095 = vunpack.c.1.s8 %v3443
  %v4096 = vunpack.c.1.s8 %v3444
  %v4097 = vunpack.c.1.s8 %v3445
  %v4098 = vunpack.c.1.s8 %v3446
  %v4099 = vunpack.c.1.s8 %v3447
  %v4100 = vunpack.c.1.s8 %v3448
  %v4101 = vunpack.c.1.s8 %v3449
  %v4102 = vunpack.c.2.s8 %v3443
  %v4103 = vunpack.c.2.s8 %v3444
  %v4104 = vunpack.c.2.s8 %v3445
  %v4105 = vunpack.c.2.s8 %v3446
  %v4106 = vunpack.c.2.s8 %v3447
  %v4107 = vunpack.c.2.s8 %v3448
  %v4108 = vunpack.c.2.s8 %v3449
  %v4109 = vunpack.c.3.s8 %v3443
  %v4110 = vunpack.c.3.s8 %v3444
  %v4111 = vunpack.c.3.s8 %v3445
  %v4112 = vunpack.c.3.s8 %v3446
  %v4113 = vunpack.c.3.s8 %v3447
  %v4114 = vunpack.c.3.s8 %v3448
  %v4115 = vunpack.c.3.s8 %v3449
  %v4116 = vunpack.c.0.s8 %v3450
  %v4117 = vunpack.c.0.s8 %v3451
  %v4118 = vunpack.c.0.s8 %v3452
  %v4119 = vunpack.c.0.s8 %v3453
  %v4120 = vunpack.c.0.s8 %v3454
  %v4121 = vunpack.c.0.s8 %v3455
  %v4122 = vunpack.c.0.s8 %v3456
  %v4123 = vunpack.c.1.s8 %v3450
  %v4124 = vunpack.c.1.s8 %v3451
  %v4125 = vunpack.c.1.s8 %v3452
  %v4126 = vunpack.c.1.s8 %v3453
  %v4127 = vunpack.c.1.s8 %v3454
  %v4128 = vunpack.c.1.s8 %v3455
  %v4129 = vunpack.c.1.s8 %v3456
  %v4130 = vunpack.c.2.s8 %v3450
  %v4131 = vunpack.c.2.s8 %v3451
  %v4132 = vunpack.c.2.s8 %v3452
  %v4133 = vunpack.c.2.s8 %v3453
  %v4134 = vunpack.c.2.s8 %v3454
  %v4135 = vunpack.c.2.s8 %v3455
  %v4136 = vunpack.c.2.s8 %v3456
  %v4137 = vunpack.c.3.s8 %v3450
  %v4138 = vunpack.c.3.s8 %v3451
  %v4139 = vunpack.c.3.s8 %v3452
  %v4140 = vunpack.c.3.s8 %v3453
  %v4141 = vunpack.c.3.s8 %v3454
  %v4142 = vunpack.c.3.s8 %v3455
  %v4143 = vunpack.c.3.s8 %v3456
  %v4144 = vunpack.c.0.s8 %v3457
  %v4145 = vunpack.c.0.s8 %v3458
  %v4146 = vunpack.c.0.s8 %v3459
  %v4147 = vunpack.c.0.s8 %v3460
  %v4148 = vunpack.c.0.s8 %v3461
  %v4149 = vunpack.c.0.s8 %v3462
  %v4150 = vunpack.c.0.s8 %v3463
  %v4151 = vunpack.c.1.s8 %v3457
  %v4152 = vunpack.c.1.s8 %v3458
  %v4153 = vunpack.c.1.s8 %v3459
  %v4154 = vunpack.c.1.s8 %v3460
  %v4155 = vunpack.c.1.s8 %v3461
  %v4156 = vunpack.c.1.s8 %v3462
  %v4157 = vunpack.c.1.s8 %v3463
  %v4158 = vunpack.c.2.s8 %v3457
  %v4159 = vunpack.c.2.s8 %v3458
  %v4160 = vunpack.c.2.s8 %v3459
  %v4161 = vunpack.c.2.s8 %v3460
  %v4162 = vunpack.c.2.s8 %v3461
  %v4163 = vunpack.c.2.s8 %v3462
  %v4164 = vunpack.c.2.s8 %v3463
  %v4165 = vunpack.c.3.s8 %v3457
  %v4166 = vunpack.c.3.s8 %v3458
  %v4167 = vunpack.c.3.s8 %v3459
  %v4168 = vunpack.c.3.s8 %v3460
  %v4169 = vunpack.c.3.s8 %v3461
  %v4170 = vunpack.c.3.s8 %v3462
  %v4171 = vunpack.c.3.s8 %v3463
  %v4172 = vunpack.c.0.s8 %v3464
  %v4173 = vunpack.c.0.s8 %v3465
  %v4174 = vunpack.c.0.s8 %v3466
  %v4175 = vunpack.c.0.s8 %v3467
  %v4176 = vunpack.c.0.s8 %v3468
  %v4177 = vunpack.c.0.s8 %v3469
  %v4178 = vunpack.c.0.s8 %v3470
  %v4179 = vunpack.c.1.s8 %v3464
  %v4180 = vunpack.c.1.s8 %v3465
  %v4181 = vunpack.c.1.s8 %v3466
  %v4182 = vunpack.c.1.s8 %v3467
  %v4183 = vunpack.c.1.s8 %v3468
  %v4184 = vunpack.c.1.s8 %v3469
  %v4185 = vunpack.c.1.s8 %v3470
  %v4186 = vunpack.c.2.s8 %v3464
  %v4187 = vunpack.c.2.s8 %v3465
  %v4188 = vunpack.c.2.s8 %v3466
  %v4189 = vunpack.c.2.s8 %v3467
  %v4190 = vunpack.c.2.s8 %v3468
  %v4191 = vunpack.c.2.s8 %v3469
  %v4192 = vunpack.c.2.s8 %v3470
  %v4193 = vunpack.c.3.s8 %v3464
  %v4194 = vunpack.c.3.s8 %v3465
  %v4195 = vunpack.c.3.s8 %v3466
  %v4196 = vunpack.c.3.s8 %v3467
  %v4197 = vunpack.c.3.s8 %v3468
  %v4198 = vunpack.c.3.s8 %v3469
  %v4199 = vunpack.c.3.s8 %v3470
  %v4200 = vunpack.c.0.s8 %v3471
  %v4201 = vunpack.c.0.s8 %v3472
  %v4202 = vunpack.c.0.s8 %v3473
  %v4203 = vunpack.c.0.s8 %v3474
  %v4204 = vunpack.c.0.s8 %v3475
  %v4205 = vunpack.c.0.s8 %v3476
  %v4206 = vunpack.c.0.s8 %v3477
  %v4207 = vunpack.c.1.s8 %v3471
  %v4208 = vunpack.c.1.s8 %v3472
  %v4209 = vunpack.c.1.s8 %v3473
  %v4210 = vunpack.c.1.s8 %v3474
  %v4211 = vunpack.c.1.s8 %v3475
  %v4212 = vunpack.c.1.s8 %v3476
  %v4213 = vunpack.c.1.s8 %v3477
  %v4214 = vunpack.c.2.s8 %v3471
  %v4215 = vunpack.c.2.s8 %v3472
  %v4216 = vunpack.c.2.s8 %v3473
  %v4217 = vunpack.c.2.s8 %v3474
  %v4218 = vunpack.c.2.s8 %v3475
  %v4219 = vunpack.c.2.s8 %v3476
  %v4220 = vunpack.c.2.s8 %v3477
  %v4221 = vunpack.c.3.s8 %v3471
  %v4222 = vunpack.c.3.s8 %v3472
  %v4223 = vunpack.c.3.s8 %v3473
  %v4224 = vunpack.c.3.s8 %v3474
  %v4225 = vunpack.c.3.s8 %v3475
  %v4226 = vunpack.c.3.s8 %v3476
  %v4227 = vunpack.c.3.s8 %v3477
  %v4228 = vunpack.c.0.s8 %v3478
  %v4229 = vunpack.c.0.s8 %v3479
  %v4230 = vunpack.c.0.s8 %v3480
  %v4231 = vunpack.c.0.s8 %v3481
  %v4232 = vunpack.c.0.s8 %v3482
  %v4233 = vunpack.c.0.s8 %v3483
  %v4234 = vunpack.c.0.s8 %v3484
  %v4235 = vunpack.c.1.s8 %v3478
  %v4236 = vunpack.c.1.s8 %v3479
  %v4237 = vunpack.c.1.s8 %v3480
  %v4238 = vunpack.c.1.s8 %v3481
  %v4239 = vunpack.c.1.s8 %v3482
  %v4240 = vunpack.c.1.s8 %v3483
  %v4241 = vunpack.c.1.s8 %v3484
  %v4242 = vunpack.c.2.s8 %v3478
  %v4243 = vunpack.c.2.s8 %v3479
  %v4244 = vunpack.c.2.s8 %v3480
  %v4245 = vunpack.c.2.s8 %v3481
  %v4246 = vunpack.c.2.s8 %v3482
  %v4247 = vunpack.c.2.s8 %v3483
  %v4248 = vunpack.c.2.s8 %v3484
  %v4249 = vunpack.c.3.s8 %v3478
  %v4250 = vunpack.c.3.s8 %v3479
  %v4251 = vunpack.c.3.s8 %v3480
  %v4252 = vunpack.c.3.s8 %v3481
  %v4253 = vunpack.c.3.s8 %v3482
  %v4254 = vunpack.c.3.s8 %v3483
  %v4255 = vunpack.c.3.s8 %v3484
  %v4256 = vunpack.c.0.s8 %v3485
  %v4257 = vunpack.c.0.s8 %v3486
  %v4258 = vunpack.c.0.s8 %v3487
  %v4259 = vunpack.c.0.s8 %v3488
  %v4260 = vunpack.c.0.s8 %v3489
  %v4261 = vunpack.c.0.s8 %v3490
  %v4262 = vunpack.c.0.s8 %v3491
  %v4263 = vunpack.c.1.s8 %v3485
  %v4264 = vunpack.c.1.s8 %v3486
  %v4265 = vunpack.c.1.s8 %v3487
  %v4266 = vunpack.c.1.s8 %v3488
  %v4267 = vunpack.c.1.s8 %v3489
  %v4268 = vunpack.c.1.s8 %v3490
  %v4269 = vunpack.c.1.s8 %v3491
  %v4270 = vunpack.c.2.s8 %v3485
  %v4271 = vunpack.c.2.s8 %v3486
  %v4272 = vunpack.c.2.s8 %v3487
  %v4273 = vunpack.c.2.s8 %v3488
  %v4274 = vunpack.c.2.s8 %v3489
  %v4275 = vunpack.c.2.s8 %v3490
  %v4276 = vunpack.c.2.s8 %v3491
  %v4277 = vunpack.c.3.s8 %v3485
  %v4278 = vunpack.c.3.s8 %v3486
  %v4279 = vunpack.c.3.s8 %v3487
  %v4280 = vunpack.c.3.s8 %v3488
  %v4281 = vunpack.c.3.s8 %v3489
  %v4282 = vunpack.c.3.s8 %v3490
  %v4283 = vunpack.c.3.s8 %v3491
  %v4284 = vunpack.c.0.s8 %v3492
  %v4285 = vunpack.c.0.s8 %v3493
  %v4286 = vunpack.c.0.s8 %v3494
  %v4287 = vunpack.c.0.s8 %v3495
  %v4288 = vunpack.c.0.s8 %v3496
  %v4289 = vunpack.c.0.s8 %v3497
  %v4290 = vunpack.c.0.s8 %v3498
  %v4291 = vunpack.c.1.s8 %v3492
  %v4292 = vunpack.c.1.s8 %v3493
  %v4293 = vunpack.c.1.s8 %v3494
  %v4294 = vunpack.c.1.s8 %v3495
  %v4295 = vunpack.c.1.s8 %v3496
  %v4296 = vunpack.c.1.s8 %v3497
  %v4297 = vunpack.c.1.s8 %v3498
  %v4298 = vunpack.c.2.s8 %v3492
  %v4299 = vunpack.c.2.s8 %v3493
  %v4300 = vunpack.c.2.s8 %v3494
  %v4301 = vunpack.c.2.s8 %v3495
  %v4302 = vunpack.c.2.s8 %v3496
  %v4303 = vunpack.c.2.s8 %v3497
  %v4304 = vunpack.c.2.s8 %v3498
  %v4305 = vunpack.c.3.s8 %v3492
  %v4306 = vunpack.c.3.s8 %v3493
  %v4307 = vunpack.c.3.s8 %v3494
  %v4308 = vunpack.c.3.s8 %v3495
  %v4309 = vunpack.c.3.s8 %v3496
  %v4310 = vunpack.c.3.s8 %v3497
  %v4311 = vunpack.c.3.s8 %v3498
  %v4312 = vunpack.c.0.s8 %v3499
  %v4313 = vunpack.c.0.s8 %v3500
  %v4314 = vunpack.c.0.s8 %v3501
  %v4315 = vunpack.c.0.s8 %v3502
  %v4316 = vunpack.c.0.s8 %v3503
  %v4317 = vunpack.c.0.s8 %v3504
  %v4318 = vunpack.c.0.s8 %v3505
  %v4319 = vunpack.c.1.s8 %v3499
  %v4320 = vunpack.c.1.s8 %v3500
  %v4321 = vunpack.c.1.s8 %v3501
  %v4322 = vunpack.c.1.s8 %v3502
  %v4323 = vunpack.c.1.s8 %v3503
  %v4324 = vunpack.c.1.s8 %v3504
  %v4325 = vunpack.c.1.s8 %v3505
  %v4326 = vunpack.c.2.s8 %v3499
  %v4327 = vunpack.c.2.s8 %v3500
  %v4328 = vunpack.c.2.s8 %v3501
  %v4329 = vunpack.c.2.s8 %v3502
  %v4330 = vunpack.c.2.s8 %v3503
  %v4331 = vunpack.c.2.s8 %v3504
  %v4332 = vunpack.c.2.s8 %v3505
  %v4333 = vunpack.c.3.s8 %v3499
  %v4334 = vunpack.c.3.s8 %v3500
  %v4335 = vunpack.c.3.s8 %v3501
  %v4336 = vunpack.c.3.s8 %v3502
  %v4337 = vunpack.c.3.s8 %v3503
  %v4338 = vunpack.c.3.s8 %v3504
  %v4339 = vunpack.c.3.s8 %v3505
  %v4340 = vunpack.c.0.s8 %v3506
  %v4341 = vunpack.c.0.s8 %v3507
  %v4342 = vunpack.c.0.s8 %v3508
  %v4343 = vunpack.c.0.s8 %v3509
  %v4344 = vunpack.c.0.s8 %v3510
  %v4345 = vunpack.c.0.s8 %v3511
  %v4346 = vunpack.c.0.s8 %v3512
  %v4347 = vunpack.c.1.s8 %v3506
  %v4348 = vunpack.c.1.s8 %v3507
  %v4349 = vunpack.c.1.s8 %v3508
  %v4350 = vunpack.c.1.s8 %v3509
  %v4351 = vunpack.c.1.s8 %v3510
  %v4352 = vunpack.c.1.s8 %v3511
  %v4353 = vunpack.c.1.s8 %v3512
  %v4354 = vunpack.c.2.s8 %v3506
  %v4355 = vunpack.c.2.s8 %v3507
  %v4356 = vunpack.c.2.s8 %v3508
  %v4357 = vunpack.c.2.s8 %v3509
  %v4358 = vunpack.c.2.s8 %v3510
  %v4359 = vunpack.c.2.s8 %v3511
  %v4360 = vunpack.c.2.s8 %v3512
  %v4361 = vunpack.c.3.s8 %v3506
  %v4362 = vunpack.c.3.s8 %v3507
  %v4363 = vunpack.c.3.s8 %v3508
  %v4364 = vunpack.c.3.s8 %v3509
  %v4365 = vunpack.c.3.s8 %v3510
  %v4366 = vunpack.c.3.s8 %v3511
  %v4367 = vunpack.c.3.s8 %v3512
  %v4368 = vunpack.c.0.s8 %v3513
  %v4369 = vunpack.c.0.s8 %v3514
  %v4370 = vunpack.c.0.s8 %v3515
  %v4371 = vunpack.c.0.s8 %v3516
  %v4372 = vunpack.c.0.s8 %v3517
  %v4373 = vunpack.c.0.s8 %v3518
  %v4374 = vunpack.c.0.s8 %v3519
  %v4375 = vunpack.c.1.s8 %v3513
  %v4376 = vunpack.c.1.s8 %v3514
  %v4377 = vunpack.c.1.s8 %v3515
  %v4378 = vunpack.c.1.s8 %v3516
  %v4379 = vunpack.c.1.s8 %v3517
  %v4380 = vunpack.c.1.s8 %v3518
  %v4381 = vunpack.c.1.s8 %v3519
  %v4382 = vunpack.c.2.s8 %v3513
  %v4383 = vunpack.c.2.s8 %v3514
  %v4384 = vunpack.c.2.s8 %v3515
  %v4385 = vunpack.c.2.s8 %v3516
  %v4386 = vunpack.c.2.s8 %v3517
  %v4387 = vunpack.c.2.s8 %v3518
  %v4388 = vunpack.c.2.s8 %v3519
  %v4389 = vunpack.c.3.s8 %v3513
  %v4390 = vunpack.c.3.s8 %v3514
  %v4391 = vunpack.c.3.s8 %v3515
  %v4392 = vunpack.c.3.s8 %v3516
  %v4393 = vunpack.c.3.s8 %v3517
  %v4394 = vunpack.c.3.s8 %v3518
  %v4395 = vunpack.c.3.s8 %v3519
  %v4396 = vunpack.c.0.s8 %v3520
  %v4397 = vunpack.c.0.s8 %v3521
  %v4398 = vunpack.c.0.s8 %v3522
  %v4399 = vunpack.c.0.s8 %v3523
  %v4400 = vunpack.c.0.s8 %v3524
  %v4401 = vunpack.c.0.s8 %v3525
  %v4402 = vunpack.c.0.s8 %v3526
  %v4403 = vunpack.c.1.s8 %v3520
  %v4404 = vunpack.c.1.s8 %v3521
  %v4405 = vunpack.c.1.s8 %v3522
  %v4406 = vunpack.c.1.s8 %v3523
  %v4407 = vunpack.c.1.s8 %v3524
  %v4408 = vunpack.c.1.s8 %v3525
  %v4409 = vunpack.c.1.s8 %v3526
  %v4410 = vunpack.c.2.s8 %v3520
  %v4411 = vunpack.c.2.s8 %v3521
  %v4412 = vunpack.c.2.s8 %v3522
  %v4413 = vunpack.c.2.s8 %v3523
  %v4414 = vunpack.c.2.s8 %v3524
  %v4415 = vunpack.c.2.s8 %v3525
  %v4416 = vunpack.c.2.s8 %v3526
  %v4417 = vunpack.c.3.s8 %v3520
  %v4418 = vunpack.c.3.s8 %v3521
  %v4419 = vunpack.c.3.s8 %v3522
  %v4420 = vunpack.c.3.s8 %v3523
  %v4421 = vunpack.c.3.s8 %v3524
  %v4422 = vunpack.c.3.s8 %v3525
  %v4423 = vunpack.c.3.s8 %v3526
  %v4424 = vcvt.s32.f32 %v3528
  %v4425 = vcvt.s32.f32 %v3529
  %v4426 = vcvt.s32.f32 %v3530
  %v4427 = vcvt.s32.f32 %v3531
  %v4428 = vcvt.s32.f32 %v3532
  %v4429 = vcvt.s32.f32 %v3533
  %v4430 = vcvt.s32.f32 %v3534
  %v4431 = vcvt.s32.f32 %v3535
  %v4432 = vcvt.s32.f32 %v3536
  %v4433 = vcvt.s32.f32 %v3537
  %v4434 = vcvt.s32.f32 %v3538
  %v4435 = vcvt.s32.f32 %v3539
  %v4436 = vcvt.s32.f32 %v3540
  %v4437 = vcvt.s32.f32 %v3541
  %v4438 = vcvt.s32.f32 %v3542
  %v4439 = vcvt.s32.f32 %v3543
  %v4440 = vcvt.s32.f32 %v3544
  %v4441 = vcvt.s32.f32 %v3545
  %v4442 = vcvt.s32.f32 %v3546
  %v4443 = vcvt.s32.f32 %v3547
  %v4444 = vcvt.s32.f32 %v3548
  %v4445 = vcvt.s32.f32 %v3549
  %v4446 = vcvt.s32.f32 %v3550
  %v4447 = vcvt.s32.f32 %v3551
  %v4448 = vcvt.s32.f32 %v3552
  %v4449 = vcvt.s32.f32 %v3553
  %v4450 = vcvt.s32.f32 %v3554
  %v4451 = vcvt.s32.f32 %v3555
  %v4452 = vcvt.s32.f32 %v3556
  %v4453 = vcvt.s32.f32 %v3557
  %v4454 = vcvt.s32.f32 %v3558
  %v4455 = vcvt.s32.f32 %v3559
  %v4456 = vcvt.s32.f32 %v3560
  %v4457 = vcvt.s32.f32 %v3561
  %v4458 = vcvt.s32.f32 %v3562
  %v4459 = vcvt.s32.f32 %v3563
  %v4460 = vcvt.s32.f32 %v3564
  %v4461 = vcvt.s32.f32 %v3565
  %v4462 = vcvt.s32.f32 %v3566
  %v4463 = vcvt.s32.f32 %v3567
  %v4464 = vcvt.s32.f32 %v3568
  %v4465 = vcvt.s32.f32 %v3569
  %v4466 = vcvt.s32.f32 %v3570
  %v4467 = vcvt.s32.f32 %v3571
  %v4468 = vcvt.s32.f32 %v3572
  %v4469 = vcvt.s32.f32 %v3573
  %v4470 = vcvt.s32.f32 %v3574
  %v4471 = vcvt.s32.f32 %v3575
  %v4472 = vcvt.s32.f32 %v3576
  %v4473 = vcvt.s32.f32 %v3577
  %v4474 = vcvt.s32.f32 %v3578
  %v4475 = vcvt.s32.f32 %v3579
  %v4476 = vcvt.s32.f32 %v3580
  %v4477 = vcvt.s32.f32 %v3581
  %v4478 = vcvt.s32.f32 %v3582
  %v4479 = vcvt.s32.f32 %v3583
  %v4480 = vcvt.s32.f32 %v3584
  %v4481 = vcvt.s32.f32 %v3585
  %v4482 = vcvt.s32.f32 %v3586
  %v4483 = vcvt.s32.f32 %v3587
  %v4484 = vcvt.s32.f32 %v3588
  %v4485 = vcvt.s32.f32 %v3589
  %v4486 = vcvt.s32.f32 %v3590
  %v4487 = vcvt.s32.f32 %v3591
  %v4488 = vcvt.s32.f32 %v3592
  %v4489 = vcvt.s32.f32 %v3593
  %v4490 = vcvt.s32.f32 %v3594
  %v4491 = vcvt.s32.f32 %v3595
  %v4492 = vcvt.s32.f32 %v3596
  %v4493 = vcvt.s32.f32 %v3597
  %v4494 = vcvt.s32.f32 %v3598
  %v4495 = vcvt.s32.f32 %v3599
  %v4496 = vcvt.s32.f32 %v3600
  %v4497 = vcvt.s32.f32 %v3601
  %v4498 = vcvt.s32.f32 %v3602
  %v4499 = vcvt.s32.f32 %v3603
  %v4500 = vcvt.s32.f32 %v3604
  %v4501 = vcvt.s32.f32 %v3605
  %v4502 = vcvt.s32.f32 %v3606
  %v4503 = vcvt.s32.f32 %v3607
  %v4504 = vcvt.s32.f32 %v3608
  %v4505 = vcvt.s32.f32 %v3609
  %v4506 = vcvt.s32.f32 %v3610
  %v4507 = vcvt.s32.f32 %v3611
  %v4508 = vcvt.s32.f32 %v3612
  %v4509 = vcvt.s32.f32 %v3613
  %v4510 = vcvt.s32.f32 %v3614
  %v4511 = vcvt.s32.f32 %v3615
  %v4512 = vcvt.s32.f32 %v3616
  %v4513 = vcvt.s32.f32 %v3617
  %v4514 = vcvt.s32.f32 %v3618
  %v4515 = vcvt.s32.f32 %v3619
  %v4516 = vcvt.s32.f32 %v3620
  %v4517 = vcvt.s32.f32 %v3621
  %v4518 = vcvt.s32.f32 %v3622
  %v4519 = vcvt.s32.f32 %v3623
  %v4520 = vcvt.s32.f32 %v3624
  %v4521 = vcvt.s32.f32 %v3625
  %v4522 = vcvt.s32.f32 %v3626
  %v4523 = vcvt.s32.f32 %v3627
  %v4524 = vcvt.s32.f32 %v3628
  %v4525 = vcvt.s32.f32 %v3629
  %v4526 = vcvt.s32.f32 %v3630
  %v4527 = vcvt.s32.f32 %v3631
  %v4528 = vcvt.s32.f32 %v3632
  %v4529 = vcvt.s32.f32 %v3633
  %v4530 = vcvt.s32.f32 %v3634
  %v4531 = vcvt.s32.f32 %v3635
  %v4532 = vcvt.s32.f32 %v3636
  %v4533 = vcvt.s32.f32 %v3637
  %v4534 = vcvt.s32.f32 %v3638
  %v4535 = vcvt.s32.f32 %v3639
  %v4536 = vcvt.s32.f32 %v3640
  %v4537 = vcvt.s32.f32 %v3641
  %v4538 = vcvt.s32.f32 %v3642
  %v4539 = vcvt.s32.f32 %v3643
  %v4540 = vcvt.s32.f32 %v3644
  %v4541 = vcvt.s32.f32 %v3645
  %v4542 = vcvt.s32.f32 %v3646
  %v4543 = vcvt.s32.f32 %v3647
  %v4544 = vcvt.s32.f32 %v3648
  %v4545 = vcvt.s32.f32 %v3649
  %v4546 = vcvt.s32.f32 %v3650
  %v4547 = vcvt.s32.f32 %v3651
  %v4548 = vcvt.s32.f32 %v3652
  %v4549 = vcvt.s32.f32 %v3653
  %v4550 = vcvt.s32.f32 %v3654
  %v4551 = vcvt.s32.f32 %v3655
  %v4552 = vcvt.s32.f32 %v3656
  %v4553 = vcvt.s32.f32 %v3657
  %v4554 = vcvt.s32.f32 %v3658
  %v4555 = vcvt.s32.f32 %v3659
  %v4556 = vcvt.s32.f32 %v3660
  %v4557 = vcvt.s32.f32 %v3661
  %v4558 = vcvt.s32.f32 %v3662
  %v4559 = vcvt.s32.f32 %v3663
  %v4560 = vcvt.s32.f32 %v3664
  %v4561 = vcvt.s32.f32 %v3665
  %v4562 = vcvt.s32.f32 %v3666
  %v4563 = vcvt.s32.f32 %v3667
  %v4564 = vcvt.s32.f32 %v3668
  %v4565 = vcvt.s32.f32 %v3669
  %v4566 = vcvt.s32.f32 %v3670
  %v4567 = vcvt.s32.f32 %v3671
  %v4568 = vcvt.s32.f32 %v3672
  %v4569 = vcvt.s32.f32 %v3673
  %v4570 = vcvt.s32.f32 %v3674
  %v4571 = vcvt.s32.f32 %v3675
  %v4572 = vcvt.s32.f32 %v3676
  %v4573 = vcvt.s32.f32 %v3677
  %v4574 = vcvt.s32.f32 %v3678
  %v4575 = vcvt.s32.f32 %v3679
  %v4576 = vcvt.s32.f32 %v3680
  %v4577 = vcvt.s32.f32 %v3681
  %v4578 = vcvt.s32.f32 %v3682
  %v4579 = vcvt.s32.f32 %v3683
  %v4580 = vcvt.s32.f32 %v3684
  %v4581 = vcvt.s32.f32 %v3685
  %v4582 = vcvt.s32.f32 %v3686
  %v4583 = vcvt.s32.f32 %v3687
  %v4584 = vcvt.s32.f32 %v3688
  %v4585 = vcvt.s32.f32 %v3689
  %v4586 = vcvt.s32.f32 %v3690
  %v4587 = vcvt.s32.f32 %v3691
  %v4588 = vcvt.s32.f32 %v3692
  %v4589 = vcvt.s32.f32 %v3693
  %v4590 = vcvt.s32.f32 %v3694
  %v4591 = vcvt.s32.f32 %v3695
  %v4592 = vcvt.s32.f32 %v3696
  %v4593 = vcvt.s32.f32 %v3697
  %v4594 = vcvt.s32.f32 %v3698
  %v4595 = vcvt.s32.f32 %v3699
  %v4596 = vcvt.s32.f32 %v3700
  %v4597 = vcvt.s32.f32 %v3701
  %v4598 = vcvt.s32.f32 %v3702
  %v4599 = vcvt.s32.f32 %v3703
  %v4600 = vcvt.s32.f32 %v3704
  %v4601 = vcvt.s32.f32 %v3705
  %v4602 = vcvt.s32.f32 %v3706
  %v4603 = vcvt.s32.f32 %v3707
  %v4604 = vcvt.s32.f32 %v3708
  %v4605 = vcvt.s32.f32 %v3709
  %v4606 = vcvt.s32.f32 %v3710
  %v4607 = vcvt.s32.f32 %v3711
  %v4608 = vcvt.s32.f32 %v3712
  %v4609 = vcvt.s32.f32 %v3713
  %v4610 = vcvt.s32.f32 %v3714
  %v4611 = vcvt.s32.f32 %v3715
  %v4612 = vcvt.s32.f32 %v3716
  %v4613 = vcvt.s32.f32 %v3717
  %v4614 = vcvt.s32.f32 %v3718
  %v4615 = vcvt.s32.f32 %v3719
  %v4616 = vcvt.s32.f32 %v3720
  %v4617 = vcvt.s32.f32 %v3721
  %v4618 = vcvt.s32.f32 %v3722
  %v4619 = vcvt.s32.f32 %v3723
  %v4620 = vcvt.s32.f32 %v3724
  %v4621 = vcvt.s32.f32 %v3725
  %v4622 = vcvt.s32.f32 %v3726
  %v4623 = vcvt.s32.f32 %v3727
  %v4624 = vcvt.s32.f32 %v3728
  %v4625 = vcvt.s32.f32 %v3729
  %v4626 = vcvt.s32.f32 %v3730
  %v4627 = vcvt.s32.f32 %v3731
  %v4628 = vcvt.s32.f32 %v3732
  %v4629 = vcvt.s32.f32 %v3733
  %v4630 = vcvt.s32.f32 %v3734
  %v4631 = vcvt.s32.f32 %v3735
  %v4632 = vcvt.s32.f32 %v3736
  %v4633 = vcvt.s32.f32 %v3737
  %v4634 = vcvt.s32.f32 %v3738
  %v4635 = vcvt.s32.f32 %v3739
  %v4636 = vcvt.s32.f32 %v3740
  %v4637 = vcvt.s32.f32 %v3741
  %v4638 = vcvt.s32.f32 %v3742
  %v4639 = vcvt.s32.f32 %v3743
  %v4640 = vcvt.s32.f32 %v3744
  %v4641 = vcvt.s32.f32 %v3745
  %v4642 = vcvt.s32.f32 %v3746
  %v4643 = vcvt.s32.f32 %v3747
  %v4644 = vcvt.s32.f32 %v3748
  %v4645 = vcvt.s32.f32 %v3749
  %v4646 = vcvt.s32.f32 %v3750
  %v4647 = vcvt.s32.f32 %v3751
  %v4648 = vcvt.s32.f32 %v3752
  %v4649 = vcvt.s32.f32 %v3753
  %v4650 = vcvt.s32.f32 %v3754
  %v4651 = vcvt.s32.f32 %v3755
  %v4652 = vcvt.s32.f32 %v3756
  %v4653 = vcvt.s32.f32 %v3757
  %v4654 = vcvt.s32.f32 %v3758
  %v4655 = vcvt.s32.f32 %v3759
  %v4656 = vcvt.s32.f32 %v3760
  %v4657 = vcvt.s32.f32 %v3761
  %v4658 = vcvt.s32.f32 %v3762
  %v4659 = vcvt.s32.f32 %v3763
  %v4660 = vcvt.s32.f32 %v3764
  %v4661 = vcvt.s32.f32 %v3765
  %v4662 = vcvt.s32.f32 %v3766
  %v4663 = vcvt.s32.f32 %v3767
  %v4664 = vcvt.s32.f32 %v3768
  %v4665 = vcvt.s32.f32 %v3769
  %v4666 = vcvt.s32.f32 %v3770
  %v4667 = vcvt.s32.f32 %v3771
  %v4668 = vcvt.s32.f32 %v3772
  %v4669 = vcvt.s32.f32 %v3773
  %v4670 = vcvt.s32.f32 %v3774
  %v4671 = vcvt.s32.f32 %v3775
  %v4672 = vcvt.s32.f32 %v3776
  %v4673 = vcvt.s32.f32 %v3777
  %v4674 = vcvt.s32.f32 %v3778
  %v4675 = vcvt.s32.f32 %v3779
  %v4676 = vcvt.s32.f32 %v3780
  %v4677 = vcvt.s32.f32 %v3781
  %v4678 = vcvt.s32.f32 %v3782
  %v4679 = vcvt.s32.f32 %v3783
  %v4680 = vcvt.s32.f32 %v3784
  %v4681 = vcvt.s32.f32 %v3785
  %v4682 = vcvt.s32.f32 %v3786
  %v4683 = vcvt.s32.f32 %v3787
  %v4684 = vcvt.s32.f32 %v3788
  %v4685 = vcvt.s32.f32 %v3789
  %v4686 = vcvt.s32.f32 %v3790
  %v4687 = vcvt.s32.f32 %v3791
  %v4688 = vcvt.s32.f32 %v3792
  %v4689 = vcvt.s32.f32 %v3793
  %v4690 = vcvt.s32.f32 %v3794
  %v4691 = vcvt.s32.f32 %v3795
  %v4692 = vcvt.s32.f32 %v3796
  %v4693 = vcvt.s32.f32 %v3797
  %v4694 = vcvt.s32.f32 %v3798
  %v4695 = vcvt.s32.f32 %v3799
  %v4696 = vcvt.s32.f32 %v3800
  %v4697 = vcvt.s32.f32 %v3801
  %v4698 = vcvt.s32.f32 %v3802
  %v4699 = vcvt.s32.f32 %v3803
  %v4700 = vcvt.s32.f32 %v3804
  %v4701 = vcvt.s32.f32 %v3805
  %v4702 = vcvt.s32.f32 %v3806
  %v4703 = vcvt.s32.f32 %v3807
  %v4704 = vcvt.s32.f32 %v3808
  %v4705 = vcvt.s32.f32 %v3809
  %v4706 = vcvt.s32.f32 %v3810
  %v4707 = vcvt.s32.f32 %v3811
  %v4708 = vcvt.s32.f32 %v3812
  %v4709 = vcvt.s32.f32 %v3813
  %v4710 = vcvt.s32.f32 %v3814
  %v4711 = vcvt.s32.f32 %v3815
  %v4712 = vcvt.s32.f32 %v3816
  %v4713 = vcvt.s32.f32 %v3817
  %v4714 = vcvt.s32.f32 %v3818
  %v4715 = vcvt.s32.f32 %v3819
  %v4716 = vcvt.s32.f32 %v3820
  %v4717 = vcvt.s32.f32 %v3821
  %v4718 = vcvt.s32.f32 %v3822
  %v4719 = vcvt.s32.f32 %v3823
  %v4720 = vcvt.s32.f32 %v3824
  %v4721 = vcvt.s32.f32 %v3825
  %v4722 = vcvt.s32.f32 %v3826
  %v4723 = vcvt.s32.f32 %v3827
  %v4724 = vcvt.s32.f32 %v3828
  %v4725 = vcvt.s32.f32 %v3829
  %v4726 = vcvt.s32.f32 %v3830
  %v4727 = vcvt.s32.f32 %v3831
  %v4728 = vcvt.s32.f32 %v3832
  %v4729 = vcvt.s32.f32 %v3833
  %v4730 = vcvt.s32.f32 %v3834
  %v4731 = vcvt.s32.f32 %v3835
  %v4732 = vcvt.s32.f32 %v3836
  %v4733 = vcvt.s32.f32 %v3837
  %v4734 = vcvt.s32.f32 %v3838
  %v4735 = vcvt.s32.f32 %v3839
  %v4736 = vcvt.s32.f32 %v3840
  %v4737 = vcvt.s32.f32 %v3841
  %v4738 = vcvt.s32.f32 %v3842
  %v4739 = vcvt.s32.f32 %v3843
  %v4740 = vcvt.s32.f32 %v3844
  %v4741 = vcvt.s32.f32 %v3845
  %v4742 = vcvt.s32.f32 %v3846
  %v4743 = vcvt.s32.f32 %v3847
  %v4744 = vcvt.s32.f32 %v3848
  %v4745 = vcvt.s32.f32 %v3849
  %v4746 = vcvt.s32.f32 %v3850
  %v4747 = vcvt.s32.f32 %v3851
  %v4748 = vcvt.s32.f32 %v3852
  %v4749 = vcvt.s32.f32 %v3853
  %v4750 = vcvt.s32.f32 %v3854
  %v4751 = vcvt.s32.f32 %v3855
  %v4752 = vcvt.s32.f32 %v3856
  %v4753 = vcvt.s32.f32 %v3857
  %v4754 = vcvt.s32.f32 %v3858
  %v4755 = vcvt.s32.f32 %v3859
  %v4756 = vcvt.s32.f32 %v3860
  %v4757 = vcvt.s32.f32 %v3861
  %v4758 = vcvt.s32.f32 %v3862
  %v4759 = vcvt.s32.f32 %v3863
  %v4760 = vcvt.s32.f32 %v3864
  %v4761 = vcvt.s32.f32 %v3865
  %v4762 = vcvt.s32.f32 %v3866
  %v4763 = vcvt.s32.f32 %v3867
  %v4764 = vcvt.s32.f32 %v3868
  %v4765 = vcvt.s32.f32 %v3869
  %v4766 = vcvt.s32.f32 %v3870
  %v4767 = vcvt.s32.f32 %v3871
  %v4768 = vcvt.s32.f32 %v3872
  %v4769 = vcvt.s32.f32 %v3873
  %v4770 = vcvt.s32.f32 %v3874
  %v4771 = vcvt.s32.f32 %v3875
  %v4772 = vcvt.s32.f32 %v3876
  %v4773 = vcvt.s32.f32 %v3877
  %v4774 = vcvt.s32.f32 %v3878
  %v4775 = vcvt.s32.f32 %v3879
  %v4776 = vcvt.s32.f32 %v3880
  %v4777 = vcvt.s32.f32 %v3881
  %v4778 = vcvt.s32.f32 %v3882
  %v4779 = vcvt.s32.f32 %v3883
  %v4780 = vcvt.s32.f32 %v3884
  %v4781 = vcvt.s32.f32 %v3885
  %v4782 = vcvt.s32.f32 %v3886
  %v4783 = vcvt.s32.f32 %v3887
  %v4784 = vcvt.s32.f32 %v3888
  %v4785 = vcvt.s32.f32 %v3889
  %v4786 = vcvt.s32.f32 %v3890
  %v4787 = vcvt.s32.f32 %v3891
  %v4788 = vcvt.s32.f32 %v3892
  %v4789 = vcvt.s32.f32 %v3893
  %v4790 = vcvt.s32.f32 %v3894
  %v4791 = vcvt.s32.f32 %v3895
  %v4792 = vcvt.s32.f32 %v3896
  %v4793 = vcvt.s32.f32 %v3897
  %v4794 = vcvt.s32.f32 %v3898
  %v4795 = vcvt.s32.f32 %v3899
  %v4796 = vcvt.s32.f32 %v3900
  %v4797 = vcvt.s32.f32 %v3901
  %v4798 = vcvt.s32.f32 %v3902
  %v4799 = vcvt.s32.f32 %v3903
  %v4800 = vcvt.s32.f32 %v3904
  %v4801 = vcvt.s32.f32 %v3905
  %v4802 = vcvt.s32.f32 %v3906
  %v4803 = vcvt.s32.f32 %v3907
  %v4804 = vcvt.s32.f32 %v3908
  %v4805 = vcvt.s32.f32 %v3909
  %v4806 = vcvt.s32.f32 %v3910
  %v4807 = vcvt.s32.f32 %v3911
  %v4808 = vcvt.s32.f32 %v3912
  %v4809 = vcvt.s32.f32 %v3913
  %v4810 = vcvt.s32.f32 %v3914
  %v4811 = vcvt.s32.f32 %v3915
  %v4812 = vcvt.s32.f32 %v3916
  %v4813 = vcvt.s32.f32 %v3917
  %v4814 = vcvt.s32.f32 %v3918
  %v4815 = vcvt.s32.f32 %v3919
  %v4816 = vcvt.s32.f32 %v3920
  %v4817 = vcvt.s32.f32 %v3921
  %v4818 = vcvt.s32.f32 %v3922
  %v4819 = vcvt.s32.f32 %v3923
  %v4820 = vcvt.s32.f32 %v3924
  %v4821 = vcvt.s32.f32 %v3925
  %v4822 = vcvt.s32.f32 %v3926
  %v4823 = vcvt.s32.f32 %v3927
  %v4824 = vcvt.s32.f32 %v3928
  %v4825 = vcvt.s32.f32 %v3929
  %v4826 = vcvt.s32.f32 %v3930
  %v4827 = vcvt.s32.f32 %v3931
  %v4828 = vcvt.s32.f32 %v3932
  %v4829 = vcvt.s32.f32 %v3933
  %v4830 = vcvt.s32.f32 %v3934
  %v4831 = vcvt.s32.f32 %v3935
  %v4832 = vcvt.s32.f32 %v3936
  %v4833 = vcvt.s32.f32 %v3937
  %v4834 = vcvt.s32.f32 %v3938
  %v4835 = vcvt.s32.f32 %v3939
  %v4836 = vcvt.s32.f32 %v3940
  %v4837 = vcvt.s32.f32 %v3941
  %v4838 = vcvt.s32.f32 %v3942
  %v4839 = vcvt.s32.f32 %v3943
  %v4840 = vcvt.s32.f32 %v3944
  %v4841 = vcvt.s32.f32 %v3945
  %v4842 = vcvt.s32.f32 %v3946
  %v4843 = vcvt.s32.f32 %v3947
  %v4844 = vcvt.s32.f32 %v3948
  %v4845 = vcvt.s32.f32 %v3949
  %v4846 = vcvt.s32.f32 %v3950
  %v4847 = vcvt.s32.f32 %v3951
  %v4848 = vcvt.s32.f32 %v3952
  %v4849 = vcvt.s32.f32 %v3953
  %v4850 = vcvt.s32.f32 %v3954
  %v4851 = vcvt.s32.f32 %v3955
  %v4852 = vcvt.s32.f32 %v3956
  %v4853 = vcvt.s32.f32 %v3957
  %v4854 = vcvt.s32.f32 %v3958
  %v4855 = vcvt.s32.f32 %v3959
  %v4856 = vcvt.s32.f32 %v3960
  %v4857 = vcvt.s32.f32 %v3961
  %v4858 = vcvt.s32.f32 %v3962
  %v4859 = vcvt.s32.f32 %v3963
  %v4860 = vcvt.s32.f32 %v3964
  %v4861 = vcvt.s32.f32 %v3965
  %v4862 = vcvt.s32.f32 %v3966
  %v4863 = vcvt.s32.f32 %v3967
  %v4864 = vcvt.s32.f32 %v3968
  %v4865 = vcvt.s32.f32 %v3969
  %v4866 = vcvt.s32.f32 %v3970
  %v4867 = vcvt.s32.f32 %v3971
  %v4868 = vcvt.s32.f32 %v3972
  %v4869 = vcvt.s32.f32 %v3973
  %v4870 = vcvt.s32.f32 %v3974
  %v4871 = vcvt.s32.f32 %v3975
  %v4872 = vcvt.s32.f32 %v3976
  %v4873 = vcvt.s32.f32 %v3977
  %v4874 = vcvt.s32.f32 %v3978
  %v4875 = vcvt.s32.f32 %v3979
  %v4876 = vcvt.s32.f32 %v3980
  %v4877 = vcvt.s32.f32 %v3981
  %v4878 = vcvt.s32.f32 %v3982
  %v4879 = vcvt.s32.f32 %v3983
  %v4880 = vcvt.s32.f32 %v3984
  %v4881 = vcvt.s32.f32 %v3985
  %v4882 = vcvt.s32.f32 %v3986
  %v4883 = vcvt.s32.f32 %v3987
  %v4884 = vcvt.s32.f32 %v3988
  %v4885 = vcvt.s32.f32 %v3989
  %v4886 = vcvt.s32.f32 %v3990
  %v4887 = vcvt.s32.f32 %v3991
  %v4888 = vcvt.s32.f32 %v3992
  %v4889 = vcvt.s32.f32 %v3993
  %v4890 = vcvt.s32.f32 %v3994
  %v4891 = vcvt.s32.f32 %v3995
  %v4892 = vcvt.s32.f32 %v3996
  %v4893 = vcvt.s32.f32 %v3997
  %v4894 = vcvt.s32.f32 %v3998
  %v4895 = vcvt.s32.f32 %v3999
  %v4896 = vcvt.s32.f32 %v4000
  %v4897 = vcvt.s32.f32 %v4001
  %v4898 = vcvt.s32.f32 %v4002
  %v4899 = vcvt.s32.f32 %v4003
  %v4900 = vcvt.s32.f32 %v4004
  %v4901 = vcvt.s32.f32 %v4005
  %v4902 = vcvt.s32.f32 %v4006
  %v4903 = vcvt.s32.f32 %v4007
  %v4904 = vcvt.s32.f32 %v4008
  %v4905 = vcvt.s32.f32 %v4009
  %v4906 = vcvt.s32.f32 %v4010
  %v4907 = vcvt.s32.f32 %v4011
  %v4908 = vcvt.s32.f32 %v4012
  %v4909 = vcvt.s32.f32 %v4013
  %v4910 = vcvt.s32.f32 %v4014
  %v4911 = vcvt.s32.f32 %v4015
  %v4912 = vcvt.s32.f32 %v4016
  %v4913 = vcvt.s32.f32 %v4017
  %v4914 = vcvt.s32.f32 %v4018
  %v4915 = vcvt.s32.f32 %v4019
  %v4916 = vcvt.s32.f32 %v4020
  %v4917 = vcvt.s32.f32 %v4021
  %v4918 = vcvt.s32.f32 %v4022
  %v4919 = vcvt.s32.f32 %v4023
  %v4920 = vcvt.s32.f32 %v4024
  %v4921 = vcvt.s32.f32 %v4025
  %v4922 = vcvt.s32.f32 %v4026
  %v4923 = vcvt.s32.f32 %v4027
  %v4924 = vcvt.s32.f32 %v4028
  %v4925 = vcvt.s32.f32 %v4029
  %v4926 = vcvt.s32.f32 %v4030
  %v4927 = vcvt.s32.f32 %v4031
  %v4928 = vcvt.s32.f32 %v4032
  %v4929 = vcvt.s32.f32 %v4033
  %v4930 = vcvt.s32.f32 %v4034
  %v4931 = vcvt.s32.f32 %v4035
  %v4932 = vcvt.s32.f32 %v4036
  %v4933 = vcvt.s32.f32 %v4037
  %v4934 = vcvt.s32.f32 %v4038
  %v4935 = vcvt.s32.f32 %v4039
  %v4936 = vcvt.s32.f32 %v4040
  %v4937 = vcvt.s32.f32 %v4041
  %v4938 = vcvt.s32.f32 %v4042
  %v4939 = vcvt.s32.f32 %v4043
  %v4940 = vcvt.s32.f32 %v4044
  %v4941 = vcvt.s32.f32 %v4045
  %v4942 = vcvt.s32.f32 %v4046
  %v4943 = vcvt.s32.f32 %v4047
  %v4944 = vcvt.s32.f32 %v4048
  %v4945 = vcvt.s32.f32 %v4049
  %v4946 = vcvt.s32.f32 %v4050
  %v4947 = vcvt.s32.f32 %v4051
  %v4948 = vcvt.s32.f32 %v4052
  %v4949 = vcvt.s32.f32 %v4053
  %v4950 = vcvt.s32.f32 %v4054
  %v4951 = vcvt.s32.f32 %v4055
  %v4952 = vcvt.s32.f32 %v4056
  %v4953 = vcvt.s32.f32 %v4057
  %v4954 = vcvt.s32.f32 %v4058
  %v4955 = vcvt.s32.f32 %v4059
  %v4956 = vcvt.s32.f32 %v4060
  %v4957 = vcvt.s32.f32 %v4061
  %v4958 = vcvt.s32.f32 %v4062
  %v4959 = vcvt.s32.f32 %v4063
  %v4960 = vcvt.s32.f32 %v4064
  %v4961 = vcvt.s32.f32 %v4065
  %v4962 = vcvt.s32.f32 %v4066
  %v4963 = vcvt.s32.f32 %v4067
  %v4964 = vcvt.s32.f32 %v4068
  %v4965 = vcvt.s32.f32 %v4069
  %v4966 = vcvt.s32.f32 %v4070
  %v4967 = vcvt.s32.f32 %v4071
  %v4968 = vcvt.s32.f32 %v4072
  %v4969 = vcvt.s32.f32 %v4073
  %v4970 = vcvt.s32.f32 %v4074
  %v4971 = vcvt.s32.f32 %v4075
  %v4972 = vcvt.s32.f32 %v4076
  %v4973 = vcvt.s32.f32 %v4077
  %v4974 = vcvt.s32.f32 %v4078
  %v4975 = vcvt.s32.f32 %v4079
  %v4976 = vcvt.s32.f32 %v4080
  %v4977 = vcvt.s32.f32 %v4081
  %v4978 = vcvt.s32.f32 %v4082
  %v4979 = vcvt.s32.f32 %v4083
  %v4980 = vcvt.s32.f32 %v4084
  %v4981 = vcvt.s32.f32 %v4085
  %v4982 = vcvt.s32.f32 %v4086
  %v4983 = vcvt.s32.f32 %v4087
  %v4984 = vcvt.s32.f32 %v4088
  %v4985 = vcvt.s32.f32 %v4089
  %v4986 = vcvt.s32.f32 %v4090
  %v4987 = vcvt.s32.f32 %v4091
  %v4988 = vcvt.s32.f32 %v4092
  %v4989 = vcvt.s32.f32 %v4093
  %v4990 = vcvt.s32.f32 %v4094
  %v4991 = vcvt.s32.f32 %v4095
  %v4992 = vcvt.s32.f32 %v4096
  %v4993 = vcvt.s32.f32 %v4097
  %v4994 = vcvt.s32.f32 %v4098
  %v4995 = vcvt.s32.f32 %v4099
  %v4996 = vcvt.s32.f32 %v4100
  %v4997 = vcvt.s32.f32 %v4101
  %v4998 = vcvt.s32.f32 %v4102
  %v4999 = vcvt.s32.f32 %v4103
  %v5000 = vcvt.s32.f32 %v4104
  %v5001 = vcvt.s32.f32 %v4105
  %v5002 = vcvt.s32.f32 %v4106
  %v5003 = vcvt.s32.f32 %v4107
  %v5004 = vcvt.s32.f32 %v4108
  %v5005 = vcvt.s32.f32 %v4109
  %v5006 = vcvt.s32.f32 %v4110
  %v5007 = vcvt.s32.f32 %v4111
  %v5008 = vcvt.s32.f32 %v4112
  %v5009 = vcvt.s32.f32 %v4113
  %v5010 = vcvt.s32.f32 %v4114
  %v5011 = vcvt.s32.f32 %v4115
  %v5012 = vcvt.s32.f32 %v4116
  %v5013 = vcvt.s32.f32 %v4117
  %v5014 = vcvt.s32.f32 %v4118
  %v5015 = vcvt.s32.f32 %v4119
  %v5016 = vcvt.s32.f32 %v4120
  %v5017 = vcvt.s32.f32 %v4121
  %v5018 = vcvt.s32.f32 %v4122
  %v5019 = vcvt.s32.f32 %v4123
  %v5020 = vcvt.s32.f32 %v4124
  %v5021 = vcvt.s32.f32 %v4125
  %v5022 = vcvt.s32.f32 %v4126
  %v5023 = vcvt.s32.f32 %v4127
  %v5024 = vcvt.s32.f32 %v4128
  %v5025 = vcvt.s32.f32 %v4129
  %v5026 = vcvt.s32.f32 %v4130
  %v5027 = vcvt.s32.f32 %v4131
  %v5028 = vcvt.s32.f32 %v4132
  %v5029 = vcvt.s32.f32 %v4133
  %v5030 = vcvt.s32.f32 %v4134
  %v5031 = vcvt.s32.f32 %v4135
  %v5032 = vcvt.s32.f32 %v4136
  %v5033 = vcvt.s32.f32 %v4137
  %v5034 = vcvt.s32.f32 %v4138
  %v5035 = vcvt.s32.f32 %v4139
  %v5036 = vcvt.s32.f32 %v4140
  %v5037 = vcvt.s32.f32 %v4141
  %v5038 = vcvt.s32.f32 %v4142
  %v5039 = vcvt.s32.f32 %v4143
  %v5040 = vcvt.s32.f32 %v4144
  %v5041 = vcvt.s32.f32 %v4145
  %v5042 = vcvt.s32.f32 %v4146
  %v5043 = vcvt.s32.f32 %v4147
  %v5044 = vcvt.s32.f32 %v4148
  %v5045 = vcvt.s32.f32 %v4149
  %v5046 = vcvt.s32.f32 %v4150
  %v5047 = vcvt.s32.f32 %v4151
  %v5048 = vcvt.s32.f32 %v4152
  %v5049 = vcvt.s32.f32 %v4153
  %v5050 = vcvt.s32.f32 %v4154
  %v5051 = vcvt.s32.f32 %v4155
  %v5052 = vcvt.s32.f32 %v4156
  %v5053 = vcvt.s32.f32 %v4157
  %v5054 = vcvt.s32.f32 %v4158
  %v5055 = vcvt.s32.f32 %v4159
  %v5056 = vcvt.s32.f32 %v4160
  %v5057 = vcvt.s32.f32 %v4161
  %v5058 = vcvt.s32.f32 %v4162
  %v5059 = vcvt.s32.f32 %v4163
  %v5060 = vcvt.s32.f32 %v4164
  %v5061 = vcvt.s32.f32 %v4165
  %v5062 = vcvt.s32.f32 %v4166
  %v5063 = vcvt.s32.f32 %v4167
  %v5064 = vcvt.s32.f32 %v4168
  %v5065 = vcvt.s32.f32 %v4169
  %v5066 = vcvt.s32.f32 %v4170
  %v5067 = vcvt.s32.f32 %v4171
  %v5068 = vcvt.s32.f32 %v4172
  %v5069 = vcvt.s32.f32 %v4173
  %v5070 = vcvt.s32.f32 %v4174
  %v5071 = vcvt.s32.f32 %v4175
  %v5072 = vcvt.s32.f32 %v4176
  %v5073 = vcvt.s32.f32 %v4177
  %v5074 = vcvt.s32.f32 %v4178
  %v5075 = vcvt.s32.f32 %v4179
  %v5076 = vcvt.s32.f32 %v4180
  %v5077 = vcvt.s32.f32 %v4181
  %v5078 = vcvt.s32.f32 %v4182
  %v5079 = vcvt.s32.f32 %v4183
  %v5080 = vcvt.s32.f32 %v4184
  %v5081 = vcvt.s32.f32 %v4185
  %v5082 = vcvt.s32.f32 %v4186
  %v5083 = vcvt.s32.f32 %v4187
  %v5084 = vcvt.s32.f32 %v4188
  %v5085 = vcvt.s32.f32 %v4189
  %v5086 = vcvt.s32.f32 %v4190
  %v5087 = vcvt.s32.f32 %v4191
  %v5088 = vcvt.s32.f32 %v4192
  %v5089 = vcvt.s32.f32 %v4193
  %v5090 = vcvt.s32.f32 %v4194
  %v5091 = vcvt.s32.f32 %v4195
  %v5092 = vcvt.s32.f32 %v4196
  %v5093 = vcvt.s32.f32 %v4197
  %v5094 = vcvt.s32.f32 %v4198
  %v5095 = vcvt.s32.f32 %v4199
  %v5096 = vcvt.s32.f32 %v4200
  %v5097 = vcvt.s32.f32 %v4201
  %v5098 = vcvt.s32.f32 %v4202
  %v5099 = vcvt.s32.f32 %v4203
  %v5100 = vcvt.s32.f32 %v4204
  %v5101 = vcvt.s32.f32 %v4205
  %v5102 = vcvt.s32.f32 %v4206
  %v5103 = vcvt.s32.f32 %v4207
  %v5104 = vcvt.s32.f32 %v4208
  %v5105 = vcvt.s32.f32 %v4209
  %v5106 = vcvt.s32.f32 %v4210
  %v5107 = vcvt.s32.f32 %v4211
  %v5108 = vcvt.s32.f32 %v4212
  %v5109 = vcvt.s32.f32 %v4213
  %v5110 = vcvt.s32.f32 %v4214
  %v5111 = vcvt.s32.f32 %v4215
  %v5112 = vcvt.s32.f32 %v4216
  %v5113 = vcvt.s32.f32 %v4217
  %v5114 = vcvt.s32.f32 %v4218
  %v5115 = vcvt.s32.f32 %v4219
  %v5116 = vcvt.s32.f32 %v4220
  %v5117 = vcvt.s32.f32 %v4221
  %v5118 = vcvt.s32.f32 %v4222
  %v5119 = vcvt.s32.f32 %v4223
  %v5120 = vcvt.s32.f32 %v4224
  %v5121 = vcvt.s32.f32 %v4225
  %v5122 = vcvt.s32.f32 %v4226
  %v5123 = vcvt.s32.f32 %v4227
  %v5124 = vcvt.s32.f32 %v4228
  %v5125 = vcvt.s32.f32 %v4229
  %v5126 = vcvt.s32.f32 %v4230
  %v5127 = vcvt.s32.f32 %v4231
  %v5128 = vcvt.s32.f32 %v4232
  %v5129 = vcvt.s32.f32 %v4233
  %v5130 = vcvt.s32.f32 %v4234
  %v5131 = vcvt.s32.f32 %v4235
  %v5132 = vcvt.s32.f32 %v4236
  %v5133 = vcvt.s32.f32 %v4237
  %v5134 = vcvt.s32.f32 %v4238
  %v5135 = vcvt.s32.f32 %v4239
  %v5136 = vcvt.s32.f32 %v4240
  %v5137 = vcvt.s32.f32 %v4241
  %v5138 = vcvt.s32.f32 %v4242
  %v5139 = vcvt.s32.f32 %v4243
  %v5140 = vcvt.s32.f32 %v4244
  %v5141 = vcvt.s32.f32 %v4245
  %v5142 = vcvt.s32.f32 %v4246
  %v5143 = vcvt.s32.f32 %v4247
  %v5144 = vcvt.s32.f32 %v4248
  %v5145 = vcvt.s32.f32 %v4249
  %v5146 = vcvt.s32.f32 %v4250
  %v5147 = vcvt.s32.f32 %v4251
  %v5148 = vcvt.s32.f32 %v4252
  %v5149 = vcvt.s32.f32 %v4253
  %v5150 = vcvt.s32.f32 %v4254
  %v5151 = vcvt.s32.f32 %v4255
  %v5152 = vcvt.s32.f32 %v4256
  %v5153 = vcvt.s32.f32 %v4257
  %v5154 = vcvt.s32.f32 %v4258
  %v5155 = vcvt.s32.f32 %v4259
  %v5156 = vcvt.s32.f32 %v4260
  %v5157 = vcvt.s32.f32 %v4261
  %v5158 = vcvt.s32.f32 %v4262
  %v5159 = vcvt.s32.f32 %v4263
  %v5160 = vcvt.s32.f32 %v4264
  %v5161 = vcvt.s32.f32 %v4265
  %v5162 = vcvt.s32.f32 %v4266
  %v5163 = vcvt.s32.f32 %v4267
  %v5164 = vcvt.s32.f32 %v4268
  %v5165 = vcvt.s32.f32 %v4269
  %v5166 = vcvt.s32.f32 %v4270
  %v5167 = vcvt.s32.f32 %v4271
  %v5168 = vcvt.s32.f32 %v4272
  %v5169 = vcvt.s32.f32 %v4273
  %v5170 = vcvt.s32.f32 %v4274
  %v5171 = vcvt.s32.f32 %v4275
  %v5172 = vcvt.s32.f32 %v4276
  %v5173 = vcvt.s32.f32 %v4277
  %v5174 = vcvt.s32.f32 %v4278
  %v5175 = vcvt.s32.f32 %v4279
  %v5176 = vcvt.s32.f32 %v4280
  %v5177 = vcvt.s32.f32 %v4281
  %v5178 = vcvt.s32.f32 %v4282
  %v5179 = vcvt.s32.f32 %v4283
  %v5180 = vcvt.s32.f32 %v4284
  %v5181 = vcvt.s32.f32 %v4285
  %v5182 = vcvt.s32.f32 %v4286
  %v5183 = vcvt.s32.f32 %v4287
  %v5184 = vcvt.s32.f32 %v4288
  %v5185 = vcvt.s32.f32 %v4289
  %v5186 = vcvt.s32.f32 %v4290
  %v5187 = vcvt.s32.f32 %v4291
  %v5188 = vcvt.s32.f32 %v4292
  %v5189 = vcvt.s32.f32 %v4293
  %v5190 = vcvt.s32.f32 %v4294
  %v5191 = vcvt.s32.f32 %v4295
  %v5192 = vcvt.s32.f32 %v4296
  %v5193 = vcvt.s32.f32 %v4297
  %v5194 = vcvt.s32.f32 %v4298
  %v5195 = vcvt.s32.f32 %v4299
  %v5196 = vcvt.s32.f32 %v4300
  %v5197 = vcvt.s32.f32 %v4301
  %v5198 = vcvt.s32.f32 %v4302
  %v5199 = vcvt.s32.f32 %v4303
  %v5200 = vcvt.s32.f32 %v4304
  %v5201 = vcvt.s32.f32 %v4305
  %v5202 = vcvt.s32.f32 %v4306
  %v5203 = vcvt.s32.f32 %v4307
  %v5204 = vcvt.s32.f32 %v4308
  %v5205 = vcvt.s32.f32 %v4309
  %v5206 = vcvt.s32.f32 %v4310
  %v5207 = vcvt.s32.f32 %v4311
  %v5208 = vcvt.s32.f32 %v4312
  %v5209 = vcvt.s32.f32 %v4313
  %v5210 = vcvt.s32.f32 %v4314
  %v5211 = vcvt.s32.f32 %v4315
  %v5212 = vcvt.s32.f32 %v4316
  %v5213 = vcvt.s32.f32 %v4317
  %v5214 = vcvt.s32.f32 %v4318
  %v5215 = vcvt.s32.f32 %v4319
  %v5216 = vcvt.s32.f32 %v4320
  %v5217 = vcvt.s32.f32 %v4321
  %v5218 = vcvt.s32.f32 %v4322
  %v5219 = vcvt.s32.f32 %v4323
  %v5220 = vcvt.s32.f32 %v4324
  %v5221 = vcvt.s32.f32 %v4325
  %v5222 = vcvt.s32.f32 %v4326
  %v5223 = vcvt.s32.f32 %v4327
  %v5224 = vcvt.s32.f32 %v4328
  %v5225 = vcvt.s32.f32 %v4329
  %v5226 = vcvt.s32.f32 %v4330
  %v5227 = vcvt.s32.f32 %v4331
  %v5228 = vcvt.s32.f32 %v4332
  %v5229 = vcvt.s32.f32 %v4333
  %v5230 = vcvt.s32.f32 %v4334
  %v5231 = vcvt.s32.f32 %v4335
  %v5232 = vcvt.s32.f32 %v4336
  %v5233 = vcvt.s32.f32 %v4337
  %v5234 = vcvt.s32.f32 %v4338
  %v5235 = vcvt.s32.f32 %v4339
  %v5236 = vcvt.s32.f32 %v4340
  %v5237 = vcvt.s32.f32 %v4341
  %v5238 = vcvt.s32.f32 %v4342
  %v5239 = vcvt.s32.f32 %v4343
  %v5240 = vcvt.s32.f32 %v4344
  %v5241 = vcvt.s32.f32 %v4345
  %v5242 = vcvt.s32.f32 %v4346
  %v5243 = vcvt.s32.f32 %v4347
  %v5244 = vcvt.s32.f32 %v4348
  %v5245 = vcvt.s32.f32 %v4349
  %v5246 = vcvt.s32.f32 %v4350
  %v5247 = vcvt.s32.f32 %v4351
  %v5248 = vcvt.s32.f32 %v4352
  %v5249 = vcvt.s32.f32 %v4353
  %v5250 = vcvt.s32.f32 %v4354
  %v5251 = vcvt.s32.f32 %v4355
  %v5252 = vcvt.s32.f32 %v4356
  %v5253 = vcvt.s32.f32 %v4357
  %v5254 = vcvt.s32.f32 %v4358
  %v5255 = vcvt.s32.f32 %v4359
  %v5256 = vcvt.s32.f32 %v4360
  %v5257 = vcvt.s32.f32 %v4361
  %v5258 = vcvt.s32.f32 %v4362
  %v5259 = vcvt.s32.f32 %v4363
  %v5260 = vcvt.s32.f32 %v4364
  %v5261 = vcvt.s32.f32 %v4365
  %v5262 = vcvt.s32.f32 %v4366
  %v5263 = vcvt.s32.f32 %v4367
  %v5264 = vcvt.s32.f32 %v4368
  %v5265 = vcvt.s32.f32 %v4369
  %v5266 = vcvt.s32.f32 %v4370
  %v5267 = vcvt.s32.f32 %v4371
  %v5268 = vcvt.s32.f32 %v4372
  %v5269 = vcvt.s32.f32 %v4373
  %v5270 = vcvt.s32.f32 %v4374
  %v5271 = vcvt.s32.f32 %v4375
  %v5272 = vcvt.s32.f32 %v4376
  %v5273 = vcvt.s32.f32 %v4377
  %v5274 = vcvt.s32.f32 %v4378
  %v5275 = vcvt.s32.f32 %v4379
  %v5276 = vcvt.s32.f32 %v4380
  %v5277 = vcvt.s32.f32 %v4381
  %v5278 = vcvt.s32.f32 %v4382
  %v5279 = vcvt.s32.f32 %v4383
  %v5280 = vcvt.s32.f32 %v4384
  %v5281 = vcvt.s32.f32 %v4385
  %v5282 = vcvt.s32.f32 %v4386
  %v5283 = vcvt.s32.f32 %v4387
  %v5284 = vcvt.s32.f32 %v4388
  %v5285 = vcvt.s32.f32 %v4389
  %v5286 = vcvt.s32.f32 %v4390
  %v5287 = vcvt.s32.f32 %v4391
  %v5288 = vcvt.s32.f32 %v4392
  %v5289 = vcvt.s32.f32 %v4393
  %v5290 = vcvt.s32.f32 %v4394
  %v5291 = vcvt.s32.f32 %v4395
  %v5292 = vcvt.s32.f32 %v4396
  %v5293 = vcvt.s32.f32 %v4397
  %v5294 = vcvt.s32.f32 %v4398
  %v5295 = vcvt.s32.f32 %v4399
  %v5296 = vcvt.s32.f32 %v4400
  %v5297 = vcvt.s32.f32 %v4401
  %v5298 = vcvt.s32.f32 %v4402
  %v5299 = vcvt.s32.f32 %v4403
  %v5300 = vcvt.s32.f32 %v4404
  %v5301 = vcvt.s32.f32 %v4405
  %v5302 = vcvt.s32.f32 %v4406
  %v5303 = vcvt.s32.f32 %v4407
  %v5304 = vcvt.s32.f32 %v4408
  %v5305 = vcvt.s32.f32 %v4409
  %v5306 = vcvt.s32.f32 %v4410
  %v5307 = vcvt.s32.f32 %v4411
  %v5308 = vcvt.s32.f32 %v4412
  %v5309 = vcvt.s32.f32 %v4413
  %v5310 = vcvt.s32.f32 %v4414
  %v5311 = vcvt.s32.f32 %v4415
  %v5312 = vcvt.s32.f32 %v4416
  %v5313 = vcvt.s32.f32 %v4417
  %v5314 = vcvt.s32.f32 %v4418
  %v5315 = vcvt.s32.f32 %v4419
  %v5316 = vcvt.s32.f32 %v4420
  %v5317 = vcvt.s32.f32 %v4421
  %v5318 = vcvt.s32.f32 %v4422
  %v5319 = vcvt.s32.f32 %v4423
  %v5321 = vlaneseq
  %v5322 = vshrl.u32 %v5321, 7
  %v5323 = vsub.s32 0, %v5322
  %v5324 = vrot.slane %v3527, %v5323
  %v5325 = vlaneseq
  %v5326 = vshrl.u32 %v5325, 7
  %v5327 = vsub.s32 1, %v5326
  %v5328 = vrot.slane %v3527, %v5327
  %v5329 = vlaneseq
  %v5330 = vshrl.u32 %v5329, 7
  %v5331 = vsub.s32 2, %v5330
  %v5332 = vrot.slane %v3527, %v5331
  %v5333 = vlaneseq
  %v5334 = vshrl.u32 %v5333, 7
  %v5335 = vsub.s32 3, %v5334
  %v5336 = vrot.slane %v3527, %v5335
  %v5337 = vlaneseq
  %v5338 = vshrl.u32 %v5337, 7
  %v5339 = vsub.s32 4, %v5338
  %v5340 = vrot.slane %v3527, %v5339
  %v5341 = vlaneseq
  %v5342 = vshrl.u32 %v5341, 7
  %v5343 = vsub.s32 5, %v5342
  %v5344 = vrot.slane %v3527, %v5343
  %v5345 = vlaneseq
  %v5346 = vshrl.u32 %v5345, 7
  %v5347 = vsub.s32 6, %v5346
  %v5348 = vrot.slane %v3527, %v5347
  %v5356 = vmul.f32 %v4424, %v5324
  %v5357 = vmul.f32 %v4425, %v5328
  %v5358 = vmul.f32 %v4426, %v5332
  %v5359 = vmul.f32 %v4427, %v5336
  %v5360 = vmul.f32 %v4428, %v5340
  %v5361 = vmul.f32 %v4429, %v5344
  %v5362 = vmul.f32 %v4430, %v5348
  %v5363 = vmul.f32 %v4431, %v5324
  %v5364 = vmul.f32 %v4432, %v5328
  %v5365 = vmul.f32 %v4433, %v5332
  %v5366 = vmul.f32 %v4434, %v5336
  %v5367 = vmul.f32 %v4435, %v5340
  %v5368 = vmul.f32 %v4436, %v5344
  %v5369 = vmul.f32 %v4437, %v5348
  %v5370 = vmul.f32 %v4438, %v5324
  %v5371 = vmul.f32 %v4439, %v5328
  %v5372 = vmul.f32 %v4440, %v5332
  %v5373 = vmul.f32 %v4441, %v5336
  %v5374 = vmul.f32 %v4442, %v5340
  %v5375 = vmul.f32 %v4443, %v5344
  %v5376 = vmul.f32 %v4444, %v5348
  %v5377 = vmul.f32 %v4445, %v5324
  %v5378 = vmul.f32 %v4446, %v5328
  %v5379 = vmul.f32 %v4447, %v5332
  %v5380 = vmul.f32 %v4448, %v5336
  %v5381 = vmul.f32 %v4449, %v5340
  %v5382 = vmul.f32 %v4450, %v5344
  %v5383 = vmul.f32 %v4451, %v5348
  %v5384 = vmul.f32 %v4452, %v5324
  %v5385 = vmul.f32 %v4453, %v5328
  %v5386 = vmul.f32 %v4454, %v5332
  %v5387 = vmul.f32 %v4455, %v5336
  %v5388 = vmul.f32 %v4456, %v5340
  %v5389 = vmul.f32 %v4457, %v5344
  %v5390 = vmul.f32 %v4458, %v5348
  %v5391 = vmul.f32 %v4459, %v5324
  %v5392 = vmul.f32 %v4460, %v5328
  %v5393 = vmul.f32 %v4461, %v5332
  %v5394 = vmul.f32 %v4462, %v5336
  %v5395 = vmul.f32 %v4463, %v5340
  %v5396 = vmul.f32 %v4464, %v5344
  %v5397 = vmul.f32 %v4465, %v5348
  %v5398 = vmul.f32 %v4466, %v5324
  %v5399 = vmul.f32 %v4467, %v5328
  %v5400 = vmul.f32 %v4468, %v5332
  %v5401 = vmul.f32 %v4469, %v5336
  %v5402 = vmul.f32 %v4470, %v5340
  %v5403 = vmul.f32 %v4471, %v5344
  %v5404 = vmul.f32 %v4472, %v5348
  %v5405 = vmul.f32 %v4473, %v5324
  %v5406 = vmul.f32 %v4474, %v5328
  %v5407 = vmul.f32 %v4475, %v5332
  %v5408 = vmul.f32 %v4476, %v5336
  %v5409 = vmul.f32 %v4477, %v5340
  %v5410 = vmul.f32 %v4478, %v5344
  %v5411 = vmul.f32 %v4479, %v5348
  %v5412 = vmul.f32 %v4480, %v5324
  %v5413 = vmul.f32 %v4481, %v5328
  %v5414 = vmul.f32 %v4482, %v5332
  %v5415 = vmul.f32 %v4483, %v5336
  %v5416 = vmul.f32 %v4484, %v5340
  %v5417 = vmul.f32 %v4485, %v5344
  %v5418 = vmul.f32 %v4486, %v5348
  %v5419 = vmul.f32 %v4487, %v5324
  %v5420 = vmul.f32 %v4488, %v5328
  %v5421 = vmul.f32 %v4489, %v5332
  %v5422 = vmul.f32 %v4490, %v5336
  %v5423 = vmul.f32 %v4491, %v5340
  %v5424 = vmul.f32 %v4492, %v5344
  %v5425 = vmul.f32 %v4493, %v5348
  %v5426 = vmul.f32 %v4494, %v5324
  %v5427 = vmul.f32 %v4495, %v5328
  %v5428 = vmul.f32 %v4496, %v5332
  %v5429 = vmul.f32 %v4497, %v5336
  %v5430 = vmul.f32 %v4498, %v5340
  %v5431 = vmul.f32 %v4499, %v5344
  %v5432 = vmul.f32 %v4500, %v5348
  %v5433 = vmul.f32 %v4501, %v5324
  %v5434 = vmul.f32 %v4502, %v5328
  %v5435 = vmul.f32 %v4503, %v5332
  %v5436 = vmul.f32 %v4504, %v5336
  %v5437 = vmul.f32 %v4505, %v5340
  %v5438 = vmul.f32 %v4506, %v5344
  %v5439 = vmul.f32 %v4507, %v5348
  %v5440 = vmul.f32 %v4508, %v5324
  %v5441 = vmul.f32 %v4509, %v5328
  %v5442 = vmul.f32 %v4510, %v5332
  %v5443 = vmul.f32 %v4511, %v5336
  %v5444 = vmul.f32 %v4512, %v5340
  %v5445 = vmul.f32 %v4513, %v5344
  %v5446 = vmul.f32 %v4514, %v5348
  %v5447 = vmul.f32 %v4515, %v5324
  %v5448 = vmul.f32 %v4516, %v5328
  %v5449 = vmul.f32 %v4517, %v5332
  %v5450 = vmul.f32 %v4518, %v5336
  %v5451 = vmul.f32 %v4519, %v5340
  %v5452 = vmul.f32 %v4520, %v5344
  %v5453 = vmul.f32 %v4521, %v5348
  %v5454 = vmul.f32 %v4522, %v5324
  %v5455 = vmul.f32 %v4523, %v5328
  %v5456 = vmul.f32 %v4524, %v5332
  %v5457 = vmul.f32 %v4525, %v5336
  %v5458 = vmul.f32 %v4526, %v5340
  %v5459 = vmul.f32 %v4527, %v5344
  %v5460 = vmul.f32 %v4528, %v5348
  %v5461 = vmul.f32 %v4529, %v5324
  %v5462 = vmul.f32 %v4530, %v5328
  %v5463 = vmul.f32 %v4531, %v5332
  %v5464 = vmul.f32 %v4532, %v5336
  %v5465 = vmul.f32 %v4533, %v5340
  %v5466 = vmul.f32 %v4534, %v5344
  %v5467 = vmul.f32 %v4535, %v5348
  %v5468 = vmul.f32 %v4536, %v5324
  %v5469 = vmul.f32 %v4537, %v5328
  %v5470 = vmul.f32 %v4538, %v5332
  %v5471 = vmul.f32 %v4539, %v5336
  %v5472 = vmul.f32 %v4540, %v5340
  %v5473 = vmul.f32 %v4541, %v5344
  %v5474 = vmul.f32 %v4542, %v5348
  %v5475 = vmul.f32 %v4543, %v5324
  %v5476 = vmul.f32 %v4544, %v5328
  %v5477 = vmul.f32 %v4545, %v5332
  %v5478 = vmul.f32 %v4546, %v5336
  %v5479 = vmul.f32 %v4547, %v5340
  %v5480 = vmul.f32 %v4548, %v5344
  %v5481 = vmul.f32 %v4549, %v5348
  %v5482 = vmul.f32 %v4550, %v5324
  %v5483 = vmul.f32 %v4551, %v5328
  %v5484 = vmul.f32 %v4552, %v5332
  %v5485 = vmul.f32 %v4553, %v5336
  %v5486 = vmul.f32 %v4554, %v5340
  %v5487 = vmul.f32 %v4555, %v5344
  %v5488 = vmul.f32 %v4556, %v5348
  %v5489 = vmul.f32 %v4557, %v5324
  %v5490 = vmul.f32 %v4558, %v5328
  %v5491 = vmul.f32 %v4559, %v5332
  %v5492 = vmul.f32 %v4560, %v5336
  %v5493 = vmul.f32 %v4561, %v5340
  %v5494 = vmul.f32 %v4562, %v5344
  %v5495 = vmul.f32 %v4563, %v5348
  %v5496 = vmul.f32 %v4564, %v5324
  %v5497 = vmul.f32 %v4565, %v5328
  %v5498 = vmul.f32 %v4566, %v5332
  %v5499 = vmul.f32 %v4567, %v5336
  %v5500 = vmul.f32 %v4568, %v5340
  %v5501 = vmul.f32 %v4569, %v5344
  %v5502 = vmul.f32 %v4570, %v5348
  %v5503 = vmul.f32 %v4571, %v5324
  %v5504 = vmul.f32 %v4572, %v5328
  %v5505 = vmul.f32 %v4573, %v5332
  %v5506 = vmul.f32 %v4574, %v5336
  %v5507 = vmul.f32 %v4575, %v5340
  %v5508 = vmul.f32 %v4576, %v5344
  %v5509 = vmul.f32 %v4577, %v5348
  %v5510 = vmul.f32 %v4578, %v5324
  %v5511 = vmul.f32 %v4579, %v5328
  %v5512 = vmul.f32 %v4580, %v5332
  %v5513 = vmul.f32 %v4581, %v5336
  %v5514 = vmul.f32 %v4582, %v5340
  %v5515 = vmul.f32 %v4583, %v5344
  %v5516 = vmul.f32 %v4584, %v5348
  %v5517 = vmul.f32 %v4585, %v5324
  %v5518 = vmul.f32 %v4586, %v5328
  %v5519 = vmul.f32 %v4587, %v5332
  %v5520 = vmul.f32 %v4588, %v5336
  %v5521 = vmul.f32 %v4589, %v5340
  %v5522 = vmul.f32 %v4590, %v5344
  %v5523 = vmul.f32 %v4591, %v5348
  %v5524 = vmul.f32 %v4592, %v5324
  %v5525 = vmul.f32 %v4593, %v5328
  %v5526 = vmul.f32 %v4594, %v5332
  %v5527 = vmul.f32 %v4595, %v5336
  %v5528 = vmul.f32 %v4596, %v5340
  %v5529 = vmul.f32 %v4597, %v5344
  %v5530 = vmul.f32 %v4598, %v5348
  %v5531 = vmul.f32 %v4599, %v5324
  %v5532 = vmul.f32 %v4600, %v5328
  %v5533 = vmul.f32 %v4601, %v5332
  %v5534 = vmul.f32 %v4602, %v5336
  %v5535 = vmul.f32 %v4603, %v5340
  %v5536 = vmul.f32 %v4604, %v5344
  %v5537 = vmul.f32 %v4605, %v5348
  %v5538 = vmul.f32 %v4606, %v5324
  %v5539 = vmul.f32 %v4607, %v5328
  %v5540 = vmul.f32 %v4608, %v5332
  %v5541 = vmul.f32 %v4609, %v5336
  %v5542 = vmul.f32 %v4610, %v5340
  %v5543 = vmul.f32 %v4611, %v5344
  %v5544 = vmul.f32 %v4612, %v5348
  %v5545 = vmul.f32 %v4613, %v5324
  %v5546 = vmul.f32 %v4614, %v5328
  %v5547 = vmul.f32 %v4615, %v5332
  %v5548 = vmul.f32 %v4616, %v5336
  %v5549 = vmul.f32 %v4617, %v5340
  %v5550 = vmul.f32 %v4618, %v5344
  %v5551 = vmul.f32 %v4619, %v5348
  %v5552 = vmul.f32 %v4620, %v5324
  %v5553 = vmul.f32 %v4621, %v5328
  %v5554 = vmul.f32 %v4622, %v5332
  %v5555 = vmul.f32 %v4623, %v5336
  %v5556 = vmul.f32 %v4624, %v5340
  %v5557 = vmul.f32 %v4625, %v5344
  %v5558 = vmul.f32 %v4626, %v5348
  %v5559 = vmul.f32 %v4627, %v5324
  %v5560 = vmul.f32 %v4628, %v5328
  %v5561 = vmul.f32 %v4629, %v5332
  %v5562 = vmul.f32 %v4630, %v5336
  %v5563 = vmul.f32 %v4631, %v5340
  %v5564 = vmul.f32 %v4632, %v5344
  %v5565 = vmul.f32 %v4633, %v5348
  %v5566 = vmul.f32 %v4634, %v5324
  %v5567 = vmul.f32 %v4635, %v5328
  %v5568 = vmul.f32 %v4636, %v5332
  %v5569 = vmul.f32 %v4637, %v5336
  %v5570 = vmul.f32 %v4638, %v5340
  %v5571 = vmul.f32 %v4639, %v5344
  %v5572 = vmul.f32 %v4640, %v5348
  %v5573 = vmul.f32 %v4641, %v5324
  %v5574 = vmul.f32 %v4642, %v5328
  %v5575 = vmul.f32 %v4643, %v5332
  %v5576 = vmul.f32 %v4644, %v5336
  %v5577 = vmul.f32 %v4645, %v5340
  %v5578 = vmul.f32 %v4646, %v5344
  %v5579 = vmul.f32 %v4647, %v5348
  %v5580 = vmul.f32 %v4648, %v5324
  %v5581 = vmul.f32 %v4649, %v5328
  %v5582 = vmul.f32 %v4650, %v5332
  %v5583 = vmul.f32 %v4651, %v5336
  %v5584 = vmul.f32 %v4652, %v5340
  %v5585 = vmul.f32 %v4653, %v5344
  %v5586 = vmul.f32 %v4654, %v5348
  %v5587 = vmul.f32 %v4655, %v5324
  %v5588 = vmul.f32 %v4656, %v5328
  %v5589 = vmul.f32 %v4657, %v5332
  %v5590 = vmul.f32 %v4658, %v5336
  %v5591 = vmul.f32 %v4659, %v5340
  %v5592 = vmul.f32 %v4660, %v5344
  %v5593 = vmul.f32 %v4661, %v5348
  %v5594 = vmul.f32 %v4662, %v5324
  %v5595 = vmul.f32 %v4663, %v5328
  %v5596 = vmul.f32 %v4664, %v5332
  %v5597 = vmul.f32 %v4665, %v5336
  %v5598 = vmul.f32 %v4666, %v5340
  %v5599 = vmul.f32 %v4667, %v5344
  %v5600 = vmul.f32 %v4668, %v5348
  %v5601 = vmul.f32 %v4669, %v5324
  %v5602 = vmul.f32 %v4670, %v5328
  %v5603 = vmul.f32 %v4671, %v5332
  %v5604 = vmul.f32 %v4672, %v5336
  %v5605 = vmul.f32 %v4673, %v5340
  %v5606 = vmul.f32 %v4674, %v5344
  %v5607 = vmul.f32 %v4675, %v5348
  %v5608 = vmul.f32 %v4676, %v5324
  %v5609 = vmul.f32 %v4677, %v5328
  %v5610 = vmul.f32 %v4678, %v5332
  %v5611 = vmul.f32 %v4679, %v5336
  %v5612 = vmul.f32 %v4680, %v5340
  %v5613 = vmul.f32 %v4681, %v5344
  %v5614 = vmul.f32 %v4682, %v5348
  %v5615 = vmul.f32 %v4683, %v5324
  %v5616 = vmul.f32 %v4684, %v5328
  %v5617 = vmul.f32 %v4685, %v5332
  %v5618 = vmul.f32 %v4686, %v5336
  %v5619 = vmul.f32 %v4687, %v5340
  %v5620 = vmul.f32 %v4688, %v5344
  %v5621 = vmul.f32 %v4689, %v5348
  %v5622 = vmul.f32 %v4690, %v5324
  %v5623 = vmul.f32 %v4691, %v5328
  %v5624 = vmul.f32 %v4692, %v5332
  %v5625 = vmul.f32 %v4693, %v5336
  %v5626 = vmul.f32 %v4694, %v5340
  %v5627 = vmul.f32 %v4695, %v5344
  %v5628 = vmul.f32 %v4696, %v5348
  %v5629 = vmul.f32 %v4697, %v5324
  %v5630 = vmul.f32 %v4698, %v5328
  %v5631 = vmul.f32 %v4699, %v5332
  %v5632 = vmul.f32 %v4700, %v5336
  %v5633 = vmul.f32 %v4701, %v5340
  %v5634 = vmul.f32 %v4702, %v5344
  %v5635 = vmul.f32 %v4703, %v5348
  %v5636 = vmul.f32 %v4704, %v5324
  %v5637 = vmul.f32 %v4705, %v5328
  %v5638 = vmul.f32 %v4706, %v5332
  %v5639 = vmul.f32 %v4707, %v5336
  %v5640 = vmul.f32 %v4708, %v5340
  %v5641 = vmul.f32 %v4709, %v5344
  %v5642 = vmul.f32 %v4710, %v5348
  %v5643 = vmul.f32 %v4711, %v5324
  %v5644 = vmul.f32 %v4712, %v5328
  %v5645 = vmul.f32 %v4713, %v5332
  %v5646 = vmul.f32 %v4714, %v5336
  %v5647 = vmul.f32 %v4715, %v5340
  %v5648 = vmul.f32 %v4716, %v5344
  %v5649 = vmul.f32 %v4717, %v5348
  %v5650 = vmul.f32 %v4718, %v5324
  %v5651 = vmul.f32 %v4719, %v5328
  %v5652 = vmul.f32 %v4720, %v5332
  %v5653 = vmul.f32 %v4721, %v5336
  %v5654 = vmul.f32 %v4722, %v5340
  %v5655 = vmul.f32 %v4723, %v5344
  %v5656 = vmul.f32 %v4724, %v5348
  %v5657 = vmul.f32 %v4725, %v5324
  %v5658 = vmul.f32 %v4726, %v5328
  %v5659 = vmul.f32 %v4727, %v5332
  %v5660 = vmul.f32 %v4728, %v5336
  %v5661 = vmul.f32 %v4729, %v5340
  %v5662 = vmul.f32 %v4730, %v5344
  %v5663 = vmul.f32 %v4731, %v5348
  %v5664 = vmul.f32 %v4732, %v5324
  %v5665 = vmul.f32 %v4733, %v5328
  %v5666 = vmul.f32 %v4734, %v5332
  %v5667 = vmul.f32 %v4735, %v5336
  %v5668 = vmul.f32 %v4736, %v5340
  %v5669 = vmul.f32 %v4737, %v5344
  %v5670 = vmul.f32 %v4738, %v5348
  %v5671 = vmul.f32 %v4739, %v5324
  %v5672 = vmul.f32 %v4740, %v5328
  %v5673 = vmul.f32 %v4741, %v5332
  %v5674 = vmul.f32 %v4742, %v5336
  %v5675 = vmul.f32 %v4743, %v5340
  %v5676 = vmul.f32 %v4744, %v5344
  %v5677 = vmul.f32 %v4745, %v5348
  %v5678 = vmul.f32 %v4746, %v5324
  %v5679 = vmul.f32 %v4747, %v5328
  %v5680 = vmul.f32 %v4748, %v5332
  %v5681 = vmul.f32 %v4749, %v5336
  %v5682 = vmul.f32 %v4750, %v5340
  %v5683 = vmul.f32 %v4751, %v5344
  %v5684 = vmul.f32 %v4752, %v5348
  %v5685 = vmul.f32 %v4753, %v5324
  %v5686 = vmul.f32 %v4754, %v5328
  %v5687 = vmul.f32 %v4755, %v5332
  %v5688 = vmul.f32 %v4756, %v5336
  %v5689 = vmul.f32 %v4757, %v5340
  %v5690 = vmul.f32 %v4758, %v5344
  %v5691 = vmul.f32 %v4759, %v5348
  %v5692 = vmul.f32 %v4760, %v5324
  %v5693 = vmul.f32 %v4761, %v5328
  %v5694 = vmul.f32 %v4762, %v5332
  %v5695 = vmul.f32 %v4763, %v5336
  %v5696 = vmul.f32 %v4764, %v5340
  %v5697 = vmul.f32 %v4765, %v5344
  %v5698 = vmul.f32 %v4766, %v5348
  %v5699 = vmul.f32 %v4767, %v5324
  %v5700 = vmul.f32 %v4768, %v5328
  %v5701 = vmul.f32 %v4769, %v5332
  %v5702 = vmul.f32 %v4770, %v5336
  %v5703 = vmul.f32 %v4771, %v5340
  %v5704 = vmul.f32 %v4772, %v5344
  %v5705 = vmul.f32 %v4773, %v5348
  %v5706 = vmul.f32 %v4774, %v5324
  %v5707 = vmul.f32 %v4775, %v5328
  %v5708 = vmul.f32 %v4776, %v5332
  %v5709 = vmul.f32 %v4777, %v5336
  %v5710 = vmul.f32 %v4778, %v5340
  %v5711 = vmul.f32 %v4779, %v5344
  %v5712 = vmul.f32 %v4780, %v5348
  %v5713 = vmul.f32 %v4781, %v5324
  %v5714 = vmul.f32 %v4782, %v5328
  %v5715 = vmul.f32 %v4783, %v5332
  %v5716 = vmul.f32 %v4784, %v5336
  %v5717 = vmul.f32 %v4785, %v5340
  %v5718 = vmul.f32 %v4786, %v5344
  %v5719 = vmul.f32 %v4787, %v5348
  %v5720 = vmul.f32 %v4788, %v5324
  %v5721 = vmul.f32 %v4789, %v5328
  %v5722 = vmul.f32 %v4790, %v5332
  %v5723 = vmul.f32 %v4791, %v5336
  %v5724 = vmul.f32 %v4792, %v5340
  %v5725 = vmul.f32 %v4793, %v5344
  %v5726 = vmul.f32 %v4794, %v5348
  %v5727 = vmul.f32 %v4795, %v5324
  %v5728 = vmul.f32 %v4796, %v5328
  %v5729 = vmul.f32 %v4797, %v5332
  %v5730 = vmul.f32 %v4798, %v5336
  %v5731 = vmul.f32 %v4799, %v5340
  %v5732 = vmul.f32 %v4800, %v5344
  %v5733 = vmul.f32 %v4801, %v5348
  %v5734 = vmul.f32 %v4802, %v5324
  %v5735 = vmul.f32 %v4803, %v5328
  %v5736 = vmul.f32 %v4804, %v5332
  %v5737 = vmul.f32 %v4805, %v5336
  %v5738 = vmul.f32 %v4806, %v5340
  %v5739 = vmul.f32 %v4807, %v5344
  %v5740 = vmul.f32 %v4808, %v5348
  %v5741 = vmul.f32 %v4809, %v5324
  %v5742 = vmul.f32 %v4810, %v5328
  %v5743 = vmul.f32 %v4811, %v5332
  %v5744 = vmul.f32 %v4812, %v5336
  %v5745 = vmul.f32 %v4813, %v5340
  %v5746 = vmul.f32 %v4814, %v5344
  %v5747 = vmul.f32 %v4815, %v5348
  %v5748 = vmul.f32 %v4816, %v5324
  %v5749 = vmul.f32 %v4817, %v5328
  %v5750 = vmul.f32 %v4818, %v5332
  %v5751 = vmul.f32 %v4819, %v5336
  %v5752 = vmul.f32 %v4820, %v5340
  %v5753 = vmul.f32 %v4821, %v5344
  %v5754 = vmul.f32 %v4822, %v5348
  %v5755 = vmul.f32 %v4823, %v5324
  %v5756 = vmul.f32 %v4824, %v5328
  %v5757 = vmul.f32 %v4825, %v5332
  %v5758 = vmul.f32 %v4826, %v5336
  %v5759 = vmul.f32 %v4827, %v5340
  %v5760 = vmul.f32 %v4828, %v5344
  %v5761 = vmul.f32 %v4829, %v5348
  %v5762 = vmul.f32 %v4830, %v5324
  %v5763 = vmul.f32 %v4831, %v5328
  %v5764 = vmul.f32 %v4832, %v5332
  %v5765 = vmul.f32 %v4833, %v5336
  %v5766 = vmul.f32 %v4834, %v5340
  %v5767 = vmul.f32 %v4835, %v5344
  %v5768 = vmul.f32 %v4836, %v5348
  %v5769 = vmul.f32 %v4837, %v5324
  %v5770 = vmul.f32 %v4838, %v5328
  %v5771 = vmul.f32 %v4839, %v5332
  %v5772 = vmul.f32 %v4840, %v5336
  %v5773 = vmul.f32 %v4841, %v5340
  %v5774 = vmul.f32 %v4842, %v5344
  %v5775 = vmul.f32 %v4843, %v5348
  %v5776 = vmul.f32 %v4844, %v5324
  %v5777 = vmul.f32 %v4845, %v5328
  %v5778 = vmul.f32 %v4846, %v5332
  %v5779 = vmul.f32 %v4847, %v5336
  %v5780 = vmul.f32 %v4848, %v5340
  %v5781 = vmul.f32 %v4849, %v5344
  %v5782 = vmul.f32 %v4850, %v5348
  %v5783 = vmul.f32 %v4851, %v5324
  %v5784 = vmul.f32 %v4852, %v5328
  %v5785 = vmul.f32 %v4853, %v5332
  %v5786 = vmul.f32 %v4854, %v5336
  %v5787 = vmul.f32 %v4855, %v5340
  %v5788 = vmul.f32 %v4856, %v5344
  %v5789 = vmul.f32 %v4857, %v5348
  %v5790 = vmul.f32 %v4858, %v5324
  %v5791 = vmul.f32 %v4859, %v5328
  %v5792 = vmul.f32 %v4860, %v5332
  %v5793 = vmul.f32 %v4861, %v5336
  %v5794 = vmul.f32 %v4862, %v5340
  %v5795 = vmul.f32 %v4863, %v5344
  %v5796 = vmul.f32 %v4864, %v5348
  %v5797 = vmul.f32 %v4865, %v5324
  %v5798 = vmul.f32 %v4866, %v5328
  %v5799 = vmul.f32 %v4867, %v5332
  %v5800 = vmul.f32 %v4868, %v5336
  %v5801 = vmul.f32 %v4869, %v5340
  %v5802 = vmul.f32 %v4870, %v5344
  %v5803 = vmul.f32 %v4871, %v5348
  %v5804 = vmul.f32 %v4872, %v5324
  %v5805 = vmul.f32 %v4873, %v5328
  %v5806 = vmul.f32 %v4874, %v5332
  %v5807 = vmul.f32 %v4875, %v5336
  %v5808 = vmul.f32 %v4876, %v5340
  %v5809 = vmul.f32 %v4877, %v5344
  %v5810 = vmul.f32 %v4878, %v5348
  %v5811 = vmul.f32 %v4879, %v5324
  %v5812 = vmul.f32 %v4880, %v5328
  %v5813 = vmul.f32 %v4881, %v5332
  %v5814 = vmul.f32 %v4882, %v5336
  %v5815 = vmul.f32 %v4883, %v5340
  %v5816 = vmul.f32 %v4884, %v5344
  %v5817 = vmul.f32 %v4885, %v5348
  %v5818 = vmul.f32 %v4886, %v5324
  %v5819 = vmul.f32 %v4887, %v5328
  %v5820 = vmul.f32 %v4888, %v5332
  %v5821 = vmul.f32 %v4889, %v5336
  %v5822 = vmul.f32 %v4890, %v5340
  %v5823 = vmul.f32 %v4891, %v5344
  %v5824 = vmul.f32 %v4892, %v5348
  %v5825 = vmul.f32 %v4893, %v5324
  %v5826 = vmul.f32 %v4894, %v5328
  %v5827 = vmul.f32 %v4895, %v5332
  %v5828 = vmul.f32 %v4896, %v5336
  %v5829 = vmul.f32 %v4897, %v5340
  %v5830 = vmul.f32 %v4898, %v5344
  %v5831 = vmul.f32 %v4899, %v5348
  %v5832 = vmul.f32 %v4900, %v5324
  %v5833 = vmul.f32 %v4901, %v5328
  %v5834 = vmul.f32 %v4902, %v5332
  %v5835 = vmul.f32 %v4903, %v5336
  %v5836 = vmul.f32 %v4904, %v5340
  %v5837 = vmul.f32 %v4905, %v5344
  %v5838 = vmul.f32 %v4906, %v5348
  %v5839 = vmul.f32 %v4907, %v5324
  %v5840 = vmul.f32 %v4908, %v5328
  %v5841 = vmul.f32 %v4909, %v5332
  %v5842 = vmul.f32 %v4910, %v5336
  %v5843 = vmul.f32 %v4911, %v5340
  %v5844 = vmul.f32 %v4912, %v5344
  %v5845 = vmul.f32 %v4913, %v5348
  %v5846 = vmul.f32 %v4914, %v5324
  %v5847 = vmul.f32 %v4915, %v5328
  %v5848 = vmul.f32 %v4916, %v5332
  %v5849 = vmul.f32 %v4917, %v5336
  %v5850 = vmul.f32 %v4918, %v5340
  %v5851 = vmul.f32 %v4919, %v5344
  %v5852 = vmul.f32 %v4920, %v5348
  %v5853 = vmul.f32 %v4921, %v5324
  %v5854 = vmul.f32 %v4922, %v5328
  %v5855 = vmul.f32 %v4923, %v5332
  %v5856 = vmul.f32 %v4924, %v5336
  %v5857 = vmul.f32 %v4925, %v5340
  %v5858 = vmul.f32 %v4926, %v5344
  %v5859 = vmul.f32 %v4927, %v5348
  %v5860 = vmul.f32 %v4928, %v5324
  %v5861 = vmul.f32 %v4929, %v5328
  %v5862 = vmul.f32 %v4930, %v5332
  %v5863 = vmul.f32 %v4931, %v5336
  %v5864 = vmul.f32 %v4932, %v5340
  %v5865 = vmul.f32 %v4933, %v5344
  %v5866 = vmul.f32 %v4934, %v5348
  %v5867 = vmul.f32 %v4935, %v5324
  %v5868 = vmul.f32 %v4936, %v5328
  %v5869 = vmul.f32 %v4937, %v5332
  %v5870 = vmul.f32 %v4938, %v5336
  %v5871 = vmul.f32 %v4939, %v5340
  %v5872 = vmul.f32 %v4940, %v5344
  %v5873 = vmul.f32 %v4941, %v5348
  %v5874 = vmul.f32 %v4942, %v5324
  %v5875 = vmul.f32 %v4943, %v5328
  %v5876 = vmul.f32 %v4944, %v5332
  %v5877 = vmul.f32 %v4945, %v5336
  %v5878 = vmul.f32 %v4946, %v5340
  %v5879 = vmul.f32 %v4947, %v5344
  %v5880 = vmul.f32 %v4948, %v5348
  %v5881 = vmul.f32 %v4949, %v5324
  %v5882 = vmul.f32 %v4950, %v5328
  %v5883 = vmul.f32 %v4951, %v5332
  %v5884 = vmul.f32 %v4952, %v5336
  %v5885 = vmul.f32 %v4953, %v5340
  %v5886 = vmul.f32 %v4954, %v5344
  %v5887 = vmul.f32 %v4955, %v5348
  %v5888 = vmul.f32 %v4956, %v5324
  %v5889 = vmul.f32 %v4957, %v5328
  %v5890 = vmul.f32 %v4958, %v5332
  %v5891 = vmul.f32 %v4959, %v5336
  %v5892 = vmul.f32 %v4960, %v5340
  %v5893 = vmul.f32 %v4961, %v5344
  %v5894 = vmul.f32 %v4962, %v5348
  %v5895 = vmul.f32 %v4963, %v5324
  %v5896 = vmul.f32 %v4964, %v5328
  %v5897 = vmul.f32 %v4965, %v5332
  %v5898 = vmul.f32 %v4966, %v5336
  %v5899 = vmul.f32 %v4967, %v5340
  %v5900 = vmul.f32 %v4968, %v5344
  %v5901 = vmul.f32 %v4969, %v5348
  %v5902 = vmul.f32 %v4970, %v5324
  %v5903 = vmul.f32 %v4971, %v5328
  %v5904 = vmul.f32 %v4972, %v5332
  %v5905 = vmul.f32 %v4973, %v5336
  %v5906 = vmul.f32 %v4974, %v5340
  %v5907 = vmul.f32 %v4975, %v5344
  %v5908 = vmul.f32 %v4976, %v5348
  %v5909 = vmul.f32 %v4977, %v5324
  %v5910 = vmul.f32 %v4978, %v5328
  %v5911 = vmul.f32 %v4979, %v5332
  %v5912 = vmul.f32 %v4980, %v5336
  %v5913 = vmul.f32 %v4981, %v5340
  %v5914 = vmul.f32 %v4982, %v5344
  %v5915 = vmul.f32 %v4983, %v5348
  %v5916 = vmul.f32 %v4984, %v5324
  %v5917 = vmul.f32 %v4985, %v5328
  %v5918 = vmul.f32 %v4986, %v5332
  %v5919 = vmul.f32 %v4987, %v5336
  %v5920 = vmul.f32 %v4988, %v5340
  %v5921 = vmul.f32 %v4989, %v5344
  %v5922 = vmul.f32 %v4990, %v5348
  %v5923 = vmul.f32 %v4991, %v5324
  %v5924 = vmul.f32 %v4992, %v5328
  %v5925 = vmul.f32 %v4993, %v5332
  %v5926 = vmul.f32 %v4994, %v5336
  %v5927 = vmul.f32 %v4995, %v5340
  %v5928 = vmul.f32 %v4996, %v5344
  %v5929 = vmul.f32 %v4997, %v5348
  %v5930 = vmul.f32 %v4998, %v5324
  %v5931 = vmul.f32 %v4999, %v5328
  %v5932 = vmul.f32 %v5000, %v5332
  %v5933 = vmul.f32 %v5001, %v5336
  %v5934 = vmul.f32 %v5002, %v5340
  %v5935 = vmul.f32 %v5003, %v5344
  %v5936 = vmul.f32 %v5004, %v5348
  %v5937 = vmul.f32 %v5005, %v5324
  %v5938 = vmul.f32 %v5006, %v5328
  %v5939 = vmul.f32 %v5007, %v5332
  %v5940 = vmul.f32 %v5008, %v5336
  %v5941 = vmul.f32 %v5009, %v5340
  %v5942 = vmul.f32 %v5010, %v5344
  %v5943 = vmul.f32 %v5011, %v5348
  %v5944 = vmul.f32 %v5012, %v5324
  %v5945 = vmul.f32 %v5013, %v5328
  %v5946 = vmul.f32 %v5014, %v5332
  %v5947 = vmul.f32 %v5015, %v5336
  %v5948 = vmul.f32 %v5016, %v5340
  %v5949 = vmul.f32 %v5017, %v5344
  %v5950 = vmul.f32 %v5018, %v5348
  %v5951 = vmul.f32 %v5019, %v5324
  %v5952 = vmul.f32 %v5020, %v5328
  %v5953 = vmul.f32 %v5021, %v5332
  %v5954 = vmul.f32 %v5022, %v5336
  %v5955 = vmul.f32 %v5023, %v5340
  %v5956 = vmul.f32 %v5024, %v5344
  %v5957 = vmul.f32 %v5025, %v5348
  %v5958 = vmul.f32 %v5026, %v5324
  %v5959 = vmul.f32 %v5027, %v5328
  %v5960 = vmul.f32 %v5028, %v5332
  %v5961 = vmul.f32 %v5029, %v5336
  %v5962 = vmul.f32 %v5030, %v5340
  %v5963 = vmul.f32 %v5031, %v5344
  %v5964 = vmul.f32 %v5032, %v5348
  %v5965 = vmul.f32 %v5033, %v5324
  %v5966 = vmul.f32 %v5034, %v5328
  %v5967 = vmul.f32 %v5035, %v5332
  %v5968 = vmul.f32 %v5036, %v5336
  %v5969 = vmul.f32 %v5037, %v5340
  %v5970 = vmul.f32 %v5038, %v5344
  %v5971 = vmul.f32 %v5039, %v5348
  %v5972 = vmul.f32 %v5040, %v5324
  %v5973 = vmul.f32 %v5041, %v5328
  %v5974 = vmul.f32 %v5042, %v5332
  %v5975 = vmul.f32 %v5043, %v5336
  %v5976 = vmul.f32 %v5044, %v5340
  %v5977 = vmul.f32 %v5045, %v5344
  %v5978 = vmul.f32 %v5046, %v5348
  %v5979 = vmul.f32 %v5047, %v5324
  %v5980 = vmul.f32 %v5048, %v5328
  %v5981 = vmul.f32 %v5049, %v5332
  %v5982 = vmul.f32 %v5050, %v5336
  %v5983 = vmul.f32 %v5051, %v5340
  %v5984 = vmul.f32 %v5052, %v5344
  %v5985 = vmul.f32 %v5053, %v5348
  %v5986 = vmul.f32 %v5054, %v5324
  %v5987 = vmul.f32 %v5055, %v5328
  %v5988 = vmul.f32 %v5056, %v5332
  %v5989 = vmul.f32 %v5057, %v5336
  %v5990 = vmul.f32 %v5058, %v5340
  %v5991 = vmul.f32 %v5059, %v5344
  %v5992 = vmul.f32 %v5060, %v5348
  %v5993 = vmul.f32 %v5061, %v5324
  %v5994 = vmul.f32 %v5062, %v5328
  %v5995 = vmul.f32 %v5063, %v5332
  %v5996 = vmul.f32 %v5064, %v5336
  %v5997 = vmul.f32 %v5065, %v5340
  %v5998 = vmul.f32 %v5066, %v5344
  %v5999 = vmul.f32 %v5067, %v5348
  %v6000 = vmul.f32 %v5068, %v5324
  %v6001 = vmul.f32 %v5069, %v5328
  %v6002 = vmul.f32 %v5070, %v5332
  %v6003 = vmul.f32 %v5071, %v5336
  %v6004 = vmul.f32 %v5072, %v5340
  %v6005 = vmul.f32 %v5073, %v5344
  %v6006 = vmul.f32 %v5074, %v5348
  %v6007 = vmul.f32 %v5075, %v5324
  %v6008 = vmul.f32 %v5076, %v5328
  %v6009 = vmul.f32 %v5077, %v5332
  %v6010 = vmul.f32 %v5078, %v5336
  %v6011 = vmul.f32 %v5079, %v5340
  %v6012 = vmul.f32 %v5080, %v5344
  %v6013 = vmul.f32 %v5081, %v5348
  %v6014 = vmul.f32 %v5082, %v5324
  %v6015 = vmul.f32 %v5083, %v5328
  %v6016 = vmul.f32 %v5084, %v5332
  %v6017 = vmul.f32 %v5085, %v5336
  %v6018 = vmul.f32 %v5086, %v5340
  %v6019 = vmul.f32 %v5087, %v5344
  %v6020 = vmul.f32 %v5088, %v5348
  %v6021 = vmul.f32 %v5089, %v5324
  %v6022 = vmul.f32 %v5090, %v5328
  %v6023 = vmul.f32 %v5091, %v5332
  %v6024 = vmul.f32 %v5092, %v5336
  %v6025 = vmul.f32 %v5093, %v5340
  %v6026 = vmul.f32 %v5094, %v5344
  %v6027 = vmul.f32 %v5095, %v5348
  %v6028 = vmul.f32 %v5096, %v5324
  %v6029 = vmul.f32 %v5097, %v5328
  %v6030 = vmul.f32 %v5098, %v5332
  %v6031 = vmul.f32 %v5099, %v5336
  %v6032 = vmul.f32 %v5100, %v5340
  %v6033 = vmul.f32 %v5101, %v5344
  %v6034 = vmul.f32 %v5102, %v5348
  %v6035 = vmul.f32 %v5103, %v5324
  %v6036 = vmul.f32 %v5104, %v5328
  %v6037 = vmul.f32 %v5105, %v5332
  %v6038 = vmul.f32 %v5106, %v5336
  %v6039 = vmul.f32 %v5107, %v5340
  %v6040 = vmul.f32 %v5108, %v5344
  %v6041 = vmul.f32 %v5109, %v5348
  %v6042 = vmul.f32 %v5110, %v5324
  %v6043 = vmul.f32 %v5111, %v5328
  %v6044 = vmul.f32 %v5112, %v5332
  %v6045 = vmul.f32 %v5113, %v5336
  %v6046 = vmul.f32 %v5114, %v5340
  %v6047 = vmul.f32 %v5115, %v5344
  %v6048 = vmul.f32 %v5116, %v5348
  %v6049 = vmul.f32 %v5117, %v5324
  %v6050 = vmul.f32 %v5118, %v5328
  %v6051 = vmul.f32 %v5119, %v5332
  %v6052 = vmul.f32 %v5120, %v5336
  %v6053 = vmul.f32 %v5121, %v5340
  %v6054 = vmul.f32 %v5122, %v5344
  %v6055 = vmul.f32 %v5123, %v5348
  %v6056 = vmul.f32 %v5124, %v5324
  %v6057 = vmul.f32 %v5125, %v5328
  %v6058 = vmul.f32 %v5126, %v5332
  %v6059 = vmul.f32 %v5127, %v5336
  %v6060 = vmul.f32 %v5128, %v5340
  %v6061 = vmul.f32 %v5129, %v5344
  %v6062 = vmul.f32 %v5130, %v5348
  %v6063 = vmul.f32 %v5131, %v5324
  %v6064 = vmul.f32 %v5132, %v5328
  %v6065 = vmul.f32 %v5133, %v5332
  %v6066 = vmul.f32 %v5134, %v5336
  %v6067 = vmul.f32 %v5135, %v5340
  %v6068 = vmul.f32 %v5136, %v5344
  %v6069 = vmul.f32 %v5137, %v5348
  %v6070 = vmul.f32 %v5138, %v5324
  %v6071 = vmul.f32 %v5139, %v5328
  %v6072 = vmul.f32 %v5140, %v5332
  %v6073 = vmul.f32 %v5141, %v5336
  %v6074 = vmul.f32 %v5142, %v5340
  %v6075 = vmul.f32 %v5143, %v5344
  %v6076 = vmul.f32 %v5144, %v5348
  %v6077 = vmul.f32 %v5145, %v5324
  %v6078 = vmul.f32 %v5146, %v5328
  %v6079 = vmul.f32 %v5147, %v5332
  %v6080 = vmul.f32 %v5148, %v5336
  %v6081 = vmul.f32 %v5149, %v5340
  %v6082 = vmul.f32 %v5150, %v5344
  %v6083 = vmul.f32 %v5151, %v5348
  %v6084 = vmul.f32 %v5152, %v5324
  %v6085 = vmul.f32 %v5153, %v5328
  %v6086 = vmul.f32 %v5154, %v5332
  %v6087 = vmul.f32 %v5155, %v5336
  %v6088 = vmul.f32 %v5156, %v5340
  %v6089 = vmul.f32 %v5157, %v5344
  %v6090 = vmul.f32 %v5158, %v5348
  %v6091 = vmul.f32 %v5159, %v5324
  %v6092 = vmul.f32 %v5160, %v5328
  %v6093 = vmul.f32 %v5161, %v5332
  %v6094 = vmul.f32 %v5162, %v5336
  %v6095 = vmul.f32 %v5163, %v5340
  %v6096 = vmul.f32 %v5164, %v5344
  %v6097 = vmul.f32 %v5165, %v5348
  %v6098 = vmul.f32 %v5166, %v5324
  %v6099 = vmul.f32 %v5167, %v5328
  %v6100 = vmul.f32 %v5168, %v5332
  %v6101 = vmul.f32 %v5169, %v5336
  %v6102 = vmul.f32 %v5170, %v5340
  %v6103 = vmul.f32 %v5171, %v5344
  %v6104 = vmul.f32 %v5172, %v5348
  %v6105 = vmul.f32 %v5173, %v5324
  %v6106 = vmul.f32 %v5174, %v5328
  %v6107 = vmul.f32 %v5175, %v5332
  %v6108 = vmul.f32 %v5176, %v5336
  %v6109 = vmul.f32 %v5177, %v5340
  %v6110 = vmul.f32 %v5178, %v5344
  %v6111 = vmul.f32 %v5179, %v5348
  %v6112 = vmul.f32 %v5180, %v5324
  %v6113 = vmul.f32 %v5181, %v5328
  %v6114 = vmul.f32 %v5182, %v5332
  %v6115 = vmul.f32 %v5183, %v5336
  %v6116 = vmul.f32 %v5184, %v5340
  %v6117 = vmul.f32 %v5185, %v5344
  %v6118 = vmul.f32 %v5186, %v5348
  %v6119 = vmul.f32 %v5187, %v5324
  %v6120 = vmul.f32 %v5188, %v5328
  %v6121 = vmul.f32 %v5189, %v5332
  %v6122 = vmul.f32 %v5190, %v5336
  %v6123 = vmul.f32 %v5191, %v5340
  %v6124 = vmul.f32 %v5192, %v5344
  %v6125 = vmul.f32 %v5193, %v5348
  %v6126 = vmul.f32 %v5194, %v5324
  %v6127 = vmul.f32 %v5195, %v5328
  %v6128 = vmul.f32 %v5196, %v5332
  %v6129 = vmul.f32 %v5197, %v5336
  %v6130 = vmul.f32 %v5198, %v5340
  %v6131 = vmul.f32 %v5199, %v5344
  %v6132 = vmul.f32 %v5200, %v5348
  %v6133 = vmul.f32 %v5201, %v5324
  %v6134 = vmul.f32 %v5202, %v5328
  %v6135 = vmul.f32 %v5203, %v5332
  %v6136 = vmul.f32 %v5204, %v5336
  %v6137 = vmul.f32 %v5205, %v5340
  %v6138 = vmul.f32 %v5206, %v5344
  %v6139 = vmul.f32 %v5207, %v5348
  %v6140 = vmul.f32 %v5208, %v5324
  %v6141 = vmul.f32 %v5209, %v5328
  %v6142 = vmul.f32 %v5210, %v5332
  %v6143 = vmul.f32 %v5211, %v5336
  %v6144 = vmul.f32 %v5212, %v5340
  %v6145 = vmul.f32 %v5213, %v5344
  %v6146 = vmul.f32 %v5214, %v5348
  %v6147 = vmul.f32 %v5215, %v5324
  %v6148 = vmul.f32 %v5216, %v5328
  %v6149 = vmul.f32 %v5217, %v5332
  %v6150 = vmul.f32 %v5218, %v5336
  %v6151 = vmul.f32 %v5219, %v5340
  %v6152 = vmul.f32 %v5220, %v5344
  %v6153 = vmul.f32 %v5221, %v5348
  %v6154 = vmul.f32 %v5222, %v5324
  %v6155 = vmul.f32 %v5223, %v5328
  %v6156 = vmul.f32 %v5224, %v5332
  %v6157 = vmul.f32 %v5225, %v5336
  %v6158 = vmul.f32 %v5226, %v5340
  %v6159 = vmul.f32 %v5227, %v5344
  %v6160 = vmul.f32 %v5228, %v5348
  %v6161 = vmul.f32 %v5229, %v5324
  %v6162 = vmul.f32 %v5230, %v5328
  %v6163 = vmul.f32 %v5231, %v5332
  %v6164 = vmul.f32 %v5232, %v5336
  %v6165 = vmul.f32 %v5233, %v5340
  %v6166 = vmul.f32 %v5234, %v5344
  %v6167 = vmul.f32 %v5235, %v5348
  %v6168 = vmul.f32 %v5236, %v5324
  %v6169 = vmul.f32 %v5237, %v5328
  %v6170 = vmul.f32 %v5238, %v5332
  %v6171 = vmul.f32 %v5239, %v5336
  %v6172 = vmul.f32 %v5240, %v5340
  %v6173 = vmul.f32 %v5241, %v5344
  %v6174 = vmul.f32 %v5242, %v5348
  %v6175 = vmul.f32 %v5243, %v5324
  %v6176 = vmul.f32 %v5244, %v5328
  %v6177 = vmul.f32 %v5245, %v5332
  %v6178 = vmul.f32 %v5246, %v5336
  %v6179 = vmul.f32 %v5247, %v5340
  %v6180 = vmul.f32 %v5248, %v5344
  %v6181 = vmul.f32 %v5249, %v5348
  %v6182 = vmul.f32 %v5250, %v5324
  %v6183 = vmul.f32 %v5251, %v5328
  %v6184 = vmul.f32 %v5252, %v5332
  %v6185 = vmul.f32 %v5253, %v5336
  %v6186 = vmul.f32 %v5254, %v5340
  %v6187 = vmul.f32 %v5255, %v5344
  %v6188 = vmul.f32 %v5256, %v5348
  %v6189 = vmul.f32 %v5257, %v5324
  %v6190 = vmul.f32 %v5258, %v5328
  %v6191 = vmul.f32 %v5259, %v5332
  %v6192 = vmul.f32 %v5260, %v5336
  %v6193 = vmul.f32 %v5261, %v5340
  %v6194 = vmul.f32 %v5262, %v5344
  %v6195 = vmul.f32 %v5263, %v5348
  %v6196 = vmul.f32 %v5264, %v5324
  %v6197 = vmul.f32 %v5265, %v5328
  %v6198 = vmul.f32 %v5266, %v5332
  %v6199 = vmul.f32 %v5267, %v5336
  %v6200 = vmul.f32 %v5268, %v5340
  %v6201 = vmul.f32 %v5269, %v5344
  %v6202 = vmul.f32 %v5270, %v5348
  %v6203 = vmul.f32 %v5271, %v5324
  %v6204 = vmul.f32 %v5272, %v5328
  %v6205 = vmul.f32 %v5273, %v5332
  %v6206 = vmul.f32 %v5274, %v5336
  %v6207 = vmul.f32 %v5275, %v5340
  %v6208 = vmul.f32 %v5276, %v5344
  %v6209 = vmul.f32 %v5277, %v5348
  %v6210 = vmul.f32 %v5278, %v5324
  %v6211 = vmul.f32 %v5279, %v5328
  %v6212 = vmul.f32 %v5280, %v5332
  %v6213 = vmul.f32 %v5281, %v5336
  %v6214 = vmul.f32 %v5282, %v5340
  %v6215 = vmul.f32 %v5283, %v5344
  %v6216 = vmul.f32 %v5284, %v5348
  %v6217 = vmul.f32 %v5285, %v5324
  %v6218 = vmul.f32 %v5286, %v5328
  %v6219 = vmul.f32 %v5287, %v5332
  %v6220 = vmul.f32 %v5288, %v5336
  %v6221 = vmul.f32 %v5289, %v5340
  %v6222 = vmul.f32 %v5290, %v5344
  %v6223 = vmul.f32 %v5291, %v5348
  %v6224 = vmul.f32 %v5292, %v5324
  %v6225 = vmul.f32 %v5293, %v5328
  %v6226 = vmul.f32 %v5294, %v5332
  %v6227 = vmul.f32 %v5295, %v5336
  %v6228 = vmul.f32 %v5296, %v5340
  %v6229 = vmul.f32 %v5297, %v5344
  %v6230 = vmul.f32 %v5298, %v5348
  %v6231 = vmul.f32 %v5299, %v5324
  %v6232 = vmul.f32 %v5300, %v5328
  %v6233 = vmul.f32 %v5301, %v5332
  %v6234 = vmul.f32 %v5302, %v5336
  %v6235 = vmul.f32 %v5303, %v5340
  %v6236 = vmul.f32 %v5304, %v5344
  %v6237 = vmul.f32 %v5305, %v5348
  %v6238 = vmul.f32 %v5306, %v5324
  %v6239 = vmul.f32 %v5307, %v5328
  %v6240 = vmul.f32 %v5308, %v5332
  %v6241 = vmul.f32 %v5309, %v5336
  %v6242 = vmul.f32 %v5310, %v5340
  %v6243 = vmul.f32 %v5311, %v5344
  %v6244 = vmul.f32 %v5312, %v5348
  %v6245 = vmul.f32 %v5313, %v5324
  %v6246 = vmul.f32 %v5314, %v5328
  %v6247 = vmul.f32 %v5315, %v5332
  %v6248 = vmul.f32 %v5316, %v5336
  %v6249 = vmul.f32 %v5317, %v5340
  %v6250 = vmul.f32 %v5318, %v5344
  %v6251 = vmul.f32 %v5319, %v5348
  %v6252 = vpack.c.bf16 %v5363, %v5356
  %v6253 = vpack.c.bf16 %v5364, %v5357
  %v6254 = vpack.c.bf16 %v5365, %v5358
  %v6255 = vpack.c.bf16 %v5366, %v5359
  %v6256 = vpack.c.bf16 %v5367, %v5360
  %v6257 = vpack.c.bf16 %v5368, %v5361
  %v6258 = vpack.c.bf16 %v5369, %v5362
  %v6259 = vpack.c.bf16 %v5377, %v5370
  %v6260 = vpack.c.bf16 %v5378, %v5371
  %v6261 = vpack.c.bf16 %v5379, %v5372
  %v6262 = vpack.c.bf16 %v5380, %v5373
  %v6263 = vpack.c.bf16 %v5381, %v5374
  %v6264 = vpack.c.bf16 %v5382, %v5375
  %v6265 = vpack.c.bf16 %v5383, %v5376
  %v6266 = vpack.c.bf16 %v5391, %v5384
  %v6267 = vpack.c.bf16 %v5392, %v5385
  %v6268 = vpack.c.bf16 %v5393, %v5386
  %v6269 = vpack.c.bf16 %v5394, %v5387
  %v6270 = vpack.c.bf16 %v5395, %v5388
  %v6271 = vpack.c.bf16 %v5396, %v5389
  %v6272 = vpack.c.bf16 %v5397, %v5390
  %v6273 = vpack.c.bf16 %v5405, %v5398
  %v6274 = vpack.c.bf16 %v5406, %v5399
  %v6275 = vpack.c.bf16 %v5407, %v5400
  %v6276 = vpack.c.bf16 %v5408, %v5401
  %v6277 = vpack.c.bf16 %v5409, %v5402
  %v6278 = vpack.c.bf16 %v5410, %v5403
  %v6279 = vpack.c.bf16 %v5411, %v5404
  %v6280 = vpack.c.bf16 %v5419, %v5412
  %v6281 = vpack.c.bf16 %v5420, %v5413
  %v6282 = vpack.c.bf16 %v5421, %v5414
  %v6283 = vpack.c.bf16 %v5422, %v5415
  %v6284 = vpack.c.bf16 %v5423, %v5416
  %v6285 = vpack.c.bf16 %v5424, %v5417
  %v6286 = vpack.c.bf16 %v5425, %v5418
  %v6287 = vpack.c.bf16 %v5433, %v5426
  %v6288 = vpack.c.bf16 %v5434, %v5427
  %v6289 = vpack.c.bf16 %v5435, %v5428
  %v6290 = vpack.c.bf16 %v5436, %v5429
  %v6291 = vpack.c.bf16 %v5437, %v5430
  %v6292 = vpack.c.bf16 %v5438, %v5431
  %v6293 = vpack.c.bf16 %v5439, %v5432
  %v6294 = vpack.c.bf16 %v5447, %v5440
  %v6295 = vpack.c.bf16 %v5448, %v5441
  %v6296 = vpack.c.bf16 %v5449, %v5442
  %v6297 = vpack.c.bf16 %v5450, %v5443
  %v6298 = vpack.c.bf16 %v5451, %v5444
  %v6299 = vpack.c.bf16 %v5452, %v5445
  %v6300 = vpack.c.bf16 %v5453, %v5446
  %v6301 = vpack.c.bf16 %v5461, %v5454
  %v6302 = vpack.c.bf16 %v5462, %v5455
  %v6303 = vpack.c.bf16 %v5463, %v5456
  %v6304 = vpack.c.bf16 %v5464, %v5457
  %v6305 = vpack.c.bf16 %v5465, %v5458
  %v6306 = vpack.c.bf16 %v5466, %v5459
  %v6307 = vpack.c.bf16 %v5467, %v5460
  %v6308 = vpack.c.bf16 %v5475, %v5468
  %v6309 = vpack.c.bf16 %v5476, %v5469
  %v6310 = vpack.c.bf16 %v5477, %v5470
  %v6311 = vpack.c.bf16 %v5478, %v5471
  %v6312 = vpack.c.bf16 %v5479, %v5472
  %v6313 = vpack.c.bf16 %v5480, %v5473
  %v6314 = vpack.c.bf16 %v5481, %v5474
  %v6315 = vpack.c.bf16 %v5489, %v5482
  %v6316 = vpack.c.bf16 %v5490, %v5483
  %v6317 = vpack.c.bf16 %v5491, %v5484
  %v6318 = vpack.c.bf16 %v5492, %v5485
  %v6319 = vpack.c.bf16 %v5493, %v5486
  %v6320 = vpack.c.bf16 %v5494, %v5487
  %v6321 = vpack.c.bf16 %v5495, %v5488
  %v6322 = vpack.c.bf16 %v5503, %v5496
  %v6323 = vpack.c.bf16 %v5504, %v5497
  %v6324 = vpack.c.bf16 %v5505, %v5498
  %v6325 = vpack.c.bf16 %v5506, %v5499
  %v6326 = vpack.c.bf16 %v5507, %v5500
  %v6327 = vpack.c.bf16 %v5508, %v5501
  %v6328 = vpack.c.bf16 %v5509, %v5502
  %v6329 = vpack.c.bf16 %v5517, %v5510
  %v6330 = vpack.c.bf16 %v5518, %v5511
  %v6331 = vpack.c.bf16 %v5519, %v5512
  %v6332 = vpack.c.bf16 %v5520, %v5513
  %v6333 = vpack.c.bf16 %v5521, %v5514
  %v6334 = vpack.c.bf16 %v5522, %v5515
  %v6335 = vpack.c.bf16 %v5523, %v5516
  %v6336 = vpack.c.bf16 %v5531, %v5524
  %v6337 = vpack.c.bf16 %v5532, %v5525
  %v6338 = vpack.c.bf16 %v5533, %v5526
  %v6339 = vpack.c.bf16 %v5534, %v5527
  %v6340 = vpack.c.bf16 %v5535, %v5528
  %v6341 = vpack.c.bf16 %v5536, %v5529
  %v6342 = vpack.c.bf16 %v5537, %v5530
  %v6343 = vpack.c.bf16 %v5545, %v5538
  %v6344 = vpack.c.bf16 %v5546, %v5539
  %v6345 = vpack.c.bf16 %v5547, %v5540
  %v6346 = vpack.c.bf16 %v5548, %v5541
  %v6347 = vpack.c.bf16 %v5549, %v5542
  %v6348 = vpack.c.bf16 %v5550, %v5543
  %v6349 = vpack.c.bf16 %v5551, %v5544
  %v6350 = vpack.c.bf16 %v5559, %v5552
  %v6351 = vpack.c.bf16 %v5560, %v5553
  %v6352 = vpack.c.bf16 %v5561, %v5554
  %v6353 = vpack.c.bf16 %v5562, %v5555
  %v6354 = vpack.c.bf16 %v5563, %v5556
  %v6355 = vpack.c.bf16 %v5564, %v5557
  %v6356 = vpack.c.bf16 %v5565, %v5558
  %v6357 = vpack.c.bf16 %v5573, %v5566
  %v6358 = vpack.c.bf16 %v5574, %v5567
  %v6359 = vpack.c.bf16 %v5575, %v5568
  %v6360 = vpack.c.bf16 %v5576, %v5569
  %v6361 = vpack.c.bf16 %v5577, %v5570
  %v6362 = vpack.c.bf16 %v5578, %v5571
  %v6363 = vpack.c.bf16 %v5579, %v5572
  %v6364 = vpack.c.bf16 %v5587, %v5580
  %v6365 = vpack.c.bf16 %v5588, %v5581
  %v6366 = vpack.c.bf16 %v5589, %v5582
  %v6367 = vpack.c.bf16 %v5590, %v5583
  %v6368 = vpack.c.bf16 %v5591, %v5584
  %v6369 = vpack.c.bf16 %v5592, %v5585
  %v6370 = vpack.c.bf16 %v5593, %v5586
  %v6371 = vpack.c.bf16 %v5601, %v5594
  %v6372 = vpack.c.bf16 %v5602, %v5595
  %v6373 = vpack.c.bf16 %v5603, %v5596
  %v6374 = vpack.c.bf16 %v5604, %v5597
  %v6375 = vpack.c.bf16 %v5605, %v5598
  %v6376 = vpack.c.bf16 %v5606, %v5599
  %v6377 = vpack.c.bf16 %v5607, %v5600
  %v6378 = vpack.c.bf16 %v5615, %v5608
  %v6379 = vpack.c.bf16 %v5616, %v5609
  %v6380 = vpack.c.bf16 %v5617, %v5610
  %v6381 = vpack.c.bf16 %v5618, %v5611
  %v6382 = vpack.c.bf16 %v5619, %v5612
  %v6383 = vpack.c.bf16 %v5620, %v5613
  %v6384 = vpack.c.bf16 %v5621, %v5614
  %v6385 = vpack.c.bf16 %v5629, %v5622
  %v6386 = vpack.c.bf16 %v5630, %v5623
  %v6387 = vpack.c.bf16 %v5631, %v5624
  %v6388 = vpack.c.bf16 %v5632, %v5625
  %v6389 = vpack.c.bf16 %v5633, %v5626
  %v6390 = vpack.c.bf16 %v5634, %v5627
  %v6391 = vpack.c.bf16 %v5635, %v5628
  %v6392 = vpack.c.bf16 %v5643, %v5636
  %v6393 = vpack.c.bf16 %v5644, %v5637
  %v6394 = vpack.c.bf16 %v5645, %v5638
  %v6395 = vpack.c.bf16 %v5646, %v5639
  %v6396 = vpack.c.bf16 %v5647, %v5640
  %v6397 = vpack.c.bf16 %v5648, %v5641
  %v6398 = vpack.c.bf16 %v5649, %v5642
  %v6399 = vpack.c.bf16 %v5657, %v5650
  %v6400 = vpack.c.bf16 %v5658, %v5651
  %v6401 = vpack.c.bf16 %v5659, %v5652
  %v6402 = vpack.c.bf16 %v5660, %v5653
  %v6403 = vpack.c.bf16 %v5661, %v5654
  %v6404 = vpack.c.bf16 %v5662, %v5655
  %v6405 = vpack.c.bf16 %v5663, %v5656
  %v6406 = vpack.c.bf16 %v5671, %v5664
  %v6407 = vpack.c.bf16 %v5672, %v5665
  %v6408 = vpack.c.bf16 %v5673, %v5666
  %v6409 = vpack.c.bf16 %v5674, %v5667
  %v6410 = vpack.c.bf16 %v5675, %v5668
  %v6411 = vpack.c.bf16 %v5676, %v5669
  %v6412 = vpack.c.bf16 %v5677, %v5670
  %v6413 = vpack.c.bf16 %v5685, %v5678
  %v6414 = vpack.c.bf16 %v5686, %v5679
  %v6415 = vpack.c.bf16 %v5687, %v5680
  %v6416 = vpack.c.bf16 %v5688, %v5681
  %v6417 = vpack.c.bf16 %v5689, %v5682
  %v6418 = vpack.c.bf16 %v5690, %v5683
  %v6419 = vpack.c.bf16 %v5691, %v5684
  %v6420 = vpack.c.bf16 %v5699, %v5692
  %v6421 = vpack.c.bf16 %v5700, %v5693
  %v6422 = vpack.c.bf16 %v5701, %v5694
  %v6423 = vpack.c.bf16 %v5702, %v5695
  %v6424 = vpack.c.bf16 %v5703, %v5696
  %v6425 = vpack.c.bf16 %v5704, %v5697
  %v6426 = vpack.c.bf16 %v5705, %v5698
  %v6427 = vpack.c.bf16 %v5713, %v5706
  %v6428 = vpack.c.bf16 %v5714, %v5707
  %v6429 = vpack.c.bf16 %v5715, %v5708
  %v6430 = vpack.c.bf16 %v5716, %v5709
  %v6431 = vpack.c.bf16 %v5717, %v5710
  %v6432 = vpack.c.bf16 %v5718, %v5711
  %v6433 = vpack.c.bf16 %v5719, %v5712
  %v6434 = vpack.c.bf16 %v5727, %v5720
  %v6435 = vpack.c.bf16 %v5728, %v5721
  %v6436 = vpack.c.bf16 %v5729, %v5722
  %v6437 = vpack.c.bf16 %v5730, %v5723
  %v6438 = vpack.c.bf16 %v5731, %v5724
  %v6439 = vpack.c.bf16 %v5732, %v5725
  %v6440 = vpack.c.bf16 %v5733, %v5726
  %v6441 = vpack.c.bf16 %v5741, %v5734
  %v6442 = vpack.c.bf16 %v5742, %v5735
  %v6443 = vpack.c.bf16 %v5743, %v5736
  %v6444 = vpack.c.bf16 %v5744, %v5737
  %v6445 = vpack.c.bf16 %v5745, %v5738
  %v6446 = vpack.c.bf16 %v5746, %v5739
  %v6447 = vpack.c.bf16 %v5747, %v5740
  %v6448 = vpack.c.bf16 %v5755, %v5748
  %v6449 = vpack.c.bf16 %v5756, %v5749
  %v6450 = vpack.c.bf16 %v5757, %v5750
  %v6451 = vpack.c.bf16 %v5758, %v5751
  %v6452 = vpack.c.bf16 %v5759, %v5752
  %v6453 = vpack.c.bf16 %v5760, %v5753
  %v6454 = vpack.c.bf16 %v5761, %v5754
  %v6455 = vpack.c.bf16 %v5769, %v5762
  %v6456 = vpack.c.bf16 %v5770, %v5763
  %v6457 = vpack.c.bf16 %v5771, %v5764
  %v6458 = vpack.c.bf16 %v5772, %v5765
  %v6459 = vpack.c.bf16 %v5773, %v5766
  %v6460 = vpack.c.bf16 %v5774, %v5767
  %v6461 = vpack.c.bf16 %v5775, %v5768
  %v6462 = vpack.c.bf16 %v5783, %v5776
  %v6463 = vpack.c.bf16 %v5784, %v5777
  %v6464 = vpack.c.bf16 %v5785, %v5778
  %v6465 = vpack.c.bf16 %v5786, %v5779
  %v6466 = vpack.c.bf16 %v5787, %v5780
  %v6467 = vpack.c.bf16 %v5788, %v5781
  %v6468 = vpack.c.bf16 %v5789, %v5782
  %v6469 = vpack.c.bf16 %v5797, %v5790
  %v6470 = vpack.c.bf16 %v5798, %v5791
  %v6471 = vpack.c.bf16 %v5799, %v5792
  %v6472 = vpack.c.bf16 %v5800, %v5793
  %v6473 = vpack.c.bf16 %v5801, %v5794
  %v6474 = vpack.c.bf16 %v5802, %v5795
  %v6475 = vpack.c.bf16 %v5803, %v5796
  %v6476 = vpack.c.bf16 %v5811, %v5804
  %v6477 = vpack.c.bf16 %v5812, %v5805
  %v6478 = vpack.c.bf16 %v5813, %v5806
  %v6479 = vpack.c.bf16 %v5814, %v5807
  %v6480 = vpack.c.bf16 %v5815, %v5808
  %v6481 = vpack.c.bf16 %v5816, %v5809
  %v6482 = vpack.c.bf16 %v5817, %v5810
  %v6483 = vpack.c.bf16 %v5825, %v5818
  %v6484 = vpack.c.bf16 %v5826, %v5819
  %v6485 = vpack.c.bf16 %v5827, %v5820
  %v6486 = vpack.c.bf16 %v5828, %v5821
  %v6487 = vpack.c.bf16 %v5829, %v5822
  %v6488 = vpack.c.bf16 %v5830, %v5823
  %v6489 = vpack.c.bf16 %v5831, %v5824
  %v6490 = vpack.c.bf16 %v5839, %v5832
  %v6491 = vpack.c.bf16 %v5840, %v5833
  %v6492 = vpack.c.bf16 %v5841, %v5834
  %v6493 = vpack.c.bf16 %v5842, %v5835
  %v6494 = vpack.c.bf16 %v5843, %v5836
  %v6495 = vpack.c.bf16 %v5844, %v5837
  %v6496 = vpack.c.bf16 %v5845, %v5838
  %v6497 = vpack.c.bf16 %v5853, %v5846
  %v6498 = vpack.c.bf16 %v5854, %v5847
  %v6499 = vpack.c.bf16 %v5855, %v5848
  %v6500 = vpack.c.bf16 %v5856, %v5849
  %v6501 = vpack.c.bf16 %v5857, %v5850
  %v6502 = vpack.c.bf16 %v5858, %v5851
  %v6503 = vpack.c.bf16 %v5859, %v5852
  %v6504 = vpack.c.bf16 %v5867, %v5860
  %v6505 = vpack.c.bf16 %v5868, %v5861
  %v6506 = vpack.c.bf16 %v5869, %v5862
  %v6507 = vpack.c.bf16 %v5870, %v5863
  %v6508 = vpack.c.bf16 %v5871, %v5864
  %v6509 = vpack.c.bf16 %v5872, %v5865
  %v6510 = vpack.c.bf16 %v5873, %v5866
  %v6511 = vpack.c.bf16 %v5881, %v5874
  %v6512 = vpack.c.bf16 %v5882, %v5875
  %v6513 = vpack.c.bf16 %v5883, %v5876
  %v6514 = vpack.c.bf16 %v5884, %v5877
  %v6515 = vpack.c.bf16 %v5885, %v5878
  %v6516 = vpack.c.bf16 %v5886, %v5879
  %v6517 = vpack.c.bf16 %v5887, %v5880
  %v6518 = vpack.c.bf16 %v5895, %v5888
  %v6519 = vpack.c.bf16 %v5896, %v5889
  %v6520 = vpack.c.bf16 %v5897, %v5890
  %v6521 = vpack.c.bf16 %v5898, %v5891
  %v6522 = vpack.c.bf16 %v5899, %v5892
  %v6523 = vpack.c.bf16 %v5900, %v5893
  %v6524 = vpack.c.bf16 %v5901, %v5894
  %v6525 = vpack.c.bf16 %v5909, %v5902
  %v6526 = vpack.c.bf16 %v5910, %v5903
  %v6527 = vpack.c.bf16 %v5911, %v5904
  %v6528 = vpack.c.bf16 %v5912, %v5905
  %v6529 = vpack.c.bf16 %v5913, %v5906
  %v6530 = vpack.c.bf16 %v5914, %v5907
  %v6531 = vpack.c.bf16 %v5915, %v5908
  %v6532 = vpack.c.bf16 %v5923, %v5916
  %v6533 = vpack.c.bf16 %v5924, %v5917
  %v6534 = vpack.c.bf16 %v5925, %v5918
  %v6535 = vpack.c.bf16 %v5926, %v5919
  %v6536 = vpack.c.bf16 %v5927, %v5920
  %v6537 = vpack.c.bf16 %v5928, %v5921
  %v6538 = vpack.c.bf16 %v5929, %v5922
  %v6539 = vpack.c.bf16 %v5937, %v5930
  %v6540 = vpack.c.bf16 %v5938, %v5931
  %v6541 = vpack.c.bf16 %v5939, %v5932
  %v6542 = vpack.c.bf16 %v5940, %v5933
  %v6543 = vpack.c.bf16 %v5941, %v5934
  %v6544 = vpack.c.bf16 %v5942, %v5935
  %v6545 = vpack.c.bf16 %v5943, %v5936
  %v6546 = vpack.c.bf16 %v5951, %v5944
  %v6547 = vpack.c.bf16 %v5952, %v5945
  %v6548 = vpack.c.bf16 %v5953, %v5946
  %v6549 = vpack.c.bf16 %v5954, %v5947
  %v6550 = vpack.c.bf16 %v5955, %v5948
  %v6551 = vpack.c.bf16 %v5956, %v5949
  %v6552 = vpack.c.bf16 %v5957, %v5950
  %v6553 = vpack.c.bf16 %v5965, %v5958
  %v6554 = vpack.c.bf16 %v5966, %v5959
  %v6555 = vpack.c.bf16 %v5967, %v5960
  %v6556 = vpack.c.bf16 %v5968, %v5961
  %v6557 = vpack.c.bf16 %v5969, %v5962
  %v6558 = vpack.c.bf16 %v5970, %v5963
  %v6559 = vpack.c.bf16 %v5971, %v5964
  %v6560 = vpack.c.bf16 %v5979, %v5972
  %v6561 = vpack.c.bf16 %v5980, %v5973
  %v6562 = vpack.c.bf16 %v5981, %v5974
  %v6563 = vpack.c.bf16 %v5982, %v5975
  %v6564 = vpack.c.bf16 %v5983, %v5976
  %v6565 = vpack.c.bf16 %v5984, %v5977
  %v6566 = vpack.c.bf16 %v5985, %v5978
  %v6567 = vpack.c.bf16 %v5993, %v5986
  %v6568 = vpack.c.bf16 %v5994, %v5987
  %v6569 = vpack.c.bf16 %v5995, %v5988
  %v6570 = vpack.c.bf16 %v5996, %v5989
  %v6571 = vpack.c.bf16 %v5997, %v5990
  %v6572 = vpack.c.bf16 %v5998, %v5991
  %v6573 = vpack.c.bf16 %v5999, %v5992
  %v6574 = vpack.c.bf16 %v6007, %v6000
  %v6575 = vpack.c.bf16 %v6008, %v6001
  %v6576 = vpack.c.bf16 %v6009, %v6002
  %v6577 = vpack.c.bf16 %v6010, %v6003
  %v6578 = vpack.c.bf16 %v6011, %v6004
  %v6579 = vpack.c.bf16 %v6012, %v6005
  %v6580 = vpack.c.bf16 %v6013, %v6006
  %v6581 = vpack.c.bf16 %v6021, %v6014
  %v6582 = vpack.c.bf16 %v6022, %v6015
  %v6583 = vpack.c.bf16 %v6023, %v6016
  %v6584 = vpack.c.bf16 %v6024, %v6017
  %v6585 = vpack.c.bf16 %v6025, %v6018
  %v6586 = vpack.c.bf16 %v6026, %v6019
  %v6587 = vpack.c.bf16 %v6027, %v6020
  %v6588 = vpack.c.bf16 %v6035, %v6028
  %v6589 = vpack.c.bf16 %v6036, %v6029
  %v6590 = vpack.c.bf16 %v6037, %v6030
  %v6591 = vpack.c.bf16 %v6038, %v6031
  %v6592 = vpack.c.bf16 %v6039, %v6032
  %v6593 = vpack.c.bf16 %v6040, %v6033
  %v6594 = vpack.c.bf16 %v6041, %v6034
  %v6595 = vpack.c.bf16 %v6049, %v6042
  %v6596 = vpack.c.bf16 %v6050, %v6043
  %v6597 = vpack.c.bf16 %v6051, %v6044
  %v6598 = vpack.c.bf16 %v6052, %v6045
  %v6599 = vpack.c.bf16 %v6053, %v6046
  %v6600 = vpack.c.bf16 %v6054, %v6047
  %v6601 = vpack.c.bf16 %v6055, %v6048
  %v6602 = vpack.c.bf16 %v6063, %v6056
  %v6603 = vpack.c.bf16 %v6064, %v6057
  %v6604 = vpack.c.bf16 %v6065, %v6058
  %v6605 = vpack.c.bf16 %v6066, %v6059
  %v6606 = vpack.c.bf16 %v6067, %v6060
  %v6607 = vpack.c.bf16 %v6068, %v6061
  %v6608 = vpack.c.bf16 %v6069, %v6062
  %v6609 = vpack.c.bf16 %v6077, %v6070
  %v6610 = vpack.c.bf16 %v6078, %v6071
  %v6611 = vpack.c.bf16 %v6079, %v6072
  %v6612 = vpack.c.bf16 %v6080, %v6073
  %v6613 = vpack.c.bf16 %v6081, %v6074
  %v6614 = vpack.c.bf16 %v6082, %v6075
  %v6615 = vpack.c.bf16 %v6083, %v6076
  %v6616 = vpack.c.bf16 %v6091, %v6084
  %v6617 = vpack.c.bf16 %v6092, %v6085
  %v6618 = vpack.c.bf16 %v6093, %v6086
  %v6619 = vpack.c.bf16 %v6094, %v6087
  %v6620 = vpack.c.bf16 %v6095, %v6088
  %v6621 = vpack.c.bf16 %v6096, %v6089
  %v6622 = vpack.c.bf16 %v6097, %v6090
  %v6623 = vpack.c.bf16 %v6105, %v6098
  %v6624 = vpack.c.bf16 %v6106, %v6099
  %v6625 = vpack.c.bf16 %v6107, %v6100
  %v6626 = vpack.c.bf16 %v6108, %v6101
  %v6627 = vpack.c.bf16 %v6109, %v6102
  %v6628 = vpack.c.bf16 %v6110, %v6103
  %v6629 = vpack.c.bf16 %v6111, %v6104
  %v6630 = vpack.c.bf16 %v6119, %v6112
  %v6631 = vpack.c.bf16 %v6120, %v6113
  %v6632 = vpack.c.bf16 %v6121, %v6114
  %v6633 = vpack.c.bf16 %v6122, %v6115
  %v6634 = vpack.c.bf16 %v6123, %v6116
  %v6635 = vpack.c.bf16 %v6124, %v6117
  %v6636 = vpack.c.bf16 %v6125, %v6118
  %v6637 = vpack.c.bf16 %v6133, %v6126
  %v6638 = vpack.c.bf16 %v6134, %v6127
  %v6639 = vpack.c.bf16 %v6135, %v6128
  %v6640 = vpack.c.bf16 %v6136, %v6129
  %v6641 = vpack.c.bf16 %v6137, %v6130
  %v6642 = vpack.c.bf16 %v6138, %v6131
  %v6643 = vpack.c.bf16 %v6139, %v6132
  %v6644 = vpack.c.bf16 %v6147, %v6140
  %v6645 = vpack.c.bf16 %v6148, %v6141
  %v6646 = vpack.c.bf16 %v6149, %v6142
  %v6647 = vpack.c.bf16 %v6150, %v6143
  %v6648 = vpack.c.bf16 %v6151, %v6144
  %v6649 = vpack.c.bf16 %v6152, %v6145
  %v6650 = vpack.c.bf16 %v6153, %v6146
  %v6651 = vpack.c.bf16 %v6161, %v6154
  %v6652 = vpack.c.bf16 %v6162, %v6155
  %v6653 = vpack.c.bf16 %v6163, %v6156
  %v6654 = vpack.c.bf16 %v6164, %v6157
  %v6655 = vpack.c.bf16 %v6165, %v6158
  %v6656 = vpack.c.bf16 %v6166, %v6159
  %v6657 = vpack.c.bf16 %v6167, %v6160
  %v6658 = vpack.c.bf16 %v6175, %v6168
  %v6659 = vpack.c.bf16 %v6176, %v6169
  %v6660 = vpack.c.bf16 %v6177, %v6170
  %v6661 = vpack.c.bf16 %v6178, %v6171
  %v6662 = vpack.c.bf16 %v6179, %v6172
  %v6663 = vpack.c.bf16 %v6180, %v6173
  %v6664 = vpack.c.bf16 %v6181, %v6174
  %v6665 = vpack.c.bf16 %v6189, %v6182
  %v6666 = vpack.c.bf16 %v6190, %v6183
  %v6667 = vpack.c.bf16 %v6191, %v6184
  %v6668 = vpack.c.bf16 %v6192, %v6185
  %v6669 = vpack.c.bf16 %v6193, %v6186
  %v6670 = vpack.c.bf16 %v6194, %v6187
  %v6671 = vpack.c.bf16 %v6195, %v6188
  %v6672 = vpack.c.bf16 %v6203, %v6196
  %v6673 = vpack.c.bf16 %v6204, %v6197
  %v6674 = vpack.c.bf16 %v6205, %v6198
  %v6675 = vpack.c.bf16 %v6206, %v6199
  %v6676 = vpack.c.bf16 %v6207, %v6200
  %v6677 = vpack.c.bf16 %v6208, %v6201
  %v6678 = vpack.c.bf16 %v6209, %v6202
  %v6679 = vpack.c.bf16 %v6217, %v6210
  %v6680 = vpack.c.bf16 %v6218, %v6211
  %v6681 = vpack.c.bf16 %v6219, %v6212
  %v6682 = vpack.c.bf16 %v6220, %v6213
  %v6683 = vpack.c.bf16 %v6221, %v6214
  %v6684 = vpack.c.bf16 %v6222, %v6215
  %v6685 = vpack.c.bf16 %v6223, %v6216
  %v6686 = vpack.c.bf16 %v6231, %v6224
  %v6687 = vpack.c.bf16 %v6232, %v6225
  %v6688 = vpack.c.bf16 %v6233, %v6226
  %v6689 = vpack.c.bf16 %v6234, %v6227
  %v6690 = vpack.c.bf16 %v6235, %v6228
  %v6691 = vpack.c.bf16 %v6236, %v6229
  %v6692 = vpack.c.bf16 %v6237, %v6230
  %v6693 = vpack.c.bf16 %v6245, %v6238
  %v6694 = vpack.c.bf16 %v6246, %v6239
  %v6695 = vpack.c.bf16 %v6247, %v6240
  %v6696 = vpack.c.bf16 %v6248, %v6241
  %v6697 = vpack.c.bf16 %v6249, %v6242
  %v6698 = vpack.c.bf16 %v6250, %v6243
  %v6699 = vpack.c.bf16 %v6251, %v6244
  %v6700 = vld [vmem:[%s15] sm:$0x7f]
  %v6702 = vlaneseq
  %v6703 = vshrl.u32 %v6702, 7
  %v6704 = vsub.s32 0, %v6703
  %v6705 = vrot.slane %v6700, %v6704
  %v6706 = vlaneseq
  %v6707 = vshrl.u32 %v6706, 7
  %v6708 = vsub.s32 1, %v6707
  %v6709 = vrot.slane %v6700, %v6708
  %v6710 = vlaneseq
  %v6711 = vshrl.u32 %v6710, 7
  %v6712 = vsub.s32 2, %v6711
  %v6713 = vrot.slane %v6700, %v6712
  %v6714 = vlaneseq
  %v6715 = vshrl.u32 %v6714, 7
  %v6716 = vsub.s32 3, %v6715
  %v6717 = vrot.slane %v6700, %v6716
  %v6718 = vlaneseq
  %v6719 = vshrl.u32 %v6718, 7
  %v6720 = vsub.s32 4, %v6719
  %v6721 = vrot.slane %v6700, %v6720
  %v6722 = vlaneseq
  %v6723 = vshrl.u32 %v6722, 7
  %v6724 = vsub.s32 5, %v6723
  %v6725 = vrot.slane %v6700, %v6724
  %v6726 = vlaneseq
  %v6727 = vshrl.u32 %v6726, 7
  %v6728 = vsub.s32 6, %v6727
  %v6729 = vrot.slane %v6700, %v6728
  %6737 = vmatprep.subr.bf16.mxu0 %v6253
  %6738 = vmatpush1.bf16.msra.mxu0 %v6252
  %6739 = vmatprep.subr.bf16.mxu0 %v6260
  %6740 = vmatpush1.bf16.msra.mxu0 %v6259
  %6741 = vmatprep.subr.bf16.mxu0 %v6267
  %6742 = vmatpush1.bf16.msra.mxu0 %v6266
  %6743 = vmatprep.subr.bf16.mxu0 %v6274
  %6744 = vmatpush1.bf16.msra.mxu0 %v6273
  %6745 = vmatprep.subr.bf16.mxu0 %v6281
  %6746 = vmatpush1.bf16.msra.mxu0 %v6280
  %6747 = vmatprep.subr.bf16.mxu0 %v6288
  %6748 = vmatpush1.bf16.msra.mxu0 %v6287
  %6749 = vmatprep.subr.bf16.mxu0 %v6295
  %6750 = vmatpush1.bf16.msra.mxu0 %v6294
  %6751 = vmatprep.subr.bf16.mxu0 %v6302
  %6752 = vmatpush1.bf16.msra.mxu0 %v6301
  %6753 = vmatprep.subr.bf16.mxu0 %v6309
  %6754 = vmatpush1.bf16.msra.mxu0 %v6308
  %6755 = vmatprep.subr.bf16.mxu0 %v6316
  %6756 = vmatpush1.bf16.msra.mxu0 %v6315
  %6757 = vmatprep.subr.bf16.mxu0 %v6323
  %6758 = vmatpush1.bf16.msra.mxu0 %v6322
  %6759 = vmatprep.subr.bf16.mxu0 %v6330
  %6760 = vmatpush1.bf16.msra.mxu0 %v6329
  %6761 = vmatprep.subr.bf16.mxu0 %v6337
  %6762 = vmatpush1.bf16.msra.mxu0 %v6336
  %6763 = vmatprep.subr.bf16.mxu0 %v6344
  %6764 = vmatpush1.bf16.msra.mxu0 %v6343
  %6765 = vmatprep.subr.bf16.mxu0 %v6351
  %6766 = vmatpush1.bf16.msra.mxu0 %v6350
  %6767 = vmatprep.subr.bf16.mxu0 %v6358
  %6768 = vmatpush1.bf16.msra.mxu0 %v6357
  %6769 = vmatprep.mubr.bf16.mxu0 %v3296
  %6770 = vmatmul.mubr.bf16.gmra.mrb[0].mxu0 %v3295
  %v6771 = vpop.f32.mrb[0].mxu0
  %v6772 = vadd.f32 %v6705, %v6771
  %v6773 = vpop.f32.mrb[0].mxu0
  %v6774 = vadd.f32 %v6709, %v6773
  %v6775 = vpop.f32.mrb[0].mxu0
  %v6776 = vpop.f32.mrb[0].mxu0
  %6777 = vdwg.mxu0
  %6778 = vmatprep.subr.bf16.mxu0 %v6365
  %6779 = vmatpush1.bf16.msra.mxu0 %v6364
  %6780 = vmatprep.subr.bf16.mxu0 %v6372
  %6781 = vmatpush1.bf16.msra.mxu0 %v6371
  %6782 = vmatprep.subr.bf16.mxu0 %v6379
  %6783 = vmatpush1.bf16.msra.mxu0 %v6378
  %6784 = vmatprep.subr.bf16.mxu0 %v6386
  %6785 = vmatpush1.bf16.msra.mxu0 %v6385
  %6786 = vmatprep.subr.bf16.mxu0 %v6393
  %6787 = vmatpush1.bf16.msra.mxu0 %v6392
  %6788 = vmatprep.subr.bf16.mxu0 %v6400
  %6789 = vmatpush1.bf16.msra.mxu0 %v6399
  %6790 = vmatprep.subr.bf16.mxu0 %v6407
  %6791 = vmatpush1.bf16.msra.mxu0 %v6406
  %6792 = vmatprep.subr.bf16.mxu0 %v6414
  %6793 = vmatpush1.bf16.msra.mxu0 %v6413
  %6794 = vmatprep.subr.bf16.mxu0 %v6421
  %6795 = vmatpush1.bf16.msra.mxu0 %v6420
  %6796 = vmatprep.subr.bf16.mxu0 %v6428
  %6797 = vmatpush1.bf16.msra.mxu0 %v6427
  %6798 = vmatprep.subr.bf16.mxu0 %v6435
  %6799 = vmatpush1.bf16.msra.mxu0 %v6434
  %6800 = vmatprep.subr.bf16.mxu0 %v6442
  %6801 = vmatpush1.bf16.msra.mxu0 %v6441
  %6802 = vmatprep.subr.bf16.mxu0 %v6449
  %6803 = vmatpush1.bf16.msra.mxu0 %v6448
  %6804 = vmatprep.subr.bf16.mxu0 %v6456
  %6805 = vmatpush1.bf16.msra.mxu0 %v6455
  %6806 = vmatprep.subr.bf16.mxu0 %v6463
  %6807 = vmatpush1.bf16.msra.mxu0 %v6462
  %6808 = vmatprep.subr.bf16.mxu0 %v6470
  %6809 = vmatpush1.bf16.msra.mxu0 %v6469
  %6810 = vmatprep.mubr.bf16.mxu0 %v3298
  %6811 = vmatmul.mubr.bf16.gmra.mrb[0].mxu0 %v3297
  %v6812 = vpop.f32.mrb[0].mxu0
  %v6813 = vadd.f32 %v6772, %v6812
  %v6814 = vpop.f32.mrb[0].mxu0
  %v6815 = vadd.f32 %v6774, %v6814
  %v6816 = vpop.f32.mrb[0].mxu0
  %v6817 = vpop.f32.mrb[0].mxu0
  %6818 = vdwg.mxu0
  %6819 = vmatprep.subr.bf16.mxu0 %v6477
  %6820 = vmatpush1.bf16.msra.mxu0 %v6476
  %6821 = vmatprep.subr.bf16.mxu0 %v6484
  %6822 = vmatpush1.bf16.msra.mxu0 %v6483
  %6823 = vmatprep.subr.bf16.mxu0 %v6491
  %6824 = vmatpush1.bf16.msra.mxu0 %v6490
  %6825 = vmatprep.subr.bf16.mxu0 %v6498
  %6826 = vmatpush1.bf16.msra.mxu0 %v6497
  %6827 = vmatprep.subr.bf16.mxu0 %v6505
  %6828 = vmatpush1.bf16.msra.mxu0 %v6504
  %6829 = vmatprep.subr.bf16.mxu0 %v6512
  %6830 = vmatpush1.bf16.msra.mxu0 %v6511
  %6831 = vmatprep.subr.bf16.mxu0 %v6519
  %6832 = vmatpush1.bf16.msra.mxu0 %v6518
  %6833 = vmatprep.subr.bf16.mxu0 %v6526
  %6834 = vmatpush1.bf16.msra.mxu0 %v6525
  %6835 = vmatprep.subr.bf16.mxu0 %v6533
  %6836 = vmatpush1.bf16.msra.mxu0 %v6532
  %6837 = vmatprep.subr.bf16.mxu0 %v6540
  %6838 = vmatpush1.bf16.msra.mxu0 %v6539
  %6839 = vmatprep.subr.bf16.mxu0 %v6547
  %6840 = vmatpush1.bf16.msra.mxu0 %v6546
  %6841 = vmatprep.subr.bf16.mxu0 %v6554
  %6842 = vmatpush1.bf16.msra.mxu0 %v6553
  %6843 = vmatprep.subr.bf16.mxu0 %v6561
  %6844 = vmatpush1.bf16.msra.mxu0 %v6560
  %6845 = vmatprep.subr.bf16.mxu0 %v6568
  %6846 = vmatpush1.bf16.msra.mxu0 %v6567
  %6847 = vmatprep.subr.bf16.mxu0 %v6575
  %6848 = vmatpush1.bf16.msra.mxu0 %v6574
  %6849 = vmatprep.subr.bf16.mxu0 %v6582
  %6850 = vmatpush1.bf16.msra.mxu0 %v6581
  %6851 = vmatprep.mubr.bf16.mxu0 %v3300
  %6852 = vmatmul.mubr.bf16.gmra.mrb[0].mxu0 %v3299
  %v6853 = vpop.f32.mrb[0].mxu0
  %v6854 = vadd.f32 %v6813, %v6853
  %v6855 = vpop.f32.mrb[0].mxu0
  %v6856 = vadd.f32 %v6815, %v6855
  %v6857 = vpop.f32.mrb[0].mxu0
  %v6858 = vpop.f32.mrb[0].mxu0
  %6859 = vdwg.mxu0
  %6860 = vmatprep.subr.bf16.mxu0 %v6589
  %6861 = vmatpush1.bf16.msra.mxu0 %v6588
  %6862 = vmatprep.subr.bf16.mxu0 %v6596
  %6863 = vmatpush1.bf16.msra.mxu0 %v6595
  %6864 = vmatprep.subr.bf16.mxu0 %v6603
  %6865 = vmatpush1.bf16.msra.mxu0 %v6602
  %6866 = vmatprep.subr.bf16.mxu0 %v6610
  %6867 = vmatpush1.bf16.msra.mxu0 %v6609
  %6868 = vmatprep.subr.bf16.mxu0 %v6617
  %6869 = vmatpush1.bf16.msra.mxu0 %v6616
  %6870 = vmatprep.subr.bf16.mxu0 %v6624
  %6871 = vmatpush1.bf16.msra.mxu0 %v6623
  %6872 = vmatprep.subr.bf16.mxu0 %v6631
  %6873 = vmatpush1.bf16.msra.mxu0 %v6630
  %6874 = vmatprep.subr.bf16.mxu0 %v6638
  %6875 = vmatpush1.bf16.msra.mxu0 %v6637
  %6876 = vmatprep.subr.bf16.mxu0 %v6645
  %6877 = vmatpush1.bf16.msra.mxu0 %v6644
  %6878 = vmatprep.subr.bf16.mxu0 %v6652
  %6879 = vmatpush1.bf16.msra.mxu0 %v6651
  %6880 = vmatprep.subr.bf16.mxu0 %v6659
  %6881 = vmatpush1.bf16.msra.mxu0 %v6658
  %6882 = vmatprep.subr.bf16.mxu0 %v6666
  %6883 = vmatpush1.bf16.msra.mxu0 %v6665
  %6884 = vmatprep.subr.bf16.mxu0 %v6673
  %6885 = vmatpush1.bf16.msra.mxu0 %v6672
  %6886 = vmatprep.subr.bf16.mxu0 %v6680
  %6887 = vmatpush1.bf16.msra.mxu0 %v6679
  %6888 = vmatprep.subr.bf16.mxu0 %v6687
  %6889 = vmatpush1.bf16.msra.mxu0 %v6686
  %6890 = vmatprep.subr.bf16.mxu0 %v6694
  %6891 = vmatpush1.bf16.msra.mxu0 %v6693
  %6892 = vmatprep.mubr.bf16.mxu0 %v3302
  %6893 = vmatmul.mubr.bf16.gmra.mrb[0].mxu0 %v3301
  %v6894 = vpop.f32.mrb[0].mxu0
  %v6895 = vadd.f32 %v6854, %v6894
  %v6896 = vpop.f32.mrb[0].mxu0
  %v6897 = vadd.f32 %v6856, %v6896
  %v6898 = vpop.f32.mrb[0].mxu0
  %v6899 = vpop.f32.mrb[0].mxu0
  %6900 = vdwg.mxu0
  %6901 = vmatprep.subr.bf16.mxu0 %v6255
  %6902 = vmatpush1.bf16.msra.mxu0 %v6254
  %6903 = vmatprep.subr.bf16.mxu0 %v6262
  %6904 = vmatpush1.bf16.msra.mxu0 %v6261
  %6905 = vmatprep.subr.bf16.mxu0 %v6269
  %6906 = vmatpush1.bf16.msra.mxu0 %v6268
  %6907 = vmatprep.subr.bf16.mxu0 %v6276
  %6908 = vmatpush1.bf16.msra.mxu0 %v6275
  %6909 = vmatprep.subr.bf16.mxu0 %v6283
  %6910 = vmatpush1.bf16.msra.mxu0 %v6282
  %6911 = vmatprep.subr.bf16.mxu0 %v6290
  %6912 = vmatpush1.bf16.msra.mxu0 %v6289
  %6913 = vmatprep.subr.bf16.mxu0 %v6297
  %6914 = vmatpush1.bf16.msra.mxu0 %v6296
  %6915 = vmatprep.subr.bf16.mxu0 %v6304
  %6916 = vmatpush1.bf16.msra.mxu0 %v6303
  %6917 = vmatprep.subr.bf16.mxu0 %v6311
  %6918 = vmatpush1.bf16.msra.mxu0 %v6310
  %6919 = vmatprep.subr.bf16.mxu0 %v6318
  %6920 = vmatpush1.bf16.msra.mxu0 %v6317
  %6921 = vmatprep.subr.bf16.mxu0 %v6325
  %6922 = vmatpush1.bf16.msra.mxu0 %v6324
  %6923 = vmatprep.subr.bf16.mxu0 %v6332
  %6924 = vmatpush1.bf16.msra.mxu0 %v6331
  %6925 = vmatprep.subr.bf16.mxu0 %v6339
  %6926 = vmatpush1.bf16.msra.mxu0 %v6338
  %6927 = vmatprep.subr.bf16.mxu0 %v6346
  %6928 = vmatpush1.bf16.msra.mxu0 %v6345
  %6929 = vmatprep.subr.bf16.mxu0 %v6353
  %6930 = vmatpush1.bf16.msra.mxu0 %v6352
  %6931 = vmatprep.subr.bf16.mxu0 %v6360
  %6932 = vmatpush1.bf16.msra.mxu0 %v6359
  %6933 = vmatprep.mubr.bf16.mxu0 %v3296
  %6934 = vmatmul.mubr.bf16.gmra.mrb[0].mxu0 %v3295
  %v6935 = vpop.f32.mrb[0].mxu0
  %v6936 = vadd.f32 %v6713, %v6935
  %v6937 = vpop.f32.mrb[0].mxu0
  %v6938 = vadd.f32 %v6717, %v6937
  %v6939 = vpop.f32.mrb[0].mxu0
  %v6940 = vpop.f32.mrb[0].mxu0
  %6941 = vdwg.mxu0
  %6942 = vmatprep.subr.bf16.mxu0 %v6367
  %6943 = vmatpush1.bf16.msra.mxu0 %v6366
  %6944 = vmatprep.subr.bf16.mxu0 %v6374
  %6945 = vmatpush1.bf16.msra.mxu0 %v6373
  %6946 = vmatprep.subr.bf16.mxu0 %v6381
  %6947 = vmatpush1.bf16.msra.mxu0 %v6380
  %6948 = vmatprep.subr.bf16.mxu0 %v6388
  %6949 = vmatpush1.bf16.msra.mxu0 %v6387
  %6950 = vmatprep.subr.bf16.mxu0 %v6395
  %6951 = vmatpush1.bf16.msra.mxu0 %v6394
  %6952 = vmatprep.subr.bf16.mxu0 %v6402
  %6953 = vmatpush1.bf16.msra.mxu0 %v6401
  %6954 = vmatprep.subr.bf16.mxu0 %v6409
  %6955 = vmatpush1.bf16.msra.mxu0 %v6408
  %6956 = vmatprep.subr.bf16.mxu0 %v6416
  %6957 = vmatpush1.bf16.msra.mxu0 %v6415
  %6958 = vmatprep.subr.bf16.mxu0 %v6423
  %6959 = vmatpush1.bf16.msra.mxu0 %v6422
  %6960 = vmatprep.subr.bf16.mxu0 %v6430
  %6961 = vmatpush1.bf16.msra.mxu0 %v6429
  %6962 = vmatprep.subr.bf16.mxu0 %v6437
  %6963 = vmatpush1.bf16.msra.mxu0 %v6436
  %6964 = vmatprep.subr.bf16.mxu0 %v6444
  %6965 = vmatpush1.bf16.msra.mxu0 %v6443
  %6966 = vmatprep.subr.bf16.mxu0 %v6451
  %6967 = vmatpush1.bf16.msra.mxu0 %v6450
  %6968 = vmatprep.subr.bf16.mxu0 %v6458
  %6969 = vmatpush1.bf16.msra.mxu0 %v6457
  %6970 = vmatprep.subr.bf16.mxu0 %v6465
  %6971 = vmatpush1.bf16.msra.mxu0 %v6464
  %6972 = vmatprep.subr.bf16.mxu0 %v6472
  %6973 = vmatpush1.bf16.msra.mxu0 %v6471
  %6974 = vmatprep.mubr.bf16.mxu0 %v3298
  %6975 = vmatmul.mubr.bf16.gmra.mrb[0].mxu0 %v3297
  %v6976 = vpop.f32.mrb[0].mxu0
  %v6977 = vadd.f32 %v6936, %v6976
  %v6978 = vpop.f32.mrb[0].mxu0
  %v6979 = vadd.f32 %v6938, %v6978
  %v6980 = vpop.f32.mrb[0].mxu0
  %v6981 = vpop.f32.mrb[0].mxu0
  %6982 = vdwg.mxu0
  %6983 = vmatprep.subr.bf16.mxu0 %v6479
  %6984 = vmatpush1.bf16.msra.mxu0 %v6478
  %6985 = vmatprep.subr.bf16.mxu0 %v6486
  %6986 = vmatpush1.bf16.msra.mxu0 %v6485
  %6987 = vmatprep.subr.bf16.mxu0 %v6493
  %6988 = vmatpush1.bf16.msra.mxu0 %v6492
  %6989 = vmatprep.subr.bf16.mxu0 %v6500
  %6990 = vmatpush1.bf16.msra.mxu0 %v6499
  %6991 = vmatprep.subr.bf16.mxu0 %v6507
  %6992 = vmatpush1.bf16.msra.mxu0 %v6506
  %6993 = vmatprep.subr.bf16.mxu0 %v6514
  %6994 = vmatpush1.bf16.msra.mxu0 %v6513
  %6995 = vmatprep.subr.bf16.mxu0 %v6521
  %6996 = vmatpush1.bf16.msra.mxu0 %v6520
  %6997 = vmatprep.subr.bf16.mxu0 %v6528
  %6998 = vmatpush1.bf16.msra.mxu0 %v6527
  %6999 = vmatprep.subr.bf16.mxu0 %v6535
  %7000 = vmatpush1.bf16.msra.mxu0 %v6534
  %7001 = vmatprep.subr.bf16.mxu0 %v6542
  %7002 = vmatpush1.bf16.msra.mxu0 %v6541
  %7003 = vmatprep.subr.bf16.mxu0 %v6549
  %7004 = vmatpush1.bf16.msra.mxu0 %v6548
  %7005 = vmatprep.subr.bf16.mxu0 %v6556
  %7006 = vmatpush1.bf16.msra.mxu0 %v6555
  %7007 = vmatprep.subr.bf16.mxu0 %v6563
  %7008 = vmatpush1.bf16.msra.mxu0 %v6562
  %7009 = vmatprep.subr.bf16.mxu0 %v6570
  %7010 = vmatpush1.bf16.msra.mxu0 %v6569
  %7011 = vmatprep.subr.bf16.mxu0 %v6577
  %7012 = vmatpush1.bf16.msra.mxu0 %v6576
  %7013 = vmatprep.subr.bf16.mxu0 %v6584
  %7014 = vmatpush1.bf16.msra.mxu0 %v6583
  %7015 = vmatprep.mubr.bf16.mxu0 %v3300
  %7016 = vmatmul.mubr.bf16.gmra.mrb[0].mxu0 %v3299
  %v7017 = vpop.f32.mrb[0].mxu0
  %v7018 = vadd.f32 %v6977, %v7017
  %v7019 = vpop.f32.mrb[0].mxu0
  %v7020 = vadd.f32 %v6979, %v7019
  %v7021 = vpop.f32.mrb[0].mxu0
  %v7022 = vpop.f32.mrb[0].mxu0
  %7023 = vdwg.mxu0
  %7024 = vmatprep.subr.bf16.mxu0 %v6591
  %7025 = vmatpush1.bf16.msra.mxu0 %v6590
  %7026 = vmatprep.subr.bf16.mxu0 %v6598
  %7027 = vmatpush1.bf16.msra.mxu0 %v6597
  %7028 = vmatprep.subr.bf16.mxu0 %v6605
  %7029 = vmatpush1.bf16.msra.mxu0 %v6604
  %7030 = vmatprep.subr.bf16.mxu0 %v6612
  %7031 = vmatpush1.bf16.msra.mxu0 %v6611
  %7032 = vmatprep.subr.bf16.mxu0 %v6619
  %7033 = vmatpush1.bf16.msra.mxu0 %v6618
  %7034 = vmatprep.subr.bf16.mxu0 %v6626
  %7035 = vmatpush1.bf16.msra.mxu0 %v6625
  %7036 = vmatprep.subr.bf16.mxu0 %v6633
  %7037 = vmatpush1.bf16.msra.mxu0 %v6632
  %7038 = vmatprep.subr.bf16.mxu0 %v6640
  %7039 = vmatpush1.bf16.msra.mxu0 %v6639
  %7040 = vmatprep.subr.bf16.mxu0 %v6647
  %7041 = vmatpush1.bf16.msra.mxu0 %v6646
  %7042 = vmatprep.subr.bf16.mxu0 %v6654
  %7043 = vmatpush1.bf16.msra.mxu0 %v6653
  %7044 = vmatprep.subr.bf16.mxu0 %v6661
  %7045 = vmatpush1.bf16.msra.mxu0 %v6660
  %7046 = vmatprep.subr.bf16.mxu0 %v6668
  %7047 = vmatpush1.bf16.msra.mxu0 %v6667
  %7048 = vmatprep.subr.bf16.mxu0 %v6675
  %7049 = vmatpush1.bf16.msra.mxu0 %v6674
  %7050 = vmatprep.subr.bf16.mxu0 %v6682
  %7051 = vmatpush1.bf16.msra.mxu0 %v6681
  %7052 = vmatprep.subr.bf16.mxu0 %v6689
  %7053 = vmatpush1.bf16.msra.mxu0 %v6688
  %7054 = vmatprep.subr.bf16.mxu0 %v6696
  %7055 = vmatpush1.bf16.msra.mxu0 %v6695
  %7056 = vmatprep.mubr.bf16.mxu0 %v3302
  %7057 = vmatmul.mubr.bf16.gmra.mrb[0].mxu0 %v3301
  %v7058 = vpop.f32.mrb[0].mxu0
  %v7059 = vadd.f32 %v7018, %v7058
  %v7060 = vpop.f32.mrb[0].mxu0
  %v7061 = vadd.f32 %v7020, %v7060
  %v7062 = vpop.f32.mrb[0].mxu0
  %v7063 = vpop.f32.mrb[0].mxu0
  %7064 = vdwg.mxu0
  %7065 = vmatprep.subr.bf16.mxu0 %v6257
  %7066 = vmatpush1.bf16.msra.mxu0 %v6256
  %7067 = vmatprep.subr.bf16.mxu0 %v6264
  %7068 = vmatpush1.bf16.msra.mxu0 %v6263
  %7069 = vmatprep.subr.bf16.mxu0 %v6271
  %7070 = vmatpush1.bf16.msra.mxu0 %v6270
  %7071 = vmatprep.subr.bf16.mxu0 %v6278
  %7072 = vmatpush1.bf16.msra.mxu0 %v6277
  %7073 = vmatprep.subr.bf16.mxu0 %v6285
  %7074 = vmatpush1.bf16.msra.mxu0 %v6284
  %7075 = vmatprep.subr.bf16.mxu0 %v6292
  %7076 = vmatpush1.bf16.msra.mxu0 %v6291
  %7077 = vmatprep.subr.bf16.mxu0 %v6299
  %7078 = vmatpush1.bf16.msra.mxu0 %v6298
  %7079 = vmatprep.subr.bf16.mxu0 %v6306
  %7080 = vmatpush1.bf16.msra.mxu0 %v6305
  %7081 = vmatprep.subr.bf16.mxu0 %v6313
  %7082 = vmatpush1.bf16.msra.mxu0 %v6312
  %7083 = vmatprep.subr.bf16.mxu0 %v6320
  %7084 = vmatpush1.bf16.msra.mxu0 %v6319
  %7085 = vmatprep.subr.bf16.mxu0 %v6327
  %7086 = vmatpush1.bf16.msra.mxu0 %v6326
  %7087 = vmatprep.subr.bf16.mxu0 %v6334
  %7088 = vmatpush1.bf16.msra.mxu0 %v6333
  %7089 = vmatprep.subr.bf16.mxu0 %v6341
  %7090 = vmatpush1.bf16.msra.mxu0 %v6340
  %7091 = vmatprep.subr.bf16.mxu0 %v6348
  %7092 = vmatpush1.bf16.msra.mxu0 %v6347
  %7093 = vmatprep.subr.bf16.mxu0 %v6355
  %7094 = vmatpush1.bf16.msra.mxu0 %v6354
  %7095 = vmatprep.subr.bf16.mxu0 %v6362
  %7096 = vmatpush1.bf16.msra.mxu0 %v6361
  %7097 = vmatprep.mubr.bf16.mxu0 %v3296
  %7098 = vmatmul.mubr.bf16.gmra.mrb[0].mxu0 %v3295
  %v7099 = vpop.f32.mrb[0].mxu0
  %v7100 = vadd.f32 %v6721, %v7099
  %v7101 = vpop.f32.mrb[0].mxu0
  %v7102 = vadd.f32 %v6725, %v7101
  %v7103 = vpop.f32.mrb[0].mxu0
  %v7104 = vpop.f32.mrb[0].mxu0
  %7105 = vdwg.mxu0
  %7106 = vmatprep.subr.bf16.mxu0 %v6369
  %7107 = vmatpush1.bf16.msra.mxu0 %v6368
  %7108 = vmatprep.subr.bf16.mxu0 %v6376
  %7109 = vmatpush1.bf16.msra.mxu0 %v6375
  %7110 = vmatprep.subr.bf16.mxu0 %v6383
  %7111 = vmatpush1.bf16.msra.mxu0 %v6382
  %7112 = vmatprep.subr.bf16.mxu0 %v6390
  %7113 = vmatpush1.bf16.msra.mxu0 %v6389
  %7114 = vmatprep.subr.bf16.mxu0 %v6397
  %7115 = vmatpush1.bf16.msra.mxu0 %v6396
  %7116 = vmatprep.subr.bf16.mxu0 %v6404
  %7117 = vmatpush1.bf16.msra.mxu0 %v6403
  %7118 = vmatprep.subr.bf16.mxu0 %v6411
  %7119 = vmatpush1.bf16.msra.mxu0 %v6410
  %7120 = vmatprep.subr.bf16.mxu0 %v6418
  %7121 = vmatpush1.bf16.msra.mxu0 %v6417
  %7122 = vmatprep.subr.bf16.mxu0 %v6425
  %7123 = vmatpush1.bf16.msra.mxu0 %v6424
  %7124 = vmatprep.subr.bf16.mxu0 %v6432
  %7125 = vmatpush1.bf16.msra.mxu0 %v6431
  %7126 = vmatprep.subr.bf16.mxu0 %v6439
  %7127 = vmatpush1.bf16.msra.mxu0 %v6438
  %7128 = vmatprep.subr.bf16.mxu0 %v6446
  %7129 = vmatpush1.bf16.msra.mxu0 %v6445
  %7130 = vmatprep.subr.bf16.mxu0 %v6453
  %7131 = vmatpush1.bf16.msra.mxu0 %v6452
  %7132 = vmatprep.subr.bf16.mxu0 %v6460
  %7133 = vmatpush1.bf16.msra.mxu0 %v6459
  %7134 = vmatprep.subr.bf16.mxu0 %v6467
  %7135 = vmatpush1.bf16.msra.mxu0 %v6466
  %7136 = vmatprep.subr.bf16.mxu0 %v6474
  %7137 = vmatpush1.bf16.msra.mxu0 %v6473
  %7138 = vmatprep.mubr.bf16.mxu0 %v3298
  %7139 = vmatmul.mubr.bf16.gmra.mrb[0].mxu0 %v3297
  %v7140 = vpop.f32.mrb[0].mxu0
  %v7141 = vadd.f32 %v7100, %v7140
  %v7142 = vpop.f32.mrb[0].mxu0
  %v7143 = vadd.f32 %v7102, %v7142
  %v7144 = vpop.f32.mrb[0].mxu0
  %v7145 = vpop.f32.mrb[0].mxu0
  %7146 = vdwg.mxu0
  %7147 = vmatprep.subr.bf16.mxu0 %v6481
  %7148 = vmatpush1.bf16.msra.mxu0 %v6480
  %7149 = vmatprep.subr.bf16.mxu0 %v6488
  %7150 = vmatpush1.bf16.msra.mxu0 %v6487
  %7151 = vmatprep.subr.bf16.mxu0 %v6495
  %7152 = vmatpush1.bf16.msra.mxu0 %v6494
  %7153 = vmatprep.subr.bf16.mxu0 %v6502
  %7154 = vmatpush1.bf16.msra.mxu0 %v6501
  %7155 = vmatprep.subr.bf16.mxu0 %v6509
  %7156 = vmatpush1.bf16.msra.mxu0 %v6508
  %7157 = vmatprep.subr.bf16.mxu0 %v6516
  %7158 = vmatpush1.bf16.msra.mxu0 %v6515
  %7159 = vmatprep.subr.bf16.mxu0 %v6523
  %7160 = vmatpush1.bf16.msra.mxu0 %v6522
  %7161 = vmatprep.subr.bf16.mxu0 %v6530
  %7162 = vmatpush1.bf16.msra.mxu0 %v6529
  %7163 = vmatprep.subr.bf16.mxu0 %v6537
  %7164 = vmatpush1.bf16.msra.mxu0 %v6536
  %7165 = vmatprep.subr.bf16.mxu0 %v6544
  %7166 = vmatpush1.bf16.msra.mxu0 %v6543
  %7167 = vmatprep.subr.bf16.mxu0 %v6551
  %7168 = vmatpush1.bf16.msra.mxu0 %v6550
  %7169 = vmatprep.subr.bf16.mxu0 %v6558
  %7170 = vmatpush1.bf16.msra.mxu0 %v6557
  %7171 = vmatprep.subr.bf16.mxu0 %v6565
  %7172 = vmatpush1.bf16.msra.mxu0 %v6564
  %7173 = vmatprep.subr.bf16.mxu0 %v6572
  %7174 = vmatpush1.bf16.msra.mxu0 %v6571
  %7175 = vmatprep.subr.bf16.mxu0 %v6579
  %7176 = vmatpush1.bf16.msra.mxu0 %v6578
  %7177 = vmatprep.subr.bf16.mxu0 %v6586
  %7178 = vmatpush1.bf16.msra.mxu0 %v6585
  %7179 = vmatprep.mubr.bf16.mxu0 %v3300
  %7180 = vmatmul.mubr.bf16.gmra.mrb[0].mxu0 %v3299
  %v7181 = vpop.f32.mrb[0].mxu0
  %v7182 = vadd.f32 %v7141, %v7181
  %v7183 = vpop.f32.mrb[0].mxu0
  %v7184 = vadd.f32 %v7143, %v7183
  %v7185 = vpop.f32.mrb[0].mxu0
  %v7186 = vpop.f32.mrb[0].mxu0
  %7187 = vdwg.mxu0
  %7188 = vmatprep.subr.bf16.mxu0 %v6593
  %7189 = vmatpush1.bf16.msra.mxu0 %v6592
  %7190 = vmatprep.subr.bf16.mxu0 %v6600
  %7191 = vmatpush1.bf16.msra.mxu0 %v6599
  %7192 = vmatprep.subr.bf16.mxu0 %v6607
  %7193 = vmatpush1.bf16.msra.mxu0 %v6606
  %7194 = vmatprep.subr.bf16.mxu0 %v6614
  %7195 = vmatpush1.bf16.msra.mxu0 %v6613
  %7196 = vmatprep.subr.bf16.mxu0 %v6621
  %7197 = vmatpush1.bf16.msra.mxu0 %v6620
  %7198 = vmatprep.subr.bf16.mxu0 %v6628
  %7199 = vmatpush1.bf16.msra.mxu0 %v6627
  %7200 = vmatprep.subr.bf16.mxu0 %v6635
  %7201 = vmatpush1.bf16.msra.mxu0 %v6634
  %7202 = vmatprep.subr.bf16.mxu0 %v6642
  %7203 = vmatpush1.bf16.msra.mxu0 %v6641
  %7204 = vmatprep.subr.bf16.mxu0 %v6649
  %7205 = vmatpush1.bf16.msra.mxu0 %v6648
  %7206 = vmatprep.subr.bf16.mxu0 %v6656
  %7207 = vmatpush1.bf16.msra.mxu0 %v6655
  %7208 = vmatprep.subr.bf16.mxu0 %v6663
  %7209 = vmatpush1.bf16.msra.mxu0 %v6662
  %7210 = vmatprep.subr.bf16.mxu0 %v6670
  %7211 = vmatpush1.bf16.msra.mxu0 %v6669
  %7212 = vmatprep.subr.bf16.mxu0 %v6677
  %7213 = vmatpush1.bf16.msra.mxu0 %v6676
  %7214 = vmatprep.subr.bf16.mxu0 %v6684
  %7215 = vmatpush1.bf16.msra.mxu0 %v6683
  %7216 = vmatprep.subr.bf16.mxu0 %v6691
  %7217 = vmatpush1.bf16.msra.mxu0 %v6690
  %7218 = vmatprep.subr.bf16.mxu0 %v6698
  %7219 = vmatpush1.bf16.msra.mxu0 %v6697
  %7220 = vmatprep.mubr.bf16.mxu0 %v3302
  %7221 = vmatmul.mubr.bf16.gmra.mrb[0].mxu0 %v3301
  %v7222 = vpop.f32.mrb[0].mxu0
  %v7223 = vadd.f32 %v7182, %v7222
  %v7224 = vpop.f32.mrb[0].mxu0
  %v7225 = vadd.f32 %v7184, %v7224
  %v7226 = vpop.f32.mrb[0].mxu0
  %v7227 = vpop.f32.mrb[0].mxu0
  %7228 = vdwg.mxu0
  %7229 = vmatprep.subr.bf16.mxu0 0
  %7230 = vmatpush1.bf16.msra.mxu0 %v6258
  %7231 = vmatprep.subr.bf16.mxu0 0
  %7232 = vmatpush1.bf16.msra.mxu0 %v6265
  %7233 = vmatprep.subr.bf16.mxu0 0
  %7234 = vmatpush1.bf16.msra.mxu0 %v6272
  %7235 = vmatprep.subr.bf16.mxu0 0
  %7236 = vmatpush1.bf16.msra.mxu0 %v6279
  %7237 = vmatprep.subr.bf16.mxu0 0
  %7238 = vmatpush1.bf16.msra.mxu0 %v6286
  %7239 = vmatprep.subr.bf16.mxu0 0
  %7240 = vmatpush1.bf16.msra.mxu0 %v6293
  %7241 = vmatprep.subr.bf16.mxu0 0
  %7242 = vmatpush1.bf16.msra.mxu0 %v6300
  %7243 = vmatprep.subr.bf16.mxu0 0
  %7244 = vmatpush1.bf16.msra.mxu0 %v6307
  %7245 = vmatprep.subr.bf16.mxu0 0
  %7246 = vmatpush1.bf16.msra.mxu0 %v6314
  %7247 = vmatprep.subr.bf16.mxu0 0
  %7248 = vmatpush1.bf16.msra.mxu0 %v6321
  %7249 = vmatprep.subr.bf16.mxu0 0
  %7250 = vmatpush1.bf16.msra.mxu0 %v6328
  %7251 = vmatprep.subr.bf16.mxu0 0
  %7252 = vmatpush1.bf16.msra.mxu0 %v6335
  %7253 = vmatprep.subr.bf16.mxu0 0
  %7254 = vmatpush1.bf16.msra.mxu0 %v6342
  %7255 = vmatprep.subr.bf16.mxu0 0
  %7256 = vmatpush1.bf16.msra.mxu0 %v6349
  %7257 = vmatprep.subr.bf16.mxu0 0
  %7258 = vmatpush1.bf16.msra.mxu0 %v6356
  %7259 = vmatprep.subr.bf16.mxu0 0
  %7260 = vmatpush1.bf16.msra.mxu0 %v6363
  %7261 = vmatprep.mubr.bf16.mxu0 %v3296
  %7262 = vmatmul.mubr.bf16.gmra.mrb[0].mxu0 %v3295
  %v7263 = vpop.f32.mrb[0].mxu0
  %v7264 = vadd.f32 %v6729, %v7263
  %v7265 = vpop.f32.mrb[0].mxu0
  %v7266 = vpop.f32.mrb[0].mxu0
  %v7267 = vpop.f32.mrb[0].mxu0
  %7268 = vdwg.mxu0
  %7269 = vmatprep.subr.bf16.mxu0 0
  %7270 = vmatpush1.bf16.msra.mxu0 %v6370
  %7271 = vmatprep.subr.bf16.mxu0 0
  %7272 = vmatpush1.bf16.msra.mxu0 %v6377
  %7273 = vmatprep.subr.bf16.mxu0 0
  %7274 = vmatpush1.bf16.msra.mxu0 %v6384
  %7275 = vmatprep.subr.bf16.mxu0 0
  %7276 = vmatpush1.bf16.msra.mxu0 %v6391
  %7277 = vmatprep.subr.bf16.mxu0 0
  %7278 = vmatpush1.bf16.msra.mxu0 %v6398
  %7279 = vmatprep.subr.bf16.mxu0 0
  %7280 = vmatpush1.bf16.msra.mxu0 %v6405
  %7281 = vmatprep.subr.bf16.mxu0 0
  %7282 = vmatpush1.bf16.msra.mxu0 %v6412
  %7283 = vmatprep.subr.bf16.mxu0 0
  %7284 = vmatpush1.bf16.msra.mxu0 %v6419
  %7285 = vmatprep.subr.bf16.mxu0 0
  %7286 = vmatpush1.bf16.msra.mxu0 %v6426
  %7287 = vmatprep.subr.bf16.mxu0 0
  %7288 = vmatpush1.bf16.msra.mxu0 %v6433
  %7289 = vmatprep.subr.bf16.mxu0 0
  %7290 = vmatpush1.bf16.msra.mxu0 %v6440
  %7291 = vmatprep.subr.bf16.mxu0 0
  %7292 = vmatpush1.bf16.msra.mxu0 %v6447
  %7293 = vmatprep.subr.bf16.mxu0 0
  %7294 = vmatpush1.bf16.msra.mxu0 %v6454
  %7295 = vmatprep.subr.bf16.mxu0 0
  %7296 = vmatpush1.bf16.msra.mxu0 %v6461
  %7297 = vmatprep.subr.bf16.mxu0 0
  %7298 = vmatpush1.bf16.msra.mxu0 %v6468
  %7299 = vmatprep.subr.bf16.mxu0 0
  %7300 = vmatpush1.bf16.msra.mxu0 %v6475
  %7301 = vmatprep.mubr.bf16.mxu0 %v3298
  %7302 = vmatmul.mubr.bf16.gmra.mrb[0].mxu0 %v3297
  %v7303 = vpop.f32.mrb[0].mxu0
  %v7304 = vadd.f32 %v7264, %v7303
  %v7305 = vpop.f32.mrb[0].mxu0
  %v7306 = vpop.f32.mrb[0].mxu0
  %v7307 = vpop.f32.mrb[0].mxu0
  %7308 = vdwg.mxu0
  %7309 = vmatprep.subr.bf16.mxu0 0
  %7310 = vmatpush1.bf16.msra.mxu0 %v6482
  %7311 = vmatprep.subr.bf16.mxu0 0
  %7312 = vmatpush1.bf16.msra.mxu0 %v6489
  %7313 = vmatprep.subr.bf16.mxu0 0
  %7314 = vmatpush1.bf16.msra.mxu0 %v6496
  %7315 = vmatprep.subr.bf16.mxu0 0
  %7316 = vmatpush1.bf16.msra.mxu0 %v6503
  %7317 = vmatprep.subr.bf16.mxu0 0
  %7318 = vmatpush1.bf16.msra.mxu0 %v6510
  %7319 = vmatprep.subr.bf16.mxu0 0
  %7320 = vmatpush1.bf16.msra.mxu0 %v6517
  %7321 = vmatprep.subr.bf16.mxu0 0
  %7322 = vmatpush1.bf16.msra.mxu0 %v6524
  %7323 = vmatprep.subr.bf16.mxu0 0
  %7324 = vmatpush1.bf16.msra.mxu0 %v6531
  %7325 = vmatprep.subr.bf16.mxu0 0
  %7326 = vmatpush1.bf16.msra.mxu0 %v6538
  %7327 = vmatprep.subr.bf16.mxu0 0
  %7328 = vmatpush1.bf16.msra.mxu0 %v6545
  %7329 = vmatprep.subr.bf16.mxu0 0
  %7330 = vmatpush1.bf16.msra.mxu0 %v6552
  %7331 = vmatprep.subr.bf16.mxu0 0
  %7332 = vmatpush1.bf16.msra.mxu0 %v6559
  %7333 = vmatprep.subr.bf16.mxu0 0
  %7334 = vmatpush1.bf16.msra.mxu0 %v6566
  %7335 = vmatprep.subr.bf16.mxu0 0
  %7336 = vmatpush1.bf16.msra.mxu0 %v6573
  %7337 = vmatprep.subr.bf16.mxu0 0
  %7338 = vmatpush1.bf16.msra.mxu0 %v6580
  %7339 = vmatprep.subr.bf16.mxu0 0
  %7340 = vmatpush1.bf16.msra.mxu0 %v6587
  %7341 = vmatprep.mubr.bf16.mxu0 %v3300
  %7342 = vmatmul.mubr.bf16.gmra.mrb[0].mxu0 %v3299
  %v7343 = vpop.f32.mrb[0].mxu0
  %v7344 = vadd.f32 %v7304, %v7343
  %v7345 = vpop.f32.mrb[0].mxu0
  %v7346 = vpop.f32.mrb[0].mxu0
  %v7347 = vpop.f32.mrb[0].mxu0
  %7348 = vdwg.mxu0
  %7349 = vmatprep.subr.bf16.mxu0 0
  %7350 = vmatpush1.bf16.msra.mxu0 %v6594
  %7351 = vmatprep.subr.bf16.mxu0 0
  %7352 = vmatpush1.bf16.msra.mxu0 %v6601
  %7353 = vmatprep.subr.bf16.mxu0 0
  %7354 = vmatpush1.bf16.msra.mxu0 %v6608
  %7355 = vmatprep.subr.bf16.mxu0 0
  %7356 = vmatpush1.bf16.msra.mxu0 %v6615
  %7357 = vmatprep.subr.bf16.mxu0 0
  %7358 = vmatpush1.bf16.msra.mxu0 %v6622
  %7359 = vmatprep.subr.bf16.mxu0 0
  %7360 = vmatpush1.bf16.msra.mxu0 %v6629
  %7361 = vmatprep.subr.bf16.mxu0 0
  %7362 = vmatpush1.bf16.msra.mxu0 %v6636
  %7363 = vmatprep.subr.bf16.mxu0 0
  %7364 = vmatpush1.bf16.msra.mxu0 %v6643
  %7365 = vmatprep.subr.bf16.mxu0 0
  %7366 = vmatpush1.bf16.msra.mxu0 %v6650
  %7367 = vmatprep.subr.bf16.mxu0 0
  %7368 = vmatpush1.bf16.msra.mxu0 %v6657
  %7369 = vmatprep.subr.bf16.mxu0 0
  %7370 = vmatpush1.bf16.msra.mxu0 %v6664
  %7371 = vmatprep.subr.bf16.mxu0 0
  %7372 = vmatpush1.bf16.msra.mxu0 %v6671
  %7373 = vmatprep.subr.bf16.mxu0 0
  %7374 = vmatpush1.bf16.msra.mxu0 %v6678
  %7375 = vmatprep.subr.bf16.mxu0 0
  %7376 = vmatpush1.bf16.msra.mxu0 %v6685
  %7377 = vmatprep.subr.bf16.mxu0 0
  %7378 = vmatpush1.bf16.msra.mxu0 %v6692
  %7379 = vmatprep.subr.bf16.mxu0 0
  %7380 = vmatpush1.bf16.msra.mxu0 %v6699
  %7381 = vmatprep.mubr.bf16.mxu0 %v3302
  %7382 = vmatmul.mubr.bf16.gmra.mrb[0].mxu0 %v3301
  %v7383 = vpop.f32.mrb[0].mxu0
  %v7384 = vadd.f32 %v7344, %v7383
  %v7385 = vpop.f32.mrb[0].mxu0
  %v7386 = vpop.f32.mrb[0].mxu0
  %v7387 = vpop.f32.mrb[0].mxu0
  %7388 = vdwg.mxu0
  %v7389 = vmul.f32 %v6895, 0.5
  %v7390 = vmul.f32 %v6897, 0.5
  %v7391 = vmul.f32 %v7059, 0.5
  %v7392 = vmul.f32 %v7061, 0.5
  %v7393 = vmul.f32 %v7223, 0.5
  %v7394 = vmul.f32 %v7225, 0.5
  %v7395 = vmul.f32 %v7384, 0.5
  %v7396 = vtanh.pop %v7389
  %v7397 = vtanh.pop %v7390
  %v7398 = vtanh.pop %v7391
  %v7399 = vtanh.pop %v7392
  %v7400 = vtanh.pop %v7393
  %v7401 = vtanh.pop %v7394
  %v7402 = vtanh.pop %v7395
  %v7403 = vadd.f32 %v7396, 1.0
  %v7404 = vadd.f32 %v7397, 1.0
  %v7405 = vadd.f32 %v7398, 1.0
  %v7406 = vadd.f32 %v7399, 1.0
  %v7407 = vadd.f32 %v7400, 1.0
  %v7408 = vadd.f32 %v7401, 1.0
  %v7409 = vadd.f32 %v7402, 1.0
  %v7410 = vmul.f32 %v7403, 0.5
  %v7411 = vmul.f32 %v7404, 0.5
  %v7412 = vmul.f32 %v7405, 0.5
  %v7413 = vmul.f32 %v7406, 0.5
  %v7414 = vmul.f32 %v7407, 0.5
  %v7415 = vmul.f32 %v7408, 0.5
  %v7416 = vmul.f32 %v7409, 0.5
  %7417 = vst [vmem:[%s16] sm:$0xff] %v7410
  %7418 = vst [vmem:[%s16 + $0x8] sm:$0xff] %v7411
  %7419 = vst [vmem:[%s16 + $0x10] sm:$0xff] %v7412
  %7420 = vst [vmem:[%s16 + $0x18] sm:$0xff] %v7413
  %7421 = vst [vmem:[%s16 + $0x20] sm:$0xff] %v7414
  %7422 = vst [vmem:[%s16 + $0x28] sm:$0xff] %v7415
  %vm7423 = vcmask 130048
  %7424 = vst.msk [vmem:[%s16 + $0x30] sm:$0xff] %vm7423, %v7416
  // Predicated region
  $region66: #{generator_zero_forward.1} parent=0 // pred_check
    _
  $region67: #{generator_zero_forward.1} parent=0 // pred_check_branch
    %7426 = sbr.rel (0) target = $region69
  $region68: #{generator_zero_forward.1} parent=0 // pred_region
    _
  $region69: #{generator_zero_forward.1} parent=0 // pred_fallthru
    _
  // Predicated region
  $region70: #{generator_zero_forward.1} parent=0 // pred_check
    _
  $region71: #{generator_zero_forward.1} parent=0 // pred_check_branch
    %7428 = sbr.rel (0) target = $region73
  $region72: #{generator_zero_forward.1} parent=0 // pred_region
    _
  $region73: #{generator_zero_forward.1} parent=0 // pred_fallthru
    _

</llo_original>
